<compile_context>
chip_gen: v7x
topology: tpu7x:2x2x1
jax: 0.10.0
libtpu: 0.0.40
codegen_flags: <defaults>
</compile_context>

<pallas_src>
import jax
import jax.numpy as jnp
from jax.experimental import pallas as pl
from jax.experimental.pallas import tpu as pltpu

BN_EPS = 1e-5                      # PyTorch BatchNorm2d default eps
MAX_TILE_M = 2048                  # upper bound on rows per grid step
VMEM_BUDGET = 20 * 1024 * 1024     # per-call double-buffered working-set target
VMEM_LIMIT = 32 * 1024 * 1024      # scoped-VMEM request (safe on v5e/v6e/v7x)


def _round_up(x, m):
    return ((x + m - 1) // m) * m


# ----------------------------- Pallas kernels -------------------------------

def time_mlp_kernel(t_ref, w1_ref, b1_ref, w2_ref, b2_ref, o_ref):
    """Linear -> ReLU -> Linear (nn.Sequential time_mlp). bf16 MXU, f32 accum."""
    h = jnp.dot(t_ref[...], w1_ref[...], preferred_element_type=jnp.float32)
    h = jnp.maximum(h + b1_ref[...], 0.0)
    o_ref[...] = (jnp.dot(h.astype(jnp.bfloat16), w2_ref[...],
                          preferred_element_type=jnp.float32) + b2_ref[...])


def _make_conv_stats_kernel(n_in, m_true, tile_m, needs_mask):
    """Split-K conv matmul + (folded) bias + ReLU; per-tile BN partial stats.

    refs = (patches_0..n-1, w_0..n-1, bias, y_out, psum_out, pssq_out)
    psum/pssq are (1, 1, Cout_pad) per-tile partials (no carried state, so the
    grid axis is "parallel" and shards across TensorCores on v7x).
    """
    def kernel(*refs):
        p_refs = refs[0:n_in]
        w_refs = refs[n_in:2 * n_in]
        b_ref = refs[2 * n_in]
        y_ref, sum_ref, ssq_ref = refs[2 * n_in + 1:]

        acc = jnp.dot(p_refs[0][...], w_refs[0][...],
                      preferred_element_type=jnp.float32)
        for j in range(1, n_in):
            acc = acc + jnp.dot(p_refs[j][...], w_refs[j][...],
                                preferred_element_type=jnp.float32)
        x = jnp.maximum(acc + b_ref[...], 0.0)          # Conv bias + ReLU (f32)
        y_ref[...] = x.astype(jnp.bfloat16)             # bf16 store (HBM traffic /2)

        def write_stats(v):
            sum_ref[...] = jnp.sum(v, axis=0, keepdims=True).reshape(1, 1, -1)
            ssq_ref[...] = jnp.sum(v * v, axis=0, keepdims=True).reshape(1, 1, -1)

        if needs_mask:
            i = pl.program_id(0)
            last = pl.num_programs(0) - 1

            @pl.when(i != last)                          # mask only on last tile
            def _():
                write_stats(x)

            @pl.when(i == last)
            def _():
                rows = i * tile_m + jax.lax.broadcasted_iota(jnp.int32, x.shape, 0)
                write_stats(jnp.where(rows < m_true, x, 0.0))
        else:
            write_stats(x)

    return kernel


def bn_apply_kernel(y_ref, sc_ref, sh_ref, o_ref):
    """y * scale + shift (final block only; every other BN is folded forward)."""
    o_ref[...] = y_ref[...].astype(jnp.float32) * sc_ref[...] + sh_ref[...]


# ----------------------------- Pallas wrappers -------------------------------

def pallas_time_mlp(t, params):
    w1, b1, w2, b2 = params
    B, time_dim = t.shape
    b_pad = _round_up(B, 16)                            # bf16 sublane packing
    d_in_pad = w1.shape[0]
    d_out_pad = w2.shape[1]
    t_p = jnp.pad(t, ((0, b_pad - B), (0, d_in_pad - time_dim))).astype(jnp.bfloat16)

    flops = 2 * b_pad * (d_in_pad * w1.shape[1] + w2.shape[0] * d_out_pad)
    bytes_accessed = (t_p.size * 2 + w1.size * 2 + w2.size * 2
                      + b1.size * 4 + b2.size * 4 + b_pad * d_out_pad * 4)

    out = pl.pallas_call(
        time_mlp_kernel,
        out_shape=jax.ShapeDtypeStruct((b_pad, d_out_pad), jnp.float32),
        in_specs=[pl.BlockSpec(memory_space=pltpu.MemorySpace.VMEM)] * 5,
        out_specs=pl.BlockSpec(memory_space=pltpu.MemorySpace.VMEM),
        compiler_params=pltpu.CompilerParams(vmem_limit_bytes=VMEM_LIMIT),
        cost_estimate=pl.CostEstimate(flops=flops, transcendentals=0,
                                      bytes_accessed=bytes_accessed),
    )(t_p, w1, b1, w2, b2)
    return out[:B, :time_dim]


def pallas_conv_relu_stats(patches, ws, bias, m_true, tile_m):
    """Tiled conv(+folded bias, ReLU) over M; returns (y bf16, psum, pssq)."""
    n = len(patches)
    m_pad = patches[0].shape[0]
    cout_pad = ws[0].shape[1]
    n_tiles = m_pad // tile_m
    needs_mask = (m_pad != m_true)

    in_specs = (
        [pl.BlockSpec((tile_m, p.shape[1]), lambda i: (i, 0)) for p in patches]
        + [pl.BlockSpec(w.shape, lambda i: (0, 0)) for w in ws]
        + [pl.BlockSpec((1, cout_pad), lambda i: (0, 0))]
    )
    out_specs = (
        pl.BlockSpec((tile_m, cout_pad), lambda i: (i, 0)),      # y (bf16)
        pl.BlockSpec((1, 1, cout_pad), lambda i: (i, 0, 0)),     # per-tile sum
        pl.BlockSpec((1, 1, cout_pad), lambda i: (i, 0, 0)),     # per-tile sumsq
    )
    out_shape = (
        jax.ShapeDtypeStruct((m_pad, cout_pad), jnp.bfloat16),
        jax.ShapeDtypeStruct((n_tiles, 1, cout_pad), jnp.float32),
        jax.ShapeDtypeStruct((n_tiles, 1, cout_pad), jnp.float32),
    )

    k_total = sum(w.shape[0] for w in ws)
    flops = 2 * m_pad * k_total * cout_pad
    bytes_accessed = (m_pad * k_total * 2 + k_total * cout_pad * 2
                      + m_pad * cout_pad * 2 + 2 * n_tiles * cout_pad * 4
                      + cout_pad * 4)

    return pl.pallas_call(
        _make_conv_stats_kernel(n, m_true, tile_m, needs_mask),
        grid=(n_tiles,),
        in_specs=in_specs,
        out_specs=out_specs,
        out_shape=out_shape,
        compiler_params=pltpu.CompilerParams(
            dimension_semantics=("parallel",),        # no carried state -> 2 TCs on v7x
            vmem_limit_bytes=VMEM_LIMIT),
        cost_estimate=pl.CostEstimate(flops=flops, transcendentals=0,
                                      bytes_accessed=bytes_accessed),
    )(*patches, *ws, bias)


def pallas_bn_apply(y, scale, shift, tile_m):
    m_pad, cout_pad = y.shape
    return pl.pallas_call(
        bn_apply_kernel,
        grid=(m_pad // tile_m,),
        in_specs=[pl.BlockSpec((tile_m, cout_pad), lambda i: (i, 0)),
                  pl.BlockSpec((1, cout_pad), lambda i: (0, 0)),
                  pl.BlockSpec((1, cout_pad), lambda i: (0, 0))],
        out_specs=pl.BlockSpec((tile_m, cout_pad), lambda i: (i, 0)),
        out_shape=jax.ShapeDtypeStruct((m_pad, cout_pad), jnp.float32),
        compiler_params=pltpu.CompilerParams(
            dimension_semantics=("parallel",),
            vmem_limit_bytes=VMEM_LIMIT),
        cost_estimate=pl.CostEstimate(
            flops=2 * m_pad * cout_pad, transcendentals=0,
            bytes_accessed=m_pad * cout_pad * 6 + 2 * cout_pad * 4),
    )(y, scale, shift)


# ----------------------------- glue (plain JAX) -------------------------------
# TODO(synk): fold the 3x3 patch construction into the conv kernel via haloed
# DMA / shifted BlockSpec views to remove this 9x HBM materialization.

def _im2col(x, stride, pad_val, m_pad, k_pad):
    """x: [B,H,W,C] bf16 -> bf16 patches [m_pad, k_pad] (tap-major, chan-minor).

    `pad_val` (1,C) replaces the spatial zero-pad so that a BN affine folded
    into the consumer's weights still yields exactly zero at border taps.
    """
    B, H, W, C = x.shape
    if pad_val is None:
        xp = jnp.pad(x, ((0, 0), (1, 1), (1, 1), (0, 0)))
    else:
        xp = jnp.broadcast_to(pad_val.reshape(1, 1, 1, C).astype(x.dtype),
                              (B, H + 2, W + 2, C))
        xp = xp.at[:, 1:H + 1, 1:W + 1, :].set(x)
    OH = (H + 2 - 3) // stride + 1
    OW = (W + 2 - 3) // stride + 1
    cols = [xp[:, i:i + stride * (OH - 1) + 1:stride,
                  j:j + stride * (OW - 1) + 1:stride, :]
            for i in range(3) for j in range(3)]
    p = jnp.stack(cols, axis=3).reshape(B * OH * OW, 9 * C).astype(jnp.bfloat16)
    # Single fused pad for both the M and K axes (no separate astype copy).
    return jnp.pad(p, ((0, m_pad - B * OH * OW), (0, k_pad - 9 * C)))


def _choose_tile_m(M, k_pads, cout_pad):
    """Largest 16-multiple M tile whose double-buffered working set fits budget."""
    def est(tm):
        stream = sum(tm * k * 2 for k in k_pads) + tm * cout_pad * 2   # patches + y
        resident = sum(k * cout_pad * 2 for k in k_pads) + 3 * cout_pad * 4
        return 2 * stream + 2 * resident
    m16 = _round_up(M, 16)
    if m16 <= MAX_TILE_M and est(m16) <= VMEM_BUDGET:
        return m16
    tile = MAX_TILE_M
    while tile > 16 and (tile > m16 or est(tile) > VMEM_BUDGET):
        tile //= 2
    # Rebalance so m_pad = round_up(M, tile) wastes at most ~15 rows.
    n_tiles = -(-M // tile)
    return _round_up(-(-M // n_tiles), 16)


def conv_block(inputs, params, stride, normalize_output=False):
    """One _block() (Conv2d -> ReLU -> BatchNorm2d, training-mode stats).

    `inputs`: list of (x_nhwc_bf16, affine) pairs — the Conv2d over their
    channel-concatenation is a split-K sum of matmuls (no jnp.concatenate).
    `affine` is the producing block's deferred BN (scale, shift) or None; it is
    folded into this block's weights/bias and into the spatial pad value, so
    the previous block's BN costs no extra HBM pass.

    Returns (y_raw bf16 NHWC, (scale, shift)) or, if `normalize_output`, the
    normalized f32 NHWC output.
    """
    ws, b, gamma, beta = params            # ws[j]: f32 [K_pad_j, Cout_pad]
    cout_pad = ws[0].shape[1]
    cout = b.shape[1]
    B, H, W, _ = inputs[0][0].shape
    OH = (H + 2 - 3) // stride + 1
    OW = (W + 2 - 3) // stride + 1
    M = B * OH * OW

    k_pads = [w.shape[0] for w in ws]
    tile_m = _choose_tile_m(M, k_pads, cout_pad)
    m_pad = _round_up(M, tile_m)

    patches, w_bf = [], []
    bias_total = jnp.pad(b, ((0, 0), (0, cout_pad - cout)))
    for (x, affine), w in zip(inputs, ws):
        cin = x.shape[-1]
        k_true, k_pad = 9 * cin, w.shape[0]
        if affine is None:
            w_j = w.astype(jnp.bfloat16)
            pad_val = None
        else:
            scale, shift = affine                         # (1, cin) f32
            scale_col = jnp.pad(jnp.tile(scale.reshape(-1), 9),
                                (0, k_pad - k_true), constant_values=1.0)
            shift_col = jnp.pad(jnp.tile(shift.reshape(-1), 9), (0, k_pad - k_true))
            w_j = (w * scale_col[:, None]).astype(jnp.bfloat16)   # fold BN scale
            bias_total = bias_total + (shift_col @ w)[None, :]    # fold BN shift
            pad_val = -(shift / scale)      # spatial pad value that maps to BN output 0
        patches.append(_im2col(x, stride, pad_val, m_pad, k_pad))
        w_bf.append(w_j)

    y, psum, pssq = pallas_conv_relu_stats(patches, w_bf, bias_total, M, tile_m)

    # Finalize training-mode batch statistics from per-tile partials (tiny).
    # NOTE: E[x^2]-E[x]^2 in f32 can cancel for large-magnitude activations;
    # clamped at 0 so it never NaNs.
    s = jnp.sum(psum, axis=0)               # (1, Cout_pad)
    ss = jnp.sum(pssq, axis=0)
    mean = s / M
    var = jnp.maximum(ss / M - mean * mean, 0.0)
    inv = jax.lax.rsqrt(var + BN_EPS)
    scale_t = gamma * inv[:, :cout]
    shift_t = beta - mean[:, :cout] * scale_t

    if normalize_output:
        scale_p = jnp.pad(scale_t, ((0, 0), (0, cout_pad - cout)))
        shift_p = jnp.pad(shift_t, ((0, 0), (0, cout_pad - cout)))
        out = pallas_bn_apply(y, scale_p, shift_p, tile_m)
        return out[:M, :cout].reshape(B, OH, OW, cout)

    y_nhwc = y[:M, :cout].reshape(B, OH, OW, cout)        # bf16, pre-BN ("raw")
    return y_nhwc, (scale_t, shift_t)


def unet_forward(params, x_nchw, t):
    x = jnp.transpose(x_nchw, (0, 2, 3, 1)).astype(jnp.bfloat16)   # NCHW -> NHWC
    time_dim = t.shape[1]
    t_emb = pallas_time_mlp(t, params["time_mlp"])                 # [B, time_dim]

    d1, d1_aff = conv_block([(x, None)], params["down1"], 1)
    d2, d2_aff = conv_block([(d1, d1_aff)], params["down2"], 2)
    d3, d3_aff = conv_block([(d2, d2_aff)], params["down3"], 2)

    B, H3, W3, _ = d3.shape
    # TODO(synk): algebraic rewrite — t_map is spatially constant; replace this
    # patch stream with a per-batch additive term in up1's epilogue.
    t_map = jnp.broadcast_to(t_emb[:, None, None, :].astype(jnp.bfloat16),
                             (B, H3, W3, time_dim))

    # Skip connections are split-K operands inside the conv kernels (no concat);
    # each carries the deferred BN affine of its producing block.
    u1, u1_aff = conv_block([(t_map, None), (d3, d3_aff)], params["up1"], 1)
    u2, u2_aff = conv_block([(u1, u1_aff), (d2, d2_aff)], params["up2"], 1)
    out = conv_block([(u2, u2_aff), (d1, d1_aff)], params["up3"], 1,
                     normalize_output=True)
    return jnp.transpose(out, (0, 3, 1, 2))                        # NHWC -> NCHW


# ----------------------------- parameter init -------------------------------

def _conv_params(key, cins, cout):
    """Conv+BN params; `cins` lists the channel split of a concatenated input.

    Weights stay f32 (master copy) so the runtime BN fold happens in f32; they
    are padded along K (to 128) and Cout (to 128) once here.  bias/gamma/beta
    are true-width so static channel counts are recoverable from shapes.
    """
    cout_pad = _round_up(cout, 128)
    fan_in = 9 * sum(cins)
    keys = jax.random.split(key, len(cins) + 1)
    ws = []
    for k, cin in zip(keys[:-1], cins):
        kt = 9 * cin
        kp = _round_up(kt, 128)
        w = jax.random.normal(k, (kt, cout), jnp.float32) / jnp.sqrt(float(fan_in))
        ws.append(jnp.pad(w, ((0, kp - kt), (0, cout_pad - cout))))
    b = jax.random.normal(keys[-1], (1, cout), jnp.float32) * 0.01
    gamma = jnp.ones((1, cout), jnp.float32)      # BatchNorm2d default init
    beta = jnp.zeros((1, cout), jnp.float32)
    return tuple(ws), b, gamma, beta


def _linear_params(key, fin, fout):
    fin_pad = _round_up(fin, 128)
    fout_pad = _round_up(fout, 128)
    kw_, kb_ = jax.random.split(key)
    w = jax.random.normal(kw_, (fin, fout), jnp.float32) / jnp.sqrt(float(fin))
    w = jnp.pad(w, ((0, fin_pad - fin), (0, fout_pad - fout))).astype(jnp.bfloat16)
    b = jnp.pad(jax.random.normal(kb_, (1, fout), jnp.float32) * 0.01,
                ((0, 0), (0, fout_pad - fout)))
    return w, b


def init_params(key, in_channels=3, out_channels=3, time_dim=256):
    ks = jax.random.split(key, 8)
    w1, b1 = _linear_params(ks[0], time_dim, time_dim * 4)
    w2, b2 = _linear_params(ks[1], time_dim * 4, time_dim)
    return {
        "time_mlp": (w1, b1, w2, b2),
        "down1": _conv_params(ks[2], [in_channels], 64),
        "down2": _conv_params(ks[3], [64], 128),
        "down3": _conv_params(ks[4], [128], 256),
        "up1": _conv_params(ks[5], [time_dim, 256], 128),    # cat(t_map, d3)
        "up2": _conv_params(ks[6], [128, 128], 64),          # cat(u1, d2)
        "up3": _conv_params(ks[7], [64, 64], out_channels),  # cat(u2, d1)
    }


# ----------------------------------- main ------------------------------------

if __name__ == "__main__":
    key = jax.random.PRNGKey(0)
    kx, kt, kp = jax.random.split(key, 3)

    B, IN_CH, OUT_CH, TIME_DIM = 2, 3, 3, 32
    H = W = 1  # only spatial size the reference forward supports (see NOTE above)

    params = init_params(kp, IN_CH, OUT_CH, TIME_DIM)
    x = jax.random.normal(kx, (B, IN_CH, H, W), jnp.float32)
    t = jax.random.normal(kt, (B, TIME_DIM), jnp.float32)

    out = jax.jit(unet_forward)(params, x, t)
    out = jax.block_until_ready(out)
    assert out.shape == (B, OUT_CH, H, W), out.shape
    assert bool(jnp.all(jnp.isfinite(out)))
    print("KERNEL_OK")
</pallas_src>

<mosaic_0001>
module attributes {stable_mosaic.version = 11 : i64} {
  func.func @kernel(%arg0: i32, %arg1: memref<16x128xbf16, #tpu.memory_space<vmem>>, %arg2: memref<128x128xbf16, #tpu.memory_space<vmem>>, %arg3: memref<1x128xf32, #tpu.memory_space<vmem>>, %arg4: memref<16x128xbf16, #tpu.memory_space<vmem>>, %arg5: memref<1x1x128xf32, #tpu.memory_space<vmem>>, %arg6: memref<1x1x128xf32, #tpu.memory_space<vmem>>) attributes {dimension_semantics = [#tpu.dimension_semantics<parallel>], iteration_bounds = array<i64: 1>, scalar_prefetch = 0 : i64, scratch_operands = 0 : i64, tpu.core_type = #tpu.core_type<tc>, window_params = [{transform_indices = @transform_0, window_bounds = array<i64: 16, 128>}, {pipeline_mode = #tpu.pipeline_mode<synchronous>, transform_indices = @transform_1, window_bounds = array<i64: 128, 128>}, {pipeline_mode = #tpu.pipeline_mode<synchronous>, transform_indices = @transform_2, window_bounds = array<i64: 1, 128>}, {transform_indices = @transform_3, window_bounds = array<i64: 16, 128>}, {transform_indices = @transform_4, window_bounds = array<i64: 1, 1, 128>}, {transform_indices = @transform_5, window_bounds = array<i64: 1, 1, 128>}]} {
    %c0 = arith.constant 0 : index
    %c0_0 = arith.constant 0 : index
    %0 = vector.load %arg1[%c0, %c0_0] : memref<16x128xbf16, #tpu.memory_space<vmem>>, vector<16x128xbf16>
    %c0_1 = arith.constant 0 : index
    %c0_2 = arith.constant 0 : index
    %1 = vector.load %arg2[%c0_1, %c0_2] : memref<128x128xbf16, #tpu.memory_space<vmem>>, vector<128x128xbf16>
    %cst = arith.constant dense<0.000000e+00> : vector<16x128xf32>
    %2 = tpu.matmul %0, %1, %cst {dimension_numbers = #tpu.dot_dimension_numbers<[1], [0], [0], [1], [0, 0, 1, 1], [], []>} : vector<16x128xbf16>, vector<128x128xbf16>, vector<16x128xf32> -> vector<16x128xf32>
    %c0_3 = arith.constant 0 : index
    %c0_4 = arith.constant 0 : index
    %3 = vector.load %arg3[%c0_3, %c0_4] : memref<1x128xf32, #tpu.memory_space<vmem>>, vector<1x128xf32>
    %4 = vector.broadcast %3 : vector<1x128xf32> to vector<16x128xf32>
    %5 = arith.addf %2, %4 : vector<16x128xf32>
    %cst_5 = arith.constant 0.000000e+00 : f32
    %6 = vector.broadcast %cst_5 : f32 to vector<16x128xf32>
    %7 = arith.maximumf %5, %6 : vector<16x128xf32>
    %8 = arith.truncf %7 : vector<16x128xf32> to vector<16x128xbf16>
    %c0_6 = arith.constant 0 : index
    %c0_7 = arith.constant 0 : index
    %9 = vector.load %arg4[%c0_6, %c0_7] : memref<16x128xbf16, #tpu.memory_space<vmem>>, vector<16x128xbf16>
    tpu.vector_store %arg4[%c0_6, %c0_7], %8 {strides = array<i32>} : memref<16x128xbf16, #tpu.memory_space<vmem>>, vector<16x128xbf16>,
    %c0_i32 = arith.constant 0 : i32
    %10 = arith.cmpi ne, %arg0, %c0_i32 : i32
    %11 = arith.extui %10 : i1 to i32
    %c0_i32_8 = arith.constant 0 : i32
    %12 = arith.cmpi ne, %11, %c0_i32_8 : i32
    scf.if %12 {
      %cst_11 = arith.constant dense<0.000000e+00> : vector<128xf32>
      %16 = vector.multi_reduction <add>, %7, %cst_11 [0] : vector<16x128xf32> to vector<128xf32>
      %17 = vector.shape_cast %16 : vector<128xf32> to vector<1x128xf32>
      %18 = vector.shape_cast %17 : vector<1x128xf32> to vector<1x1x128xf32>
      %c0_12 = arith.constant 0 : index
      %c0_13 = arith.constant 0 : index
      %c0_14 = arith.constant 0 : index
      %19 = vector.load %arg5[%c0_12, %c0_13, %c0_14] : memref<1x1x128xf32, #tpu.memory_space<vmem>>, vector<1x1x128xf32>
      tpu.vector_store %arg5[%c0_12, %c0_13, %c0_14], %18 {strides = array<i32>} : memref<1x1x128xf32, #tpu.memory_space<vmem>>, vector<1x1x128xf32>,
      %20 = arith.mulf %7, %7 : vector<16x128xf32>
      %cst_15 = arith.constant dense<0.000000e+00> : vector<128xf32>
      %21 = vector.multi_reduction <add>, %20, %cst_15 [0] : vector<16x128xf32> to vector<128xf32>
      %22 = vector.shape_cast %21 : vector<128xf32> to vector<1x128xf32>
      %23 = vector.shape_cast %22 : vector<1x128xf32> to vector<1x1x128xf32>
      %c0_16 = arith.constant 0 : index
      %c0_17 = arith.constant 0 : index
      %c0_18 = arith.constant 0 : index
      %24 = vector.load %arg6[%c0_16, %c0_17, %c0_18] : memref<1x1x128xf32, #tpu.memory_space<vmem>>, vector<1x1x128xf32>
      tpu.vector_store %arg6[%c0_16, %c0_17, %c0_18], %23 {strides = array<i32>} : memref<1x1x128xf32, #tpu.memory_space<vmem>>, vector<1x1x128xf32>,
    } else {
    }
    %c0_i32_9 = arith.constant 0 : i32
    %13 = arith.cmpi eq, %arg0, %c0_i32_9 : i32
    %14 = arith.extui %13 : i1 to i32
    %c0_i32_10 = arith.constant 0 : i32
    %15 = arith.cmpi ne, %14, %c0_i32_10 : i32
    scf.if %15 {
      %c16_i32 = arith.constant 16 : i32
      %16 = arith.muli %arg0, %c16_i32 : i32
      %17 = tpu.iota {dimensions = array<i32: 0>} : vector<16x128xi32>
      %18 = vector.broadcast %16 : i32 to vector<16x128xi32>
      %19 = arith.addi %18, %17 : vector<16x128xi32>
      %c2_i32 = arith.constant 2 : i32
      %20 = vector.broadcast %c2_i32 : i32 to vector<16x128xi32>
      %21 = arith.cmpi slt, %19, %20 : vector<16x128xi32>
      %cst_11 = arith.constant 0.000000e+00 : f32
      %22 = vector.broadcast %cst_11 : f32 to vector<16x128xf32>
      %23 = arith.select %21, %7, %22 : vector<16x128xi1>, vector<16x128xf32>
      %cst_12 = arith.constant dense<0.000000e+00> : vector<128xf32>
      %24 = vector.multi_reduction <add>, %23, %cst_12 [0] : vector<16x128xf32> to vector<128xf32>
      %25 = vector.shape_cast %24 : vector<128xf32> to vector<1x128xf32>
      %26 = vector.shape_cast %25 : vector<1x128xf32> to vector<1x1x128xf32>
      %c0_13 = arith.constant 0 : index
      %c0_14 = arith.constant 0 : index
      %c0_15 = arith.constant 0 : index
      %27 = vector.load %arg5[%c0_13, %c0_14, %c0_15] : memref<1x1x128xf32, #tpu.memory_space<vmem>>, vector<1x1x128xf32>
      tpu.vector_store %arg5[%c0_13, %c0_14, %c0_15], %26 {strides = array<i32>} : memref<1x1x128xf32, #tpu.memory_space<vmem>>, vector<1x1x128xf32>,
      %28 = arith.mulf %23, %23 : vector<16x128xf32>
      %cst_16 = arith.constant dense<0.000000e+00> : vector<128xf32>
      %29 = vector.multi_reduction <add>, %28, %cst_16 [0] : vector<16x128xf32> to vector<128xf32>
      %30 = vector.shape_cast %29 : vector<128xf32> to vector<1x128xf32>
      %31 = vector.shape_cast %30 : vector<1x128xf32> to vector<1x1x128xf32>
      %c0_17 = arith.constant 0 : index
      %c0_18 = arith.constant 0 : index
      %c0_19 = arith.constant 0 : index
      %32 = vector.load %arg6[%c0_17, %c0_18, %c0_19] : memref<1x1x128xf32, #tpu.memory_space<vmem>>, vector<1x1x128xf32>
      tpu.vector_store %arg6[%c0_17, %c0_18, %c0_19], %31 {strides = array<i32>} : memref<1x1x128xf32, #tpu.memory_space<vmem>>, vector<1x1x128xf32>,
    } else {
    }
    return
  }
  func.func @transform_0(%arg0: i32) -> (i32, i32) {
    %c0_i32 = arith.constant 0 : i32
    %c0_i32_0 = arith.constant 0 : i32
    return %arg0, %c0_i32 : i32, i32
  }
  func.func @transform_1(%arg0: i32) -> (i32, i32) {
    %c0_i32 = arith.constant 0 : i32
    %c0_i32_0 = arith.constant 0 : i32
    %c0_i32_1 = arith.constant 0 : i32
    return %c0_i32, %c0_i32_0 : i32, i32
  }
  func.func @transform_2(%arg0: i32) -> (i32, i32) {
    %c0_i32 = arith.constant 0 : i32
    %c0_i32_0 = arith.constant 0 : i32
    %c0_i32_1 = arith.constant 0 : i32
    return %c0_i32, %c0_i32_0 : i32, i32
  }
  func.func @transform_3(%arg0: i32) -> (i32, i32) {
    %c0_i32 = arith.constant 0 : i32
    %c0_i32_0 = arith.constant 0 : i32
    return %arg0, %c0_i32 : i32, i32
  }
  func.func @transform_4(%arg0: i32) -> (i32, i32, i32) {
    %c0_i32 = arith.constant 0 : i32
    %c0_i32_0 = arith.constant 0 : i32
    %c0_i32_1 = arith.constant 0 : i32
    return %arg0, %c0_i32, %c0_i32_0 : i32, i32, i32
  }
  func.func @transform_5(%arg0: i32) -> (i32, i32, i32) {
    %c0_i32 = arith.constant 0 : i32
    %c0_i32_0 = arith.constant 0 : i32
    %c0_i32_1 = arith.constant 0 : i32
    return %arg0, %c0_i32, %c0_i32_0 : i32, i32, i32
  }
}

module attributes {stable_mosaic.version = 11 : i64} {
  func.func @kernel(%arg0: i32, %arg1: memref<16x640xbf16, #tpu.memory_space<vmem>>, %arg2: memref<640x128xbf16, #tpu.memory_space<vmem>>, %arg3: memref<1x128xf32, #tpu.memory_space<vmem>>, %arg4: memref<16x128xbf16, #tpu.memory_space<vmem>>, %arg5: memref<1x1x128xf32, #tpu.memory_space<vmem>>, %arg6: memref<1x1x128xf32, #tpu.memory_space<vmem>>) attributes {dimension_semantics = [#tpu.dimension_semantics<parallel>], iteration_bounds = array<i64: 1>, scalar_prefetch = 0 : i64, scratch_operands = 0 : i64, tpu.core_type = #tpu.core_type<tc>, window_params = [{transform_indices = @transform_0, window_bounds = array<i64: 16, 640>}, {pipeline_mode = #tpu.pipeline_mode<synchronous>, transform_indices = @transform_1, window_bounds = array<i64: 640, 128>}, {pipeline_mode = #tpu.pipeline_mode<synchronous>, transform_indices = @transform_2, window_bounds = array<i64: 1, 128>}, {transform_indices = @transform_3, window_bounds = array<i64: 16, 128>}, {transform_indices = @transform_4, window_bounds = array<i64: 1, 1, 128>}, {transform_indices = @transform_5, window_bounds = array<i64: 1, 1, 128>}]} {
    %c0 = arith.constant 0 : index
    %c0_0 = arith.constant 0 : index
    %0 = vector.load %arg1[%c0, %c0_0] : memref<16x640xbf16, #tpu.memory_space<vmem>>, vector<16x640xbf16>
    %c0_1 = arith.constant 0 : index
    %c0_2 = arith.constant 0 : index
    %1 = vector.load %arg2[%c0_1, %c0_2] : memref<640x128xbf16, #tpu.memory_space<vmem>>, vector<640x128xbf16>
    %cst = arith.constant dense<0.000000e+00> : vector<16x128xf32>
    %2 = tpu.matmul %0, %1, %cst {dimension_numbers = #tpu.dot_dimension_numbers<[1], [0], [0], [1], [0, 0, 1, 1], [], []>} : vector<16x640xbf16>, vector<640x128xbf16>, vector<16x128xf32> -> vector<16x128xf32>
    %c0_3 = arith.constant 0 : index
    %c0_4 = arith.constant 0 : index
    %3 = vector.load %arg3[%c0_3, %c0_4] : memref<1x128xf32, #tpu.memory_space<vmem>>, vector<1x128xf32>
    %4 = vector.broadcast %3 : vector<1x128xf32> to vector<16x128xf32>
    %5 = arith.addf %2, %4 : vector<16x128xf32>
    %cst_5 = arith.constant 0.000000e+00 : f32
    %6 = vector.broadcast %cst_5 : f32 to vector<16x128xf32>
    %7 = arith.maximumf %5, %6 : vector<16x128xf32>
    %8 = arith.truncf %7 : vector<16x128xf32> to vector<16x128xbf16>
    %c0_6 = arith.constant 0 : index
    %c0_7 = arith.constant 0 : index
    %9 = vector.load %arg4[%c0_6, %c0_7] : memref<16x128xbf16, #tpu.memory_space<vmem>>, vector<16x128xbf16>
    tpu.vector_store %arg4[%c0_6, %c0_7], %8 {strides = array<i32>} : memref<16x128xbf16, #tpu.memory_space<vmem>>, vector<16x128xbf16>,
    %c0_i32 = arith.constant 0 : i32
    %10 = arith.cmpi ne, %arg0, %c0_i32 : i32
    %11 = arith.extui %10 : i1 to i32
    %c0_i32_8 = arith.constant 0 : i32
    %12 = arith.cmpi ne, %11, %c0_i32_8 : i32
    scf.if %12 {
      %cst_11 = arith.constant dense<0.000000e+00> : vector<128xf32>
      %16 = vector.multi_reduction <add>, %7, %cst_11 [0] : vector<16x128xf32> to vector<128xf32>
      %17 = vector.shape_cast %16 : vector<128xf32> to vector<1x128xf32>
      %18 = vector.shape_cast %17 : vector<1x128xf32> to vector<1x1x128xf32>
      %c0_12 = arith.constant 0 : index
      %c0_13 = arith.constant 0 : index
      %c0_14 = arith.constant 0 : index
      %19 = vector.load %arg5[%c0_12, %c0_13, %c0_14] : memref<1x1x128xf32, #tpu.memory_space<vmem>>, vector<1x1x128xf32>
      tpu.vector_store %arg5[%c0_12, %c0_13, %c0_14], %18 {strides = array<i32>} : memref<1x1x128xf32, #tpu.memory_space<vmem>>, vector<1x1x128xf32>,
      %20 = arith.mulf %7, %7 : vector<16x128xf32>
      %cst_15 = arith.constant dense<0.000000e+00> : vector<128xf32>
      %21 = vector.multi_reduction <add>, %20, %cst_15 [0] : vector<16x128xf32> to vector<128xf32>
      %22 = vector.shape_cast %21 : vector<128xf32> to vector<1x128xf32>
      %23 = vector.shape_cast %22 : vector<1x128xf32> to vector<1x1x128xf32>
      %c0_16 = arith.constant 0 : index
      %c0_17 = arith.constant 0 : index
      %c0_18 = arith.constant 0 : index
      %24 = vector.load %arg6[%c0_16, %c0_17, %c0_18] : memref<1x1x128xf32, #tpu.memory_space<vmem>>, vector<1x1x128xf32>
      tpu.vector_store %arg6[%c0_16, %c0_17, %c0_18], %23 {strides = array<i32>} : memref<1x1x128xf32, #tpu.memory_space<vmem>>, vector<1x1x128xf32>,
    } else {
    }
    %c0_i32_9 = arith.constant 0 : i32
    %13 = arith.cmpi eq, %arg0, %c0_i32_9 : i32
    %14 = arith.extui %13 : i1 to i32
    %c0_i32_10 = arith.constant 0 : i32
    %15 = arith.cmpi ne, %14, %c0_i32_10 : i32
    scf.if %15 {
      %c16_i32 = arith.constant 16 : i32
      %16 = arith.muli %arg0, %c16_i32 : i32
      %17 = tpu.iota {dimensions = array<i32: 0>} : vector<16x128xi32>
      %18 = vector.broadcast %16 : i32 to vector<16x128xi32>
      %19 = arith.addi %18, %17 : vector<16x128xi32>
      %c2_i32 = arith.constant 2 : i32
      %20 = vector.broadcast %c2_i32 : i32 to vector<16x128xi32>
      %21 = arith.cmpi slt, %19, %20 : vector<16x128xi32>
      %cst_11 = arith.constant 0.000000e+00 : f32
      %22 = vector.broadcast %cst_11 : f32 to vector<16x128xf32>
      %23 = arith.select %21, %7, %22 : vector<16x128xi1>, vector<16x128xf32>
      %cst_12 = arith.constant dense<0.000000e+00> : vector<128xf32>
      %24 = vector.multi_reduction <add>, %23, %cst_12 [0] : vector<16x128xf32> to vector<128xf32>
      %25 = vector.shape_cast %24 : vector<128xf32> to vector<1x128xf32>
      %26 = vector.shape_cast %25 : vector<1x128xf32> to vector<1x1x128xf32>
      %c0_13 = arith.constant 0 : index
      %c0_14 = arith.constant 0 : index
      %c0_15 = arith.constant 0 : index
      %27 = vector.load %arg5[%c0_13, %c0_14, %c0_15] : memref<1x1x128xf32, #tpu.memory_space<vmem>>, vector<1x1x128xf32>
      tpu.vector_store %arg5[%c0_13, %c0_14, %c0_15], %26 {strides = array<i32>} : memref<1x1x128xf32, #tpu.memory_space<vmem>>, vector<1x1x128xf32>,
      %28 = arith.mulf %23, %23 : vector<16x128xf32>
      %cst_16 = arith.constant dense<0.000000e+00> : vector<128xf32>
      %29 = vector.multi_reduction <add>, %28, %cst_16 [0] : vector<16x128xf32> to vector<128xf32>
      %30 = vector.shape_cast %29 : vector<128xf32> to vector<1x128xf32>
      %31 = vector.shape_cast %30 : vector<1x128xf32> to vector<1x1x128xf32>
      %c0_17 = arith.constant 0 : index
      %c0_18 = arith.constant 0 : index
      %c0_19 = arith.constant 0 : index
      %32 = vector.load %arg6[%c0_17, %c0_18, %c0_19] : memref<1x1x128xf32, #tpu.memory_space<vmem>>, vector<1x1x128xf32>
      tpu.vector_store %arg6[%c0_17, %c0_18, %c0_19], %31 {strides = array<i32>} : memref<1x1x128xf32, #tpu.memory_space<vmem>>, vector<1x1x128xf32>,
    } else {
    }
    return
  }
  func.func @transform_0(%arg0: i32) -> (i32, i32) {
    %c0_i32 = arith.constant 0 : i32
    %c0_i32_0 = arith.constant 0 : i32
    return %arg0, %c0_i32 : i32, i32
  }
  func.func @transform_1(%arg0: i32) -> (i32, i32) {
    %c0_i32 = arith.constant 0 : i32
    %c0_i32_0 = arith.constant 0 : i32
    %c0_i32_1 = arith.constant 0 : i32
    return %c0_i32, %c0_i32_0 : i32, i32
  }
  func.func @transform_2(%arg0: i32) -> (i32, i32) {
    %c0_i32 = arith.constant 0 : i32
    %c0_i32_0 = arith.constant 0 : i32
    %c0_i32_1 = arith.constant 0 : i32
    return %c0_i32, %c0_i32_0 : i32, i32
  }
  func.func @transform_3(%arg0: i32) -> (i32, i32) {
    %c0_i32 = arith.constant 0 : i32
    %c0_i32_0 = arith.constant 0 : i32
    return %arg0, %c0_i32 : i32, i32
  }
  func.func @transform_4(%arg0: i32) -> (i32, i32, i32) {
    %c0_i32 = arith.constant 0 : i32
    %c0_i32_0 = arith.constant 0 : i32
    %c0_i32_1 = arith.constant 0 : i32
    return %arg0, %c0_i32, %c0_i32_0 : i32, i32, i32
  }
  func.func @transform_5(%arg0: i32) -> (i32, i32, i32) {
    %c0_i32 = arith.constant 0 : i32
    %c0_i32_0 = arith.constant 0 : i32
    %c0_i32_1 = arith.constant 0 : i32
    return %arg0, %c0_i32, %c0_i32_0 : i32, i32, i32
  }
}

module attributes {stable_mosaic.version = 11 : i64} {
  func.func @kernel(%arg0: i32, %arg1: memref<16x1152xbf16, #tpu.memory_space<vmem>>, %arg2: memref<1152x256xbf16, #tpu.memory_space<vmem>>, %arg3: memref<1x256xf32, #tpu.memory_space<vmem>>, %arg4: memref<16x256xbf16, #tpu.memory_space<vmem>>, %arg5: memref<1x1x256xf32, #tpu.memory_space<vmem>>, %arg6: memref<1x1x256xf32, #tpu.memory_space<vmem>>) attributes {dimension_semantics = [#tpu.dimension_semantics<parallel>], iteration_bounds = array<i64: 1>, scalar_prefetch = 0 : i64, scratch_operands = 0 : i64, tpu.core_type = #tpu.core_type<tc>, window_params = [{transform_indices = @transform_0, window_bounds = array<i64: 16, 1152>}, {pipeline_mode = #tpu.pipeline_mode<synchronous>, transform_indices = @transform_1, window_bounds = array<i64: 1152, 256>}, {pipeline_mode = #tpu.pipeline_mode<synchronous>, transform_indices = @transform_2, window_bounds = array<i64: 1, 256>}, {transform_indices = @transform_3, window_bounds = array<i64: 16, 256>}, {transform_indices = @transform_4, window_bounds = array<i64: 1, 1, 256>}, {transform_indices = @transform_5, window_bounds = array<i64: 1, 1, 256>}]} {
    %c0 = arith.constant 0 : index
    %c0_0 = arith.constant 0 : index
    %0 = vector.load %arg1[%c0, %c0_0] : memref<16x1152xbf16, #tpu.memory_space<vmem>>, vector<16x1152xbf16>
    %c0_1 = arith.constant 0 : index
    %c0_2 = arith.constant 0 : index
    %1 = vector.load %arg2[%c0_1, %c0_2] : memref<1152x256xbf16, #tpu.memory_space<vmem>>, vector<1152x256xbf16>
    %cst = arith.constant dense<0.000000e+00> : vector<16x256xf32>
    %2 = tpu.matmul %0, %1, %cst {dimension_numbers = #tpu.dot_dimension_numbers<[1], [0], [0], [1], [0, 0, 1, 1], [], []>} : vector<16x1152xbf16>, vector<1152x256xbf16>, vector<16x256xf32> -> vector<16x256xf32>
    %c0_3 = arith.constant 0 : index
    %c0_4 = arith.constant 0 : index
    %3 = vector.load %arg3[%c0_3, %c0_4] : memref<1x256xf32, #tpu.memory_space<vmem>>, vector<1x256xf32>
    %4 = vector.broadcast %3 : vector<1x256xf32> to vector<16x256xf32>
    %5 = arith.addf %2, %4 : vector<16x256xf32>
    %cst_5 = arith.constant 0.000000e+00 : f32
    %6 = vector.broadcast %cst_5 : f32 to vector<16x256xf32>
    %7 = arith.maximumf %5, %6 : vector<16x256xf32>
    %8 = arith.truncf %7 : vector<16x256xf32> to vector<16x256xbf16>
    %c0_6 = arith.constant 0 : index
    %c0_7 = arith.constant 0 : index
    %9 = vector.load %arg4[%c0_6, %c0_7] : memref<16x256xbf16, #tpu.memory_space<vmem>>, vector<16x256xbf16>
    tpu.vector_store %arg4[%c0_6, %c0_7], %8 {strides = array<i32>} : memref<16x256xbf16, #tpu.memory_space<vmem>>, vector<16x256xbf16>,
    %c0_i32 = arith.constant 0 : i32
    %10 = arith.cmpi ne, %arg0, %c0_i32 : i32
    %11 = arith.extui %10 : i1 to i32
    %c0_i32_8 = arith.constant 0 : i32
    %12 = arith.cmpi ne, %11, %c0_i32_8 : i32
    scf.if %12 {
      %cst_11 = arith.constant dense<0.000000e+00> : vector<256xf32>
      %16 = vector.multi_reduction <add>, %7, %cst_11 [0] : vector<16x256xf32> to vector<256xf32>
      %17 = vector.shape_cast %16 : vector<256xf32> to vector<1x256xf32>
      %18 = vector.shape_cast %17 : vector<1x256xf32> to vector<1x1x256xf32>
      %c0_12 = arith.constant 0 : index
      %c0_13 = arith.constant 0 : index
      %c0_14 = arith.constant 0 : index
      %19 = vector.load %arg5[%c0_12, %c0_13, %c0_14] : memref<1x1x256xf32, #tpu.memory_space<vmem>>, vector<1x1x256xf32>
      tpu.vector_store %arg5[%c0_12, %c0_13, %c0_14], %18 {strides = array<i32>} : memref<1x1x256xf32, #tpu.memory_space<vmem>>, vector<1x1x256xf32>,
      %20 = arith.mulf %7, %7 : vector<16x256xf32>
      %cst_15 = arith.constant dense<0.000000e+00> : vector<256xf32>
      %21 = vector.multi_reduction <add>, %20, %cst_15 [0] : vector<16x256xf32> to vector<256xf32>
      %22 = vector.shape_cast %21 : vector<256xf32> to vector<1x256xf32>
      %23 = vector.shape_cast %22 : vector<1x256xf32> to vector<1x1x256xf32>
      %c0_16 = arith.constant 0 : index
      %c0_17 = arith.constant 0 : index
      %c0_18 = arith.constant 0 : index
      %24 = vector.load %arg6[%c0_16, %c0_17, %c0_18] : memref<1x1x256xf32, #tpu.memory_space<vmem>>, vector<1x1x256xf32>
      tpu.vector_store %arg6[%c0_16, %c0_17, %c0_18], %23 {strides = array<i32>} : memref<1x1x256xf32, #tpu.memory_space<vmem>>, vector<1x1x256xf32>,
    } else {
    }
    %c0_i32_9 = arith.constant 0 : i32
    %13 = arith.cmpi eq, %arg0, %c0_i32_9 : i32
    %14 = arith.extui %13 : i1 to i32
    %c0_i32_10 = arith.constant 0 : i32
    %15 = arith.cmpi ne, %14, %c0_i32_10 : i32
    scf.if %15 {
      %c16_i32 = arith.constant 16 : i32
      %16 = arith.muli %arg0, %c16_i32 : i32
      %17 = tpu.iota {dimensions = array<i32: 0>} : vector<16x256xi32>
      %18 = vector.broadcast %16 : i32 to vector<16x256xi32>
      %19 = arith.addi %18, %17 : vector<16x256xi32>
      %c2_i32 = arith.constant 2 : i32
      %20 = vector.broadcast %c2_i32 : i32 to vector<16x256xi32>
      %21 = arith.cmpi slt, %19, %20 : vector<16x256xi32>
      %cst_11 = arith.constant 0.000000e+00 : f32
      %22 = vector.broadcast %cst_11 : f32 to vector<16x256xf32>
      %23 = arith.select %21, %7, %22 : vector<16x256xi1>, vector<16x256xf32>
      %cst_12 = arith.constant dense<0.000000e+00> : vector<256xf32>
      %24 = vector.multi_reduction <add>, %23, %cst_12 [0] : vector<16x256xf32> to vector<256xf32>
      %25 = vector.shape_cast %24 : vector<256xf32> to vector<1x256xf32>
      %26 = vector.shape_cast %25 : vector<1x256xf32> to vector<1x1x256xf32>
      %c0_13 = arith.constant 0 : index
      %c0_14 = arith.constant 0 : index
      %c0_15 = arith.constant 0 : index
      %27 = vector.load %arg5[%c0_13, %c0_14, %c0_15] : memref<1x1x256xf32, #tpu.memory_space<vmem>>, vector<1x1x256xf32>
      tpu.vector_store %arg5[%c0_13, %c0_14, %c0_15], %26 {strides = array<i32>} : memref<1x1x256xf32, #tpu.memory_space<vmem>>, vector<1x1x256xf32>,
      %28 = arith.mulf %23, %23 : vector<16x256xf32>
      %cst_16 = arith.constant dense<0.000000e+00> : vector<256xf32>
      %29 = vector.multi_reduction <add>, %28, %cst_16 [0] : vector<16x256xf32> to vector<256xf32>
      %30 = vector.shape_cast %29 : vector<256xf32> to vector<1x256xf32>
      %31 = vector.shape_cast %30 : vector<1x256xf32> to vector<1x1x256xf32>
      %c0_17 = arith.constant 0 : index
      %c0_18 = arith.constant 0 : index
      %c0_19 = arith.constant 0 : index
      %32 = vector.load %arg6[%c0_17, %c0_18, %c0_19] : memref<1x1x256xf32, #tpu.memory_space<vmem>>, vector<1x1x256xf32>
      tpu.vector_store %arg6[%c0_17, %c0_18, %c0_19], %31 {strides = array<i32>} : memref<1x1x256xf32, #tpu.memory_space<vmem>>, vector<1x1x256xf32>,
    } else {
    }
    return
  }
  func.func @transform_0(%arg0: i32) -> (i32, i32) {
    %c0_i32 = arith.constant 0 : i32
    %c0_i32_0 = arith.constant 0 : i32
    return %arg0, %c0_i32 : i32, i32
  }
  func.func @transform_1(%arg0: i32) -> (i32, i32) {
    %c0_i32 = arith.constant 0 : i32
    %c0_i32_0 = arith.constant 0 : i32
    %c0_i32_1 = arith.constant 0 : i32
    return %c0_i32, %c0_i32_0 : i32, i32
  }
  func.func @transform_2(%arg0: i32) -> (i32, i32) {
    %c0_i32 = arith.constant 0 : i32
    %c0_i32_0 = arith.constant 0 : i32
    %c0_i32_1 = arith.constant 0 : i32
    return %c0_i32, %c0_i32_0 : i32, i32
  }
  func.func @transform_3(%arg0: i32) -> (i32, i32) {
    %c0_i32 = arith.constant 0 : i32
    %c0_i32_0 = arith.constant 0 : i32
    return %arg0, %c0_i32 : i32, i32
  }
  func.func @transform_4(%arg0: i32) -> (i32, i32, i32) {
    %c0_i32 = arith.constant 0 : i32
    %c0_i32_0 = arith.constant 0 : i32
    %c0_i32_1 = arith.constant 0 : i32
    return %arg0, %c0_i32, %c0_i32_0 : i32, i32, i32
  }
  func.func @transform_5(%arg0: i32) -> (i32, i32, i32) {
    %c0_i32 = arith.constant 0 : i32
    %c0_i32_0 = arith.constant 0 : i32
    %c0_i32_1 = arith.constant 0 : i32
    return %arg0, %c0_i32, %c0_i32_0 : i32, i32, i32
  }
}

module attributes {stable_mosaic.version = 11 : i64} {
  func.func @time_mlp_kernel(%arg0: memref<16x128xbf16, #tpu.memory_space<vmem>>, %arg1: memref<128x128xbf16, #tpu.memory_space<vmem>>, %arg2: memref<1x128xf32, #tpu.memory_space<vmem>>, %arg3: memref<128x128xbf16, #tpu.memory_space<vmem>>, %arg4: memref<1x128xf32, #tpu.memory_space<vmem>>, %arg5: memref<16x128xf32, #tpu.memory_space<vmem>>) attributes {dimension_semantics = [], scalar_prefetch = 0 : i64, scratch_operands = 0 : i64, tpu.core_type = #tpu.core_type<tc>} {
    %c0 = arith.constant 0 : index
    %c0_0 = arith.constant 0 : index
    %0 = vector.load %arg0[%c0, %c0_0] : memref<16x128xbf16, #tpu.memory_space<vmem>>, vector<16x128xbf16>
    %c0_1 = arith.constant 0 : index
    %c0_2 = arith.constant 0 : index
    %1 = vector.load %arg1[%c0_1, %c0_2] : memref<128x128xbf16, #tpu.memory_space<vmem>>, vector<128x128xbf16>
    %cst = arith.constant dense<0.000000e+00> : vector<16x128xf32>
    %2 = tpu.matmul %0, %1, %cst {dimension_numbers = #tpu.dot_dimension_numbers<[1], [0], [0], [1], [0, 0, 1, 1], [], []>} : vector<16x128xbf16>, vector<128x128xbf16>, vector<16x128xf32> -> vector<16x128xf32>
    %c0_3 = arith.constant 0 : index
    %c0_4 = arith.constant 0 : index
    %3 = vector.load %arg2[%c0_3, %c0_4] : memref<1x128xf32, #tpu.memory_space<vmem>>, vector<1x128xf32>
    %4 = vector.broadcast %3 : vector<1x128xf32> to vector<16x128xf32>
    %5 = arith.addf %2, %4 : vector<16x128xf32>
    %cst_5 = arith.constant 0.000000e+00 : f32
    %6 = vector.broadcast %cst_5 : f32 to vector<16x128xf32>
    %7 = arith.maximumf %5, %6 : vector<16x128xf32>
    %8 = arith.truncf %7 : vector<16x128xf32> to vector<16x128xbf16>
    %c0_6 = arith.constant 0 : index
    %c0_7 = arith.constant 0 : index
    %9 = vector.load %arg3[%c0_6, %c0_7] : memref<128x128xbf16, #tpu.memory_space<vmem>>, vector<128x128xbf16>
    %cst_8 = arith.constant dense<0.000000e+00> : vector<16x128xf32>
    %10 = tpu.matmul %8, %9, %cst_8 {dimension_numbers = #tpu.dot_dimension_numbers<[1], [0], [0], [1], [0, 0, 1, 1], [], []>} : vector<16x128xbf16>, vector<128x128xbf16>, vector<16x128xf32> -> vector<16x128xf32>
    %c0_9 = arith.constant 0 : index
    %c0_10 = arith.constant 0 : index
    %11 = vector.load %arg4[%c0_9, %c0_10] : memref<1x128xf32, #tpu.memory_space<vmem>>, vector<1x128xf32>
    %12 = vector.broadcast %11 : vector<1x128xf32> to vector<16x128xf32>
    %13 = arith.addf %10, %12 : vector<16x128xf32>
    %c0_11 = arith.constant 0 : index
    %c0_12 = arith.constant 0 : index
    %14 = vector.load %arg5[%c0_11, %c0_12] : memref<16x128xf32, #tpu.memory_space<vmem>>, vector<16x128xf32>
    tpu.vector_store %arg5[%c0_11, %c0_12], %13 {strides = array<i32>} : memref<16x128xf32, #tpu.memory_space<vmem>>, vector<16x128xf32>,
    return
  }
}

module attributes {stable_mosaic.version = 11 : i64} {
  func.func @kernel(%arg0: i32, %arg1: memref<16x384xbf16, #tpu.memory_space<vmem>>, %arg2: memref<16x2304xbf16, #tpu.memory_space<vmem>>, %arg3: memref<384x128xbf16, #tpu.memory_space<vmem>>, %arg4: memref<2304x128xbf16, #tpu.memory_space<vmem>>, %arg5: memref<1x128xf32, #tpu.memory_space<vmem>>, %arg6: memref<16x128xbf16, #tpu.memory_space<vmem>>, %arg7: memref<1x1x128xf32, #tpu.memory_space<vmem>>, %arg8: memref<1x1x128xf32, #tpu.memory_space<vmem>>) attributes {dimension_semantics = [#tpu.dimension_semantics<parallel>], iteration_bounds = array<i64: 1>, scalar_prefetch = 0 : i64, scratch_operands = 0 : i64, tpu.core_type = #tpu.core_type<tc>, window_params = [{transform_indices = @transform_0, window_bounds = array<i64: 16, 384>}, {transform_indices = @transform_1, window_bounds = array<i64: 16, 2304>}, {pipeline_mode = #tpu.pipeline_mode<synchronous>, transform_indices = @transform_2, window_bounds = array<i64: 384, 128>}, {pipeline_mode = #tpu.pipeline_mode<synchronous>, transform_indices = @transform_3, window_bounds = array<i64: 2304, 128>}, {pipeline_mode = #tpu.pipeline_mode<synchronous>, transform_indices = @transform_4, window_bounds = array<i64: 1, 128>}, {transform_indices = @transform_5, window_bounds = array<i64: 16, 128>}, {transform_indices = @transform_6, window_bounds = array<i64: 1, 1, 128>}, {transform_indices = @transform_7, window_bounds = array<i64: 1, 1, 128>}]} {
    %c0 = arith.constant 0 : index
    %c0_0 = arith.constant 0 : index
    %0 = vector.load %arg1[%c0, %c0_0] : memref<16x384xbf16, #tpu.memory_space<vmem>>, vector<16x384xbf16>
    %c0_1 = arith.constant 0 : index
    %c0_2 = arith.constant 0 : index
    %1 = vector.load %arg3[%c0_1, %c0_2] : memref<384x128xbf16, #tpu.memory_space<vmem>>, vector<384x128xbf16>
    %cst = arith.constant dense<0.000000e+00> : vector<16x128xf32>
    %2 = tpu.matmul %0, %1, %cst {dimension_numbers = #tpu.dot_dimension_numbers<[1], [0], [0], [1], [0, 0, 1, 1], [], []>} : vector<16x384xbf16>, vector<384x128xbf16>, vector<16x128xf32> -> vector<16x128xf32>
    %c0_3 = arith.constant 0 : index
    %c0_4 = arith.constant 0 : index
    %3 = vector.load %arg2[%c0_3, %c0_4] : memref<16x2304xbf16, #tpu.memory_space<vmem>>, vector<16x2304xbf16>
    %c0_5 = arith.constant 0 : index
    %c0_6 = arith.constant 0 : index
    %4 = vector.load %arg4[%c0_5, %c0_6] : memref<2304x128xbf16, #tpu.memory_space<vmem>>, vector<2304x128xbf16>
    %cst_7 = arith.constant dense<0.000000e+00> : vector<16x128xf32>
    %5 = tpu.matmul %3, %4, %cst_7 {dimension_numbers = #tpu.dot_dimension_numbers<[1], [0], [0], [1], [0, 0, 1, 1], [], []>} : vector<16x2304xbf16>, vector<2304x128xbf16>, vector<16x128xf32> -> vector<16x128xf32>
    %6 = arith.addf %2, %5 : vector<16x128xf32>
    %c0_8 = arith.constant 0 : index
    %c0_9 = arith.constant 0 : index
    %7 = vector.load %arg5[%c0_8, %c0_9] : memref<1x128xf32, #tpu.memory_space<vmem>>, vector<1x128xf32>
    %8 = vector.broadcast %7 : vector<1x128xf32> to vector<16x128xf32>
    %9 = arith.addf %6, %8 : vector<16x128xf32>
    %cst_10 = arith.constant 0.000000e+00 : f32
    %10 = vector.broadcast %cst_10 : f32 to vector<16x128xf32>
    %11 = arith.maximumf %9, %10 : vector<16x128xf32>
    %12 = arith.truncf %11 : vector<16x128xf32> to vector<16x128xbf16>
    %c0_11 = arith.constant 0 : index
    %c0_12 = arith.constant 0 : index
    %13 = vector.load %arg6[%c0_11, %c0_12] : memref<16x128xbf16, #tpu.memory_space<vmem>>, vector<16x128xbf16>
    tpu.vector_store %arg6[%c0_11, %c0_12], %12 {strides = array<i32>} : memref<16x128xbf16, #tpu.memory_space<vmem>>, vector<16x128xbf16>,
    %c0_i32 = arith.constant 0 : i32
    %14 = arith.cmpi ne, %arg0, %c0_i32 : i32
    %15 = arith.extui %14 : i1 to i32
    %c0_i32_13 = arith.constant 0 : i32
    %16 = arith.cmpi ne, %15, %c0_i32_13 : i32
    scf.if %16 {
      %cst_16 = arith.constant dense<0.000000e+00> : vector<128xf32>
      %20 = vector.multi_reduction <add>, %11, %cst_16 [0] : vector<16x128xf32> to vector<128xf32>
      %21 = vector.shape_cast %20 : vector<128xf32> to vector<1x128xf32>
      %22 = vector.shape_cast %21 : vector<1x128xf32> to vector<1x1x128xf32>
      %c0_17 = arith.constant 0 : index
      %c0_18 = arith.constant 0 : index
      %c0_19 = arith.constant 0 : index
      %23 = vector.load %arg7[%c0_17, %c0_18, %c0_19] : memref<1x1x128xf32, #tpu.memory_space<vmem>>, vector<1x1x128xf32>
      tpu.vector_store %arg7[%c0_17, %c0_18, %c0_19], %22 {strides = array<i32>} : memref<1x1x128xf32, #tpu.memory_space<vmem>>, vector<1x1x128xf32>,
      %24 = arith.mulf %11, %11 : vector<16x128xf32>
      %cst_20 = arith.constant dense<0.000000e+00> : vector<128xf32>
      %25 = vector.multi_reduction <add>, %24, %cst_20 [0] : vector<16x128xf32> to vector<128xf32>
      %26 = vector.shape_cast %25 : vector<128xf32> to vector<1x128xf32>
      %27 = vector.shape_cast %26 : vector<1x128xf32> to vector<1x1x128xf32>
      %c0_21 = arith.constant 0 : index
      %c0_22 = arith.constant 0 : index
      %c0_23 = arith.constant 0 : index
      %28 = vector.load %arg8[%c0_21, %c0_22, %c0_23] : memref<1x1x128xf32, #tpu.memory_space<vmem>>, vector<1x1x128xf32>
      tpu.vector_store %arg8[%c0_21, %c0_22, %c0_23], %27 {strides = array<i32>} : memref<1x1x128xf32, #tpu.memory_space<vmem>>, vector<1x1x128xf32>,
    } else {
    }
    %c0_i32_14 = arith.constant 0 : i32
    %17 = arith.cmpi eq, %arg0, %c0_i32_14 : i32
    %18 = arith.extui %17 : i1 to i32
    %c0_i32_15 = arith.constant 0 : i32
    %19 = arith.cmpi ne, %18, %c0_i32_15 : i32
    scf.if %19 {
      %c16_i32 = arith.constant 16 : i32
      %20 = arith.muli %arg0, %c16_i32 : i32
      %21 = tpu.iota {dimensions = array<i32: 0>} : vector<16x128xi32>
      %22 = vector.broadcast %20 : i32 to vector<16x128xi32>
      %23 = arith.addi %22, %21 : vector<16x128xi32>
      %c2_i32 = arith.constant 2 : i32
      %24 = vector.broadcast %c2_i32 : i32 to vector<16x128xi32>
      %25 = arith.cmpi slt, %23, %24 : vector<16x128xi32>
      %cst_16 = arith.constant 0.000000e+00 : f32
      %26 = vector.broadcast %cst_16 : f32 to vector<16x128xf32>
      %27 = arith.select %25, %11, %26 : vector<16x128xi1>, vector<16x128xf32>
      %cst_17 = arith.constant dense<0.000000e+00> : vector<128xf32>
      %28 = vector.multi_reduction <add>, %27, %cst_17 [0] : vector<16x128xf32> to vector<128xf32>
      %29 = vector.shape_cast %28 : vector<128xf32> to vector<1x128xf32>
      %30 = vector.shape_cast %29 : vector<1x128xf32> to vector<1x1x128xf32>
      %c0_18 = arith.constant 0 : index
      %c0_19 = arith.constant 0 : index
      %c0_20 = arith.constant 0 : index
      %31 = vector.load %arg7[%c0_18, %c0_19, %c0_20] : memref<1x1x128xf32, #tpu.memory_space<vmem>>, vector<1x1x128xf32>
      tpu.vector_store %arg7[%c0_18, %c0_19, %c0_20], %30 {strides = array<i32>} : memref<1x1x128xf32, #tpu.memory_space<vmem>>, vector<1x1x128xf32>,
      %32 = arith.mulf %27, %27 : vector<16x128xf32>
      %cst_21 = arith.constant dense<0.000000e+00> : vector<128xf32>
      %33 = vector.multi_reduction <add>, %32, %cst_21 [0] : vector<16x128xf32> to vector<128xf32>
      %34 = vector.shape_cast %33 : vector<128xf32> to vector<1x128xf32>
      %35 = vector.shape_cast %34 : vector<1x128xf32> to vector<1x1x128xf32>
      %c0_22 = arith.constant 0 : index
      %c0_23 = arith.constant 0 : index
      %c0_24 = arith.constant 0 : index
      %36 = vector.load %arg8[%c0_22, %c0_23, %c0_24] : memref<1x1x128xf32, #tpu.memory_space<vmem>>, vector<1x1x128xf32>
      tpu.vector_store %arg8[%c0_22, %c0_23, %c0_24], %35 {strides = array<i32>} : memref<1x1x128xf32, #tpu.memory_space<vmem>>, vector<1x1x128xf32>,
    } else {
    }
    return
  }
  func.func @transform_0(%arg0: i32) -> (i32, i32) {
    %c0_i32 = arith.constant 0 : i32
    %c0_i32_0 = arith.constant 0 : i32
    return %arg0, %c0_i32 : i32, i32
  }
  func.func @transform_1(%arg0: i32) -> (i32, i32) {
    %c0_i32 = arith.constant 0 : i32
    %c0_i32_0 = arith.constant 0 : i32
    return %arg0, %c0_i32 : i32, i32
  }
  func.func @transform_2(%arg0: i32) -> (i32, i32) {
    %c0_i32 = arith.constant 0 : i32
    %c0_i32_0 = arith.constant 0 : i32
    %c0_i32_1 = arith.constant 0 : i32
    return %c0_i32, %c0_i32_0 : i32, i32
  }
  func.func @transform_3(%arg0: i32) -> (i32, i32) {
    %c0_i32 = arith.constant 0 : i32
    %c0_i32_0 = arith.constant 0 : i32
    %c0_i32_1 = arith.constant 0 : i32
    return %c0_i32, %c0_i32_0 : i32, i32
  }
  func.func @transform_4(%arg0: i32) -> (i32, i32) {
    %c0_i32 = arith.constant 0 : i32
    %c0_i32_0 = arith.constant 0 : i32
    %c0_i32_1 = arith.constant 0 : i32
    return %c0_i32, %c0_i32_0 : i32, i32
  }
  func.func @transform_5(%arg0: i32) -> (i32, i32) {
    %c0_i32 = arith.constant 0 : i32
    %c0_i32_0 = arith.constant 0 : i32
    return %arg0, %c0_i32 : i32, i32
  }
  func.func @transform_6(%arg0: i32) -> (i32, i32, i32) {
    %c0_i32 = arith.constant 0 : i32
    %c0_i32_0 = arith.constant 0 : i32
    %c0_i32_1 = arith.constant 0 : i32
    return %arg0, %c0_i32, %c0_i32_0 : i32, i32, i32
  }
  func.func @transform_7(%arg0: i32) -> (i32, i32, i32) {
    %c0_i32 = arith.constant 0 : i32
    %c0_i32_0 = arith.constant 0 : i32
    %c0_i32_1 = arith.constant 0 : i32
    return %arg0, %c0_i32, %c0_i32_0 : i32, i32, i32
  }
}

module attributes {stable_mosaic.version = 11 : i64} {
  func.func @kernel(%arg0: i32, %arg1: memref<16x1152xbf16, #tpu.memory_space<vmem>>, %arg2: memref<16x1152xbf16, #tpu.memory_space<vmem>>, %arg3: memref<1152x128xbf16, #tpu.memory_space<vmem>>, %arg4: memref<1152x128xbf16, #tpu.memory_space<vmem>>, %arg5: memref<1x128xf32, #tpu.memory_space<vmem>>, %arg6: memref<16x128xbf16, #tpu.memory_space<vmem>>, %arg7: memref<1x1x128xf32, #tpu.memory_space<vmem>>, %arg8: memref<1x1x128xf32, #tpu.memory_space<vmem>>) attributes {dimension_semantics = [#tpu.dimension_semantics<parallel>], iteration_bounds = array<i64: 1>, scalar_prefetch = 0 : i64, scratch_operands = 0 : i64, tpu.core_type = #tpu.core_type<tc>, window_params = [{transform_indices = @transform_0, window_bounds = array<i64: 16, 1152>}, {transform_indices = @transform_1, window_bounds = array<i64: 16, 1152>}, {pipeline_mode = #tpu.pipeline_mode<synchronous>, transform_indices = @transform_2, window_bounds = array<i64: 1152, 128>}, {pipeline_mode = #tpu.pipeline_mode<synchronous>, transform_indices = @transform_3, window_bounds = array<i64: 1152, 128>}, {pipeline_mode = #tpu.pipeline_mode<synchronous>, transform_indices = @transform_4, window_bounds = array<i64: 1, 128>}, {transform_indices = @transform_5, window_bounds = array<i64: 16, 128>}, {transform_indices = @transform_6, window_bounds = array<i64: 1, 1, 128>}, {transform_indices = @transform_7, window_bounds = array<i64: 1, 1, 128>}]} {
    %c0 = arith.constant 0 : index
    %c0_0 = arith.constant 0 : index
    %0 = vector.load %arg1[%c0, %c0_0] : memref<16x1152xbf16, #tpu.memory_space<vmem>>, vector<16x1152xbf16>
    %c0_1 = arith.constant 0 : index
    %c0_2 = arith.constant 0 : index
    %1 = vector.load %arg3[%c0_1, %c0_2] : memref<1152x128xbf16, #tpu.memory_space<vmem>>, vector<1152x128xbf16>
    %cst = arith.constant dense<0.000000e+00> : vector<16x128xf32>
    %2 = tpu.matmul %0, %1, %cst {dimension_numbers = #tpu.dot_dimension_numbers<[1], [0], [0], [1], [0, 0, 1, 1], [], []>} : vector<16x1152xbf16>, vector<1152x128xbf16>, vector<16x128xf32> -> vector<16x128xf32>
    %c0_3 = arith.constant 0 : index
    %c0_4 = arith.constant 0 : index
    %3 = vector.load %arg2[%c0_3, %c0_4] : memref<16x1152xbf16, #tpu.memory_space<vmem>>, vector<16x1152xbf16>
    %c0_5 = arith.constant 0 : index
    %c0_6 = arith.constant 0 : index
    %4 = vector.load %arg4[%c0_5, %c0_6] : memref<1152x128xbf16, #tpu.memory_space<vmem>>, vector<1152x128xbf16>
    %cst_7 = arith.constant dense<0.000000e+00> : vector<16x128xf32>
    %5 = tpu.matmul %3, %4, %cst_7 {dimension_numbers = #tpu.dot_dimension_numbers<[1], [0], [0], [1], [0, 0, 1, 1], [], []>} : vector<16x1152xbf16>, vector<1152x128xbf16>, vector<16x128xf32> -> vector<16x128xf32>
    %6 = arith.addf %2, %5 : vector<16x128xf32>
    %c0_8 = arith.constant 0 : index
    %c0_9 = arith.constant 0 : index
    %7 = vector.load %arg5[%c0_8, %c0_9] : memref<1x128xf32, #tpu.memory_space<vmem>>, vector<1x128xf32>
    %8 = vector.broadcast %7 : vector<1x128xf32> to vector<16x128xf32>
    %9 = arith.addf %6, %8 : vector<16x128xf32>
    %cst_10 = arith.constant 0.000000e+00 : f32
    %10 = vector.broadcast %cst_10 : f32 to vector<16x128xf32>
    %11 = arith.maximumf %9, %10 : vector<16x128xf32>
    %12 = arith.truncf %11 : vector<16x128xf32> to vector<16x128xbf16>
    %c0_11 = arith.constant 0 : index
    %c0_12 = arith.constant 0 : index
    %13 = vector.load %arg6[%c0_11, %c0_12] : memref<16x128xbf16, #tpu.memory_space<vmem>>, vector<16x128xbf16>
    tpu.vector_store %arg6[%c0_11, %c0_12], %12 {strides = array<i32>} : memref<16x128xbf16, #tpu.memory_space<vmem>>, vector<16x128xbf16>,
    %c0_i32 = arith.constant 0 : i32
    %14 = arith.cmpi ne, %arg0, %c0_i32 : i32
    %15 = arith.extui %14 : i1 to i32
    %c0_i32_13 = arith.constant 0 : i32
    %16 = arith.cmpi ne, %15, %c0_i32_13 : i32
    scf.if %16 {
      %cst_16 = arith.constant dense<0.000000e+00> : vector<128xf32>
      %20 = vector.multi_reduction <add>, %11, %cst_16 [0] : vector<16x128xf32> to vector<128xf32>
      %21 = vector.shape_cast %20 : vector<128xf32> to vector<1x128xf32>
      %22 = vector.shape_cast %21 : vector<1x128xf32> to vector<1x1x128xf32>
      %c0_17 = arith.constant 0 : index
      %c0_18 = arith.constant 0 : index
      %c0_19 = arith.constant 0 : index
      %23 = vector.load %arg7[%c0_17, %c0_18, %c0_19] : memref<1x1x128xf32, #tpu.memory_space<vmem>>, vector<1x1x128xf32>
      tpu.vector_store %arg7[%c0_17, %c0_18, %c0_19], %22 {strides = array<i32>} : memref<1x1x128xf32, #tpu.memory_space<vmem>>, vector<1x1x128xf32>,
      %24 = arith.mulf %11, %11 : vector<16x128xf32>
      %cst_20 = arith.constant dense<0.000000e+00> : vector<128xf32>
      %25 = vector.multi_reduction <add>, %24, %cst_20 [0] : vector<16x128xf32> to vector<128xf32>
      %26 = vector.shape_cast %25 : vector<128xf32> to vector<1x128xf32>
      %27 = vector.shape_cast %26 : vector<1x128xf32> to vector<1x1x128xf32>
      %c0_21 = arith.constant 0 : index
      %c0_22 = arith.constant 0 : index
      %c0_23 = arith.constant 0 : index
      %28 = vector.load %arg8[%c0_21, %c0_22, %c0_23] : memref<1x1x128xf32, #tpu.memory_space<vmem>>, vector<1x1x128xf32>
      tpu.vector_store %arg8[%c0_21, %c0_22, %c0_23], %27 {strides = array<i32>} : memref<1x1x128xf32, #tpu.memory_space<vmem>>, vector<1x1x128xf32>,
    } else {
    }
    %c0_i32_14 = arith.constant 0 : i32
    %17 = arith.cmpi eq, %arg0, %c0_i32_14 : i32
    %18 = arith.extui %17 : i1 to i32
    %c0_i32_15 = arith.constant 0 : i32
    %19 = arith.cmpi ne, %18, %c0_i32_15 : i32
    scf.if %19 {
      %c16_i32 = arith.constant 16 : i32
      %20 = arith.muli %arg0, %c16_i32 : i32
      %21 = tpu.iota {dimensions = array<i32: 0>} : vector<16x128xi32>
      %22 = vector.broadcast %20 : i32 to vector<16x128xi32>
      %23 = arith.addi %22, %21 : vector<16x128xi32>
      %c2_i32 = arith.constant 2 : i32
      %24 = vector.broadcast %c2_i32 : i32 to vector<16x128xi32>
      %25 = arith.cmpi slt, %23, %24 : vector<16x128xi32>
      %cst_16 = arith.constant 0.000000e+00 : f32
      %26 = vector.broadcast %cst_16 : f32 to vector<16x128xf32>
      %27 = arith.select %25, %11, %26 : vector<16x128xi1>, vector<16x128xf32>
      %cst_17 = arith.constant dense<0.000000e+00> : vector<128xf32>
      %28 = vector.multi_reduction <add>, %27, %cst_17 [0] : vector<16x128xf32> to vector<128xf32>
      %29 = vector.shape_cast %28 : vector<128xf32> to vector<1x128xf32>
      %30 = vector.shape_cast %29 : vector<1x128xf32> to vector<1x1x128xf32>
      %c0_18 = arith.constant 0 : index
      %c0_19 = arith.constant 0 : index
      %c0_20 = arith.constant 0 : index
      %31 = vector.load %arg7[%c0_18, %c0_19, %c0_20] : memref<1x1x128xf32, #tpu.memory_space<vmem>>, vector<1x1x128xf32>
      tpu.vector_store %arg7[%c0_18, %c0_19, %c0_20], %30 {strides = array<i32>} : memref<1x1x128xf32, #tpu.memory_space<vmem>>, vector<1x1x128xf32>,
      %32 = arith.mulf %27, %27 : vector<16x128xf32>
      %cst_21 = arith.constant dense<0.000000e+00> : vector<128xf32>
      %33 = vector.multi_reduction <add>, %32, %cst_21 [0] : vector<16x128xf32> to vector<128xf32>
      %34 = vector.shape_cast %33 : vector<128xf32> to vector<1x128xf32>
      %35 = vector.shape_cast %34 : vector<1x128xf32> to vector<1x1x128xf32>
      %c0_22 = arith.constant 0 : index
      %c0_23 = arith.constant 0 : index
      %c0_24 = arith.constant 0 : index
      %36 = vector.load %arg8[%c0_22, %c0_23, %c0_24] : memref<1x1x128xf32, #tpu.memory_space<vmem>>, vector<1x1x128xf32>
      tpu.vector_store %arg8[%c0_22, %c0_23, %c0_24], %35 {strides = array<i32>} : memref<1x1x128xf32, #tpu.memory_space<vmem>>, vector<1x1x128xf32>,
    } else {
    }
    return
  }
  func.func @transform_0(%arg0: i32) -> (i32, i32) {
    %c0_i32 = arith.constant 0 : i32
    %c0_i32_0 = arith.constant 0 : i32
    return %arg0, %c0_i32 : i32, i32
  }
  func.func @transform_1(%arg0: i32) -> (i32, i32) {
    %c0_i32 = arith.constant 0 : i32
    %c0_i32_0 = arith.constant 0 : i32
    return %arg0, %c0_i32 : i32, i32
  }
  func.func @transform_2(%arg0: i32) -> (i32, i32) {
    %c0_i32 = arith.constant 0 : i32
    %c0_i32_0 = arith.constant 0 : i32
    %c0_i32_1 = arith.constant 0 : i32
    return %c0_i32, %c0_i32_0 : i32, i32
  }
  func.func @transform_3(%arg0: i32) -> (i32, i32) {
    %c0_i32 = arith.constant 0 : i32
    %c0_i32_0 = arith.constant 0 : i32
    %c0_i32_1 = arith.constant 0 : i32
    return %c0_i32, %c0_i32_0 : i32, i32
  }
  func.func @transform_4(%arg0: i32) -> (i32, i32) {
    %c0_i32 = arith.constant 0 : i32
    %c0_i32_0 = arith.constant 0 : i32
    %c0_i32_1 = arith.constant 0 : i32
    return %c0_i32, %c0_i32_0 : i32, i32
  }
  func.func @transform_5(%arg0: i32) -> (i32, i32) {
    %c0_i32 = arith.constant 0 : i32
    %c0_i32_0 = arith.constant 0 : i32
    return %arg0, %c0_i32 : i32, i32
  }
  func.func @transform_6(%arg0: i32) -> (i32, i32, i32) {
    %c0_i32 = arith.constant 0 : i32
    %c0_i32_0 = arith.constant 0 : i32
    %c0_i32_1 = arith.constant 0 : i32
    return %arg0, %c0_i32, %c0_i32_0 : i32, i32, i32
  }
  func.func @transform_7(%arg0: i32) -> (i32, i32, i32) {
    %c0_i32 = arith.constant 0 : i32
    %c0_i32_0 = arith.constant 0 : i32
    %c0_i32_1 = arith.constant 0 : i32
    return %arg0, %c0_i32, %c0_i32_0 : i32, i32, i32
  }
}

module attributes {stable_mosaic.version = 11 : i64} {
  func.func @kernel(%arg0: i32, %arg1: memref<16x640xbf16, #tpu.memory_space<vmem>>, %arg2: memref<16x640xbf16, #tpu.memory_space<vmem>>, %arg3: memref<640x128xbf16, #tpu.memory_space<vmem>>, %arg4: memref<640x128xbf16, #tpu.memory_space<vmem>>, %arg5: memref<1x128xf32, #tpu.memory_space<vmem>>, %arg6: memref<16x128xbf16, #tpu.memory_space<vmem>>, %arg7: memref<1x1x128xf32, #tpu.memory_space<vmem>>, %arg8: memref<1x1x128xf32, #tpu.memory_space<vmem>>) attributes {dimension_semantics = [#tpu.dimension_semantics<parallel>], iteration_bounds = array<i64: 1>, scalar_prefetch = 0 : i64, scratch_operands = 0 : i64, tpu.core_type = #tpu.core_type<tc>, window_params = [{transform_indices = @transform_0, window_bounds = array<i64: 16, 640>}, {transform_indices = @transform_1, window_bounds = array<i64: 16, 640>}, {pipeline_mode = #tpu.pipeline_mode<synchronous>, transform_indices = @transform_2, window_bounds = array<i64: 640, 128>}, {pipeline_mode = #tpu.pipeline_mode<synchronous>, transform_indices = @transform_3, window_bounds = array<i64: 640, 128>}, {pipeline_mode = #tpu.pipeline_mode<synchronous>, transform_indices = @transform_4, window_bounds = array<i64: 1, 128>}, {transform_indices = @transform_5, window_bounds = array<i64: 16, 128>}, {transform_indices = @transform_6, window_bounds = array<i64: 1, 1, 128>}, {transform_indices = @transform_7, window_bounds = array<i64: 1, 1, 128>}]} {
    %c0 = arith.constant 0 : index
    %c0_0 = arith.constant 0 : index
    %0 = vector.load %arg1[%c0, %c0_0] : memref<16x640xbf16, #tpu.memory_space<vmem>>, vector<16x640xbf16>
    %c0_1 = arith.constant 0 : index
    %c0_2 = arith.constant 0 : index
    %1 = vector.load %arg3[%c0_1, %c0_2] : memref<640x128xbf16, #tpu.memory_space<vmem>>, vector<640x128xbf16>
    %cst = arith.constant dense<0.000000e+00> : vector<16x128xf32>
    %2 = tpu.matmul %0, %1, %cst {dimension_numbers = #tpu.dot_dimension_numbers<[1], [0], [0], [1], [0, 0, 1, 1], [], []>} : vector<16x640xbf16>, vector<640x128xbf16>, vector<16x128xf32> -> vector<16x128xf32>
    %c0_3 = arith.constant 0 : index
    %c0_4 = arith.constant 0 : index
    %3 = vector.load %arg2[%c0_3, %c0_4] : memref<16x640xbf16, #tpu.memory_space<vmem>>, vector<16x640xbf16>
    %c0_5 = arith.constant 0 : index
    %c0_6 = arith.constant 0 : index
    %4 = vector.load %arg4[%c0_5, %c0_6] : memref<640x128xbf16, #tpu.memory_space<vmem>>, vector<640x128xbf16>
    %cst_7 = arith.constant dense<0.000000e+00> : vector<16x128xf32>
    %5 = tpu.matmul %3, %4, %cst_7 {dimension_numbers = #tpu.dot_dimension_numbers<[1], [0], [0], [1], [0, 0, 1, 1], [], []>} : vector<16x640xbf16>, vector<640x128xbf16>, vector<16x128xf32> -> vector<16x128xf32>
    %6 = arith.addf %2, %5 : vector<16x128xf32>
    %c0_8 = arith.constant 0 : index
    %c0_9 = arith.constant 0 : index
    %7 = vector.load %arg5[%c0_8, %c0_9] : memref<1x128xf32, #tpu.memory_space<vmem>>, vector<1x128xf32>
    %8 = vector.broadcast %7 : vector<1x128xf32> to vector<16x128xf32>
    %9 = arith.addf %6, %8 : vector<16x128xf32>
    %cst_10 = arith.constant 0.000000e+00 : f32
    %10 = vector.broadcast %cst_10 : f32 to vector<16x128xf32>
    %11 = arith.maximumf %9, %10 : vector<16x128xf32>
    %12 = arith.truncf %11 : vector<16x128xf32> to vector<16x128xbf16>
    %c0_11 = arith.constant 0 : index
    %c0_12 = arith.constant 0 : index
    %13 = vector.load %arg6[%c0_11, %c0_12] : memref<16x128xbf16, #tpu.memory_space<vmem>>, vector<16x128xbf16>
    tpu.vector_store %arg6[%c0_11, %c0_12], %12 {strides = array<i32>} : memref<16x128xbf16, #tpu.memory_space<vmem>>, vector<16x128xbf16>,
    %c0_i32 = arith.constant 0 : i32
    %14 = arith.cmpi ne, %arg0, %c0_i32 : i32
    %15 = arith.extui %14 : i1 to i32
    %c0_i32_13 = arith.constant 0 : i32
    %16 = arith.cmpi ne, %15, %c0_i32_13 : i32
    scf.if %16 {
      %cst_16 = arith.constant dense<0.000000e+00> : vector<128xf32>
      %20 = vector.multi_reduction <add>, %11, %cst_16 [0] : vector<16x128xf32> to vector<128xf32>
      %21 = vector.shape_cast %20 : vector<128xf32> to vector<1x128xf32>
      %22 = vector.shape_cast %21 : vector<1x128xf32> to vector<1x1x128xf32>
      %c0_17 = arith.constant 0 : index
      %c0_18 = arith.constant 0 : index
      %c0_19 = arith.constant 0 : index
      %23 = vector.load %arg7[%c0_17, %c0_18, %c0_19] : memref<1x1x128xf32, #tpu.memory_space<vmem>>, vector<1x1x128xf32>
      tpu.vector_store %arg7[%c0_17, %c0_18, %c0_19], %22 {strides = array<i32>} : memref<1x1x128xf32, #tpu.memory_space<vmem>>, vector<1x1x128xf32>,
      %24 = arith.mulf %11, %11 : vector<16x128xf32>
      %cst_20 = arith.constant dense<0.000000e+00> : vector<128xf32>
      %25 = vector.multi_reduction <add>, %24, %cst_20 [0] : vector<16x128xf32> to vector<128xf32>
      %26 = vector.shape_cast %25 : vector<128xf32> to vector<1x128xf32>
      %27 = vector.shape_cast %26 : vector<1x128xf32> to vector<1x1x128xf32>
      %c0_21 = arith.constant 0 : index
      %c0_22 = arith.constant 0 : index
      %c0_23 = arith.constant 0 : index
      %28 = vector.load %arg8[%c0_21, %c0_22, %c0_23] : memref<1x1x128xf32, #tpu.memory_space<vmem>>, vector<1x1x128xf32>
      tpu.vector_store %arg8[%c0_21, %c0_22, %c0_23], %27 {strides = array<i32>} : memref<1x1x128xf32, #tpu.memory_space<vmem>>, vector<1x1x128xf32>,
    } else {
    }
    %c0_i32_14 = arith.constant 0 : i32
    %17 = arith.cmpi eq, %arg0, %c0_i32_14 : i32
    %18 = arith.extui %17 : i1 to i32
    %c0_i32_15 = arith.constant 0 : i32
    %19 = arith.cmpi ne, %18, %c0_i32_15 : i32
    scf.if %19 {
      %c16_i32 = arith.constant 16 : i32
      %20 = arith.muli %arg0, %c16_i32 : i32
      %21 = tpu.iota {dimensions = array<i32: 0>} : vector<16x128xi32>
      %22 = vector.broadcast %20 : i32 to vector<16x128xi32>
      %23 = arith.addi %22, %21 : vector<16x128xi32>
      %c2_i32 = arith.constant 2 : i32
      %24 = vector.broadcast %c2_i32 : i32 to vector<16x128xi32>
      %25 = arith.cmpi slt, %23, %24 : vector<16x128xi32>
      %cst_16 = arith.constant 0.000000e+00 : f32
      %26 = vector.broadcast %cst_16 : f32 to vector<16x128xf32>
      %27 = arith.select %25, %11, %26 : vector<16x128xi1>, vector<16x128xf32>
      %cst_17 = arith.constant dense<0.000000e+00> : vector<128xf32>
      %28 = vector.multi_reduction <add>, %27, %cst_17 [0] : vector<16x128xf32> to vector<128xf32>
      %29 = vector.shape_cast %28 : vector<128xf32> to vector<1x128xf32>
      %30 = vector.shape_cast %29 : vector<1x128xf32> to vector<1x1x128xf32>
      %c0_18 = arith.constant 0 : index
      %c0_19 = arith.constant 0 : index
      %c0_20 = arith.constant 0 : index
      %31 = vector.load %arg7[%c0_18, %c0_19, %c0_20] : memref<1x1x128xf32, #tpu.memory_space<vmem>>, vector<1x1x128xf32>
      tpu.vector_store %arg7[%c0_18, %c0_19, %c0_20], %30 {strides = array<i32>} : memref<1x1x128xf32, #tpu.memory_space<vmem>>, vector<1x1x128xf32>,
      %32 = arith.mulf %27, %27 : vector<16x128xf32>
      %cst_21 = arith.constant dense<0.000000e+00> : vector<128xf32>
      %33 = vector.multi_reduction <add>, %32, %cst_21 [0] : vector<16x128xf32> to vector<128xf32>
      %34 = vector.shape_cast %33 : vector<128xf32> to vector<1x128xf32>
      %35 = vector.shape_cast %34 : vector<1x128xf32> to vector<1x1x128xf32>
      %c0_22 = arith.constant 0 : index
      %c0_23 = arith.constant 0 : index
      %c0_24 = arith.constant 0 : index
      %36 = vector.load %arg8[%c0_22, %c0_23, %c0_24] : memref<1x1x128xf32, #tpu.memory_space<vmem>>, vector<1x1x128xf32>
      tpu.vector_store %arg8[%c0_22, %c0_23, %c0_24], %35 {strides = array<i32>} : memref<1x1x128xf32, #tpu.memory_space<vmem>>, vector<1x1x128xf32>,
    } else {
    }
    return
  }
  func.func @transform_0(%arg0: i32) -> (i32, i32) {
    %c0_i32 = arith.constant 0 : i32
    %c0_i32_0 = arith.constant 0 : i32
    return %arg0, %c0_i32 : i32, i32
  }
  func.func @transform_1(%arg0: i32) -> (i32, i32) {
    %c0_i32 = arith.constant 0 : i32
    %c0_i32_0 = arith.constant 0 : i32
    return %arg0, %c0_i32 : i32, i32
  }
  func.func @transform_2(%arg0: i32) -> (i32, i32) {
    %c0_i32 = arith.constant 0 : i32
    %c0_i32_0 = arith.constant 0 : i32
    %c0_i32_1 = arith.constant 0 : i32
    return %c0_i32, %c0_i32_0 : i32, i32
  }
  func.func @transform_3(%arg0: i32) -> (i32, i32) {
    %c0_i32 = arith.constant 0 : i32
    %c0_i32_0 = arith.constant 0 : i32
    %c0_i32_1 = arith.constant 0 : i32
    return %c0_i32, %c0_i32_0 : i32, i32
  }
  func.func @transform_4(%arg0: i32) -> (i32, i32) {
    %c0_i32 = arith.constant 0 : i32
    %c0_i32_0 = arith.constant 0 : i32
    %c0_i32_1 = arith.constant 0 : i32
    return %c0_i32, %c0_i32_0 : i32, i32
  }
  func.func @transform_5(%arg0: i32) -> (i32, i32) {
    %c0_i32 = arith.constant 0 : i32
    %c0_i32_0 = arith.constant 0 : i32
    return %arg0, %c0_i32 : i32, i32
  }
  func.func @transform_6(%arg0: i32) -> (i32, i32, i32) {
    %c0_i32 = arith.constant 0 : i32
    %c0_i32_0 = arith.constant 0 : i32
    %c0_i32_1 = arith.constant 0 : i32
    return %arg0, %c0_i32, %c0_i32_0 : i32, i32, i32
  }
  func.func @transform_7(%arg0: i32) -> (i32, i32, i32) {
    %c0_i32 = arith.constant 0 : i32
    %c0_i32_0 = arith.constant 0 : i32
    %c0_i32_1 = arith.constant 0 : i32
    return %arg0, %c0_i32, %c0_i32_0 : i32, i32, i32
  }
}

module attributes {stable_mosaic.version = 11 : i64} {
  func.func @bn_apply_kernel(%arg0: i32, %arg1: memref<16x128xbf16, #tpu.memory_space<vmem>>, %arg2: memref<1x128xf32, #tpu.memory_space<vmem>>, %arg3: memref<1x128xf32, #tpu.memory_space<vmem>>, %arg4: memref<16x128xf32, #tpu.memory_space<vmem>>) attributes {dimension_semantics = [#tpu.dimension_semantics<parallel>], iteration_bounds = array<i64: 1>, scalar_prefetch = 0 : i64, scratch_operands = 0 : i64, tpu.core_type = #tpu.core_type<tc>, window_params = [{transform_indices = @transform_0, window_bounds = array<i64: 16, 128>}, {pipeline_mode = #tpu.pipeline_mode<synchronous>, transform_indices = @transform_1, window_bounds = array<i64: 1, 128>}, {pipeline_mode = #tpu.pipeline_mode<synchronous>, transform_indices = @transform_2, window_bounds = array<i64: 1, 128>}, {transform_indices = @transform_3, window_bounds = array<i64: 16, 128>}]} {
    %c0 = arith.constant 0 : index
    %c0_0 = arith.constant 0 : index
    %0 = vector.load %arg1[%c0, %c0_0] : memref<16x128xbf16, #tpu.memory_space<vmem>>, vector<16x128xbf16>
    %1 = arith.extf %0 : vector<16x128xbf16> to vector<16x128xf32>
    %c0_1 = arith.constant 0 : index
    %c0_2 = arith.constant 0 : index
    %2 = vector.load %arg2[%c0_1, %c0_2] : memref<1x128xf32, #tpu.memory_space<vmem>>, vector<1x128xf32>
    %3 = vector.broadcast %2 : vector<1x128xf32> to vector<16x128xf32>
    %4 = arith.mulf %1, %3 : vector<16x128xf32>
    %c0_3 = arith.constant 0 : index
    %c0_4 = arith.constant 0 : index
    %5 = vector.load %arg3[%c0_3, %c0_4] : memref<1x128xf32, #tpu.memory_space<vmem>>, vector<1x128xf32>
    %6 = vector.broadcast %5 : vector<1x128xf32> to vector<16x128xf32>
    %7 = arith.addf %4, %6 : vector<16x128xf32>
    %c0_5 = arith.constant 0 : index
    %c0_6 = arith.constant 0 : index
    %8 = vector.load %arg4[%c0_5, %c0_6] : memref<16x128xf32, #tpu.memory_space<vmem>>, vector<16x128xf32>
    tpu.vector_store %arg4[%c0_5, %c0_6], %7 {strides = array<i32>} : memref<16x128xf32, #tpu.memory_space<vmem>>, vector<16x128xf32>,
    return
  }
  func.func @transform_0(%arg0: i32) -> (i32, i32) {
    %c0_i32 = arith.constant 0 : i32
    %c0_i32_0 = arith.constant 0 : i32
    return %arg0, %c0_i32 : i32, i32
  }
  func.func @transform_1(%arg0: i32) -> (i32, i32) {
    %c0_i32 = arith.constant 0 : i32
    %c0_i32_0 = arith.constant 0 : i32
    %c0_i32_1 = arith.constant 0 : i32
    return %c0_i32, %c0_i32_0 : i32, i32
  }
  func.func @transform_2(%arg0: i32) -> (i32, i32) {
    %c0_i32 = arith.constant 0 : i32
    %c0_i32_0 = arith.constant 0 : i32
    %c0_i32_1 = arith.constant 0 : i32
    return %c0_i32, %c0_i32_0 : i32, i32
  }
  func.func @transform_3(%arg0: i32) -> (i32, i32) {
    %c0_i32 = arith.constant 0 : i32
    %c0_i32_0 = arith.constant 0 : i32
    return %arg0, %c0_i32 : i32, i32
  }
}

</mosaic_0001>

<llo_original>
// kernel: tile.58
$region0: #{tile.58}
  #allocation0 [shape = 's32[1]{0}', space=sflag, size = 0x4, scoped, tag = 'scoped memory for tile.58']
  %s0 = inlined_call_operand.vmem [shape: f32[64], index: 0, kind: input, shape index: {}]
  %s1 = inlined_call_operand.vmem [shape: f32[9,64], index: 1, kind: output, shape index: {}]
  // Predicated region
  $region2: #{tile.58} parent=0 // pred_check
    _
  $region3: #{tile.58} parent=0 // pred_check_branch
    %3 = sbr.rel (0) target = $region5
  $region4: #{tile.58} parent=0 // pred_region
    _
  $region5: #{tile.58} parent=0 // pred_fallthru
    _
  %v4 = vld [vmem:[%s0] ss:$0 sm:$0xff]
  %5 = vst [vmem:[%s1] sm:$0xff] %v4
  %s6 = scalar_lea.vmem %s1, 8
  %7 = vst [vmem:[%s6] sm:$0xff] %v4

// kernel: tile.59
$region0: #{tile.59}
  %s0 = inlined_call_operand.vmem [shape: f32[9,64], index: 0, kind: input, shape index: {}]
  %s1 = inlined_call_operand.vmem [shape: f32[576], index: 1, kind: output, shape index: {}]
  %v2 = vld [vmem:[%s0] ss:$2 sm:$0x1f]
  %vm3 = vcmask 523264
  %4 = vst.msk [vmem:[%s1] sm:$0x1f] %vm3, %v2
  %s5 = scalar_lea.vmem %s0, 1
  %v6 = vld [vmem:[%s5] ss:$2 sm:$0xf]
  %7 = vrot.lane.b32.xlu0 %v6, 64
  %v8 = vpop.permute.xlu0 %7
  %vm9 = vcmask 1048064
  %10 = vst.msk [vmem:[%s1] sm:$0xf] %vm9, %v8

// kernel: unet_forward.9
$region0: #{unet_forward.9}
  #allocation0 [shape = 'u32[]', space=smem, size = 0x4, offset = 0x4, fixed_abs, tag = 'smem constant byte address 0x4 - core index']
  #allocation1 [shape = 'u32[144,128]{1,0:T(1,128)}', space=vmem, size = 0x12000, scoped, tag = 'internal scratch']
  %s0 = inlined_call_operand.vmem [shape: bf16[16,128], index: 0, kind: input, shape index: {}]
  %s1 = inlined_call_operand.vmem [shape: bf16[128,128], index: 1, kind: input, shape index: {}]
  %s2 = inlined_call_operand.vmem [shape: f32[1,128], index: 2, kind: input, shape index: {}]
  %s3 = inlined_call_operand.vmem [shape: bf16[16,128], index: 3, kind: output, shape index: {0}]
  %s4 = inlined_call_operand.vmem [shape: f32[1,1,128], index: 4, kind: output, shape index: {1}]
  %s5 = inlined_call_operand.vmem [shape: f32[1,1,128], index: 5, kind: output, shape index: {2}]
  %6 = xla_tuple %s3, %s4, %s5
  %s7 = sld [smem:[#allocation0]]
  $region46: #{unet_forward.9} parent=0
    _
  %s9 = ssub.s32 1, %s7
  %s10 = scalar_select 0, %s9, %s7
  // Predicated region
  $region2: #{unet_forward.9} parent=0 // pred_check
    _
  $region3: #{unet_forward.9} parent=0 // pred_check_branch
    %12 = sbr.rel (0) target = $region5
  $region4: #{unet_forward.9} parent=0 // pred_region
    _
  $region5: #{unet_forward.9} parent=0 // pred_fallthru
    _
  // Predicated region
  $region6: #{unet_forward.9} parent=0 // pred_check
    _
  $region7: #{unet_forward.9} parent=0 // pred_check_branch
    %14 = sbr.rel (0) target = $region9
  $region8: #{unet_forward.9} parent=0 // pred_region
    _
  $region9: #{unet_forward.9} parent=0 // pred_fallthru
    _
  // Predicated region
  $region10: #{unet_forward.9} parent=0 // pred_check
    _
  $region11: #{unet_forward.9} parent=0 // pred_check_branch
    %16 = sbr.rel (0) target = $region13
  $region12: #{unet_forward.9} parent=0 // pred_region
    _
  $region13: #{unet_forward.9} parent=0 // pred_fallthru
    _
  %v18 = vld [vmem:[%s0] sm:$0xf]
  %v19 = vld [vmem:[%s0 + $0x4] sm:$0xf]
  %v20 = vld [vmem:[%s1] sm:$0xf]
  %v21 = vld [vmem:[%s1 + $0x4] sm:$0xf]
  %v22 = vld [vmem:[%s1 + $0x8] sm:$0xf]
  %v23 = vld [vmem:[%s1 + $0xc] sm:$0xf]
  %v24 = vld [vmem:[%s1 + $0x10] sm:$0xf]
  %v25 = vld [vmem:[%s1 + $0x14] sm:$0xf]
  %v26 = vld [vmem:[%s1 + $0x18] sm:$0xf]
  %v27 = vld [vmem:[%s1 + $0x1c] sm:$0xf]
  %v28 = vld [vmem:[%s1 + $0x20] sm:$0xf]
  %v29 = vld [vmem:[%s1 + $0x24] sm:$0xf]
  %v30 = vld [vmem:[%s1 + $0x28] sm:$0xf]
  %v31 = vld [vmem:[%s1 + $0x2c] sm:$0xf]
  %v32 = vld [vmem:[%s1 + $0x30] sm:$0xf]
  %v33 = vld [vmem:[%s1 + $0x34] sm:$0xf]
  %v34 = vld [vmem:[%s1 + $0x38] sm:$0xf]
  %v35 = vld [vmem:[%s1 + $0x3c] sm:$0xf]
  %v36 = vld [vmem:[%s2] sm:$0x1]
  %v38 = vlaneseq
  %v39 = vshrl.u32 %v38, 7
  %v40 = vsub.s32 0, %v39
  %v41 = vrot.slane %v36, %v40
  %v45 = vunpack.c.l.b16 %v18
  %v46 = vunpack.c.l.b16 %v19
  %v47 = vpack.c.b16 %v46, %v45
  %v65 = vunpack.c.l.b16 %v20
  %v66 = vunpack.c.l.b16 %v21
  %v67 = vunpack.c.l.b16 %v22
  %v68 = vunpack.c.l.b16 %v23
  %v69 = vunpack.c.l.b16 %v24
  %v70 = vunpack.c.l.b16 %v25
  %v71 = vunpack.c.l.b16 %v26
  %v72 = vunpack.c.l.b16 %v27
  %v73 = vunpack.c.l.b16 %v28
  %v74 = vunpack.c.l.b16 %v29
  %v75 = vunpack.c.l.b16 %v30
  %v76 = vunpack.c.l.b16 %v31
  %v77 = vunpack.c.l.b16 %v32
  %v78 = vunpack.c.l.b16 %v33
  %v79 = vunpack.c.l.b16 %v34
  %v80 = vunpack.c.l.b16 %v35
  %v81 = vpack.c.b16 %v66, %v65
  %v82 = vpack.c.b16 %v68, %v67
  %v83 = vpack.c.b16 %v70, %v69
  %v84 = vpack.c.b16 %v72, %v71
  %v85 = vpack.c.b16 %v74, %v73
  %v86 = vpack.c.b16 %v76, %v75
  %v87 = vpack.c.b16 %v78, %v77
  %v88 = vpack.c.b16 %v80, %v79
  %97 = vmatprep.subr.bf16.mxu0 0
  %98 = vmatpush1.bf16.msra.mxu0 %v81
  %99 = vmatprep.subr.bf16.mxu0 0
  %100 = vmatpush1.bf16.msra.mxu0 %v82
  %101 = vmatprep.subr.bf16.mxu0 0
  %102 = vmatpush1.bf16.msra.mxu0 %v83
  %103 = vmatprep.subr.bf16.mxu0 0
  %104 = vmatpush1.bf16.msra.mxu0 %v84
  %105 = vmatprep.subr.bf16.mxu0 0
  %106 = vmatpush1.bf16.msra.mxu0 %v85
  %107 = vmatprep.subr.bf16.mxu0 0
  %108 = vmatpush1.bf16.msra.mxu0 %v86
  %109 = vmatprep.subr.bf16.mxu0 0
  %110 = vmatpush1.bf16.msra.mxu0 %v87
  %111 = vmatprep.subr.bf16.mxu0 0
  %112 = vmatpush1.bf16.msra.mxu0 %v88
  %113 = vmatprep.subr.bf16.mxu0 0
  %114 = vmatpush1.bf16.msra.mxu0 0
  %115 = vmatprep.subr.bf16.mxu0 0
  %116 = vmatpush1.bf16.msra.mxu0 0
  %117 = vmatprep.subr.bf16.mxu0 0
  %118 = vmatpush1.bf16.msra.mxu0 0
  %119 = vmatprep.subr.bf16.mxu0 0
  %120 = vmatpush1.bf16.msra.mxu0 0
  %121 = vmatprep.subr.bf16.mxu0 0
  %122 = vmatpush1.bf16.msra.mxu0 0
  %123 = vmatprep.subr.bf16.mxu0 0
  %124 = vmatpush1.bf16.msra.mxu0 0
  %125 = vmatprep.subr.bf16.mxu0 0
  %126 = vmatpush1.bf16.msra.mxu0 0
  %127 = vmatprep.subr.bf16.mxu0 0
  %128 = vmatpush1.bf16.msra.mxu0 0
  %129 = vmatprep.mubr.bf16.mxu0 0
  %130 = vmatmul.mubr.bf16.gmra.mrb[0].mxu0 %v47
  %v131 = vpop.f32.mrb[0].mxu0
  %v132 = vadd.f32 %v41, %v131
  %v133 = vpop.f32.mrb[0].mxu0
  %v134 = vpop.f32.mrb[0].mxu0
  %v135 = vadd.f32 %v41, %v134
  %v136 = vpop.f32.mrb[0].mxu0
  %137 = vdwg.mxu0
  %v138 = vmax.f32 %v132, 0.0
  %v139 = vmax.f32 %v135, 0.0
  %v140 = vpack.c.bf16 %v139, %v138
  %v142 = vunpack.c.l.b16 %v140
  %v143 = vunpack.c.h.b16 %v140
  %v144 = vpack.c.b16 %v142, %v142
  %v145 = vpack.c.b16 %v143, %v143
  %148 = vst [vmem:[%s3] sm:$0xf] %v144
  %149 = vst [vmem:[%s3 + $0x4] sm:$0xf] %v145
  %p150 = scmp.ne.s32.totalorder 0, 0
  // Predicated region
  $region14: #{unet_forward.9} parent=0 // pred_check
    %p151 = pneg %p150
  $region15: #{unet_forward.9} parent=0 // pred_check_branch
    %153 = sbr.rel (%p151) target = $region17
  $region16: #{unet_forward.9} parent=0 // pred_region
    %v154 = vadd.f32 %v138, %v139
    %v155 = vrot.slane %v154, 4
    %v156 = vadd.f32 %v154, %v155
    %v157 = vrot.slane %v156, 2
    %v158 = vadd.f32 %v156, %v157
    %v159 = vrot.slane %v158, 1
    %v160 = vadd.f32 %v158, %v159
    %161 = vst [vmem:[%s4] sm:$0x1] %v160
    %v162 = vmul.f32 %v138, %v138
    %v163 = vmul.f32 %v139, %v139
    %v164 = vadd.f32 %v162, %v163
    %v165 = vrot.slane %v164, 4
    %v166 = vadd.f32 %v164, %v165
    %v167 = vrot.slane %v166, 2
    %v168 = vadd.f32 %v166, %v167
    %v169 = vrot.slane %v168, 1
    %v170 = vadd.f32 %v168, %v169
    %171 = vst [vmem:[%s5] sm:$0x1] %v170
  $region17: #{unet_forward.9} parent=0 // pred_fallthru
    _
  %p172 = scmp.eq.s32.totalorder 0, 0
  // Predicated region
  $region18: #{unet_forward.9} parent=0 // pred_check
    %p173 = pneg %p172
  $region19: #{unet_forward.9} parent=0 // pred_check_branch
    %175 = sbr.rel (%p173) target = $region21
  $region20: #{unet_forward.9} parent=0 // pred_region
    %s176 = smul.u32 0, 16
    %v177 = vlaneseq
    %v178 = vshrl.u32 %v177, 7
    %v179 = vadd.s32 %v178, 8
    %v180 = vstv %s176
    %v181 = vadd.s32 %v180, %v178
    %v182 = vadd.s32 %v180, %v179
    %vm183 = vcmp.lt.s32.totalorder %v181, 2
    %vm184 = vcmp.lt.s32.totalorder %v182, 2
    %v185 = vsel %vm183, %v138, 0.0
    %v186 = vsel %vm184, %v139, 0.0
    %v187 = vadd.f32 %v185, %v186
    %v188 = vrot.slane %v187, 4
    %v189 = vadd.f32 %v187, %v188
    %v190 = vrot.slane %v189, 2
    %v191 = vadd.f32 %v189, %v190
    %v192 = vrot.slane %v191, 1
    %v193 = vadd.f32 %v191, %v192
    %194 = vst [vmem:[%s4] sm:$0x1] %v193
    %v195 = vmul.f32 %v185, %v185
    %v196 = vmul.f32 %v186, %v186
    %v197 = vadd.f32 %v195, %v196
    %v198 = vrot.slane %v197, 4
    %v199 = vadd.f32 %v197, %v198
    %v200 = vrot.slane %v199, 2
    %v201 = vadd.f32 %v199, %v200
    %v202 = vrot.slane %v201, 1
    %v203 = vadd.f32 %v201, %v202
    %204 = vst [vmem:[%s5] sm:$0x1] %v203
  $region21: #{unet_forward.9} parent=0 // pred_fallthru
    _
  // Predicated region
  $region22: #{unet_forward.9} parent=0 // pred_check
    _
  $region23: #{unet_forward.9} parent=0 // pred_check_branch
    %206 = sbr.rel (0) target = $region25
  $region24: #{unet_forward.9} parent=0 // pred_region
    _
  $region25: #{unet_forward.9} parent=0 // pred_fallthru
    _
  // Predicated region
  $region26: #{unet_forward.9} parent=0 // pred_check
    _
  $region27: #{unet_forward.9} parent=0 // pred_check_branch
    %208 = sbr.rel (0) target = $region29
  $region28: #{unet_forward.9} parent=0 // pred_region
    _
  $region29: #{unet_forward.9} parent=0 // pred_fallthru
    _
  // Predicated region
  $region30: #{unet_forward.9} parent=0 // pred_check
    _
  $region31: #{unet_forward.9} parent=0 // pred_check_branch
    %210 = sbr.rel (0) target = $region33
  $region32: #{unet_forward.9} parent=0 // pred_region
    _
  $region33: #{unet_forward.9} parent=0 // pred_fallthru
    _
  // Predicated region
  $region34: #{unet_forward.9} parent=0 // pred_check
    _
  $region35: #{unet_forward.9} parent=0 // pred_check_branch
    %212 = sbr.rel (0) target = $region37
  $region36: #{unet_forward.9} parent=0 // pred_region
    _
  $region37: #{unet_forward.9} parent=0 // pred_fallthru
    _
  // Predicated region
  $region38: #{unet_forward.9} parent=0 // pred_check
    _
  $region39: #{unet_forward.9} parent=0 // pred_check_branch
    %214 = sbr.rel (0) target = $region41
  $region40: #{unet_forward.9} parent=0 // pred_region
    _
  $region41: #{unet_forward.9} parent=0 // pred_fallthru
    _
  // Predicated region
  $region42: #{unet_forward.9} parent=0 // pred_check
    _
  $region43: #{unet_forward.9} parent=0 // pred_check_branch
    %216 = sbr.rel (0) target = $region45
  $region44: #{unet_forward.9} parent=0 // pred_region
    _
  $region45: #{unet_forward.9} parent=0 // pred_fallthru
    _

// kernel: unet_forward.10
$region0: #{unet_forward.10}
  #allocation0 [shape = 'u32[]', space=smem, size = 0x4, offset = 0x4, fixed_abs, tag = 'smem constant byte address 0x4 - core index']
  #allocation1 [shape = 'u32[144,128]{1,0:T(1,128)}', space=vmem, size = 0x12000, scoped, tag = 'internal scratch']
  %s0 = inlined_call_operand.vmem [shape: bf16[16,640], index: 0, kind: input, shape index: {}]
  %s1 = inlined_call_operand.vmem [shape: bf16[640,128], index: 1, kind: input, shape index: {}]
  %s2 = inlined_call_operand.vmem [shape: f32[1,128], index: 2, kind: input, shape index: {}]
  %s3 = inlined_call_operand.vmem [shape: bf16[16,128], index: 3, kind: output, shape index: {0}]
  %s4 = inlined_call_operand.vmem [shape: f32[1,1,128], index: 4, kind: output, shape index: {1}]
  %s5 = inlined_call_operand.vmem [shape: f32[1,1,128], index: 5, kind: output, shape index: {2}]
  %6 = xla_tuple %s3, %s4, %s5
  %s7 = sld [smem:[#allocation0]]
  $region46: #{unet_forward.10} parent=0
    _
  %s9 = ssub.s32 1, %s7
  %s10 = scalar_select 0, %s9, %s7
  // Predicated region
  $region2: #{unet_forward.10} parent=0 // pred_check
    _
  $region3: #{unet_forward.10} parent=0 // pred_check_branch
    %12 = sbr.rel (0) target = $region5
  $region4: #{unet_forward.10} parent=0 // pred_region
    _
  $region5: #{unet_forward.10} parent=0 // pred_fallthru
    _
  // Predicated region
  $region6: #{unet_forward.10} parent=0 // pred_check
    _
  $region7: #{unet_forward.10} parent=0 // pred_check_branch
    %14 = sbr.rel (0) target = $region9
  $region8: #{unet_forward.10} parent=0 // pred_region
    _
  $region9: #{unet_forward.10} parent=0 // pred_fallthru
    _
  // Predicated region
  $region10: #{unet_forward.10} parent=0 // pred_check
    _
  $region11: #{unet_forward.10} parent=0 // pred_check_branch
    %16 = sbr.rel (0) target = $region13
  $region12: #{unet_forward.10} parent=0 // pred_region
    _
  $region13: #{unet_forward.10} parent=0 // pred_fallthru
    _
  %v18 = vld [vmem:[%s0] sm:$0xff]
  %v19 = vld [vmem:[%s0 + $0x8] sm:$0xff]
  %v20 = vld [vmem:[%s0 + $0x10] sm:$0xf]
  %v21 = vld [vmem:[%s0 + $0x14] sm:$0xff]
  %v22 = vld [vmem:[%s0 + $0x1c] sm:$0xff]
  %v23 = vld [vmem:[%s0 + $0x24] sm:$0xf]
  %v24 = vld [vmem:[%s1] sm:$0xf]
  %v25 = vld [vmem:[%s1 + $0x4] sm:$0xf]
  %v26 = vld [vmem:[%s1 + $0x8] sm:$0xf]
  %v27 = vld [vmem:[%s1 + $0xc] sm:$0xf]
  %v28 = vld [vmem:[%s1 + $0x10] sm:$0xf]
  %v29 = vld [vmem:[%s1 + $0x14] sm:$0xf]
  %v30 = vld [vmem:[%s1 + $0x18] sm:$0xf]
  %v31 = vld [vmem:[%s1 + $0x1c] sm:$0xf]
  %v32 = vld [vmem:[%s1 + $0x20] sm:$0xf]
  %v33 = vld [vmem:[%s1 + $0x24] sm:$0xf]
  %v34 = vld [vmem:[%s1 + $0x28] sm:$0xf]
  %v35 = vld [vmem:[%s1 + $0x2c] sm:$0xf]
  %v36 = vld [vmem:[%s1 + $0x30] sm:$0xf]
  %v37 = vld [vmem:[%s1 + $0x34] sm:$0xf]
  %v38 = vld [vmem:[%s1 + $0x38] sm:$0xf]
  %v39 = vld [vmem:[%s1 + $0x3c] sm:$0xf]
  %v40 = vld [vmem:[%s1 + $0x40] sm:$0xf]
  %v41 = vld [vmem:[%s1 + $0x44] sm:$0xf]
  %v42 = vld [vmem:[%s1 + $0x48] sm:$0xf]
  %v43 = vld [vmem:[%s1 + $0x4c] sm:$0xf]
  %v44 = vld [vmem:[%s1 + $0x50] sm:$0xf]
  %v45 = vld [vmem:[%s1 + $0x54] sm:$0xf]
  %v46 = vld [vmem:[%s1 + $0x58] sm:$0xf]
  %v47 = vld [vmem:[%s1 + $0x5c] sm:$0xf]
  %v48 = vld [vmem:[%s1 + $0x60] sm:$0xf]
  %v49 = vld [vmem:[%s1 + $0x64] sm:$0xf]
  %v50 = vld [vmem:[%s1 + $0x68] sm:$0xf]
  %v51 = vld [vmem:[%s1 + $0x6c] sm:$0xf]
  %v52 = vld [vmem:[%s1 + $0x70] sm:$0xf]
  %v53 = vld [vmem:[%s1 + $0x74] sm:$0xf]
  %v54 = vld [vmem:[%s1 + $0x78] sm:$0xf]
  %v55 = vld [vmem:[%s1 + $0x7c] sm:$0xf]
  %v56 = vld [vmem:[%s1 + $0x80] sm:$0xf]
  %v57 = vld [vmem:[%s1 + $0x84] sm:$0xf]
  %v58 = vld [vmem:[%s1 + $0x88] sm:$0xf]
  %v59 = vld [vmem:[%s1 + $0x8c] sm:$0xf]
  %v60 = vld [vmem:[%s1 + $0x90] sm:$0xf]
  %v61 = vld [vmem:[%s1 + $0x94] sm:$0xf]
  %v62 = vld [vmem:[%s1 + $0x98] sm:$0xf]
  %v63 = vld [vmem:[%s1 + $0x9c] sm:$0xf]
  %v64 = vld [vmem:[%s1 + $0xa0] sm:$0xf]
  %v65 = vld [vmem:[%s1 + $0xa4] sm:$0xf]
  %v66 = vld [vmem:[%s1 + $0xa8] sm:$0xf]
  %v67 = vld [vmem:[%s1 + $0xac] sm:$0xf]
  %v68 = vld [vmem:[%s1 + $0xb0] sm:$0xf]
  %v69 = vld [vmem:[%s1 + $0xb4] sm:$0xf]
  %v70 = vld [vmem:[%s1 + $0xb8] sm:$0xf]
  %v71 = vld [vmem:[%s1 + $0xbc] sm:$0xf]
  %v72 = vld [vmem:[%s1 + $0xc0] sm:$0xf]
  %v73 = vld [vmem:[%s1 + $0xc4] sm:$0xf]
  %v74 = vld [vmem:[%s1 + $0xc8] sm:$0xf]
  %v75 = vld [vmem:[%s1 + $0xcc] sm:$0xf]
  %v76 = vld [vmem:[%s1 + $0xd0] sm:$0xf]
  %v77 = vld [vmem:[%s1 + $0xd4] sm:$0xf]
  %v78 = vld [vmem:[%s1 + $0xd8] sm:$0xf]
  %v79 = vld [vmem:[%s1 + $0xdc] sm:$0xf]
  %v80 = vld [vmem:[%s1 + $0xe0] sm:$0xf]
  %v81 = vld [vmem:[%s1 + $0xe4] sm:$0xf]
  %v82 = vld [vmem:[%s1 + $0xe8] sm:$0xf]
  %v83 = vld [vmem:[%s1 + $0xec] sm:$0xf]
  %v84 = vld [vmem:[%s1 + $0xf0] sm:$0xf]
  %v85 = vld [vmem:[%s1 + $0xf4] sm:$0xf]
  %v86 = vld [vmem:[%s1 + $0xf8] sm:$0xf]
  %v87 = vld [vmem:[%s1 + $0xfc] sm:$0xf]
  %v88 = vld [vmem:[%s1 + $0x100] sm:$0xf]
  %v89 = vld [vmem:[%s1 + $0x104] sm:$0xf]
  %v90 = vld [vmem:[%s1 + $0x108] sm:$0xf]
  %v91 = vld [vmem:[%s1 + $0x10c] sm:$0xf]
  %v92 = vld [vmem:[%s1 + $0x110] sm:$0xf]
  %v93 = vld [vmem:[%s1 + $0x114] sm:$0xf]
  %v94 = vld [vmem:[%s1 + $0x118] sm:$0xf]
  %v95 = vld [vmem:[%s1 + $0x11c] sm:$0xf]
  %v96 = vld [vmem:[%s1 + $0x120] sm:$0xf]
  %v97 = vld [vmem:[%s1 + $0x124] sm:$0xf]
  %v98 = vld [vmem:[%s1 + $0x128] sm:$0xf]
  %v99 = vld [vmem:[%s1 + $0x12c] sm:$0xf]
  %v100 = vld [vmem:[%s1 + $0x130] sm:$0xf]
  %v101 = vld [vmem:[%s1 + $0x134] sm:$0xf]
  %v102 = vld [vmem:[%s1 + $0x138] sm:$0xf]
  %v103 = vld [vmem:[%s1 + $0x13c] sm:$0xf]
  %v104 = vld [vmem:[%s2] sm:$0x1]
  %v106 = vlaneseq
  %v107 = vshrl.u32 %v106, 7
  %v108 = vsub.s32 0, %v107
  %v109 = vrot.slane %v104, %v108
  %v117 = vunpack.c.l.b16 %v18
  %v118 = vunpack.c.h.b16 %v18
  %v119 = vunpack.c.l.b16 %v19
  %v120 = vunpack.c.h.b16 %v19
  %v121 = vunpack.c.l.b16 %v20
  %v122 = vunpack.c.l.b16 %v21
  %v123 = vunpack.c.h.b16 %v21
  %v124 = vunpack.c.l.b16 %v22
  %v125 = vunpack.c.h.b16 %v22
  %v126 = vunpack.c.l.b16 %v23
  %v127 = vpack.c.b16 %v122, %v117
  %v128 = vpack.c.b16 %v123, %v118
  %v129 = vpack.c.b16 %v124, %v119
  %v130 = vpack.c.b16 %v125, %v120
  %v131 = vpack.c.b16 %v126, %v121
  %v217 = vunpack.c.l.b16 %v24
  %v218 = vunpack.c.l.b16 %v25
  %v219 = vunpack.c.l.b16 %v26
  %v220 = vunpack.c.l.b16 %v27
  %v221 = vunpack.c.l.b16 %v28
  %v222 = vunpack.c.l.b16 %v29
  %v223 = vunpack.c.l.b16 %v30
  %v224 = vunpack.c.l.b16 %v31
  %v225 = vunpack.c.l.b16 %v32
  %v226 = vunpack.c.l.b16 %v33
  %v227 = vunpack.c.l.b16 %v34
  %v228 = vunpack.c.l.b16 %v35
  %v229 = vunpack.c.l.b16 %v36
  %v230 = vunpack.c.l.b16 %v37
  %v231 = vunpack.c.l.b16 %v38
  %v232 = vunpack.c.l.b16 %v39
  %v233 = vunpack.c.l.b16 %v40
  %v234 = vunpack.c.l.b16 %v41
  %v235 = vunpack.c.l.b16 %v42
  %v236 = vunpack.c.l.b16 %v43
  %v237 = vunpack.c.l.b16 %v44
  %v238 = vunpack.c.l.b16 %v45
  %v239 = vunpack.c.l.b16 %v46
  %v240 = vunpack.c.l.b16 %v47
  %v241 = vunpack.c.l.b16 %v48
  %v242 = vunpack.c.l.b16 %v49
  %v243 = vunpack.c.l.b16 %v50
  %v244 = vunpack.c.l.b16 %v51
  %v245 = vunpack.c.l.b16 %v52
  %v246 = vunpack.c.l.b16 %v53
  %v247 = vunpack.c.l.b16 %v54
  %v248 = vunpack.c.l.b16 %v55
  %v249 = vunpack.c.l.b16 %v56
  %v250 = vunpack.c.l.b16 %v57
  %v251 = vunpack.c.l.b16 %v58
  %v252 = vunpack.c.l.b16 %v59
  %v253 = vunpack.c.l.b16 %v60
  %v254 = vunpack.c.l.b16 %v61
  %v255 = vunpack.c.l.b16 %v62
  %v256 = vunpack.c.l.b16 %v63
  %v257 = vunpack.c.l.b16 %v64
  %v258 = vunpack.c.l.b16 %v65
  %v259 = vunpack.c.l.b16 %v66
  %v260 = vunpack.c.l.b16 %v67
  %v261 = vunpack.c.l.b16 %v68
  %v262 = vunpack.c.l.b16 %v69
  %v263 = vunpack.c.l.b16 %v70
  %v264 = vunpack.c.l.b16 %v71
  %v265 = vunpack.c.l.b16 %v72
  %v266 = vunpack.c.l.b16 %v73
  %v267 = vunpack.c.l.b16 %v74
  %v268 = vunpack.c.l.b16 %v75
  %v269 = vunpack.c.l.b16 %v76
  %v270 = vunpack.c.l.b16 %v77
  %v271 = vunpack.c.l.b16 %v78
  %v272 = vunpack.c.l.b16 %v79
  %v273 = vunpack.c.l.b16 %v80
  %v274 = vunpack.c.l.b16 %v81
  %v275 = vunpack.c.l.b16 %v82
  %v276 = vunpack.c.l.b16 %v83
  %v277 = vunpack.c.l.b16 %v84
  %v278 = vunpack.c.l.b16 %v85
  %v279 = vunpack.c.l.b16 %v86
  %v280 = vunpack.c.l.b16 %v87
  %v281 = vunpack.c.l.b16 %v88
  %v282 = vunpack.c.l.b16 %v89
  %v283 = vunpack.c.l.b16 %v90
  %v284 = vunpack.c.l.b16 %v91
  %v285 = vunpack.c.l.b16 %v92
  %v286 = vunpack.c.l.b16 %v93
  %v287 = vunpack.c.l.b16 %v94
  %v288 = vunpack.c.l.b16 %v95
  %v289 = vunpack.c.l.b16 %v96
  %v290 = vunpack.c.l.b16 %v97
  %v291 = vunpack.c.l.b16 %v98
  %v292 = vunpack.c.l.b16 %v99
  %v293 = vunpack.c.l.b16 %v100
  %v294 = vunpack.c.l.b16 %v101
  %v295 = vunpack.c.l.b16 %v102
  %v296 = vunpack.c.l.b16 %v103
  %v297 = vpack.c.b16 %v218, %v217
  %v298 = vpack.c.b16 %v220, %v219
  %v299 = vpack.c.b16 %v222, %v221
  %v300 = vpack.c.b16 %v224, %v223
  %v301 = vpack.c.b16 %v226, %v225
  %v302 = vpack.c.b16 %v228, %v227
  %v303 = vpack.c.b16 %v230, %v229
  %v304 = vpack.c.b16 %v232, %v231
  %v305 = vpack.c.b16 %v234, %v233
  %v306 = vpack.c.b16 %v236, %v235
  %v307 = vpack.c.b16 %v238, %v237
  %v308 = vpack.c.b16 %v240, %v239
  %v309 = vpack.c.b16 %v242, %v241
  %v310 = vpack.c.b16 %v244, %v243
  %v311 = vpack.c.b16 %v246, %v245
  %v312 = vpack.c.b16 %v248, %v247
  %v313 = vpack.c.b16 %v250, %v249
  %v314 = vpack.c.b16 %v252, %v251
  %v315 = vpack.c.b16 %v254, %v253
  %v316 = vpack.c.b16 %v256, %v255
  %v317 = vpack.c.b16 %v258, %v257
  %v318 = vpack.c.b16 %v260, %v259
  %v319 = vpack.c.b16 %v262, %v261
  %v320 = vpack.c.b16 %v264, %v263
  %v321 = vpack.c.b16 %v266, %v265
  %v322 = vpack.c.b16 %v268, %v267
  %v323 = vpack.c.b16 %v270, %v269
  %v324 = vpack.c.b16 %v272, %v271
  %v325 = vpack.c.b16 %v274, %v273
  %v326 = vpack.c.b16 %v276, %v275
  %v327 = vpack.c.b16 %v278, %v277
  %v328 = vpack.c.b16 %v280, %v279
  %v329 = vpack.c.b16 %v282, %v281
  %v330 = vpack.c.b16 %v284, %v283
  %v331 = vpack.c.b16 %v286, %v285
  %v332 = vpack.c.b16 %v288, %v287
  %v333 = vpack.c.b16 %v290, %v289
  %v334 = vpack.c.b16 %v292, %v291
  %v335 = vpack.c.b16 %v294, %v293
  %v336 = vpack.c.b16 %v296, %v295
  %377 = vmatprep.subr.bf16.mxu0 0
  %378 = vmatpush1.bf16.msra.mxu0 %v297
  %379 = vmatprep.subr.bf16.mxu0 0
  %380 = vmatpush1.bf16.msra.mxu0 %v298
  %381 = vmatprep.subr.bf16.mxu0 0
  %382 = vmatpush1.bf16.msra.mxu0 %v299
  %383 = vmatprep.subr.bf16.mxu0 0
  %384 = vmatpush1.bf16.msra.mxu0 %v300
  %385 = vmatprep.subr.bf16.mxu0 0
  %386 = vmatpush1.bf16.msra.mxu0 %v301
  %387 = vmatprep.subr.bf16.mxu0 0
  %388 = vmatpush1.bf16.msra.mxu0 %v302
  %389 = vmatprep.subr.bf16.mxu0 0
  %390 = vmatpush1.bf16.msra.mxu0 %v303
  %391 = vmatprep.subr.bf16.mxu0 0
  %392 = vmatpush1.bf16.msra.mxu0 %v304
  %393 = vmatprep.subr.bf16.mxu0 0
  %394 = vmatpush1.bf16.msra.mxu0 %v305
  %395 = vmatprep.subr.bf16.mxu0 0
  %396 = vmatpush1.bf16.msra.mxu0 %v306
  %397 = vmatprep.subr.bf16.mxu0 0
  %398 = vmatpush1.bf16.msra.mxu0 %v307
  %399 = vmatprep.subr.bf16.mxu0 0
  %400 = vmatpush1.bf16.msra.mxu0 %v308
  %401 = vmatprep.subr.bf16.mxu0 0
  %402 = vmatpush1.bf16.msra.mxu0 %v309
  %403 = vmatprep.subr.bf16.mxu0 0
  %404 = vmatpush1.bf16.msra.mxu0 %v310
  %405 = vmatprep.subr.bf16.mxu0 0
  %406 = vmatpush1.bf16.msra.mxu0 %v311
  %407 = vmatprep.subr.bf16.mxu0 0
  %408 = vmatpush1.bf16.msra.mxu0 %v312
  %409 = vmatprep.mubr.bf16.mxu0 %v128
  %410 = vmatmul.mubr.bf16.gmra.mrb[0].mxu0 %v127
  %v411 = vpop.f32.mrb[0].mxu0
  %v412 = vadd.f32 %v109, %v411
  %v413 = vpop.f32.mrb[0].mxu0
  %v414 = vpop.f32.mrb[0].mxu0
  %v415 = vadd.f32 %v109, %v414
  %v416 = vpop.f32.mrb[0].mxu0
  %417 = vdwg.mxu0
  %418 = vmatprep.subr.bf16.mxu0 0
  %419 = vmatpush1.bf16.msra.mxu0 %v313
  %420 = vmatprep.subr.bf16.mxu0 0
  %421 = vmatpush1.bf16.msra.mxu0 %v314
  %422 = vmatprep.subr.bf16.mxu0 0
  %423 = vmatpush1.bf16.msra.mxu0 %v315
  %424 = vmatprep.subr.bf16.mxu0 0
  %425 = vmatpush1.bf16.msra.mxu0 %v316
  %426 = vmatprep.subr.bf16.mxu0 0
  %427 = vmatpush1.bf16.msra.mxu0 %v317
  %428 = vmatprep.subr.bf16.mxu0 0
  %429 = vmatpush1.bf16.msra.mxu0 %v318
  %430 = vmatprep.subr.bf16.mxu0 0
  %431 = vmatpush1.bf16.msra.mxu0 %v319
  %432 = vmatprep.subr.bf16.mxu0 0
  %433 = vmatpush1.bf16.msra.mxu0 %v320
  %434 = vmatprep.subr.bf16.mxu0 0
  %435 = vmatpush1.bf16.msra.mxu0 %v321
  %436 = vmatprep.subr.bf16.mxu0 0
  %437 = vmatpush1.bf16.msra.mxu0 %v322
  %438 = vmatprep.subr.bf16.mxu0 0
  %439 = vmatpush1.bf16.msra.mxu0 %v323
  %440 = vmatprep.subr.bf16.mxu0 0
  %441 = vmatpush1.bf16.msra.mxu0 %v324
  %442 = vmatprep.subr.bf16.mxu0 0
  %443 = vmatpush1.bf16.msra.mxu0 %v325
  %444 = vmatprep.subr.bf16.mxu0 0
  %445 = vmatpush1.bf16.msra.mxu0 %v326
  %446 = vmatprep.subr.bf16.mxu0 0
  %447 = vmatpush1.bf16.msra.mxu0 %v327
  %448 = vmatprep.subr.bf16.mxu0 0
  %449 = vmatpush1.bf16.msra.mxu0 %v328
  %450 = vmatprep.mubr.bf16.mxu0 %v130
  %451 = vmatmul.mubr.bf16.gmra.mrb[0].mxu0 %v129
  %v452 = vpop.f32.mrb[0].mxu0
  %v453 = vadd.f32 %v412, %v452
  %v454 = vpop.f32.mrb[0].mxu0
  %v455 = vpop.f32.mrb[0].mxu0
  %v456 = vadd.f32 %v415, %v455
  %v457 = vpop.f32.mrb[0].mxu0
  %458 = vdwg.mxu0
  %459 = vmatprep.subr.bf16.mxu0 0
  %460 = vmatpush1.bf16.msra.mxu0 %v329
  %461 = vmatprep.subr.bf16.mxu0 0
  %462 = vmatpush1.bf16.msra.mxu0 %v330
  %463 = vmatprep.subr.bf16.mxu0 0
  %464 = vmatpush1.bf16.msra.mxu0 %v331
  %465 = vmatprep.subr.bf16.mxu0 0
  %466 = vmatpush1.bf16.msra.mxu0 %v332
  %467 = vmatprep.subr.bf16.mxu0 0
  %468 = vmatpush1.bf16.msra.mxu0 %v333
  %469 = vmatprep.subr.bf16.mxu0 0
  %470 = vmatpush1.bf16.msra.mxu0 %v334
  %471 = vmatprep.subr.bf16.mxu0 0
  %472 = vmatpush1.bf16.msra.mxu0 %v335
  %473 = vmatprep.subr.bf16.mxu0 0
  %474 = vmatpush1.bf16.msra.mxu0 %v336
  %475 = vmatprep.subr.bf16.mxu0 0
  %476 = vmatpush1.bf16.msra.mxu0 0
  %477 = vmatprep.subr.bf16.mxu0 0
  %478 = vmatpush1.bf16.msra.mxu0 0
  %479 = vmatprep.subr.bf16.mxu0 0
  %480 = vmatpush1.bf16.msra.mxu0 0
  %481 = vmatprep.subr.bf16.mxu0 0
  %482 = vmatpush1.bf16.msra.mxu0 0
  %483 = vmatprep.subr.bf16.mxu0 0
  %484 = vmatpush1.bf16.msra.mxu0 0
  %485 = vmatprep.subr.bf16.mxu0 0
  %486 = vmatpush1.bf16.msra.mxu0 0
  %487 = vmatprep.subr.bf16.mxu0 0
  %488 = vmatpush1.bf16.msra.mxu0 0
  %489 = vmatprep.subr.bf16.mxu0 0
  %490 = vmatpush1.bf16.msra.mxu0 0
  %491 = vmatprep.mubr.bf16.mxu0 0
  %492 = vmatmul.mubr.bf16.gmra.mrb[0].mxu0 %v131
  %v493 = vpop.f32.mrb[0].mxu0
  %v494 = vadd.f32 %v453, %v493
  %v495 = vpop.f32.mrb[0].mxu0
  %v496 = vpop.f32.mrb[0].mxu0
  %v497 = vadd.f32 %v456, %v496
  %v498 = vpop.f32.mrb[0].mxu0
  %499 = vdwg.mxu0
  %v500 = vmax.f32 %v494, 0.0
  %v501 = vmax.f32 %v497, 0.0
  %v502 = vpack.c.bf16 %v501, %v500
  %v504 = vunpack.c.l.b16 %v502
  %v505 = vunpack.c.h.b16 %v502
  %v506 = vpack.c.b16 %v504, %v504
  %v507 = vpack.c.b16 %v505, %v505
  %510 = vst [vmem:[%s3] sm:$0xf] %v506
  %511 = vst [vmem:[%s3 + $0x4] sm:$0xf] %v507
  %p512 = scmp.ne.s32.totalorder 0, 0
  // Predicated region
  $region14: #{unet_forward.10} parent=0 // pred_check
    %p513 = pneg %p512
  $region15: #{unet_forward.10} parent=0 // pred_check_branch
    %515 = sbr.rel (%p513) target = $region17
  $region16: #{unet_forward.10} parent=0 // pred_region
    %v516 = vadd.f32 %v500, %v501
    %v517 = vrot.slane %v516, 4
    %v518 = vadd.f32 %v516, %v517
    %v519 = vrot.slane %v518, 2
    %v520 = vadd.f32 %v518, %v519
    %v521 = vrot.slane %v520, 1
    %v522 = vadd.f32 %v520, %v521
    %523 = vst [vmem:[%s4] sm:$0x1] %v522
    %v524 = vmul.f32 %v500, %v500
    %v525 = vmul.f32 %v501, %v501
    %v526 = vadd.f32 %v524, %v525
    %v527 = vrot.slane %v526, 4
    %v528 = vadd.f32 %v526, %v527
    %v529 = vrot.slane %v528, 2
    %v530 = vadd.f32 %v528, %v529
    %v531 = vrot.slane %v530, 1
    %v532 = vadd.f32 %v530, %v531
    %533 = vst [vmem:[%s5] sm:$0x1] %v532
  $region17: #{unet_forward.10} parent=0 // pred_fallthru
    _
  %p534 = scmp.eq.s32.totalorder 0, 0
  // Predicated region
  $region18: #{unet_forward.10} parent=0 // pred_check
    %p535 = pneg %p534
  $region19: #{unet_forward.10} parent=0 // pred_check_branch
    %537 = sbr.rel (%p535) target = $region21
  $region20: #{unet_forward.10} parent=0 // pred_region
    %s538 = smul.u32 0, 16
    %v539 = vlaneseq
    %v540 = vshrl.u32 %v539, 7
    %v541 = vadd.s32 %v540, 8
    %v542 = vstv %s538
    %v543 = vadd.s32 %v542, %v540
    %v544 = vadd.s32 %v542, %v541
    %vm545 = vcmp.lt.s32.totalorder %v543, 2
    %vm546 = vcmp.lt.s32.totalorder %v544, 2
    %v547 = vsel %vm545, %v500, 0.0
    %v548 = vsel %vm546, %v501, 0.0
    %v549 = vadd.f32 %v547, %v548
    %v550 = vrot.slane %v549, 4
    %v551 = vadd.f32 %v549, %v550
    %v552 = vrot.slane %v551, 2
    %v553 = vadd.f32 %v551, %v552
    %v554 = vrot.slane %v553, 1
    %v555 = vadd.f32 %v553, %v554
    %556 = vst [vmem:[%s4] sm:$0x1] %v555
    %v557 = vmul.f32 %v547, %v547
    %v558 = vmul.f32 %v548, %v548
    %v559 = vadd.f32 %v557, %v558
    %v560 = vrot.slane %v559, 4
    %v561 = vadd.f32 %v559, %v560
    %v562 = vrot.slane %v561, 2
    %v563 = vadd.f32 %v561, %v562
    %v564 = vrot.slane %v563, 1
    %v565 = vadd.f32 %v563, %v564
    %566 = vst [vmem:[%s5] sm:$0x1] %v565
  $region21: #{unet_forward.10} parent=0 // pred_fallthru
    _
  // Predicated region
  $region22: #{unet_forward.10} parent=0 // pred_check
    _
  $region23: #{unet_forward.10} parent=0 // pred_check_branch
    %568 = sbr.rel (0) target = $region25
  $region24: #{unet_forward.10} parent=0 // pred_region
    _
  $region25: #{unet_forward.10} parent=0 // pred_fallthru
    _
  // Predicated region
  $region26: #{unet_forward.10} parent=0 // pred_check
    _
  $region27: #{unet_forward.10} parent=0 // pred_check_branch
    %570 = sbr.rel (0) target = $region29
  $region28: #{unet_forward.10} parent=0 // pred_region
    _
  $region29: #{unet_forward.10} parent=0 // pred_fallthru
    _
  // Predicated region
  $region30: #{unet_forward.10} parent=0 // pred_check
    _
  $region31: #{unet_forward.10} parent=0 // pred_check_branch
    %572 = sbr.rel (0) target = $region33
  $region32: #{unet_forward.10} parent=0 // pred_region
    _
  $region33: #{unet_forward.10} parent=0 // pred_fallthru
    _
  // Predicated region
  $region34: #{unet_forward.10} parent=0 // pred_check
    _
  $region35: #{unet_forward.10} parent=0 // pred_check_branch
    %574 = sbr.rel (0) target = $region37
  $region36: #{unet_forward.10} parent=0 // pred_region
    _
  $region37: #{unet_forward.10} parent=0 // pred_fallthru
    _
  // Predicated region
  $region38: #{unet_forward.10} parent=0 // pred_check
    _
  $region39: #{unet_forward.10} parent=0 // pred_check_branch
    %576 = sbr.rel (0) target = $region41
  $region40: #{unet_forward.10} parent=0 // pred_region
    _
  $region41: #{unet_forward.10} parent=0 // pred_fallthru
    _
  // Predicated region
  $region42: #{unet_forward.10} parent=0 // pred_check
    _
  $region43: #{unet_forward.10} parent=0 // pred_check_branch
    %578 = sbr.rel (0) target = $region45
  $region44: #{unet_forward.10} parent=0 // pred_region
    _
  $region45: #{unet_forward.10} parent=0 // pred_fallthru
    _

// kernel: tile.74
$region0: #{tile.74}
  #allocation0 [shape = 's32[1]{0}', space=sflag, size = 0x4, scoped, tag = 'scoped memory for tile.74']
  %s0 = inlined_call_operand.vmem [shape: f32[256], index: 0, kind: input, shape index: {}]
  %s1 = inlined_call_operand.vmem [shape: f32[9,256], index: 1, kind: output, shape index: {}]
  // Predicated region
  $region2: #{tile.74} parent=0 // pred_check
    _
  $region3: #{tile.74} parent=0 // pred_check_branch
    %3 = sbr.rel (0) target = $region5
  $region4: #{tile.74} parent=0 // pred_region
    _
  $region5: #{tile.74} parent=0 // pred_fallthru
    _
  %v4 = vld [vmem:[%s0] ss:$0 sm:$0xff]
  %5 = vst [vmem:[%s1] sm:$0xff] %v4
  %s6 = scalar_lea.vmem %s1, 16
  %7 = vst [vmem:[%s6] sm:$0xff] %v4
  %s8 = scalar_lea.vmem %s0, 1
  %v9 = vld [vmem:[%s8] ss:$0 sm:$0xff]
  %s10 = scalar_lea.vmem %s1, 8
  %11 = vst [vmem:[%s10] sm:$0xff] %v9
  %s12 = scalar_lea.vmem %s1, 24
  %13 = vst [vmem:[%s12] sm:$0xff] %v9

// kernel: mul.64
$region0: #{mul.64}
  %s0 = inlined_call_operand.vmem [shape: f32[9,256], index: 0, kind: input, shape index: {}]
  %s1 = inlined_call_operand.vmem [shape: f32[2304], index: 1, kind: output, shape index: {}]
  %v2 = vld [vmem:[%s0] sm:$0xff]
  %3 = vst [vmem:[%s1] ss:$2 sm:$0xff] %v2
  %s4 = scalar_lea.vmem %s0, 8
  %v5 = vld [vmem:[%s4] sm:$0xff]
  %s6 = scalar_lea.vmem %s1, 1
  %7 = vst [vmem:[%s6] ss:$2 sm:$0xff] %v5
  %s8 = scalar_lea.vmem %s0, 16
  %s9 = smov 3
  %v10 = vld [vmem:[%s8] ss:$8 sm:%s9]
  %s11 = scalar_lea.vmem %s1, 16
  %12 = vst [vmem:[%s11] sm:$0x3] %v10

// kernel: unet_forward.11
$region0: #{unet_forward.11}
  #allocation0 [shape = 'u32[]', space=smem, size = 0x4, offset = 0x4, fixed_abs, tag = 'smem constant byte address 0x4 - core index']
  #allocation1 [shape = 'u32[144,128]{1,0:T(1,128)}', space=vmem, size = 0x12000, scoped, tag = 'internal scratch']
  %s0 = inlined_call_operand.vmem [shape: bf16[16,1152], index: 0, kind: input, shape index: {}]
  %s1 = inlined_call_operand.vmem [shape: bf16[1152,256], index: 1, kind: input, shape index: {}]
  %s2 = inlined_call_operand.vmem [shape: f32[1,256], index: 2, kind: input, shape index: {}]
  %s3 = inlined_call_operand.vmem [shape: bf16[16,256], index: 3, kind: output, shape index: {0}]
  %s4 = inlined_call_operand.vmem [shape: f32[1,1,256], index: 4, kind: output, shape index: {1}]
  %s5 = inlined_call_operand.vmem [shape: f32[1,1,256], index: 5, kind: output, shape index: {2}]
  %6 = xla_tuple %s3, %s4, %s5
  %s7 = sld [smem:[#allocation0]]
  $region46: #{unet_forward.11} parent=0
    _
  %s9 = ssub.s32 1, %s7
  %s10 = scalar_select 0, %s9, %s7
  // Predicated region
  $region2: #{unet_forward.11} parent=0 // pred_check
    _
  $region3: #{unet_forward.11} parent=0 // pred_check_branch
    %12 = sbr.rel (0) target = $region5
  $region4: #{unet_forward.11} parent=0 // pred_region
    _
  $region5: #{unet_forward.11} parent=0 // pred_fallthru
    _
  // Predicated region
  $region6: #{unet_forward.11} parent=0 // pred_check
    _
  $region7: #{unet_forward.11} parent=0 // pred_check_branch
    %14 = sbr.rel (0) target = $region9
  $region8: #{unet_forward.11} parent=0 // pred_region
    _
  $region9: #{unet_forward.11} parent=0 // pred_fallthru
    _
  // Predicated region
  $region10: #{unet_forward.11} parent=0 // pred_check
    _
  $region11: #{unet_forward.11} parent=0 // pred_check_branch
    %16 = sbr.rel (0) target = $region13
  $region12: #{unet_forward.11} parent=0 // pred_region
    _
  $region13: #{unet_forward.11} parent=0 // pred_fallthru
    _
  %v18 = vld [vmem:[%s0] sm:$0xff]
  %v19 = vld [vmem:[%s0 + $0x8] sm:$0xff]
  %v20 = vld [vmem:[%s0 + $0x10] sm:$0xff]
  %v21 = vld [vmem:[%s0 + $0x18] sm:$0xff]
  %v22 = vld [vmem:[%s0 + $0x20] sm:$0xf]
  %v23 = vld [vmem:[%s0 + $0x24] sm:$0xff]
  %v24 = vld [vmem:[%s0 + $0x2c] sm:$0xff]
  %v25 = vld [vmem:[%s0 + $0x34] sm:$0xff]
  %v26 = vld [vmem:[%s0 + $0x3c] sm:$0xff]
  %v27 = vld [vmem:[%s0 + $0x44] sm:$0xf]
  %v28 = vld [vmem:[%s1] sm:$0xff]
  %v29 = vld [vmem:[%s1 + $0x8] sm:$0xff]
  %v30 = vld [vmem:[%s1 + $0x10] sm:$0xff]
  %v31 = vld [vmem:[%s1 + $0x18] sm:$0xff]
  %v32 = vld [vmem:[%s1 + $0x20] sm:$0xff]
  %v33 = vld [vmem:[%s1 + $0x28] sm:$0xff]
  %v34 = vld [vmem:[%s1 + $0x30] sm:$0xff]
  %v35 = vld [vmem:[%s1 + $0x38] sm:$0xff]
  %v36 = vld [vmem:[%s1 + $0x40] sm:$0xff]
  %v37 = vld [vmem:[%s1 + $0x48] sm:$0xff]
  %v38 = vld [vmem:[%s1 + $0x50] sm:$0xff]
  %v39 = vld [vmem:[%s1 + $0x58] sm:$0xff]
  %v40 = vld [vmem:[%s1 + $0x60] sm:$0xff]
  %v41 = vld [vmem:[%s1 + $0x68] sm:$0xff]
  %v42 = vld [vmem:[%s1 + $0x70] sm:$0xff]
  %v43 = vld [vmem:[%s1 + $0x78] sm:$0xff]
  %v44 = vld [vmem:[%s1 + $0x80] sm:$0xff]
  %v45 = vld [vmem:[%s1 + $0x88] sm:$0xff]
  %v46 = vld [vmem:[%s1 + $0x90] sm:$0xff]
  %v47 = vld [vmem:[%s1 + $0x98] sm:$0xff]
  %v48 = vld [vmem:[%s1 + $0xa0] sm:$0xff]
  %v49 = vld [vmem:[%s1 + $0xa8] sm:$0xff]
  %v50 = vld [vmem:[%s1 + $0xb0] sm:$0xff]
  %v51 = vld [vmem:[%s1 + $0xb8] sm:$0xff]
  %v52 = vld [vmem:[%s1 + $0xc0] sm:$0xff]
  %v53 = vld [vmem:[%s1 + $0xc8] sm:$0xff]
  %v54 = vld [vmem:[%s1 + $0xd0] sm:$0xff]
  %v55 = vld [vmem:[%s1 + $0xd8] sm:$0xff]
  %v56 = vld [vmem:[%s1 + $0xe0] sm:$0xff]
  %v57 = vld [vmem:[%s1 + $0xe8] sm:$0xff]
  %v58 = vld [vmem:[%s1 + $0xf0] sm:$0xff]
  %v59 = vld [vmem:[%s1 + $0xf8] sm:$0xff]
  %v60 = vld [vmem:[%s1 + $0x100] sm:$0xff]
  %v61 = vld [vmem:[%s1 + $0x108] sm:$0xff]
  %v62 = vld [vmem:[%s1 + $0x110] sm:$0xff]
  %v63 = vld [vmem:[%s1 + $0x118] sm:$0xff]
  %v64 = vld [vmem:[%s1 + $0x120] sm:$0xff]
  %v65 = vld [vmem:[%s1 + $0x128] sm:$0xff]
  %v66 = vld [vmem:[%s1 + $0x130] sm:$0xff]
  %v67 = vld [vmem:[%s1 + $0x138] sm:$0xff]
  %v68 = vld [vmem:[%s1 + $0x140] sm:$0xff]
  %v69 = vld [vmem:[%s1 + $0x148] sm:$0xff]
  %v70 = vld [vmem:[%s1 + $0x150] sm:$0xff]
  %v71 = vld [vmem:[%s1 + $0x158] sm:$0xff]
  %v72 = vld [vmem:[%s1 + $0x160] sm:$0xff]
  %v73 = vld [vmem:[%s1 + $0x168] sm:$0xff]
  %v74 = vld [vmem:[%s1 + $0x170] sm:$0xff]
  %v75 = vld [vmem:[%s1 + $0x178] sm:$0xff]
  %v76 = vld [vmem:[%s1 + $0x180] sm:$0xff]
  %v77 = vld [vmem:[%s1 + $0x188] sm:$0xff]
  %v78 = vld [vmem:[%s1 + $0x190] sm:$0xff]
  %v79 = vld [vmem:[%s1 + $0x198] sm:$0xff]
  %v80 = vld [vmem:[%s1 + $0x1a0] sm:$0xff]
  %v81 = vld [vmem:[%s1 + $0x1a8] sm:$0xff]
  %v82 = vld [vmem:[%s1 + $0x1b0] sm:$0xff]
  %v83 = vld [vmem:[%s1 + $0x1b8] sm:$0xff]
  %v84 = vld [vmem:[%s1 + $0x1c0] sm:$0xff]
  %v85 = vld [vmem:[%s1 + $0x1c8] sm:$0xff]
  %v86 = vld [vmem:[%s1 + $0x1d0] sm:$0xff]
  %v87 = vld [vmem:[%s1 + $0x1d8] sm:$0xff]
  %v88 = vld [vmem:[%s1 + $0x1e0] sm:$0xff]
  %v89 = vld [vmem:[%s1 + $0x1e8] sm:$0xff]
  %v90 = vld [vmem:[%s1 + $0x1f0] sm:$0xff]
  %v91 = vld [vmem:[%s1 + $0x1f8] sm:$0xff]
  %v92 = vld [vmem:[%s1 + $0x200] sm:$0xff]
  %v93 = vld [vmem:[%s1 + $0x208] sm:$0xff]
  %v94 = vld [vmem:[%s1 + $0x210] sm:$0xff]
  %v95 = vld [vmem:[%s1 + $0x218] sm:$0xff]
  %v96 = vld [vmem:[%s1 + $0x220] sm:$0xff]
  %v97 = vld [vmem:[%s1 + $0x228] sm:$0xff]
  %v98 = vld [vmem:[%s1 + $0x230] sm:$0xff]
  %v99 = vld [vmem:[%s1 + $0x238] sm:$0xff]
  %v100 = vld [vmem:[%s1 + $0x240] sm:$0xff]
  %v101 = vld [vmem:[%s1 + $0x248] sm:$0xff]
  %v102 = vld [vmem:[%s1 + $0x250] sm:$0xff]
  %v103 = vld [vmem:[%s1 + $0x258] sm:$0xff]
  %v104 = vld [vmem:[%s1 + $0x260] sm:$0xff]
  %v105 = vld [vmem:[%s1 + $0x268] sm:$0xff]
  %v106 = vld [vmem:[%s1 + $0x270] sm:$0xff]
  %v107 = vld [vmem:[%s1 + $0x278] sm:$0xff]
  %v108 = vld [vmem:[%s1 + $0x280] sm:$0xff]
  %v109 = vld [vmem:[%s1 + $0x288] sm:$0xff]
  %v110 = vld [vmem:[%s1 + $0x290] sm:$0xff]
  %v111 = vld [vmem:[%s1 + $0x298] sm:$0xff]
  %v112 = vld [vmem:[%s1 + $0x2a0] sm:$0xff]
  %v113 = vld [vmem:[%s1 + $0x2a8] sm:$0xff]
  %v114 = vld [vmem:[%s1 + $0x2b0] sm:$0xff]
  %v115 = vld [vmem:[%s1 + $0x2b8] sm:$0xff]
  %v116 = vld [vmem:[%s1 + $0x2c0] sm:$0xff]
  %v117 = vld [vmem:[%s1 + $0x2c8] sm:$0xff]
  %v118 = vld [vmem:[%s1 + $0x2d0] sm:$0xff]
  %v119 = vld [vmem:[%s1 + $0x2d8] sm:$0xff]
  %v120 = vld [vmem:[%s1 + $0x2e0] sm:$0xff]
  %v121 = vld [vmem:[%s1 + $0x2e8] sm:$0xff]
  %v122 = vld [vmem:[%s1 + $0x2f0] sm:$0xff]
  %v123 = vld [vmem:[%s1 + $0x2f8] sm:$0xff]
  %v124 = vld [vmem:[%s1 + $0x300] sm:$0xff]
  %v125 = vld [vmem:[%s1 + $0x308] sm:$0xff]
  %v126 = vld [vmem:[%s1 + $0x310] sm:$0xff]
  %v127 = vld [vmem:[%s1 + $0x318] sm:$0xff]
  %v128 = vld [vmem:[%s1 + $0x320] sm:$0xff]
  %v129 = vld [vmem:[%s1 + $0x328] sm:$0xff]
  %v130 = vld [vmem:[%s1 + $0x330] sm:$0xff]
  %v131 = vld [vmem:[%s1 + $0x338] sm:$0xff]
  %v132 = vld [vmem:[%s1 + $0x340] sm:$0xff]
  %v133 = vld [vmem:[%s1 + $0x348] sm:$0xff]
  %v134 = vld [vmem:[%s1 + $0x350] sm:$0xff]
  %v135 = vld [vmem:[%s1 + $0x358] sm:$0xff]
  %v136 = vld [vmem:[%s1 + $0x360] sm:$0xff]
  %v137 = vld [vmem:[%s1 + $0x368] sm:$0xff]
  %v138 = vld [vmem:[%s1 + $0x370] sm:$0xff]
  %v139 = vld [vmem:[%s1 + $0x378] sm:$0xff]
  %v140 = vld [vmem:[%s1 + $0x380] sm:$0xff]
  %v141 = vld [vmem:[%s1 + $0x388] sm:$0xff]
  %v142 = vld [vmem:[%s1 + $0x390] sm:$0xff]
  %v143 = vld [vmem:[%s1 + $0x398] sm:$0xff]
  %v144 = vld [vmem:[%s1 + $0x3a0] sm:$0xff]
  %v145 = vld [vmem:[%s1 + $0x3a8] sm:$0xff]
  %v146 = vld [vmem:[%s1 + $0x3b0] sm:$0xff]
  %v147 = vld [vmem:[%s1 + $0x3b8] sm:$0xff]
  %v148 = vld [vmem:[%s1 + $0x3c0] sm:$0xff]
  %v149 = vld [vmem:[%s1 + $0x3c8] sm:$0xff]
  %v150 = vld [vmem:[%s1 + $0x3d0] sm:$0xff]
  %v151 = vld [vmem:[%s1 + $0x3d8] sm:$0xff]
  %v152 = vld [vmem:[%s1 + $0x3e0] sm:$0xff]
  %v153 = vld [vmem:[%s1 + $0x3e8] sm:$0xff]
  %v154 = vld [vmem:[%s1 + $0x3f0] sm:$0xff]
  %v155 = vld [vmem:[%s1 + $0x3f8] sm:$0xff]
  %v156 = vld [vmem:[%s1 + $0x400] sm:$0xff]
  %v157 = vld [vmem:[%s1 + $0x408] sm:$0xff]
  %v158 = vld [vmem:[%s1 + $0x410] sm:$0xff]
  %v159 = vld [vmem:[%s1 + $0x418] sm:$0xff]
  %v160 = vld [vmem:[%s1 + $0x420] sm:$0xff]
  %v161 = vld [vmem:[%s1 + $0x428] sm:$0xff]
  %v162 = vld [vmem:[%s1 + $0x430] sm:$0xff]
  %v163 = vld [vmem:[%s1 + $0x438] sm:$0xff]
  %v164 = vld [vmem:[%s1 + $0x440] sm:$0xff]
  %v165 = vld [vmem:[%s1 + $0x448] sm:$0xff]
  %v166 = vld [vmem:[%s1 + $0x450] sm:$0xff]
  %v167 = vld [vmem:[%s1 + $0x458] sm:$0xff]
  %v168 = vld [vmem:[%s1 + $0x460] sm:$0xff]
  %v169 = vld [vmem:[%s1 + $0x468] sm:$0xff]
  %v170 = vld [vmem:[%s1 + $0x470] sm:$0xff]
  %v171 = vld [vmem:[%s1 + $0x478] sm:$0xff]
  %v172 = vld [vmem:[%s2] sm:$0x3]
  %v174 = vlaneseq
  %v175 = vshrl.u32 %v174, 7
  %v176 = vsub.s32 0, %v175
  %v177 = vrot.slane %v172, %v176
  %v178 = vlaneseq
  %v179 = vshrl.u32 %v178, 7
  %v180 = vsub.s32 1, %v179
  %v181 = vrot.slane %v172, %v180
  %v194 = vunpack.c.l.b16 %v18
  %v195 = vunpack.c.h.b16 %v18
  %v196 = vunpack.c.l.b16 %v19
  %v197 = vunpack.c.h.b16 %v19
  %v198 = vunpack.c.l.b16 %v20
  %v199 = vunpack.c.h.b16 %v20
  %v200 = vunpack.c.l.b16 %v21
  %v201 = vunpack.c.h.b16 %v21
  %v202 = vunpack.c.l.b16 %v22
  %v203 = vunpack.c.l.b16 %v23
  %v204 = vunpack.c.h.b16 %v23
  %v205 = vunpack.c.l.b16 %v24
  %v206 = vunpack.c.h.b16 %v24
  %v207 = vunpack.c.l.b16 %v25
  %v208 = vunpack.c.h.b16 %v25
  %v209 = vunpack.c.l.b16 %v26
  %v210 = vunpack.c.h.b16 %v26
  %v211 = vunpack.c.l.b16 %v27
  %v212 = vpack.c.b16 %v203, %v194
  %v213 = vpack.c.b16 %v204, %v195
  %v214 = vpack.c.b16 %v205, %v196
  %v215 = vpack.c.b16 %v206, %v197
  %v216 = vpack.c.b16 %v207, %v198
  %v217 = vpack.c.b16 %v208, %v199
  %v218 = vpack.c.b16 %v209, %v200
  %v219 = vpack.c.b16 %v210, %v201
  %v220 = vpack.c.b16 %v211, %v202
  %v374 = vunpack.c.l.b16 %v28
  %v375 = vunpack.c.h.b16 %v28
  %v376 = vunpack.c.l.b16 %v29
  %v377 = vunpack.c.h.b16 %v29
  %v378 = vunpack.c.l.b16 %v30
  %v379 = vunpack.c.h.b16 %v30
  %v380 = vunpack.c.l.b16 %v31
  %v381 = vunpack.c.h.b16 %v31
  %v382 = vunpack.c.l.b16 %v32
  %v383 = vunpack.c.h.b16 %v32
  %v384 = vunpack.c.l.b16 %v33
  %v385 = vunpack.c.h.b16 %v33
  %v386 = vunpack.c.l.b16 %v34
  %v387 = vunpack.c.h.b16 %v34
  %v388 = vunpack.c.l.b16 %v35
  %v389 = vunpack.c.h.b16 %v35
  %v390 = vunpack.c.l.b16 %v36
  %v391 = vunpack.c.h.b16 %v36
  %v392 = vunpack.c.l.b16 %v37
  %v393 = vunpack.c.h.b16 %v37
  %v394 = vunpack.c.l.b16 %v38
  %v395 = vunpack.c.h.b16 %v38
  %v396 = vunpack.c.l.b16 %v39
  %v397 = vunpack.c.h.b16 %v39
  %v398 = vunpack.c.l.b16 %v40
  %v399 = vunpack.c.h.b16 %v40
  %v400 = vunpack.c.l.b16 %v41
  %v401 = vunpack.c.h.b16 %v41
  %v402 = vunpack.c.l.b16 %v42
  %v403 = vunpack.c.h.b16 %v42
  %v404 = vunpack.c.l.b16 %v43
  %v405 = vunpack.c.h.b16 %v43
  %v406 = vunpack.c.l.b16 %v44
  %v407 = vunpack.c.h.b16 %v44
  %v408 = vunpack.c.l.b16 %v45
  %v409 = vunpack.c.h.b16 %v45
  %v410 = vunpack.c.l.b16 %v46
  %v411 = vunpack.c.h.b16 %v46
  %v412 = vunpack.c.l.b16 %v47
  %v413 = vunpack.c.h.b16 %v47
  %v414 = vunpack.c.l.b16 %v48
  %v415 = vunpack.c.h.b16 %v48
  %v416 = vunpack.c.l.b16 %v49
  %v417 = vunpack.c.h.b16 %v49
  %v418 = vunpack.c.l.b16 %v50
  %v419 = vunpack.c.h.b16 %v50
  %v420 = vunpack.c.l.b16 %v51
  %v421 = vunpack.c.h.b16 %v51
  %v422 = vunpack.c.l.b16 %v52
  %v423 = vunpack.c.h.b16 %v52
  %v424 = vunpack.c.l.b16 %v53
  %v425 = vunpack.c.h.b16 %v53
  %v426 = vunpack.c.l.b16 %v54
  %v427 = vunpack.c.h.b16 %v54
  %v428 = vunpack.c.l.b16 %v55
  %v429 = vunpack.c.h.b16 %v55
  %v430 = vunpack.c.l.b16 %v56
  %v431 = vunpack.c.h.b16 %v56
  %v432 = vunpack.c.l.b16 %v57
  %v433 = vunpack.c.h.b16 %v57
  %v434 = vunpack.c.l.b16 %v58
  %v435 = vunpack.c.h.b16 %v58
  %v436 = vunpack.c.l.b16 %v59
  %v437 = vunpack.c.h.b16 %v59
  %v438 = vunpack.c.l.b16 %v60
  %v439 = vunpack.c.h.b16 %v60
  %v440 = vunpack.c.l.b16 %v61
  %v441 = vunpack.c.h.b16 %v61
  %v442 = vunpack.c.l.b16 %v62
  %v443 = vunpack.c.h.b16 %v62
  %v444 = vunpack.c.l.b16 %v63
  %v445 = vunpack.c.h.b16 %v63
  %v446 = vunpack.c.l.b16 %v64
  %v447 = vunpack.c.h.b16 %v64
  %v448 = vunpack.c.l.b16 %v65
  %v449 = vunpack.c.h.b16 %v65
  %v450 = vunpack.c.l.b16 %v66
  %v451 = vunpack.c.h.b16 %v66
  %v452 = vunpack.c.l.b16 %v67
  %v453 = vunpack.c.h.b16 %v67
  %v454 = vunpack.c.l.b16 %v68
  %v455 = vunpack.c.h.b16 %v68
  %v456 = vunpack.c.l.b16 %v69
  %v457 = vunpack.c.h.b16 %v69
  %v458 = vunpack.c.l.b16 %v70
  %v459 = vunpack.c.h.b16 %v70
  %v460 = vunpack.c.l.b16 %v71
  %v461 = vunpack.c.h.b16 %v71
  %v462 = vunpack.c.l.b16 %v72
  %v463 = vunpack.c.h.b16 %v72
  %v464 = vunpack.c.l.b16 %v73
  %v465 = vunpack.c.h.b16 %v73
  %v466 = vunpack.c.l.b16 %v74
  %v467 = vunpack.c.h.b16 %v74
  %v468 = vunpack.c.l.b16 %v75
  %v469 = vunpack.c.h.b16 %v75
  %v470 = vunpack.c.l.b16 %v76
  %v471 = vunpack.c.h.b16 %v76
  %v472 = vunpack.c.l.b16 %v77
  %v473 = vunpack.c.h.b16 %v77
  %v474 = vunpack.c.l.b16 %v78
  %v475 = vunpack.c.h.b16 %v78
  %v476 = vunpack.c.l.b16 %v79
  %v477 = vunpack.c.h.b16 %v79
  %v478 = vunpack.c.l.b16 %v80
  %v479 = vunpack.c.h.b16 %v80
  %v480 = vunpack.c.l.b16 %v81
  %v481 = vunpack.c.h.b16 %v81
  %v482 = vunpack.c.l.b16 %v82
  %v483 = vunpack.c.h.b16 %v82
  %v484 = vunpack.c.l.b16 %v83
  %v485 = vunpack.c.h.b16 %v83
  %v486 = vunpack.c.l.b16 %v84
  %v487 = vunpack.c.h.b16 %v84
  %v488 = vunpack.c.l.b16 %v85
  %v489 = vunpack.c.h.b16 %v85
  %v490 = vunpack.c.l.b16 %v86
  %v491 = vunpack.c.h.b16 %v86
  %v492 = vunpack.c.l.b16 %v87
  %v493 = vunpack.c.h.b16 %v87
  %v494 = vunpack.c.l.b16 %v88
  %v495 = vunpack.c.h.b16 %v88
  %v496 = vunpack.c.l.b16 %v89
  %v497 = vunpack.c.h.b16 %v89
  %v498 = vunpack.c.l.b16 %v90
  %v499 = vunpack.c.h.b16 %v90
  %v500 = vunpack.c.l.b16 %v91
  %v501 = vunpack.c.h.b16 %v91
  %v502 = vunpack.c.l.b16 %v92
  %v503 = vunpack.c.h.b16 %v92
  %v504 = vunpack.c.l.b16 %v93
  %v505 = vunpack.c.h.b16 %v93
  %v506 = vunpack.c.l.b16 %v94
  %v507 = vunpack.c.h.b16 %v94
  %v508 = vunpack.c.l.b16 %v95
  %v509 = vunpack.c.h.b16 %v95
  %v510 = vunpack.c.l.b16 %v96
  %v511 = vunpack.c.h.b16 %v96
  %v512 = vunpack.c.l.b16 %v97
  %v513 = vunpack.c.h.b16 %v97
  %v514 = vunpack.c.l.b16 %v98
  %v515 = vunpack.c.h.b16 %v98
  %v516 = vunpack.c.l.b16 %v99
  %v517 = vunpack.c.h.b16 %v99
  %v518 = vunpack.c.l.b16 %v100
  %v519 = vunpack.c.h.b16 %v100
  %v520 = vunpack.c.l.b16 %v101
  %v521 = vunpack.c.h.b16 %v101
  %v522 = vunpack.c.l.b16 %v102
  %v523 = vunpack.c.h.b16 %v102
  %v524 = vunpack.c.l.b16 %v103
  %v525 = vunpack.c.h.b16 %v103
  %v526 = vunpack.c.l.b16 %v104
  %v527 = vunpack.c.h.b16 %v104
  %v528 = vunpack.c.l.b16 %v105
  %v529 = vunpack.c.h.b16 %v105
  %v530 = vunpack.c.l.b16 %v106
  %v531 = vunpack.c.h.b16 %v106
  %v532 = vunpack.c.l.b16 %v107
  %v533 = vunpack.c.h.b16 %v107
  %v534 = vunpack.c.l.b16 %v108
  %v535 = vunpack.c.h.b16 %v108
  %v536 = vunpack.c.l.b16 %v109
  %v537 = vunpack.c.h.b16 %v109
  %v538 = vunpack.c.l.b16 %v110
  %v539 = vunpack.c.h.b16 %v110
  %v540 = vunpack.c.l.b16 %v111
  %v541 = vunpack.c.h.b16 %v111
  %v542 = vunpack.c.l.b16 %v112
  %v543 = vunpack.c.h.b16 %v112
  %v544 = vunpack.c.l.b16 %v113
  %v545 = vunpack.c.h.b16 %v113
  %v546 = vunpack.c.l.b16 %v114
  %v547 = vunpack.c.h.b16 %v114
  %v548 = vunpack.c.l.b16 %v115
  %v549 = vunpack.c.h.b16 %v115
  %v550 = vunpack.c.l.b16 %v116
  %v551 = vunpack.c.h.b16 %v116
  %v552 = vunpack.c.l.b16 %v117
  %v553 = vunpack.c.h.b16 %v117
  %v554 = vunpack.c.l.b16 %v118
  %v555 = vunpack.c.h.b16 %v118
  %v556 = vunpack.c.l.b16 %v119
  %v557 = vunpack.c.h.b16 %v119
  %v558 = vunpack.c.l.b16 %v120
  %v559 = vunpack.c.h.b16 %v120
  %v560 = vunpack.c.l.b16 %v121
  %v561 = vunpack.c.h.b16 %v121
  %v562 = vunpack.c.l.b16 %v122
  %v563 = vunpack.c.h.b16 %v122
  %v564 = vunpack.c.l.b16 %v123
  %v565 = vunpack.c.h.b16 %v123
  %v566 = vunpack.c.l.b16 %v124
  %v567 = vunpack.c.h.b16 %v124
  %v568 = vunpack.c.l.b16 %v125
  %v569 = vunpack.c.h.b16 %v125
  %v570 = vunpack.c.l.b16 %v126
  %v571 = vunpack.c.h.b16 %v126
  %v572 = vunpack.c.l.b16 %v127
  %v573 = vunpack.c.h.b16 %v127
  %v574 = vunpack.c.l.b16 %v128
  %v575 = vunpack.c.h.b16 %v128
  %v576 = vunpack.c.l.b16 %v129
  %v577 = vunpack.c.h.b16 %v129
  %v578 = vunpack.c.l.b16 %v130
  %v579 = vunpack.c.h.b16 %v130
  %v580 = vunpack.c.l.b16 %v131
  %v581 = vunpack.c.h.b16 %v131
  %v582 = vunpack.c.l.b16 %v132
  %v583 = vunpack.c.h.b16 %v132
  %v584 = vunpack.c.l.b16 %v133
  %v585 = vunpack.c.h.b16 %v133
  %v586 = vunpack.c.l.b16 %v134
  %v587 = vunpack.c.h.b16 %v134
  %v588 = vunpack.c.l.b16 %v135
  %v589 = vunpack.c.h.b16 %v135
  %v590 = vunpack.c.l.b16 %v136
  %v591 = vunpack.c.h.b16 %v136
  %v592 = vunpack.c.l.b16 %v137
  %v593 = vunpack.c.h.b16 %v137
  %v594 = vunpack.c.l.b16 %v138
  %v595 = vunpack.c.h.b16 %v138
  %v596 = vunpack.c.l.b16 %v139
  %v597 = vunpack.c.h.b16 %v139
  %v598 = vunpack.c.l.b16 %v140
  %v599 = vunpack.c.h.b16 %v140
  %v600 = vunpack.c.l.b16 %v141
  %v601 = vunpack.c.h.b16 %v141
  %v602 = vunpack.c.l.b16 %v142
  %v603 = vunpack.c.h.b16 %v142
  %v604 = vunpack.c.l.b16 %v143
  %v605 = vunpack.c.h.b16 %v143
  %v606 = vunpack.c.l.b16 %v144
  %v607 = vunpack.c.h.b16 %v144
  %v608 = vunpack.c.l.b16 %v145
  %v609 = vunpack.c.h.b16 %v145
  %v610 = vunpack.c.l.b16 %v146
  %v611 = vunpack.c.h.b16 %v146
  %v612 = vunpack.c.l.b16 %v147
  %v613 = vunpack.c.h.b16 %v147
  %v614 = vunpack.c.l.b16 %v148
  %v615 = vunpack.c.h.b16 %v148
  %v616 = vunpack.c.l.b16 %v149
  %v617 = vunpack.c.h.b16 %v149
  %v618 = vunpack.c.l.b16 %v150
  %v619 = vunpack.c.h.b16 %v150
  %v620 = vunpack.c.l.b16 %v151
  %v621 = vunpack.c.h.b16 %v151
  %v622 = vunpack.c.l.b16 %v152
  %v623 = vunpack.c.h.b16 %v152
  %v624 = vunpack.c.l.b16 %v153
  %v625 = vunpack.c.h.b16 %v153
  %v626 = vunpack.c.l.b16 %v154
  %v627 = vunpack.c.h.b16 %v154
  %v628 = vunpack.c.l.b16 %v155
  %v629 = vunpack.c.h.b16 %v155
  %v630 = vunpack.c.l.b16 %v156
  %v631 = vunpack.c.h.b16 %v156
  %v632 = vunpack.c.l.b16 %v157
  %v633 = vunpack.c.h.b16 %v157
  %v634 = vunpack.c.l.b16 %v158
  %v635 = vunpack.c.h.b16 %v158
  %v636 = vunpack.c.l.b16 %v159
  %v637 = vunpack.c.h.b16 %v159
  %v638 = vunpack.c.l.b16 %v160
  %v639 = vunpack.c.h.b16 %v160
  %v640 = vunpack.c.l.b16 %v161
  %v641 = vunpack.c.h.b16 %v161
  %v642 = vunpack.c.l.b16 %v162
  %v643 = vunpack.c.h.b16 %v162
  %v644 = vunpack.c.l.b16 %v163
  %v645 = vunpack.c.h.b16 %v163
  %v646 = vunpack.c.l.b16 %v164
  %v647 = vunpack.c.h.b16 %v164
  %v648 = vunpack.c.l.b16 %v165
  %v649 = vunpack.c.h.b16 %v165
  %v650 = vunpack.c.l.b16 %v166
  %v651 = vunpack.c.h.b16 %v166
  %v652 = vunpack.c.l.b16 %v167
  %v653 = vunpack.c.h.b16 %v167
  %v654 = vunpack.c.l.b16 %v168
  %v655 = vunpack.c.h.b16 %v168
  %v656 = vunpack.c.l.b16 %v169
  %v657 = vunpack.c.h.b16 %v169
  %v658 = vunpack.c.l.b16 %v170
  %v659 = vunpack.c.h.b16 %v170
  %v660 = vunpack.c.l.b16 %v171
  %v661 = vunpack.c.h.b16 %v171
  %v662 = vpack.c.b16 %v376, %v374
  %v663 = vpack.c.b16 %v377, %v375
  %v664 = vpack.c.b16 %v380, %v378
  %v665 = vpack.c.b16 %v381, %v379
  %v666 = vpack.c.b16 %v384, %v382
  %v667 = vpack.c.b16 %v385, %v383
  %v668 = vpack.c.b16 %v388, %v386
  %v669 = vpack.c.b16 %v389, %v387
  %v670 = vpack.c.b16 %v392, %v390
  %v671 = vpack.c.b16 %v393, %v391
  %v672 = vpack.c.b16 %v396, %v394
  %v673 = vpack.c.b16 %v397, %v395
  %v674 = vpack.c.b16 %v400, %v398
  %v675 = vpack.c.b16 %v401, %v399
  %v676 = vpack.c.b16 %v404, %v402
  %v677 = vpack.c.b16 %v405, %v403
  %v678 = vpack.c.b16 %v408, %v406
  %v679 = vpack.c.b16 %v409, %v407
  %v680 = vpack.c.b16 %v412, %v410
  %v681 = vpack.c.b16 %v413, %v411
  %v682 = vpack.c.b16 %v416, %v414
  %v683 = vpack.c.b16 %v417, %v415
  %v684 = vpack.c.b16 %v420, %v418
  %v685 = vpack.c.b16 %v421, %v419
  %v686 = vpack.c.b16 %v424, %v422
  %v687 = vpack.c.b16 %v425, %v423
  %v688 = vpack.c.b16 %v428, %v426
  %v689 = vpack.c.b16 %v429, %v427
  %v690 = vpack.c.b16 %v432, %v430
  %v691 = vpack.c.b16 %v433, %v431
  %v692 = vpack.c.b16 %v436, %v434
  %v693 = vpack.c.b16 %v437, %v435
  %v694 = vpack.c.b16 %v440, %v438
  %v695 = vpack.c.b16 %v441, %v439
  %v696 = vpack.c.b16 %v444, %v442
  %v697 = vpack.c.b16 %v445, %v443
  %v698 = vpack.c.b16 %v448, %v446
  %v699 = vpack.c.b16 %v449, %v447
  %v700 = vpack.c.b16 %v452, %v450
  %v701 = vpack.c.b16 %v453, %v451
  %v702 = vpack.c.b16 %v456, %v454
  %v703 = vpack.c.b16 %v457, %v455
  %v704 = vpack.c.b16 %v460, %v458
  %v705 = vpack.c.b16 %v461, %v459
  %v706 = vpack.c.b16 %v464, %v462
  %v707 = vpack.c.b16 %v465, %v463
  %v708 = vpack.c.b16 %v468, %v466
  %v709 = vpack.c.b16 %v469, %v467
  %v710 = vpack.c.b16 %v472, %v470
  %v711 = vpack.c.b16 %v473, %v471
  %v712 = vpack.c.b16 %v476, %v474
  %v713 = vpack.c.b16 %v477, %v475
  %v714 = vpack.c.b16 %v480, %v478
  %v715 = vpack.c.b16 %v481, %v479
  %v716 = vpack.c.b16 %v484, %v482
  %v717 = vpack.c.b16 %v485, %v483
  %v718 = vpack.c.b16 %v488, %v486
  %v719 = vpack.c.b16 %v489, %v487
  %v720 = vpack.c.b16 %v492, %v490
  %v721 = vpack.c.b16 %v493, %v491
  %v722 = vpack.c.b16 %v496, %v494
  %v723 = vpack.c.b16 %v497, %v495
  %v724 = vpack.c.b16 %v500, %v498
  %v725 = vpack.c.b16 %v501, %v499
  %v726 = vpack.c.b16 %v504, %v502
  %v727 = vpack.c.b16 %v505, %v503
  %v728 = vpack.c.b16 %v508, %v506
  %v729 = vpack.c.b16 %v509, %v507
  %v730 = vpack.c.b16 %v512, %v510
  %v731 = vpack.c.b16 %v513, %v511
  %v732 = vpack.c.b16 %v516, %v514
  %v733 = vpack.c.b16 %v517, %v515
  %v734 = vpack.c.b16 %v520, %v518
  %v735 = vpack.c.b16 %v521, %v519
  %v736 = vpack.c.b16 %v524, %v522
  %v737 = vpack.c.b16 %v525, %v523
  %v738 = vpack.c.b16 %v528, %v526
  %v739 = vpack.c.b16 %v529, %v527
  %v740 = vpack.c.b16 %v532, %v530
  %v741 = vpack.c.b16 %v533, %v531
  %v742 = vpack.c.b16 %v536, %v534
  %v743 = vpack.c.b16 %v537, %v535
  %v744 = vpack.c.b16 %v540, %v538
  %v745 = vpack.c.b16 %v541, %v539
  %v746 = vpack.c.b16 %v544, %v542
  %v747 = vpack.c.b16 %v545, %v543
  %v748 = vpack.c.b16 %v548, %v546
  %v749 = vpack.c.b16 %v549, %v547
  %v750 = vpack.c.b16 %v552, %v550
  %v751 = vpack.c.b16 %v553, %v551
  %v752 = vpack.c.b16 %v556, %v554
  %v753 = vpack.c.b16 %v557, %v555
  %v754 = vpack.c.b16 %v560, %v558
  %v755 = vpack.c.b16 %v561, %v559
  %v756 = vpack.c.b16 %v564, %v562
  %v757 = vpack.c.b16 %v565, %v563
  %v758 = vpack.c.b16 %v568, %v566
  %v759 = vpack.c.b16 %v569, %v567
  %v760 = vpack.c.b16 %v572, %v570
  %v761 = vpack.c.b16 %v573, %v571
  %v762 = vpack.c.b16 %v576, %v574
  %v763 = vpack.c.b16 %v577, %v575
  %v764 = vpack.c.b16 %v580, %v578
  %v765 = vpack.c.b16 %v581, %v579
  %v766 = vpack.c.b16 %v584, %v582
  %v767 = vpack.c.b16 %v585, %v583
  %v768 = vpack.c.b16 %v588, %v586
  %v769 = vpack.c.b16 %v589, %v587
  %v770 = vpack.c.b16 %v592, %v590
  %v771 = vpack.c.b16 %v593, %v591
  %v772 = vpack.c.b16 %v596, %v594
  %v773 = vpack.c.b16 %v597, %v595
  %v774 = vpack.c.b16 %v600, %v598
  %v775 = vpack.c.b16 %v601, %v599
  %v776 = vpack.c.b16 %v604, %v602
  %v777 = vpack.c.b16 %v605, %v603
  %v778 = vpack.c.b16 %v608, %v606
  %v779 = vpack.c.b16 %v609, %v607
  %v780 = vpack.c.b16 %v612, %v610
  %v781 = vpack.c.b16 %v613, %v611
  %v782 = vpack.c.b16 %v616, %v614
  %v783 = vpack.c.b16 %v617, %v615
  %v784 = vpack.c.b16 %v620, %v618
  %v785 = vpack.c.b16 %v621, %v619
  %v786 = vpack.c.b16 %v624, %v622
  %v787 = vpack.c.b16 %v625, %v623
  %v788 = vpack.c.b16 %v628, %v626
  %v789 = vpack.c.b16 %v629, %v627
  %v790 = vpack.c.b16 %v632, %v630
  %v791 = vpack.c.b16 %v633, %v631
  %v792 = vpack.c.b16 %v636, %v634
  %v793 = vpack.c.b16 %v637, %v635
  %v794 = vpack.c.b16 %v640, %v638
  %v795 = vpack.c.b16 %v641, %v639
  %v796 = vpack.c.b16 %v644, %v642
  %v797 = vpack.c.b16 %v645, %v643
  %v798 = vpack.c.b16 %v648, %v646
  %v799 = vpack.c.b16 %v649, %v647
  %v800 = vpack.c.b16 %v652, %v650
  %v801 = vpack.c.b16 %v653, %v651
  %v802 = vpack.c.b16 %v656, %v654
  %v803 = vpack.c.b16 %v657, %v655
  %v804 = vpack.c.b16 %v660, %v658
  %v805 = vpack.c.b16 %v661, %v659
  %950 = vmatprep.subr.bf16.mxu0 %v663
  %951 = vmatpush1.bf16.msra.mxu0 %v662
  %952 = vmatprep.subr.bf16.mxu0 %v665
  %953 = vmatpush1.bf16.msra.mxu0 %v664
  %954 = vmatprep.subr.bf16.mxu0 %v667
  %955 = vmatpush1.bf16.msra.mxu0 %v666
  %956 = vmatprep.subr.bf16.mxu0 %v669
  %957 = vmatpush1.bf16.msra.mxu0 %v668
  %958 = vmatprep.subr.bf16.mxu0 %v671
  %959 = vmatpush1.bf16.msra.mxu0 %v670
  %960 = vmatprep.subr.bf16.mxu0 %v673
  %961 = vmatpush1.bf16.msra.mxu0 %v672
  %962 = vmatprep.subr.bf16.mxu0 %v675
  %963 = vmatpush1.bf16.msra.mxu0 %v674
  %964 = vmatprep.subr.bf16.mxu0 %v677
  %965 = vmatpush1.bf16.msra.mxu0 %v676
  %966 = vmatprep.subr.bf16.mxu0 %v679
  %967 = vmatpush1.bf16.msra.mxu0 %v678
  %968 = vmatprep.subr.bf16.mxu0 %v681
  %969 = vmatpush1.bf16.msra.mxu0 %v680
  %970 = vmatprep.subr.bf16.mxu0 %v683
  %971 = vmatpush1.bf16.msra.mxu0 %v682
  %972 = vmatprep.subr.bf16.mxu0 %v685
  %973 = vmatpush1.bf16.msra.mxu0 %v684
  %974 = vmatprep.subr.bf16.mxu0 %v687
  %975 = vmatpush1.bf16.msra.mxu0 %v686
  %976 = vmatprep.subr.bf16.mxu0 %v689
  %977 = vmatpush1.bf16.msra.mxu0 %v688
  %978 = vmatprep.subr.bf16.mxu0 %v691
  %979 = vmatpush1.bf16.msra.mxu0 %v690
  %980 = vmatprep.subr.bf16.mxu0 %v693
  %981 = vmatpush1.bf16.msra.mxu0 %v692
  %982 = vmatprep.mubr.bf16.mxu0 %v213
  %983 = vmatmul.mubr.bf16.gmra.mrb[0].mxu0 %v212
  %v984 = vpop.f32.mrb[0].mxu0
  %v985 = vadd.f32 %v177, %v984
  %v986 = vpop.f32.mrb[0].mxu0
  %v987 = vadd.f32 %v181, %v986
  %v988 = vpop.f32.mrb[0].mxu0
  %v989 = vadd.f32 %v177, %v988
  %v990 = vpop.f32.mrb[0].mxu0
  %v991 = vadd.f32 %v181, %v990
  %992 = vdwg.mxu0
  %993 = vmatprep.subr.bf16.mxu0 %v695
  %994 = vmatpush1.bf16.msra.mxu0 %v694
  %995 = vmatprep.subr.bf16.mxu0 %v697
  %996 = vmatpush1.bf16.msra.mxu0 %v696
  %997 = vmatprep.subr.bf16.mxu0 %v699
  %998 = vmatpush1.bf16.msra.mxu0 %v698
  %999 = vmatprep.subr.bf16.mxu0 %v701
  %1000 = vmatpush1.bf16.msra.mxu0 %v700
  %1001 = vmatprep.subr.bf16.mxu0 %v703
  %1002 = vmatpush1.bf16.msra.mxu0 %v702
  %1003 = vmatprep.subr.bf16.mxu0 %v705
  %1004 = vmatpush1.bf16.msra.mxu0 %v704
  %1005 = vmatprep.subr.bf16.mxu0 %v707
  %1006 = vmatpush1.bf16.msra.mxu0 %v706
  %1007 = vmatprep.subr.bf16.mxu0 %v709
  %1008 = vmatpush1.bf16.msra.mxu0 %v708
  %1009 = vmatprep.subr.bf16.mxu0 %v711
  %1010 = vmatpush1.bf16.msra.mxu0 %v710
  %1011 = vmatprep.subr.bf16.mxu0 %v713
  %1012 = vmatpush1.bf16.msra.mxu0 %v712
  %1013 = vmatprep.subr.bf16.mxu0 %v715
  %1014 = vmatpush1.bf16.msra.mxu0 %v714
  %1015 = vmatprep.subr.bf16.mxu0 %v717
  %1016 = vmatpush1.bf16.msra.mxu0 %v716
  %1017 = vmatprep.subr.bf16.mxu0 %v719
  %1018 = vmatpush1.bf16.msra.mxu0 %v718
  %1019 = vmatprep.subr.bf16.mxu0 %v721
  %1020 = vmatpush1.bf16.msra.mxu0 %v720
  %1021 = vmatprep.subr.bf16.mxu0 %v723
  %1022 = vmatpush1.bf16.msra.mxu0 %v722
  %1023 = vmatprep.subr.bf16.mxu0 %v725
  %1024 = vmatpush1.bf16.msra.mxu0 %v724
  %1025 = vmatprep.mubr.bf16.mxu0 %v215
  %1026 = vmatmul.mubr.bf16.gmra.mrb[0].mxu0 %v214
  %v1027 = vpop.f32.mrb[0].mxu0
  %v1028 = vadd.f32 %v985, %v1027
  %v1029 = vpop.f32.mrb[0].mxu0
  %v1030 = vadd.f32 %v987, %v1029
  %v1031 = vpop.f32.mrb[0].mxu0
  %v1032 = vadd.f32 %v989, %v1031
  %v1033 = vpop.f32.mrb[0].mxu0
  %v1034 = vadd.f32 %v991, %v1033
  %1035 = vdwg.mxu0
  %1036 = vmatprep.subr.bf16.mxu0 %v727
  %1037 = vmatpush1.bf16.msra.mxu0 %v726
  %1038 = vmatprep.subr.bf16.mxu0 %v729
  %1039 = vmatpush1.bf16.msra.mxu0 %v728
  %1040 = vmatprep.subr.bf16.mxu0 %v731
  %1041 = vmatpush1.bf16.msra.mxu0 %v730
  %1042 = vmatprep.subr.bf16.mxu0 %v733
  %1043 = vmatpush1.bf16.msra.mxu0 %v732
  %1044 = vmatprep.subr.bf16.mxu0 %v735
  %1045 = vmatpush1.bf16.msra.mxu0 %v734
  %1046 = vmatprep.subr.bf16.mxu0 %v737
  %1047 = vmatpush1.bf16.msra.mxu0 %v736
  %1048 = vmatprep.subr.bf16.mxu0 %v739
  %1049 = vmatpush1.bf16.msra.mxu0 %v738
  %1050 = vmatprep.subr.bf16.mxu0 %v741
  %1051 = vmatpush1.bf16.msra.mxu0 %v740
  %1052 = vmatprep.subr.bf16.mxu0 %v743
  %1053 = vmatpush1.bf16.msra.mxu0 %v742
  %1054 = vmatprep.subr.bf16.mxu0 %v745
  %1055 = vmatpush1.bf16.msra.mxu0 %v744
  %1056 = vmatprep.subr.bf16.mxu0 %v747
  %1057 = vmatpush1.bf16.msra.mxu0 %v746
  %1058 = vmatprep.subr.bf16.mxu0 %v749
  %1059 = vmatpush1.bf16.msra.mxu0 %v748
  %1060 = vmatprep.subr.bf16.mxu0 %v751
  %1061 = vmatpush1.bf16.msra.mxu0 %v750
  %1062 = vmatprep.subr.bf16.mxu0 %v753
  %1063 = vmatpush1.bf16.msra.mxu0 %v752
  %1064 = vmatprep.subr.bf16.mxu0 %v755
  %1065 = vmatpush1.bf16.msra.mxu0 %v754
  %1066 = vmatprep.subr.bf16.mxu0 %v757
  %1067 = vmatpush1.bf16.msra.mxu0 %v756
  %1068 = vmatprep.mubr.bf16.mxu0 %v217
  %1069 = vmatmul.mubr.bf16.gmra.mrb[0].mxu0 %v216
  %v1070 = vpop.f32.mrb[0].mxu0
  %v1071 = vadd.f32 %v1028, %v1070
  %v1072 = vpop.f32.mrb[0].mxu0
  %v1073 = vadd.f32 %v1030, %v1072
  %v1074 = vpop.f32.mrb[0].mxu0
  %v1075 = vadd.f32 %v1032, %v1074
  %v1076 = vpop.f32.mrb[0].mxu0
  %v1077 = vadd.f32 %v1034, %v1076
  %1078 = vdwg.mxu0
  %1079 = vmatprep.subr.bf16.mxu0 %v759
  %1080 = vmatpush1.bf16.msra.mxu0 %v758
  %1081 = vmatprep.subr.bf16.mxu0 %v761
  %1082 = vmatpush1.bf16.msra.mxu0 %v760
  %1083 = vmatprep.subr.bf16.mxu0 %v763
  %1084 = vmatpush1.bf16.msra.mxu0 %v762
  %1085 = vmatprep.subr.bf16.mxu0 %v765
  %1086 = vmatpush1.bf16.msra.mxu0 %v764
  %1087 = vmatprep.subr.bf16.mxu0 %v767
  %1088 = vmatpush1.bf16.msra.mxu0 %v766
  %1089 = vmatprep.subr.bf16.mxu0 %v769
  %1090 = vmatpush1.bf16.msra.mxu0 %v768
  %1091 = vmatprep.subr.bf16.mxu0 %v771
  %1092 = vmatpush1.bf16.msra.mxu0 %v770
  %1093 = vmatprep.subr.bf16.mxu0 %v773
  %1094 = vmatpush1.bf16.msra.mxu0 %v772
  %1095 = vmatprep.subr.bf16.mxu0 %v775
  %1096 = vmatpush1.bf16.msra.mxu0 %v774
  %1097 = vmatprep.subr.bf16.mxu0 %v777
  %1098 = vmatpush1.bf16.msra.mxu0 %v776
  %1099 = vmatprep.subr.bf16.mxu0 %v779
  %1100 = vmatpush1.bf16.msra.mxu0 %v778
  %1101 = vmatprep.subr.bf16.mxu0 %v781
  %1102 = vmatpush1.bf16.msra.mxu0 %v780
  %1103 = vmatprep.subr.bf16.mxu0 %v783
  %1104 = vmatpush1.bf16.msra.mxu0 %v782
  %1105 = vmatprep.subr.bf16.mxu0 %v785
  %1106 = vmatpush1.bf16.msra.mxu0 %v784
  %1107 = vmatprep.subr.bf16.mxu0 %v787
  %1108 = vmatpush1.bf16.msra.mxu0 %v786
  %1109 = vmatprep.subr.bf16.mxu0 %v789
  %1110 = vmatpush1.bf16.msra.mxu0 %v788
  %1111 = vmatprep.mubr.bf16.mxu0 %v219
  %1112 = vmatmul.mubr.bf16.gmra.mrb[0].mxu0 %v218
  %v1113 = vpop.f32.mrb[0].mxu0
  %v1114 = vadd.f32 %v1071, %v1113
  %v1115 = vpop.f32.mrb[0].mxu0
  %v1116 = vadd.f32 %v1073, %v1115
  %v1117 = vpop.f32.mrb[0].mxu0
  %v1118 = vadd.f32 %v1075, %v1117
  %v1119 = vpop.f32.mrb[0].mxu0
  %v1120 = vadd.f32 %v1077, %v1119
  %1121 = vdwg.mxu0
  %1122 = vmatprep.subr.bf16.mxu0 %v791
  %1123 = vmatpush1.bf16.msra.mxu0 %v790
  %1124 = vmatprep.subr.bf16.mxu0 %v793
  %1125 = vmatpush1.bf16.msra.mxu0 %v792
  %1126 = vmatprep.subr.bf16.mxu0 %v795
  %1127 = vmatpush1.bf16.msra.mxu0 %v794
  %1128 = vmatprep.subr.bf16.mxu0 %v797
  %1129 = vmatpush1.bf16.msra.mxu0 %v796
  %1130 = vmatprep.subr.bf16.mxu0 %v799
  %1131 = vmatpush1.bf16.msra.mxu0 %v798
  %1132 = vmatprep.subr.bf16.mxu0 %v801
  %1133 = vmatpush1.bf16.msra.mxu0 %v800
  %1134 = vmatprep.subr.bf16.mxu0 %v803
  %1135 = vmatpush1.bf16.msra.mxu0 %v802
  %1136 = vmatprep.subr.bf16.mxu0 %v805
  %1137 = vmatpush1.bf16.msra.mxu0 %v804
  %1138 = vmatprep.subr.bf16.mxu0 0
  %1139 = vmatpush1.bf16.msra.mxu0 0
  %1140 = vmatprep.subr.bf16.mxu0 0
  %1141 = vmatpush1.bf16.msra.mxu0 0
  %1142 = vmatprep.subr.bf16.mxu0 0
  %1143 = vmatpush1.bf16.msra.mxu0 0
  %1144 = vmatprep.subr.bf16.mxu0 0
  %1145 = vmatpush1.bf16.msra.mxu0 0
  %1146 = vmatprep.subr.bf16.mxu0 0
  %1147 = vmatpush1.bf16.msra.mxu0 0
  %1148 = vmatprep.subr.bf16.mxu0 0
  %1149 = vmatpush1.bf16.msra.mxu0 0
  %1150 = vmatprep.subr.bf16.mxu0 0
  %1151 = vmatpush1.bf16.msra.mxu0 0
  %1152 = vmatprep.subr.bf16.mxu0 0
  %1153 = vmatpush1.bf16.msra.mxu0 0
  %1154 = vmatprep.mubr.bf16.mxu0 0
  %1155 = vmatmul.mubr.bf16.gmra.mrb[0].mxu0 %v220
  %v1156 = vpop.f32.mrb[0].mxu0
  %v1157 = vadd.f32 %v1114, %v1156
  %v1158 = vpop.f32.mrb[0].mxu0
  %v1159 = vadd.f32 %v1116, %v1158
  %v1160 = vpop.f32.mrb[0].mxu0
  %v1161 = vadd.f32 %v1118, %v1160
  %v1162 = vpop.f32.mrb[0].mxu0
  %v1163 = vadd.f32 %v1120, %v1162
  %1164 = vdwg.mxu0
  %v1165 = vmax.f32 %v1157, 0.0
  %v1166 = vmax.f32 %v1159, 0.0
  %v1167 = vmax.f32 %v1161, 0.0
  %v1168 = vmax.f32 %v1163, 0.0
  %v1169 = vpack.c.bf16 %v1167, %v1165
  %v1170 = vpack.c.bf16 %v1168, %v1166
  %v1173 = vunpack.c.l.b16 %v1169
  %v1174 = vunpack.c.l.b16 %v1170
  %v1175 = vunpack.c.h.b16 %v1169
  %v1176 = vunpack.c.h.b16 %v1170
  %v1177 = vpack.c.b16 %v1174, %v1173
  %v1178 = vpack.c.b16 %v1176, %v1175
  %1181 = vst [vmem:[%s3] sm:$0xff] %v1177
  %1182 = vst [vmem:[%s3 + $0x8] sm:$0xff] %v1178
  %p1183 = scmp.ne.s32.totalorder 0, 0
  // Predicated region
  $region14: #{unet_forward.11} parent=0 // pred_check
    %p1184 = pneg %p1183
  $region15: #{unet_forward.11} parent=0 // pred_check_branch
    %1186 = sbr.rel (%p1184) target = $region17
  $region16: #{unet_forward.11} parent=0 // pred_region
    %v1187 = vadd.f32 %v1165, %v1167
    %v1188 = vrot.slane %v1187, 4
    %v1189 = vadd.f32 %v1187, %v1188
    %v1190 = vrot.slane %v1189, 2
    %v1191 = vadd.f32 %v1189, %v1190
    %v1192 = vrot.slane %v1191, 1
    %v1193 = vadd.f32 %v1191, %v1192
    %v1194 = vadd.f32 %v1166, %v1168
    %v1195 = vrot.slane %v1194, 4
    %v1196 = vadd.f32 %v1194, %v1195
    %v1197 = vrot.slane %v1196, 2
    %v1198 = vadd.f32 %v1196, %v1197
    %v1199 = vrot.slane %v1198, 1
    %v1200 = vadd.f32 %v1198, %v1199
    %v1203 = vcombine.low %v1193, %v1200
    %v1205 = vunpack.c.l.s4 1966171168
    %v1206 = vunpack.c.0.s8 %v1205
    %v1207 = vlaneseq
    %v1208 = vshrl.u32 %v1207, 7
    %v1209 = vsub.s32 %v1206, %v1208
    %v1210 = vrot.slane %v1203, %v1209
    %v1212 = vunpack.c.l.s4 1966171168
    %v1213 = vunpack.c.0.s8 %v1212
    %v1214 = vlaneseq
    %v1215 = vshrl.u32 %v1214, 7
    %v1216 = vsub.s32 %v1213, %v1215
    %v1217 = vrot.slane %v1210, %v1216
    %v1219 = vlaneseq
    %vm1220 = vcmp.ge.s32.totalorder %v1219, 0
    %vm1221 = vcmp.lt.s32.totalorder %v1219, 256
    %vm1222 = vmand %vm1220, %vm1221
    %1223 = vst.msk [vmem:[%s4] sm:$0x3] %vm1222, %v1217
    %v1224 = vmul.f32 %v1165, %v1165
    %v1225 = vmul.f32 %v1166, %v1166
    %v1226 = vmul.f32 %v1167, %v1167
    %v1227 = vmul.f32 %v1168, %v1168
    %v1228 = vadd.f32 %v1224, %v1226
    %v1229 = vrot.slane %v1228, 4
    %v1230 = vadd.f32 %v1228, %v1229
    %v1231 = vrot.slane %v1230, 2
    %v1232 = vadd.f32 %v1230, %v1231
    %v1233 = vrot.slane %v1232, 1
    %v1234 = vadd.f32 %v1232, %v1233
    %v1235 = vadd.f32 %v1225, %v1227
    %v1236 = vrot.slane %v1235, 4
    %v1237 = vadd.f32 %v1235, %v1236
    %v1238 = vrot.slane %v1237, 2
    %v1239 = vadd.f32 %v1237, %v1238
    %v1240 = vrot.slane %v1239, 1
    %v1241 = vadd.f32 %v1239, %v1240
    %v1244 = vcombine.low %v1234, %v1241
    %v1246 = vunpack.c.l.s4 1966171168
    %v1247 = vunpack.c.0.s8 %v1246
    %v1248 = vlaneseq
    %v1249 = vshrl.u32 %v1248, 7
    %v1250 = vsub.s32 %v1247, %v1249
    %v1251 = vrot.slane %v1244, %v1250
    %v1253 = vunpack.c.l.s4 1966171168
    %v1254 = vunpack.c.0.s8 %v1253
    %v1255 = vlaneseq
    %v1256 = vshrl.u32 %v1255, 7
    %v1257 = vsub.s32 %v1254, %v1256
    %v1258 = vrot.slane %v1251, %v1257
    %1260 = vst.msk [vmem:[%s5] sm:$0x3] %vm1222, %v1258
  $region17: #{unet_forward.11} parent=0 // pred_fallthru
    _
  %p1261 = scmp.eq.s32.totalorder 0, 0
  // Predicated region
  $region18: #{unet_forward.11} parent=0 // pred_check
    %p1262 = pneg %p1261
  $region19: #{unet_forward.11} parent=0 // pred_check_branch
    %1264 = sbr.rel (%p1262) target = $region21
  $region20: #{unet_forward.11} parent=0 // pred_region
    %s1265 = smul.u32 0, 16
    %v1266 = vlaneseq
    %v1267 = vshrl.u32 %v1266, 7
    %v1268 = vadd.s32 %v1267, 8
    %v1269 = vstv %s1265
    %v1270 = vadd.s32 %v1269, %v1267
    %v1271 = vadd.s32 %v1269, %v1268
    %vm1272 = vcmp.lt.s32.totalorder %v1270, 2
    %vm1273 = vcmp.lt.s32.totalorder %v1271, 2
    %v1274 = vsel %vm1272, %v1165, 0.0
    %v1275 = vsel %vm1272, %v1166, 0.0
    %v1276 = vsel %vm1273, %v1167, 0.0
    %v1277 = vsel %vm1273, %v1168, 0.0
    %v1278 = vadd.f32 %v1274, %v1276
    %v1279 = vrot.slane %v1278, 4
    %v1280 = vadd.f32 %v1278, %v1279
    %v1281 = vrot.slane %v1280, 2
    %v1282 = vadd.f32 %v1280, %v1281
    %v1283 = vrot.slane %v1282, 1
    %v1284 = vadd.f32 %v1282, %v1283
    %v1285 = vadd.f32 %v1275, %v1277
    %v1286 = vrot.slane %v1285, 4
    %v1287 = vadd.f32 %v1285, %v1286
    %v1288 = vrot.slane %v1287, 2
    %v1289 = vadd.f32 %v1287, %v1288
    %v1290 = vrot.slane %v1289, 1
    %v1291 = vadd.f32 %v1289, %v1290
    %v1294 = vcombine.low %v1284, %v1291
    %v1296 = vunpack.c.l.s4 1966171168
    %v1297 = vunpack.c.0.s8 %v1296
    %v1298 = vlaneseq
    %v1299 = vshrl.u32 %v1298, 7
    %v1300 = vsub.s32 %v1297, %v1299
    %v1301 = vrot.slane %v1294, %v1300
    %v1303 = vunpack.c.l.s4 1966171168
    %v1304 = vunpack.c.0.s8 %v1303
    %v1305 = vlaneseq
    %v1306 = vshrl.u32 %v1305, 7
    %v1307 = vsub.s32 %v1304, %v1306
    %v1308 = vrot.slane %v1301, %v1307
    %v1310 = vlaneseq
    %vm1311 = vcmp.ge.s32.totalorder %v1310, 0
    %vm1312 = vcmp.lt.s32.totalorder %v1310, 256
    %vm1313 = vmand %vm1311, %vm1312
    %1314 = vst.msk [vmem:[%s4] sm:$0x3] %vm1313, %v1308
    %v1315 = vmul.f32 %v1274, %v1274
    %v1316 = vmul.f32 %v1275, %v1275
    %v1317 = vmul.f32 %v1276, %v1276
    %v1318 = vmul.f32 %v1277, %v1277
    %v1319 = vadd.f32 %v1315, %v1317
    %v1320 = vrot.slane %v1319, 4
    %v1321 = vadd.f32 %v1319, %v1320
    %v1322 = vrot.slane %v1321, 2
    %v1323 = vadd.f32 %v1321, %v1322
    %v1324 = vrot.slane %v1323, 1
    %v1325 = vadd.f32 %v1323, %v1324
    %v1326 = vadd.f32 %v1316, %v1318
    %v1327 = vrot.slane %v1326, 4
    %v1328 = vadd.f32 %v1326, %v1327
    %v1329 = vrot.slane %v1328, 2
    %v1330 = vadd.f32 %v1328, %v1329
    %v1331 = vrot.slane %v1330, 1
    %v1332 = vadd.f32 %v1330, %v1331
    %v1335 = vcombine.low %v1325, %v1332
    %v1337 = vunpack.c.l.s4 1966171168
    %v1338 = vunpack.c.0.s8 %v1337
    %v1339 = vlaneseq
    %v1340 = vshrl.u32 %v1339, 7
    %v1341 = vsub.s32 %v1338, %v1340
    %v1342 = vrot.slane %v1335, %v1341
    %v1344 = vunpack.c.l.s4 1966171168
    %v1345 = vunpack.c.0.s8 %v1344
    %v1346 = vlaneseq
    %v1347 = vshrl.u32 %v1346, 7
    %v1348 = vsub.s32 %v1345, %v1347
    %v1349 = vrot.slane %v1342, %v1348
    %1351 = vst.msk [vmem:[%s5] sm:$0x3] %vm1313, %v1349
  $region21: #{unet_forward.11} parent=0 // pred_fallthru
    _
  // Predicated region
  $region22: #{unet_forward.11} parent=0 // pred_check
    _
  $region23: #{unet_forward.11} parent=0 // pred_check_branch
    %1353 = sbr.rel (0) target = $region25
  $region24: #{unet_forward.11} parent=0 // pred_region
    _
  $region25: #{unet_forward.11} parent=0 // pred_fallthru
    _
  // Predicated region
  $region26: #{unet_forward.11} parent=0 // pred_check
    _
  $region27: #{unet_forward.11} parent=0 // pred_check_branch
    %1355 = sbr.rel (0) target = $region29
  $region28: #{unet_forward.11} parent=0 // pred_region
    _
  $region29: #{unet_forward.11} parent=0 // pred_fallthru
    _
  // Predicated region
  $region30: #{unet_forward.11} parent=0 // pred_check
    _
  $region31: #{unet_forward.11} parent=0 // pred_check_branch
    %1357 = sbr.rel (0) target = $region33
  $region32: #{unet_forward.11} parent=0 // pred_region
    _
  $region33: #{unet_forward.11} parent=0 // pred_fallthru
    _
  // Predicated region
  $region34: #{unet_forward.11} parent=0 // pred_check
    _
  $region35: #{unet_forward.11} parent=0 // pred_check_branch
    %1359 = sbr.rel (0) target = $region37
  $region36: #{unet_forward.11} parent=0 // pred_region
    _
  $region37: #{unet_forward.11} parent=0 // pred_fallthru
    _
  // Predicated region
  $region38: #{unet_forward.11} parent=0 // pred_check
    _
  $region39: #{unet_forward.11} parent=0 // pred_check_branch
    %1361 = sbr.rel (0) target = $region41
  $region40: #{unet_forward.11} parent=0 // pred_region
    _
  $region41: #{unet_forward.11} parent=0 // pred_fallthru
    _
  // Predicated region
  $region42: #{unet_forward.11} parent=0 // pred_check
    _
  $region43: #{unet_forward.11} parent=0 // pred_check_branch
    %1363 = sbr.rel (0) target = $region45
  $region44: #{unet_forward.11} parent=0 // pred_region
    _
  $region45: #{unet_forward.11} parent=0 // pred_fallthru
    _

// kernel: unet_forward.8
$region0: #{unet_forward.8}
  #allocation0 [shape = 'u32[]', space=smem, size = 0x4, offset = 0x4, fixed_abs, tag = 'smem constant byte address 0x4 - core index']
  #allocation1 [shape = 'u32[144,128]{1,0:T(1,128)}', space=vmem, size = 0x12000, scoped, tag = 'internal scratch']
  %s0 = inlined_call_operand.vmem [shape: bf16[16,128], index: 0, kind: input, shape index: {}]
  %s1 = inlined_call_operand.vmem [shape: bf16[128,128], index: 1, kind: input, shape index: {}]
  %s2 = inlined_call_operand.vmem [shape: f32[1,128], index: 2, kind: input, shape index: {}]
  %s3 = inlined_call_operand.vmem [shape: bf16[128,128], index: 3, kind: input, shape index: {}]
  %s4 = inlined_call_operand.vmem [shape: f32[1,128], index: 4, kind: input, shape index: {}]
  %s5 = inlined_call_operand.vmem [shape: f32[16,128], index: 5, kind: output, shape index: {}]
  %s6 = sld [smem:[#allocation0]]
  $region30: #{unet_forward.8} parent=0
    _
  %s8 = ssub.s32 1, %s6
  %s9 = scalar_select 0, %s8, %s6
  // Predicated region
  $region2: #{unet_forward.8} parent=0 // pred_check
    _
  $region3: #{unet_forward.8} parent=0 // pred_check_branch
    %11 = sbr.rel (0) target = $region5
  $region4: #{unet_forward.8} parent=0 // pred_region
    _
  $region5: #{unet_forward.8} parent=0 // pred_fallthru
    _
  // Predicated region
  $region6: #{unet_forward.8} parent=0 // pred_check
    _
  $region7: #{unet_forward.8} parent=0 // pred_check_branch
    %13 = sbr.rel (0) target = $region9
  $region8: #{unet_forward.8} parent=0 // pred_region
    _
  $region9: #{unet_forward.8} parent=0 // pred_fallthru
    _
  // Predicated region
  $region10: #{unet_forward.8} parent=0 // pred_check
    _
  $region11: #{unet_forward.8} parent=0 // pred_check_branch
    %15 = sbr.rel (0) target = $region13
  $region12: #{unet_forward.8} parent=0 // pred_region
    _
  $region13: #{unet_forward.8} parent=0 // pred_fallthru
    _
  // Predicated region
  $region14: #{unet_forward.8} parent=0 // pred_check
    _
  $region15: #{unet_forward.8} parent=0 // pred_check_branch
    %17 = sbr.rel (0) target = $region17
  $region16: #{unet_forward.8} parent=0 // pred_region
    _
  $region17: #{unet_forward.8} parent=0 // pred_fallthru
    _
  // Predicated region
  $region18: #{unet_forward.8} parent=0 // pred_check
    _
  $region19: #{unet_forward.8} parent=0 // pred_check_branch
    %19 = sbr.rel (0) target = $region21
  $region20: #{unet_forward.8} parent=0 // pred_region
    _
  $region21: #{unet_forward.8} parent=0 // pred_fallthru
    _
  %v21 = vld [vmem:[%s0] sm:$0xf]
  %v22 = vld [vmem:[%s0 + $0x4] sm:$0xf]
  %v23 = vld [vmem:[%s1] sm:$0xf]
  %v24 = vld [vmem:[%s1 + $0x4] sm:$0xf]
  %v25 = vld [vmem:[%s1 + $0x8] sm:$0xf]
  %v26 = vld [vmem:[%s1 + $0xc] sm:$0xf]
  %v27 = vld [vmem:[%s1 + $0x10] sm:$0xf]
  %v28 = vld [vmem:[%s1 + $0x14] sm:$0xf]
  %v29 = vld [vmem:[%s1 + $0x18] sm:$0xf]
  %v30 = vld [vmem:[%s1 + $0x1c] sm:$0xf]
  %v31 = vld [vmem:[%s1 + $0x20] sm:$0xf]
  %v32 = vld [vmem:[%s1 + $0x24] sm:$0xf]
  %v33 = vld [vmem:[%s1 + $0x28] sm:$0xf]
  %v34 = vld [vmem:[%s1 + $0x2c] sm:$0xf]
  %v35 = vld [vmem:[%s1 + $0x30] sm:$0xf]
  %v36 = vld [vmem:[%s1 + $0x34] sm:$0xf]
  %v37 = vld [vmem:[%s1 + $0x38] sm:$0xf]
  %v38 = vld [vmem:[%s1 + $0x3c] sm:$0xf]
  %v39 = vld [vmem:[%s2] sm:$0x1]
  %v41 = vlaneseq
  %v42 = vshrl.u32 %v41, 7
  %v43 = vsub.s32 0, %v42
  %v44 = vrot.slane %v39, %v43
  %v48 = vunpack.c.l.b16 %v21
  %v49 = vunpack.c.l.b16 %v22
  %v50 = vpack.c.b16 %v49, %v48
  %v68 = vunpack.c.l.b16 %v23
  %v69 = vunpack.c.l.b16 %v24
  %v70 = vunpack.c.l.b16 %v25
  %v71 = vunpack.c.l.b16 %v26
  %v72 = vunpack.c.l.b16 %v27
  %v73 = vunpack.c.l.b16 %v28
  %v74 = vunpack.c.l.b16 %v29
  %v75 = vunpack.c.l.b16 %v30
  %v76 = vunpack.c.l.b16 %v31
  %v77 = vunpack.c.l.b16 %v32
  %v78 = vunpack.c.l.b16 %v33
  %v79 = vunpack.c.l.b16 %v34
  %v80 = vunpack.c.l.b16 %v35
  %v81 = vunpack.c.l.b16 %v36
  %v82 = vunpack.c.l.b16 %v37
  %v83 = vunpack.c.l.b16 %v38
  %v84 = vpack.c.b16 %v69, %v68
  %v85 = vpack.c.b16 %v71, %v70
  %v86 = vpack.c.b16 %v73, %v72
  %v87 = vpack.c.b16 %v75, %v74
  %v88 = vpack.c.b16 %v77, %v76
  %v89 = vpack.c.b16 %v79, %v78
  %v90 = vpack.c.b16 %v81, %v80
  %v91 = vpack.c.b16 %v83, %v82
  %100 = vmatprep.subr.bf16.mxu0 0
  %101 = vmatpush1.bf16.msra.mxu0 %v84
  %102 = vmatprep.subr.bf16.mxu0 0
  %103 = vmatpush1.bf16.msra.mxu0 %v85
  %104 = vmatprep.subr.bf16.mxu0 0
  %105 = vmatpush1.bf16.msra.mxu0 %v86
  %106 = vmatprep.subr.bf16.mxu0 0
  %107 = vmatpush1.bf16.msra.mxu0 %v87
  %108 = vmatprep.subr.bf16.mxu0 0
  %109 = vmatpush1.bf16.msra.mxu0 %v88
  %110 = vmatprep.subr.bf16.mxu0 0
  %111 = vmatpush1.bf16.msra.mxu0 %v89
  %112 = vmatprep.subr.bf16.mxu0 0
  %113 = vmatpush1.bf16.msra.mxu0 %v90
  %114 = vmatprep.subr.bf16.mxu0 0
  %115 = vmatpush1.bf16.msra.mxu0 %v91
  %116 = vmatprep.subr.bf16.mxu0 0
  %117 = vmatpush1.bf16.msra.mxu0 0
  %118 = vmatprep.subr.bf16.mxu0 0
  %119 = vmatpush1.bf16.msra.mxu0 0
  %120 = vmatprep.subr.bf16.mxu0 0
  %121 = vmatpush1.bf16.msra.mxu0 0
  %122 = vmatprep.subr.bf16.mxu0 0
  %123 = vmatpush1.bf16.msra.mxu0 0
  %124 = vmatprep.subr.bf16.mxu0 0
  %125 = vmatpush1.bf16.msra.mxu0 0
  %126 = vmatprep.subr.bf16.mxu0 0
  %127 = vmatpush1.bf16.msra.mxu0 0
  %128 = vmatprep.subr.bf16.mxu0 0
  %129 = vmatpush1.bf16.msra.mxu0 0
  %130 = vmatprep.subr.bf16.mxu0 0
  %131 = vmatpush1.bf16.msra.mxu0 0
  %132 = vmatprep.mubr.bf16.mxu0 0
  %133 = vmatmul.mubr.bf16.gmra.mrb[0].mxu0 %v50
  %v134 = vpop.f32.mrb[0].mxu0
  %v135 = vadd.f32 %v44, %v134
  %v136 = vpop.f32.mrb[0].mxu0
  %v137 = vpop.f32.mrb[0].mxu0
  %v138 = vadd.f32 %v44, %v137
  %v139 = vpop.f32.mrb[0].mxu0
  %140 = vdwg.mxu0
  %v141 = vmax.f32 %v135, 0.0
  %v142 = vmax.f32 %v138, 0.0
  %v143 = vpack.c.bf16 %v142, %v141
  %v144 = vld [vmem:[%s3] sm:$0xf]
  %v145 = vld [vmem:[%s3 + $0x4] sm:$0xf]
  %v146 = vld [vmem:[%s3 + $0x8] sm:$0xf]
  %v147 = vld [vmem:[%s3 + $0xc] sm:$0xf]
  %v148 = vld [vmem:[%s3 + $0x10] sm:$0xf]
  %v149 = vld [vmem:[%s3 + $0x14] sm:$0xf]
  %v150 = vld [vmem:[%s3 + $0x18] sm:$0xf]
  %v151 = vld [vmem:[%s3 + $0x1c] sm:$0xf]
  %v152 = vld [vmem:[%s3 + $0x20] sm:$0xf]
  %v153 = vld [vmem:[%s3 + $0x24] sm:$0xf]
  %v154 = vld [vmem:[%s3 + $0x28] sm:$0xf]
  %v155 = vld [vmem:[%s3 + $0x2c] sm:$0xf]
  %v156 = vld [vmem:[%s3 + $0x30] sm:$0xf]
  %v157 = vld [vmem:[%s3 + $0x34] sm:$0xf]
  %v158 = vld [vmem:[%s3 + $0x38] sm:$0xf]
  %v159 = vld [vmem:[%s3 + $0x3c] sm:$0xf]
  %v160 = vld [vmem:[%s4] sm:$0x1]
  %v162 = vlaneseq
  %v163 = vshrl.u32 %v162, 7
  %v164 = vsub.s32 0, %v163
  %v165 = vrot.slane %v160, %v164
  %v183 = vunpack.c.l.b16 %v144
  %v184 = vunpack.c.l.b16 %v145
  %v185 = vunpack.c.l.b16 %v146
  %v186 = vunpack.c.l.b16 %v147
  %v187 = vunpack.c.l.b16 %v148
  %v188 = vunpack.c.l.b16 %v149
  %v189 = vunpack.c.l.b16 %v150
  %v190 = vunpack.c.l.b16 %v151
  %v191 = vunpack.c.l.b16 %v152
  %v192 = vunpack.c.l.b16 %v153
  %v193 = vunpack.c.l.b16 %v154
  %v194 = vunpack.c.l.b16 %v155
  %v195 = vunpack.c.l.b16 %v156
  %v196 = vunpack.c.l.b16 %v157
  %v197 = vunpack.c.l.b16 %v158
  %v198 = vunpack.c.l.b16 %v159
  %v199 = vpack.c.b16 %v184, %v183
  %v200 = vpack.c.b16 %v186, %v185
  %v201 = vpack.c.b16 %v188, %v187
  %v202 = vpack.c.b16 %v190, %v189
  %v203 = vpack.c.b16 %v192, %v191
  %v204 = vpack.c.b16 %v194, %v193
  %v205 = vpack.c.b16 %v196, %v195
  %v206 = vpack.c.b16 %v198, %v197
  %215 = vmatprep.subr.bf16.mxu0 0
  %216 = vmatpush1.bf16.msra.mxu0 %v199
  %217 = vmatprep.subr.bf16.mxu0 0
  %218 = vmatpush1.bf16.msra.mxu0 %v200
  %219 = vmatprep.subr.bf16.mxu0 0
  %220 = vmatpush1.bf16.msra.mxu0 %v201
  %221 = vmatprep.subr.bf16.mxu0 0
  %222 = vmatpush1.bf16.msra.mxu0 %v202
  %223 = vmatprep.subr.bf16.mxu0 0
  %224 = vmatpush1.bf16.msra.mxu0 %v203
  %225 = vmatprep.subr.bf16.mxu0 0
  %226 = vmatpush1.bf16.msra.mxu0 %v204
  %227 = vmatprep.subr.bf16.mxu0 0
  %228 = vmatpush1.bf16.msra.mxu0 %v205
  %229 = vmatprep.subr.bf16.mxu0 0
  %230 = vmatpush1.bf16.msra.mxu0 %v206
  %231 = vmatprep.subr.bf16.mxu0 0
  %232 = vmatpush1.bf16.msra.mxu0 0
  %233 = vmatprep.subr.bf16.mxu0 0
  %234 = vmatpush1.bf16.msra.mxu0 0
  %235 = vmatprep.subr.bf16.mxu0 0
  %236 = vmatpush1.bf16.msra.mxu0 0
  %237 = vmatprep.subr.bf16.mxu0 0
  %238 = vmatpush1.bf16.msra.mxu0 0
  %239 = vmatprep.subr.bf16.mxu0 0
  %240 = vmatpush1.bf16.msra.mxu0 0
  %241 = vmatprep.subr.bf16.mxu0 0
  %242 = vmatpush1.bf16.msra.mxu0 0
  %243 = vmatprep.subr.bf16.mxu0 0
  %244 = vmatpush1.bf16.msra.mxu0 0
  %245 = vmatprep.subr.bf16.mxu0 0
  %246 = vmatpush1.bf16.msra.mxu0 0
  %247 = vmatprep.mubr.bf16.mxu0 0
  %248 = vmatmul.mubr.bf16.gmra.mrb[0].mxu0 %v143
  %v249 = vpop.f32.mrb[0].mxu0
  %v250 = vadd.f32 %v165, %v249
  %v251 = vpop.f32.mrb[0].mxu0
  %v252 = vpop.f32.mrb[0].mxu0
  %v253 = vadd.f32 %v165, %v252
  %v254 = vpop.f32.mrb[0].mxu0
  %255 = vdwg.mxu0
  %256 = vst [vmem:[%s5] sm:$0xff] %v250
  %257 = vst [vmem:[%s5 + $0x8] sm:$0xff] %v253
  // Predicated region
  $region22: #{unet_forward.8} parent=0 // pred_check
    _
  $region23: #{unet_forward.8} parent=0 // pred_check_branch
    %259 = sbr.rel (0) target = $region25
  $region24: #{unet_forward.8} parent=0 // pred_region
    _
  $region25: #{unet_forward.8} parent=0 // pred_fallthru
    _
  // Predicated region
  $region26: #{unet_forward.8} parent=0 // pred_check
    _
  $region27: #{unet_forward.8} parent=0 // pred_check_branch
    %261 = sbr.rel (0) target = $region29
  $region28: #{unet_forward.8} parent=0 // pred_region
    _
  $region29: #{unet_forward.8} parent=0 // pred_fallthru
    _

// kernel: unet_forward.13
$region0: #{unet_forward.13}
  #allocation0 [shape = 'u32[]', space=smem, size = 0x4, offset = 0x4, fixed_abs, tag = 'smem constant byte address 0x4 - core index']
  #allocation1 [shape = 'u32[144,128]{1,0:T(1,128)}', space=vmem, size = 0x12000, scoped, tag = 'internal scratch']
  %s0 = inlined_call_operand.vmem [shape: bf16[16,1152], index: 0, kind: input, shape index: {}]
  %s1 = inlined_call_operand.vmem [shape: bf16[16,1152], index: 1, kind: input, shape index: {}]
  %s2 = inlined_call_operand.vmem [shape: bf16[1152,128], index: 2, kind: input, shape index: {}]
  %s3 = inlined_call_operand.vmem [shape: bf16[1152,128], index: 3, kind: input, shape index: {}]
  %s4 = inlined_call_operand.vmem [shape: f32[1,128], index: 4, kind: input, shape index: {}]
  %s5 = inlined_call_operand.vmem [shape: bf16[16,128], index: 5, kind: output, shape index: {0}]
  %s6 = inlined_call_operand.vmem [shape: f32[1,1,128], index: 6, kind: output, shape index: {1}]
  %s7 = inlined_call_operand.vmem [shape: f32[1,1,128], index: 7, kind: output, shape index: {2}]
  %8 = xla_tuple %s5, %s6, %s7
  %s9 = sld [smem:[#allocation0]]
  $region54: #{unet_forward.13} parent=0
    _
  %s11 = ssub.s32 1, %s9
  %s12 = scalar_select 0, %s11, %s9
  // Predicated region
  $region2: #{unet_forward.13} parent=0 // pred_check
    _
  $region3: #{unet_forward.13} parent=0 // pred_check_branch
    %14 = sbr.rel (0) target = $region5
  $region4: #{unet_forward.13} parent=0 // pred_region
    _
  $region5: #{unet_forward.13} parent=0 // pred_fallthru
    _
  // Predicated region
  $region6: #{unet_forward.13} parent=0 // pred_check
    _
  $region7: #{unet_forward.13} parent=0 // pred_check_branch
    %16 = sbr.rel (0) target = $region9
  $region8: #{unet_forward.13} parent=0 // pred_region
    _
  $region9: #{unet_forward.13} parent=0 // pred_fallthru
    _
  // Predicated region
  $region10: #{unet_forward.13} parent=0 // pred_check
    _
  $region11: #{unet_forward.13} parent=0 // pred_check_branch
    %18 = sbr.rel (0) target = $region13
  $region12: #{unet_forward.13} parent=0 // pred_region
    _
  $region13: #{unet_forward.13} parent=0 // pred_fallthru
    _
  // Predicated region
  $region14: #{unet_forward.13} parent=0 // pred_check
    _
  $region15: #{unet_forward.13} parent=0 // pred_check_branch
    %20 = sbr.rel (0) target = $region17
  $region16: #{unet_forward.13} parent=0 // pred_region
    _
  $region17: #{unet_forward.13} parent=0 // pred_fallthru
    _
  // Predicated region
  $region18: #{unet_forward.13} parent=0 // pred_check
    _
  $region19: #{unet_forward.13} parent=0 // pred_check_branch
    %22 = sbr.rel (0) target = $region21
  $region20: #{unet_forward.13} parent=0 // pred_region
    _
  $region21: #{unet_forward.13} parent=0 // pred_fallthru
    _
  %v24 = vld [vmem:[%s0] sm:$0xff]
  %v25 = vld [vmem:[%s0 + $0x8] sm:$0xff]
  %v26 = vld [vmem:[%s0 + $0x10] sm:$0xff]
  %v27 = vld [vmem:[%s0 + $0x18] sm:$0xff]
  %v28 = vld [vmem:[%s0 + $0x20] sm:$0xf]
  %v29 = vld [vmem:[%s0 + $0x24] sm:$0xff]
  %v30 = vld [vmem:[%s0 + $0x2c] sm:$0xff]
  %v31 = vld [vmem:[%s0 + $0x34] sm:$0xff]
  %v32 = vld [vmem:[%s0 + $0x3c] sm:$0xff]
  %v33 = vld [vmem:[%s0 + $0x44] sm:$0xf]
  %v34 = vld [vmem:[%s2] sm:$0xf]
  %v35 = vld [vmem:[%s2 + $0x4] sm:$0xf]
  %v36 = vld [vmem:[%s2 + $0x8] sm:$0xf]
  %v37 = vld [vmem:[%s2 + $0xc] sm:$0xf]
  %v38 = vld [vmem:[%s2 + $0x10] sm:$0xf]
  %v39 = vld [vmem:[%s2 + $0x14] sm:$0xf]
  %v40 = vld [vmem:[%s2 + $0x18] sm:$0xf]
  %v41 = vld [vmem:[%s2 + $0x1c] sm:$0xf]
  %v42 = vld [vmem:[%s2 + $0x20] sm:$0xf]
  %v43 = vld [vmem:[%s2 + $0x24] sm:$0xf]
  %v44 = vld [vmem:[%s2 + $0x28] sm:$0xf]
  %v45 = vld [vmem:[%s2 + $0x2c] sm:$0xf]
  %v46 = vld [vmem:[%s2 + $0x30] sm:$0xf]
  %v47 = vld [vmem:[%s2 + $0x34] sm:$0xf]
  %v48 = vld [vmem:[%s2 + $0x38] sm:$0xf]
  %v49 = vld [vmem:[%s2 + $0x3c] sm:$0xf]
  %v50 = vld [vmem:[%s2 + $0x40] sm:$0xf]
  %v51 = vld [vmem:[%s2 + $0x44] sm:$0xf]
  %v52 = vld [vmem:[%s2 + $0x48] sm:$0xf]
  %v53 = vld [vmem:[%s2 + $0x4c] sm:$0xf]
  %v54 = vld [vmem:[%s2 + $0x50] sm:$0xf]
  %v55 = vld [vmem:[%s2 + $0x54] sm:$0xf]
  %v56 = vld [vmem:[%s2 + $0x58] sm:$0xf]
  %v57 = vld [vmem:[%s2 + $0x5c] sm:$0xf]
  %v58 = vld [vmem:[%s2 + $0x60] sm:$0xf]
  %v59 = vld [vmem:[%s2 + $0x64] sm:$0xf]
  %v60 = vld [vmem:[%s2 + $0x68] sm:$0xf]
  %v61 = vld [vmem:[%s2 + $0x6c] sm:$0xf]
  %v62 = vld [vmem:[%s2 + $0x70] sm:$0xf]
  %v63 = vld [vmem:[%s2 + $0x74] sm:$0xf]
  %v64 = vld [vmem:[%s2 + $0x78] sm:$0xf]
  %v65 = vld [vmem:[%s2 + $0x7c] sm:$0xf]
  %v66 = vld [vmem:[%s2 + $0x80] sm:$0xf]
  %v67 = vld [vmem:[%s2 + $0x84] sm:$0xf]
  %v68 = vld [vmem:[%s2 + $0x88] sm:$0xf]
  %v69 = vld [vmem:[%s2 + $0x8c] sm:$0xf]
  %v70 = vld [vmem:[%s2 + $0x90] sm:$0xf]
  %v71 = vld [vmem:[%s2 + $0x94] sm:$0xf]
  %v72 = vld [vmem:[%s2 + $0x98] sm:$0xf]
  %v73 = vld [vmem:[%s2 + $0x9c] sm:$0xf]
  %v74 = vld [vmem:[%s2 + $0xa0] sm:$0xf]
  %v75 = vld [vmem:[%s2 + $0xa4] sm:$0xf]
  %v76 = vld [vmem:[%s2 + $0xa8] sm:$0xf]
  %v77 = vld [vmem:[%s2 + $0xac] sm:$0xf]
  %v78 = vld [vmem:[%s2 + $0xb0] sm:$0xf]
  %v79 = vld [vmem:[%s2 + $0xb4] sm:$0xf]
  %v80 = vld [vmem:[%s2 + $0xb8] sm:$0xf]
  %v81 = vld [vmem:[%s2 + $0xbc] sm:$0xf]
  %v82 = vld [vmem:[%s2 + $0xc0] sm:$0xf]
  %v83 = vld [vmem:[%s2 + $0xc4] sm:$0xf]
  %v84 = vld [vmem:[%s2 + $0xc8] sm:$0xf]
  %v85 = vld [vmem:[%s2 + $0xcc] sm:$0xf]
  %v86 = vld [vmem:[%s2 + $0xd0] sm:$0xf]
  %v87 = vld [vmem:[%s2 + $0xd4] sm:$0xf]
  %v88 = vld [vmem:[%s2 + $0xd8] sm:$0xf]
  %v89 = vld [vmem:[%s2 + $0xdc] sm:$0xf]
  %v90 = vld [vmem:[%s2 + $0xe0] sm:$0xf]
  %v91 = vld [vmem:[%s2 + $0xe4] sm:$0xf]
  %v92 = vld [vmem:[%s2 + $0xe8] sm:$0xf]
  %v93 = vld [vmem:[%s2 + $0xec] sm:$0xf]
  %v94 = vld [vmem:[%s2 + $0xf0] sm:$0xf]
  %v95 = vld [vmem:[%s2 + $0xf4] sm:$0xf]
  %v96 = vld [vmem:[%s2 + $0xf8] sm:$0xf]
  %v97 = vld [vmem:[%s2 + $0xfc] sm:$0xf]
  %v98 = vld [vmem:[%s2 + $0x100] sm:$0xf]
  %v99 = vld [vmem:[%s2 + $0x104] sm:$0xf]
  %v100 = vld [vmem:[%s2 + $0x108] sm:$0xf]
  %v101 = vld [vmem:[%s2 + $0x10c] sm:$0xf]
  %v102 = vld [vmem:[%s2 + $0x110] sm:$0xf]
  %v103 = vld [vmem:[%s2 + $0x114] sm:$0xf]
  %v104 = vld [vmem:[%s2 + $0x118] sm:$0xf]
  %v105 = vld [vmem:[%s2 + $0x11c] sm:$0xf]
  %v106 = vld [vmem:[%s2 + $0x120] sm:$0xf]
  %v107 = vld [vmem:[%s2 + $0x124] sm:$0xf]
  %v108 = vld [vmem:[%s2 + $0x128] sm:$0xf]
  %v109 = vld [vmem:[%s2 + $0x12c] sm:$0xf]
  %v110 = vld [vmem:[%s2 + $0x130] sm:$0xf]
  %v111 = vld [vmem:[%s2 + $0x134] sm:$0xf]
  %v112 = vld [vmem:[%s2 + $0x138] sm:$0xf]
  %v113 = vld [vmem:[%s2 + $0x13c] sm:$0xf]
  %v114 = vld [vmem:[%s2 + $0x140] sm:$0xf]
  %v115 = vld [vmem:[%s2 + $0x144] sm:$0xf]
  %v116 = vld [vmem:[%s2 + $0x148] sm:$0xf]
  %v117 = vld [vmem:[%s2 + $0x14c] sm:$0xf]
  %v118 = vld [vmem:[%s2 + $0x150] sm:$0xf]
  %v119 = vld [vmem:[%s2 + $0x154] sm:$0xf]
  %v120 = vld [vmem:[%s2 + $0x158] sm:$0xf]
  %v121 = vld [vmem:[%s2 + $0x15c] sm:$0xf]
  %v122 = vld [vmem:[%s2 + $0x160] sm:$0xf]
  %v123 = vld [vmem:[%s2 + $0x164] sm:$0xf]
  %v124 = vld [vmem:[%s2 + $0x168] sm:$0xf]
  %v125 = vld [vmem:[%s2 + $0x16c] sm:$0xf]
  %v126 = vld [vmem:[%s2 + $0x170] sm:$0xf]
  %v127 = vld [vmem:[%s2 + $0x174] sm:$0xf]
  %v128 = vld [vmem:[%s2 + $0x178] sm:$0xf]
  %v129 = vld [vmem:[%s2 + $0x17c] sm:$0xf]
  %v130 = vld [vmem:[%s2 + $0x180] sm:$0xf]
  %v131 = vld [vmem:[%s2 + $0x184] sm:$0xf]
  %v132 = vld [vmem:[%s2 + $0x188] sm:$0xf]
  %v133 = vld [vmem:[%s2 + $0x18c] sm:$0xf]
  %v134 = vld [vmem:[%s2 + $0x190] sm:$0xf]
  %v135 = vld [vmem:[%s2 + $0x194] sm:$0xf]
  %v136 = vld [vmem:[%s2 + $0x198] sm:$0xf]
  %v137 = vld [vmem:[%s2 + $0x19c] sm:$0xf]
  %v138 = vld [vmem:[%s2 + $0x1a0] sm:$0xf]
  %v139 = vld [vmem:[%s2 + $0x1a4] sm:$0xf]
  %v140 = vld [vmem:[%s2 + $0x1a8] sm:$0xf]
  %v141 = vld [vmem:[%s2 + $0x1ac] sm:$0xf]
  %v142 = vld [vmem:[%s2 + $0x1b0] sm:$0xf]
  %v143 = vld [vmem:[%s2 + $0x1b4] sm:$0xf]
  %v144 = vld [vmem:[%s2 + $0x1b8] sm:$0xf]
  %v145 = vld [vmem:[%s2 + $0x1bc] sm:$0xf]
  %v146 = vld [vmem:[%s2 + $0x1c0] sm:$0xf]
  %v147 = vld [vmem:[%s2 + $0x1c4] sm:$0xf]
  %v148 = vld [vmem:[%s2 + $0x1c8] sm:$0xf]
  %v149 = vld [vmem:[%s2 + $0x1cc] sm:$0xf]
  %v150 = vld [vmem:[%s2 + $0x1d0] sm:$0xf]
  %v151 = vld [vmem:[%s2 + $0x1d4] sm:$0xf]
  %v152 = vld [vmem:[%s2 + $0x1d8] sm:$0xf]
  %v153 = vld [vmem:[%s2 + $0x1dc] sm:$0xf]
  %v154 = vld [vmem:[%s2 + $0x1e0] sm:$0xf]
  %v155 = vld [vmem:[%s2 + $0x1e4] sm:$0xf]
  %v156 = vld [vmem:[%s2 + $0x1e8] sm:$0xf]
  %v157 = vld [vmem:[%s2 + $0x1ec] sm:$0xf]
  %v158 = vld [vmem:[%s2 + $0x1f0] sm:$0xf]
  %v159 = vld [vmem:[%s2 + $0x1f4] sm:$0xf]
  %v160 = vld [vmem:[%s2 + $0x1f8] sm:$0xf]
  %v161 = vld [vmem:[%s2 + $0x1fc] sm:$0xf]
  %v162 = vld [vmem:[%s2 + $0x200] sm:$0xf]
  %v163 = vld [vmem:[%s2 + $0x204] sm:$0xf]
  %v164 = vld [vmem:[%s2 + $0x208] sm:$0xf]
  %v165 = vld [vmem:[%s2 + $0x20c] sm:$0xf]
  %v166 = vld [vmem:[%s2 + $0x210] sm:$0xf]
  %v167 = vld [vmem:[%s2 + $0x214] sm:$0xf]
  %v168 = vld [vmem:[%s2 + $0x218] sm:$0xf]
  %v169 = vld [vmem:[%s2 + $0x21c] sm:$0xf]
  %v170 = vld [vmem:[%s2 + $0x220] sm:$0xf]
  %v171 = vld [vmem:[%s2 + $0x224] sm:$0xf]
  %v172 = vld [vmem:[%s2 + $0x228] sm:$0xf]
  %v173 = vld [vmem:[%s2 + $0x22c] sm:$0xf]
  %v174 = vld [vmem:[%s2 + $0x230] sm:$0xf]
  %v175 = vld [vmem:[%s2 + $0x234] sm:$0xf]
  %v176 = vld [vmem:[%s2 + $0x238] sm:$0xf]
  %v177 = vld [vmem:[%s2 + $0x23c] sm:$0xf]
  %v178 = vld [vmem:[%s1] sm:$0xff]
  %v179 = vld [vmem:[%s1 + $0x8] sm:$0xff]
  %v180 = vld [vmem:[%s1 + $0x10] sm:$0xff]
  %v181 = vld [vmem:[%s1 + $0x18] sm:$0xff]
  %v182 = vld [vmem:[%s1 + $0x20] sm:$0xf]
  %v183 = vld [vmem:[%s1 + $0x24] sm:$0xff]
  %v184 = vld [vmem:[%s1 + $0x2c] sm:$0xff]
  %v185 = vld [vmem:[%s1 + $0x34] sm:$0xff]
  %v186 = vld [vmem:[%s1 + $0x3c] sm:$0xff]
  %v187 = vld [vmem:[%s1 + $0x44] sm:$0xf]
  %v188 = vld [vmem:[%s3] sm:$0xf]
  %v189 = vld [vmem:[%s3 + $0x4] sm:$0xf]
  %v190 = vld [vmem:[%s3 + $0x8] sm:$0xf]
  %v191 = vld [vmem:[%s3 + $0xc] sm:$0xf]
  %v192 = vld [vmem:[%s3 + $0x10] sm:$0xf]
  %v193 = vld [vmem:[%s3 + $0x14] sm:$0xf]
  %v194 = vld [vmem:[%s3 + $0x18] sm:$0xf]
  %v195 = vld [vmem:[%s3 + $0x1c] sm:$0xf]
  %v196 = vld [vmem:[%s3 + $0x20] sm:$0xf]
  %v197 = vld [vmem:[%s3 + $0x24] sm:$0xf]
  %v198 = vld [vmem:[%s3 + $0x28] sm:$0xf]
  %v199 = vld [vmem:[%s3 + $0x2c] sm:$0xf]
  %v200 = vld [vmem:[%s3 + $0x30] sm:$0xf]
  %v201 = vld [vmem:[%s3 + $0x34] sm:$0xf]
  %v202 = vld [vmem:[%s3 + $0x38] sm:$0xf]
  %v203 = vld [vmem:[%s3 + $0x3c] sm:$0xf]
  %v204 = vld [vmem:[%s3 + $0x40] sm:$0xf]
  %v205 = vld [vmem:[%s3 + $0x44] sm:$0xf]
  %v206 = vld [vmem:[%s3 + $0x48] sm:$0xf]
  %v207 = vld [vmem:[%s3 + $0x4c] sm:$0xf]
  %v208 = vld [vmem:[%s3 + $0x50] sm:$0xf]
  %v209 = vld [vmem:[%s3 + $0x54] sm:$0xf]
  %v210 = vld [vmem:[%s3 + $0x58] sm:$0xf]
  %v211 = vld [vmem:[%s3 + $0x5c] sm:$0xf]
  %v212 = vld [vmem:[%s3 + $0x60] sm:$0xf]
  %v213 = vld [vmem:[%s3 + $0x64] sm:$0xf]
  %v214 = vld [vmem:[%s3 + $0x68] sm:$0xf]
  %v215 = vld [vmem:[%s3 + $0x6c] sm:$0xf]
  %v216 = vld [vmem:[%s3 + $0x70] sm:$0xf]
  %v217 = vld [vmem:[%s3 + $0x74] sm:$0xf]
  %v218 = vld [vmem:[%s3 + $0x78] sm:$0xf]
  %v219 = vld [vmem:[%s3 + $0x7c] sm:$0xf]
  %v220 = vld [vmem:[%s3 + $0x80] sm:$0xf]
  %v221 = vld [vmem:[%s3 + $0x84] sm:$0xf]
  %v222 = vld [vmem:[%s3 + $0x88] sm:$0xf]
  %v223 = vld [vmem:[%s3 + $0x8c] sm:$0xf]
  %v224 = vld [vmem:[%s3 + $0x90] sm:$0xf]
  %v225 = vld [vmem:[%s3 + $0x94] sm:$0xf]
  %v226 = vld [vmem:[%s3 + $0x98] sm:$0xf]
  %v227 = vld [vmem:[%s3 + $0x9c] sm:$0xf]
  %v228 = vld [vmem:[%s3 + $0xa0] sm:$0xf]
  %v229 = vld [vmem:[%s3 + $0xa4] sm:$0xf]
  %v230 = vld [vmem:[%s3 + $0xa8] sm:$0xf]
  %v231 = vld [vmem:[%s3 + $0xac] sm:$0xf]
  %v232 = vld [vmem:[%s3 + $0xb0] sm:$0xf]
  %v233 = vld [vmem:[%s3 + $0xb4] sm:$0xf]
  %v234 = vld [vmem:[%s3 + $0xb8] sm:$0xf]
  %v235 = vld [vmem:[%s3 + $0xbc] sm:$0xf]
  %v236 = vld [vmem:[%s3 + $0xc0] sm:$0xf]
  %v237 = vld [vmem:[%s3 + $0xc4] sm:$0xf]
  %v238 = vld [vmem:[%s3 + $0xc8] sm:$0xf]
  %v239 = vld [vmem:[%s3 + $0xcc] sm:$0xf]
  %v240 = vld [vmem:[%s3 + $0xd0] sm:$0xf]
  %v241 = vld [vmem:[%s3 + $0xd4] sm:$0xf]
  %v242 = vld [vmem:[%s3 + $0xd8] sm:$0xf]
  %v243 = vld [vmem:[%s3 + $0xdc] sm:$0xf]
  %v244 = vld [vmem:[%s3 + $0xe0] sm:$0xf]
  %v245 = vld [vmem:[%s3 + $0xe4] sm:$0xf]
  %v246 = vld [vmem:[%s3 + $0xe8] sm:$0xf]
  %v247 = vld [vmem:[%s3 + $0xec] sm:$0xf]
  %v248 = vld [vmem:[%s3 + $0xf0] sm:$0xf]
  %v249 = vld [vmem:[%s3 + $0xf4] sm:$0xf]
  %v250 = vld [vmem:[%s3 + $0xf8] sm:$0xf]
  %v251 = vld [vmem:[%s3 + $0xfc] sm:$0xf]
  %v252 = vld [vmem:[%s3 + $0x100] sm:$0xf]
  %v253 = vld [vmem:[%s3 + $0x104] sm:$0xf]
  %v254 = vld [vmem:[%s3 + $0x108] sm:$0xf]
  %v255 = vld [vmem:[%s3 + $0x10c] sm:$0xf]
  %v256 = vld [vmem:[%s3 + $0x110] sm:$0xf]
  %v257 = vld [vmem:[%s3 + $0x114] sm:$0xf]
  %v258 = vld [vmem:[%s3 + $0x118] sm:$0xf]
  %v259 = vld [vmem:[%s3 + $0x11c] sm:$0xf]
  %v260 = vld [vmem:[%s3 + $0x120] sm:$0xf]
  %v261 = vld [vmem:[%s3 + $0x124] sm:$0xf]
  %v262 = vld [vmem:[%s3 + $0x128] sm:$0xf]
  %v263 = vld [vmem:[%s3 + $0x12c] sm:$0xf]
  %v264 = vld [vmem:[%s3 + $0x130] sm:$0xf]
  %v265 = vld [vmem:[%s3 + $0x134] sm:$0xf]
  %v266 = vld [vmem:[%s3 + $0x138] sm:$0xf]
  %v267 = vld [vmem:[%s3 + $0x13c] sm:$0xf]
  %v268 = vld [vmem:[%s3 + $0x140] sm:$0xf]
  %v269 = vld [vmem:[%s3 + $0x144] sm:$0xf]
  %v270 = vld [vmem:[%s3 + $0x148] sm:$0xf]
  %v271 = vld [vmem:[%s3 + $0x14c] sm:$0xf]
  %v272 = vld [vmem:[%s3 + $0x150] sm:$0xf]
  %v273 = vld [vmem:[%s3 + $0x154] sm:$0xf]
  %v274 = vld [vmem:[%s3 + $0x158] sm:$0xf]
  %v275 = vld [vmem:[%s3 + $0x15c] sm:$0xf]
  %v276 = vld [vmem:[%s3 + $0x160] sm:$0xf]
  %v277 = vld [vmem:[%s3 + $0x164] sm:$0xf]
  %v278 = vld [vmem:[%s3 + $0x168] sm:$0xf]
  %v279 = vld [vmem:[%s3 + $0x16c] sm:$0xf]
  %v280 = vld [vmem:[%s3 + $0x170] sm:$0xf]
  %v281 = vld [vmem:[%s3 + $0x174] sm:$0xf]
  %v282 = vld [vmem:[%s3 + $0x178] sm:$0xf]
  %v283 = vld [vmem:[%s3 + $0x17c] sm:$0xf]
  %v284 = vld [vmem:[%s3 + $0x180] sm:$0xf]
  %v285 = vld [vmem:[%s3 + $0x184] sm:$0xf]
  %v286 = vld [vmem:[%s3 + $0x188] sm:$0xf]
  %v287 = vld [vmem:[%s3 + $0x18c] sm:$0xf]
  %v288 = vld [vmem:[%s3 + $0x190] sm:$0xf]
  %v289 = vld [vmem:[%s3 + $0x194] sm:$0xf]
  %v290 = vld [vmem:[%s3 + $0x198] sm:$0xf]
  %v291 = vld [vmem:[%s3 + $0x19c] sm:$0xf]
  %v292 = vld [vmem:[%s3 + $0x1a0] sm:$0xf]
  %v293 = vld [vmem:[%s3 + $0x1a4] sm:$0xf]
  %v294 = vld [vmem:[%s3 + $0x1a8] sm:$0xf]
  %v295 = vld [vmem:[%s3 + $0x1ac] sm:$0xf]
  %v296 = vld [vmem:[%s3 + $0x1b0] sm:$0xf]
  %v297 = vld [vmem:[%s3 + $0x1b4] sm:$0xf]
  %v298 = vld [vmem:[%s3 + $0x1b8] sm:$0xf]
  %v299 = vld [vmem:[%s3 + $0x1bc] sm:$0xf]
  %v300 = vld [vmem:[%s3 + $0x1c0] sm:$0xf]
  %v301 = vld [vmem:[%s3 + $0x1c4] sm:$0xf]
  %v302 = vld [vmem:[%s3 + $0x1c8] sm:$0xf]
  %v303 = vld [vmem:[%s3 + $0x1cc] sm:$0xf]
  %v304 = vld [vmem:[%s3 + $0x1d0] sm:$0xf]
  %v305 = vld [vmem:[%s3 + $0x1d4] sm:$0xf]
  %v306 = vld [vmem:[%s3 + $0x1d8] sm:$0xf]
  %v307 = vld [vmem:[%s3 + $0x1dc] sm:$0xf]
  %v308 = vld [vmem:[%s3 + $0x1e0] sm:$0xf]
  %v309 = vld [vmem:[%s3 + $0x1e4] sm:$0xf]
  %v310 = vld [vmem:[%s3 + $0x1e8] sm:$0xf]
  %v311 = vld [vmem:[%s3 + $0x1ec] sm:$0xf]
  %v312 = vld [vmem:[%s3 + $0x1f0] sm:$0xf]
  %v313 = vld [vmem:[%s3 + $0x1f4] sm:$0xf]
  %v314 = vld [vmem:[%s3 + $0x1f8] sm:$0xf]
  %v315 = vld [vmem:[%s3 + $0x1fc] sm:$0xf]
  %v316 = vld [vmem:[%s3 + $0x200] sm:$0xf]
  %v317 = vld [vmem:[%s3 + $0x204] sm:$0xf]
  %v318 = vld [vmem:[%s3 + $0x208] sm:$0xf]
  %v319 = vld [vmem:[%s3 + $0x20c] sm:$0xf]
  %v320 = vld [vmem:[%s3 + $0x210] sm:$0xf]
  %v321 = vld [vmem:[%s3 + $0x214] sm:$0xf]
  %v322 = vld [vmem:[%s3 + $0x218] sm:$0xf]
  %v323 = vld [vmem:[%s3 + $0x21c] sm:$0xf]
  %v324 = vld [vmem:[%s3 + $0x220] sm:$0xf]
  %v325 = vld [vmem:[%s3 + $0x224] sm:$0xf]
  %v326 = vld [vmem:[%s3 + $0x228] sm:$0xf]
  %v327 = vld [vmem:[%s3 + $0x22c] sm:$0xf]
  %v328 = vld [vmem:[%s3 + $0x230] sm:$0xf]
  %v329 = vld [vmem:[%s3 + $0x234] sm:$0xf]
  %v330 = vld [vmem:[%s3 + $0x238] sm:$0xf]
  %v331 = vld [vmem:[%s3 + $0x23c] sm:$0xf]
  %v342 = vunpack.c.l.b16 %v178
  %v343 = vunpack.c.h.b16 %v178
  %v344 = vunpack.c.l.b16 %v179
  %v345 = vunpack.c.h.b16 %v179
  %v346 = vunpack.c.l.b16 %v180
  %v347 = vunpack.c.h.b16 %v180
  %v348 = vunpack.c.l.b16 %v181
  %v349 = vunpack.c.h.b16 %v181
  %v350 = vunpack.c.l.b16 %v182
  %v351 = vunpack.c.l.b16 %v183
  %v352 = vunpack.c.h.b16 %v183
  %v353 = vunpack.c.l.b16 %v184
  %v354 = vunpack.c.h.b16 %v184
  %v355 = vunpack.c.l.b16 %v185
  %v356 = vunpack.c.h.b16 %v185
  %v357 = vunpack.c.l.b16 %v186
  %v358 = vunpack.c.h.b16 %v186
  %v359 = vunpack.c.l.b16 %v187
  %v360 = vpack.c.b16 %v351, %v342
  %v361 = vpack.c.b16 %v352, %v343
  %v362 = vpack.c.b16 %v353, %v344
  %v363 = vpack.c.b16 %v354, %v345
  %v364 = vpack.c.b16 %v355, %v346
  %v365 = vpack.c.b16 %v356, %v347
  %v366 = vpack.c.b16 %v357, %v348
  %v367 = vpack.c.b16 %v358, %v349
  %v368 = vpack.c.b16 %v359, %v350
  %v522 = vunpack.c.l.b16 %v188
  %v523 = vunpack.c.l.b16 %v189
  %v524 = vunpack.c.l.b16 %v190
  %v525 = vunpack.c.l.b16 %v191
  %v526 = vunpack.c.l.b16 %v192
  %v527 = vunpack.c.l.b16 %v193
  %v528 = vunpack.c.l.b16 %v194
  %v529 = vunpack.c.l.b16 %v195
  %v530 = vunpack.c.l.b16 %v196
  %v531 = vunpack.c.l.b16 %v197
  %v532 = vunpack.c.l.b16 %v198
  %v533 = vunpack.c.l.b16 %v199
  %v534 = vunpack.c.l.b16 %v200
  %v535 = vunpack.c.l.b16 %v201
  %v536 = vunpack.c.l.b16 %v202
  %v537 = vunpack.c.l.b16 %v203
  %v538 = vunpack.c.l.b16 %v204
  %v539 = vunpack.c.l.b16 %v205
  %v540 = vunpack.c.l.b16 %v206
  %v541 = vunpack.c.l.b16 %v207
  %v542 = vunpack.c.l.b16 %v208
  %v543 = vunpack.c.l.b16 %v209
  %v544 = vunpack.c.l.b16 %v210
  %v545 = vunpack.c.l.b16 %v211
  %v546 = vunpack.c.l.b16 %v212
  %v547 = vunpack.c.l.b16 %v213
  %v548 = vunpack.c.l.b16 %v214
  %v549 = vunpack.c.l.b16 %v215
  %v550 = vunpack.c.l.b16 %v216
  %v551 = vunpack.c.l.b16 %v217
  %v552 = vunpack.c.l.b16 %v218
  %v553 = vunpack.c.l.b16 %v219
  %v554 = vunpack.c.l.b16 %v220
  %v555 = vunpack.c.l.b16 %v221
  %v556 = vunpack.c.l.b16 %v222
  %v557 = vunpack.c.l.b16 %v223
  %v558 = vunpack.c.l.b16 %v224
  %v559 = vunpack.c.l.b16 %v225
  %v560 = vunpack.c.l.b16 %v226
  %v561 = vunpack.c.l.b16 %v227
  %v562 = vunpack.c.l.b16 %v228
  %v563 = vunpack.c.l.b16 %v229
  %v564 = vunpack.c.l.b16 %v230
  %v565 = vunpack.c.l.b16 %v231
  %v566 = vunpack.c.l.b16 %v232
  %v567 = vunpack.c.l.b16 %v233
  %v568 = vunpack.c.l.b16 %v234
  %v569 = vunpack.c.l.b16 %v235
  %v570 = vunpack.c.l.b16 %v236
  %v571 = vunpack.c.l.b16 %v237
  %v572 = vunpack.c.l.b16 %v238
  %v573 = vunpack.c.l.b16 %v239
  %v574 = vunpack.c.l.b16 %v240
  %v575 = vunpack.c.l.b16 %v241
  %v576 = vunpack.c.l.b16 %v242
  %v577 = vunpack.c.l.b16 %v243
  %v578 = vunpack.c.l.b16 %v244
  %v579 = vunpack.c.l.b16 %v245
  %v580 = vunpack.c.l.b16 %v246
  %v581 = vunpack.c.l.b16 %v247
  %v582 = vunpack.c.l.b16 %v248
  %v583 = vunpack.c.l.b16 %v249
  %v584 = vunpack.c.l.b16 %v250
  %v585 = vunpack.c.l.b16 %v251
  %v586 = vunpack.c.l.b16 %v252
  %v587 = vunpack.c.l.b16 %v253
  %v588 = vunpack.c.l.b16 %v254
  %v589 = vunpack.c.l.b16 %v255
  %v590 = vunpack.c.l.b16 %v256
  %v591 = vunpack.c.l.b16 %v257
  %v592 = vunpack.c.l.b16 %v258
  %v593 = vunpack.c.l.b16 %v259
  %v594 = vunpack.c.l.b16 %v260
  %v595 = vunpack.c.l.b16 %v261
  %v596 = vunpack.c.l.b16 %v262
  %v597 = vunpack.c.l.b16 %v263
  %v598 = vunpack.c.l.b16 %v264
  %v599 = vunpack.c.l.b16 %v265
  %v600 = vunpack.c.l.b16 %v266
  %v601 = vunpack.c.l.b16 %v267
  %v602 = vunpack.c.l.b16 %v268
  %v603 = vunpack.c.l.b16 %v269
  %v604 = vunpack.c.l.b16 %v270
  %v605 = vunpack.c.l.b16 %v271
  %v606 = vunpack.c.l.b16 %v272
  %v607 = vunpack.c.l.b16 %v273
  %v608 = vunpack.c.l.b16 %v274
  %v609 = vunpack.c.l.b16 %v275
  %v610 = vunpack.c.l.b16 %v276
  %v611 = vunpack.c.l.b16 %v277
  %v612 = vunpack.c.l.b16 %v278
  %v613 = vunpack.c.l.b16 %v279
  %v614 = vunpack.c.l.b16 %v280
  %v615 = vunpack.c.l.b16 %v281
  %v616 = vunpack.c.l.b16 %v282
  %v617 = vunpack.c.l.b16 %v283
  %v618 = vunpack.c.l.b16 %v284
  %v619 = vunpack.c.l.b16 %v285
  %v620 = vunpack.c.l.b16 %v286
  %v621 = vunpack.c.l.b16 %v287
  %v622 = vunpack.c.l.b16 %v288
  %v623 = vunpack.c.l.b16 %v289
  %v624 = vunpack.c.l.b16 %v290
  %v625 = vunpack.c.l.b16 %v291
  %v626 = vunpack.c.l.b16 %v292
  %v627 = vunpack.c.l.b16 %v293
  %v628 = vunpack.c.l.b16 %v294
  %v629 = vunpack.c.l.b16 %v295
  %v630 = vunpack.c.l.b16 %v296
  %v631 = vunpack.c.l.b16 %v297
  %v632 = vunpack.c.l.b16 %v298
  %v633 = vunpack.c.l.b16 %v299
  %v634 = vunpack.c.l.b16 %v300
  %v635 = vunpack.c.l.b16 %v301
  %v636 = vunpack.c.l.b16 %v302
  %v637 = vunpack.c.l.b16 %v303
  %v638 = vunpack.c.l.b16 %v304
  %v639 = vunpack.c.l.b16 %v305
  %v640 = vunpack.c.l.b16 %v306
  %v641 = vunpack.c.l.b16 %v307
  %v642 = vunpack.c.l.b16 %v308
  %v643 = vunpack.c.l.b16 %v309
  %v644 = vunpack.c.l.b16 %v310
  %v645 = vunpack.c.l.b16 %v311
  %v646 = vunpack.c.l.b16 %v312
  %v647 = vunpack.c.l.b16 %v313
  %v648 = vunpack.c.l.b16 %v314
  %v649 = vunpack.c.l.b16 %v315
  %v650 = vunpack.c.l.b16 %v316
  %v651 = vunpack.c.l.b16 %v317
  %v652 = vunpack.c.l.b16 %v318
  %v653 = vunpack.c.l.b16 %v319
  %v654 = vunpack.c.l.b16 %v320
  %v655 = vunpack.c.l.b16 %v321
  %v656 = vunpack.c.l.b16 %v322
  %v657 = vunpack.c.l.b16 %v323
  %v658 = vunpack.c.l.b16 %v324
  %v659 = vunpack.c.l.b16 %v325
  %v660 = vunpack.c.l.b16 %v326
  %v661 = vunpack.c.l.b16 %v327
  %v662 = vunpack.c.l.b16 %v328
  %v663 = vunpack.c.l.b16 %v329
  %v664 = vunpack.c.l.b16 %v330
  %v665 = vunpack.c.l.b16 %v331
  %v666 = vpack.c.b16 %v523, %v522
  %v667 = vpack.c.b16 %v525, %v524
  %v668 = vpack.c.b16 %v527, %v526
  %v669 = vpack.c.b16 %v529, %v528
  %v670 = vpack.c.b16 %v531, %v530
  %v671 = vpack.c.b16 %v533, %v532
  %v672 = vpack.c.b16 %v535, %v534
  %v673 = vpack.c.b16 %v537, %v536
  %v674 = vpack.c.b16 %v539, %v538
  %v675 = vpack.c.b16 %v541, %v540
  %v676 = vpack.c.b16 %v543, %v542
  %v677 = vpack.c.b16 %v545, %v544
  %v678 = vpack.c.b16 %v547, %v546
  %v679 = vpack.c.b16 %v549, %v548
  %v680 = vpack.c.b16 %v551, %v550
  %v681 = vpack.c.b16 %v553, %v552
  %v682 = vpack.c.b16 %v555, %v554
  %v683 = vpack.c.b16 %v557, %v556
  %v684 = vpack.c.b16 %v559, %v558
  %v685 = vpack.c.b16 %v561, %v560
  %v686 = vpack.c.b16 %v563, %v562
  %v687 = vpack.c.b16 %v565, %v564
  %v688 = vpack.c.b16 %v567, %v566
  %v689 = vpack.c.b16 %v569, %v568
  %v690 = vpack.c.b16 %v571, %v570
  %v691 = vpack.c.b16 %v573, %v572
  %v692 = vpack.c.b16 %v575, %v574
  %v693 = vpack.c.b16 %v577, %v576
  %v694 = vpack.c.b16 %v579, %v578
  %v695 = vpack.c.b16 %v581, %v580
  %v696 = vpack.c.b16 %v583, %v582
  %v697 = vpack.c.b16 %v585, %v584
  %v698 = vpack.c.b16 %v587, %v586
  %v699 = vpack.c.b16 %v589, %v588
  %v700 = vpack.c.b16 %v591, %v590
  %v701 = vpack.c.b16 %v593, %v592
  %v702 = vpack.c.b16 %v595, %v594
  %v703 = vpack.c.b16 %v597, %v596
  %v704 = vpack.c.b16 %v599, %v598
  %v705 = vpack.c.b16 %v601, %v600
  %v706 = vpack.c.b16 %v603, %v602
  %v707 = vpack.c.b16 %v605, %v604
  %v708 = vpack.c.b16 %v607, %v606
  %v709 = vpack.c.b16 %v609, %v608
  %v710 = vpack.c.b16 %v611, %v610
  %v711 = vpack.c.b16 %v613, %v612
  %v712 = vpack.c.b16 %v615, %v614
  %v713 = vpack.c.b16 %v617, %v616
  %v714 = vpack.c.b16 %v619, %v618
  %v715 = vpack.c.b16 %v621, %v620
  %v716 = vpack.c.b16 %v623, %v622
  %v717 = vpack.c.b16 %v625, %v624
  %v718 = vpack.c.b16 %v627, %v626
  %v719 = vpack.c.b16 %v629, %v628
  %v720 = vpack.c.b16 %v631, %v630
  %v721 = vpack.c.b16 %v633, %v632
  %v722 = vpack.c.b16 %v635, %v634
  %v723 = vpack.c.b16 %v637, %v636
  %v724 = vpack.c.b16 %v639, %v638
  %v725 = vpack.c.b16 %v641, %v640
  %v726 = vpack.c.b16 %v643, %v642
  %v727 = vpack.c.b16 %v645, %v644
  %v728 = vpack.c.b16 %v647, %v646
  %v729 = vpack.c.b16 %v649, %v648
  %v730 = vpack.c.b16 %v651, %v650
  %v731 = vpack.c.b16 %v653, %v652
  %v732 = vpack.c.b16 %v655, %v654
  %v733 = vpack.c.b16 %v657, %v656
  %v734 = vpack.c.b16 %v659, %v658
  %v735 = vpack.c.b16 %v661, %v660
  %v736 = vpack.c.b16 %v663, %v662
  %v737 = vpack.c.b16 %v665, %v664
  %810 = vmatprep.subr.bf16.mxu0 0
  %811 = vmatpush1.bf16.msra.mxu0 %v666
  %812 = vmatprep.subr.bf16.mxu0 0
  %813 = vmatpush1.bf16.msra.mxu0 %v667
  %814 = vmatprep.subr.bf16.mxu0 0
  %815 = vmatpush1.bf16.msra.mxu0 %v668
  %816 = vmatprep.subr.bf16.mxu0 0
  %817 = vmatpush1.bf16.msra.mxu0 %v669
  %818 = vmatprep.subr.bf16.mxu0 0
  %819 = vmatpush1.bf16.msra.mxu0 %v670
  %820 = vmatprep.subr.bf16.mxu0 0
  %821 = vmatpush1.bf16.msra.mxu0 %v671
  %822 = vmatprep.subr.bf16.mxu0 0
  %823 = vmatpush1.bf16.msra.mxu0 %v672
  %824 = vmatprep.subr.bf16.mxu0 0
  %825 = vmatpush1.bf16.msra.mxu0 %v673
  %826 = vmatprep.subr.bf16.mxu0 0
  %827 = vmatpush1.bf16.msra.mxu0 %v674
  %828 = vmatprep.subr.bf16.mxu0 0
  %829 = vmatpush1.bf16.msra.mxu0 %v675
  %830 = vmatprep.subr.bf16.mxu0 0
  %831 = vmatpush1.bf16.msra.mxu0 %v676
  %832 = vmatprep.subr.bf16.mxu0 0
  %833 = vmatpush1.bf16.msra.mxu0 %v677
  %834 = vmatprep.subr.bf16.mxu0 0
  %835 = vmatpush1.bf16.msra.mxu0 %v678
  %836 = vmatprep.subr.bf16.mxu0 0
  %837 = vmatpush1.bf16.msra.mxu0 %v679
  %838 = vmatprep.subr.bf16.mxu0 0
  %839 = vmatpush1.bf16.msra.mxu0 %v680
  %840 = vmatprep.subr.bf16.mxu0 0
  %841 = vmatpush1.bf16.msra.mxu0 %v681
  %842 = vmatprep.mubr.bf16.mxu0 %v361
  %843 = vmatmul.mubr.bf16.gmra.mrb[0].mxu0 %v360
  %v844 = vpop.f32.mrb[0].mxu0
  %v845 = vadd.f32 0.0, %v844
  %v846 = vpop.f32.mrb[0].mxu0
  %v847 = vpop.f32.mrb[0].mxu0
  %v848 = vadd.f32 0.0, %v847
  %v849 = vpop.f32.mrb[0].mxu0
  %850 = vdwg.mxu0
  %851 = vmatprep.subr.bf16.mxu0 0
  %852 = vmatpush1.bf16.msra.mxu0 %v682
  %853 = vmatprep.subr.bf16.mxu0 0
  %854 = vmatpush1.bf16.msra.mxu0 %v683
  %855 = vmatprep.subr.bf16.mxu0 0
  %856 = vmatpush1.bf16.msra.mxu0 %v684
  %857 = vmatprep.subr.bf16.mxu0 0
  %858 = vmatpush1.bf16.msra.mxu0 %v685
  %859 = vmatprep.subr.bf16.mxu0 0
  %860 = vmatpush1.bf16.msra.mxu0 %v686
  %861 = vmatprep.subr.bf16.mxu0 0
  %862 = vmatpush1.bf16.msra.mxu0 %v687
  %863 = vmatprep.subr.bf16.mxu0 0
  %864 = vmatpush1.bf16.msra.mxu0 %v688
  %865 = vmatprep.subr.bf16.mxu0 0
  %866 = vmatpush1.bf16.msra.mxu0 %v689
  %867 = vmatprep.subr.bf16.mxu0 0
  %868 = vmatpush1.bf16.msra.mxu0 %v690
  %869 = vmatprep.subr.bf16.mxu0 0
  %870 = vmatpush1.bf16.msra.mxu0 %v691
  %871 = vmatprep.subr.bf16.mxu0 0
  %872 = vmatpush1.bf16.msra.mxu0 %v692
  %873 = vmatprep.subr.bf16.mxu0 0
  %874 = vmatpush1.bf16.msra.mxu0 %v693
  %875 = vmatprep.subr.bf16.mxu0 0
  %876 = vmatpush1.bf16.msra.mxu0 %v694
  %877 = vmatprep.subr.bf16.mxu0 0
  %878 = vmatpush1.bf16.msra.mxu0 %v695
  %879 = vmatprep.subr.bf16.mxu0 0
  %880 = vmatpush1.bf16.msra.mxu0 %v696
  %881 = vmatprep.subr.bf16.mxu0 0
  %882 = vmatpush1.bf16.msra.mxu0 %v697
  %883 = vmatprep.mubr.bf16.mxu0 %v363
  %884 = vmatmul.mubr.bf16.gmra.mrb[0].mxu0 %v362
  %v885 = vpop.f32.mrb[0].mxu0
  %v886 = vadd.f32 %v845, %v885
  %v887 = vpop.f32.mrb[0].mxu0
  %v888 = vpop.f32.mrb[0].mxu0
  %v889 = vadd.f32 %v848, %v888
  %v890 = vpop.f32.mrb[0].mxu0
  %891 = vdwg.mxu0
  %892 = vmatprep.subr.bf16.mxu0 0
  %893 = vmatpush1.bf16.msra.mxu0 %v698
  %894 = vmatprep.subr.bf16.mxu0 0
  %895 = vmatpush1.bf16.msra.mxu0 %v699
  %896 = vmatprep.subr.bf16.mxu0 0
  %897 = vmatpush1.bf16.msra.mxu0 %v700
  %898 = vmatprep.subr.bf16.mxu0 0
  %899 = vmatpush1.bf16.msra.mxu0 %v701
  %900 = vmatprep.subr.bf16.mxu0 0
  %901 = vmatpush1.bf16.msra.mxu0 %v702
  %902 = vmatprep.subr.bf16.mxu0 0
  %903 = vmatpush1.bf16.msra.mxu0 %v703
  %904 = vmatprep.subr.bf16.mxu0 0
  %905 = vmatpush1.bf16.msra.mxu0 %v704
  %906 = vmatprep.subr.bf16.mxu0 0
  %907 = vmatpush1.bf16.msra.mxu0 %v705
  %908 = vmatprep.subr.bf16.mxu0 0
  %909 = vmatpush1.bf16.msra.mxu0 %v706
  %910 = vmatprep.subr.bf16.mxu0 0
  %911 = vmatpush1.bf16.msra.mxu0 %v707
  %912 = vmatprep.subr.bf16.mxu0 0
  %913 = vmatpush1.bf16.msra.mxu0 %v708
  %914 = vmatprep.subr.bf16.mxu0 0
  %915 = vmatpush1.bf16.msra.mxu0 %v709
  %916 = vmatprep.subr.bf16.mxu0 0
  %917 = vmatpush1.bf16.msra.mxu0 %v710
  %918 = vmatprep.subr.bf16.mxu0 0
  %919 = vmatpush1.bf16.msra.mxu0 %v711
  %920 = vmatprep.subr.bf16.mxu0 0
  %921 = vmatpush1.bf16.msra.mxu0 %v712
  %922 = vmatprep.subr.bf16.mxu0 0
  %923 = vmatpush1.bf16.msra.mxu0 %v713
  %924 = vmatprep.mubr.bf16.mxu0 %v365
  %925 = vmatmul.mubr.bf16.gmra.mrb[0].mxu0 %v364
  %v926 = vpop.f32.mrb[0].mxu0
  %v927 = vadd.f32 %v886, %v926
  %v928 = vpop.f32.mrb[0].mxu0
  %v929 = vpop.f32.mrb[0].mxu0
  %v930 = vadd.f32 %v889, %v929
  %v931 = vpop.f32.mrb[0].mxu0
  %932 = vdwg.mxu0
  %933 = vmatprep.subr.bf16.mxu0 0
  %934 = vmatpush1.bf16.msra.mxu0 %v714
  %935 = vmatprep.subr.bf16.mxu0 0
  %936 = vmatpush1.bf16.msra.mxu0 %v715
  %937 = vmatprep.subr.bf16.mxu0 0
  %938 = vmatpush1.bf16.msra.mxu0 %v716
  %939 = vmatprep.subr.bf16.mxu0 0
  %940 = vmatpush1.bf16.msra.mxu0 %v717
  %941 = vmatprep.subr.bf16.mxu0 0
  %942 = vmatpush1.bf16.msra.mxu0 %v718
  %943 = vmatprep.subr.bf16.mxu0 0
  %944 = vmatpush1.bf16.msra.mxu0 %v719
  %945 = vmatprep.subr.bf16.mxu0 0
  %946 = vmatpush1.bf16.msra.mxu0 %v720
  %947 = vmatprep.subr.bf16.mxu0 0
  %948 = vmatpush1.bf16.msra.mxu0 %v721
  %949 = vmatprep.subr.bf16.mxu0 0
  %950 = vmatpush1.bf16.msra.mxu0 %v722
  %951 = vmatprep.subr.bf16.mxu0 0
  %952 = vmatpush1.bf16.msra.mxu0 %v723
  %953 = vmatprep.subr.bf16.mxu0 0
  %954 = vmatpush1.bf16.msra.mxu0 %v724
  %955 = vmatprep.subr.bf16.mxu0 0
  %956 = vmatpush1.bf16.msra.mxu0 %v725
  %957 = vmatprep.subr.bf16.mxu0 0
  %958 = vmatpush1.bf16.msra.mxu0 %v726
  %959 = vmatprep.subr.bf16.mxu0 0
  %960 = vmatpush1.bf16.msra.mxu0 %v727
  %961 = vmatprep.subr.bf16.mxu0 0
  %962 = vmatpush1.bf16.msra.mxu0 %v728
  %963 = vmatprep.subr.bf16.mxu0 0
  %964 = vmatpush1.bf16.msra.mxu0 %v729
  %965 = vmatprep.mubr.bf16.mxu0 %v367
  %966 = vmatmul.mubr.bf16.gmra.mrb[0].mxu0 %v366
  %v967 = vpop.f32.mrb[0].mxu0
  %v968 = vadd.f32 %v927, %v967
  %v969 = vpop.f32.mrb[0].mxu0
  %v970 = vpop.f32.mrb[0].mxu0
  %v971 = vadd.f32 %v930, %v970
  %v972 = vpop.f32.mrb[0].mxu0
  %973 = vdwg.mxu0
  %974 = vmatprep.subr.bf16.mxu0 0
  %975 = vmatpush1.bf16.msra.mxu0 %v730
  %976 = vmatprep.subr.bf16.mxu0 0
  %977 = vmatpush1.bf16.msra.mxu0 %v731
  %978 = vmatprep.subr.bf16.mxu0 0
  %979 = vmatpush1.bf16.msra.mxu0 %v732
  %980 = vmatprep.subr.bf16.mxu0 0
  %981 = vmatpush1.bf16.msra.mxu0 %v733
  %982 = vmatprep.subr.bf16.mxu0 0
  %983 = vmatpush1.bf16.msra.mxu0 %v734
  %984 = vmatprep.subr.bf16.mxu0 0
  %985 = vmatpush1.bf16.msra.mxu0 %v735
  %986 = vmatprep.subr.bf16.mxu0 0
  %987 = vmatpush1.bf16.msra.mxu0 %v736
  %988 = vmatprep.subr.bf16.mxu0 0
  %989 = vmatpush1.bf16.msra.mxu0 %v737
  %990 = vmatprep.subr.bf16.mxu0 0
  %991 = vmatpush1.bf16.msra.mxu0 0
  %992 = vmatprep.subr.bf16.mxu0 0
  %993 = vmatpush1.bf16.msra.mxu0 0
  %994 = vmatprep.subr.bf16.mxu0 0
  %995 = vmatpush1.bf16.msra.mxu0 0
  %996 = vmatprep.subr.bf16.mxu0 0
  %997 = vmatpush1.bf16.msra.mxu0 0
  %998 = vmatprep.subr.bf16.mxu0 0
  %999 = vmatpush1.bf16.msra.mxu0 0
  %1000 = vmatprep.subr.bf16.mxu0 0
  %1001 = vmatpush1.bf16.msra.mxu0 0
  %1002 = vmatprep.subr.bf16.mxu0 0
  %1003 = vmatpush1.bf16.msra.mxu0 0
  %1004 = vmatprep.subr.bf16.mxu0 0
  %1005 = vmatpush1.bf16.msra.mxu0 0
  %1006 = vmatprep.mubr.bf16.mxu0 0
  %1007 = vmatmul.mubr.bf16.gmra.mrb[0].mxu0 %v368
  %v1008 = vpop.f32.mrb[0].mxu0
  %v1009 = vadd.f32 %v968, %v1008
  %v1010 = vpop.f32.mrb[0].mxu0
  %v1011 = vpop.f32.mrb[0].mxu0
  %v1012 = vadd.f32 %v971, %v1011
  %v1013 = vpop.f32.mrb[0].mxu0
  %1014 = vdwg.mxu0
  %v1025 = vunpack.c.l.b16 %v24
  %v1026 = vunpack.c.h.b16 %v24
  %v1027 = vunpack.c.l.b16 %v25
  %v1028 = vunpack.c.h.b16 %v25
  %v1029 = vunpack.c.l.b16 %v26
  %v1030 = vunpack.c.h.b16 %v26
  %v1031 = vunpack.c.l.b16 %v27
  %v1032 = vunpack.c.h.b16 %v27
  %v1033 = vunpack.c.l.b16 %v28
  %v1034 = vunpack.c.l.b16 %v29
  %v1035 = vunpack.c.h.b16 %v29
  %v1036 = vunpack.c.l.b16 %v30
  %v1037 = vunpack.c.h.b16 %v30
  %v1038 = vunpack.c.l.b16 %v31
  %v1039 = vunpack.c.h.b16 %v31
  %v1040 = vunpack.c.l.b16 %v32
  %v1041 = vunpack.c.h.b16 %v32
  %v1042 = vunpack.c.l.b16 %v33
  %v1043 = vpack.c.b16 %v1034, %v1025
  %v1044 = vpack.c.b16 %v1035, %v1026
  %v1045 = vpack.c.b16 %v1036, %v1027
  %v1046 = vpack.c.b16 %v1037, %v1028
  %v1047 = vpack.c.b16 %v1038, %v1029
  %v1048 = vpack.c.b16 %v1039, %v1030
  %v1049 = vpack.c.b16 %v1040, %v1031
  %v1050 = vpack.c.b16 %v1041, %v1032
  %v1051 = vpack.c.b16 %v1042, %v1033
  %v1205 = vunpack.c.l.b16 %v34
  %v1206 = vunpack.c.l.b16 %v35
  %v1207 = vunpack.c.l.b16 %v36
  %v1208 = vunpack.c.l.b16 %v37
  %v1209 = vunpack.c.l.b16 %v38
  %v1210 = vunpack.c.l.b16 %v39
  %v1211 = vunpack.c.l.b16 %v40
  %v1212 = vunpack.c.l.b16 %v41
  %v1213 = vunpack.c.l.b16 %v42
  %v1214 = vunpack.c.l.b16 %v43
  %v1215 = vunpack.c.l.b16 %v44
  %v1216 = vunpack.c.l.b16 %v45
  %v1217 = vunpack.c.l.b16 %v46
  %v1218 = vunpack.c.l.b16 %v47
  %v1219 = vunpack.c.l.b16 %v48
  %v1220 = vunpack.c.l.b16 %v49
  %v1221 = vunpack.c.l.b16 %v50
  %v1222 = vunpack.c.l.b16 %v51
  %v1223 = vunpack.c.l.b16 %v52
  %v1224 = vunpack.c.l.b16 %v53
  %v1225 = vunpack.c.l.b16 %v54
  %v1226 = vunpack.c.l.b16 %v55
  %v1227 = vunpack.c.l.b16 %v56
  %v1228 = vunpack.c.l.b16 %v57
  %v1229 = vunpack.c.l.b16 %v58
  %v1230 = vunpack.c.l.b16 %v59
  %v1231 = vunpack.c.l.b16 %v60
  %v1232 = vunpack.c.l.b16 %v61
  %v1233 = vunpack.c.l.b16 %v62
  %v1234 = vunpack.c.l.b16 %v63
  %v1235 = vunpack.c.l.b16 %v64
  %v1236 = vunpack.c.l.b16 %v65
  %v1237 = vunpack.c.l.b16 %v66
  %v1238 = vunpack.c.l.b16 %v67
  %v1239 = vunpack.c.l.b16 %v68
  %v1240 = vunpack.c.l.b16 %v69
  %v1241 = vunpack.c.l.b16 %v70
  %v1242 = vunpack.c.l.b16 %v71
  %v1243 = vunpack.c.l.b16 %v72
  %v1244 = vunpack.c.l.b16 %v73
  %v1245 = vunpack.c.l.b16 %v74
  %v1246 = vunpack.c.l.b16 %v75
  %v1247 = vunpack.c.l.b16 %v76
  %v1248 = vunpack.c.l.b16 %v77
  %v1249 = vunpack.c.l.b16 %v78
  %v1250 = vunpack.c.l.b16 %v79
  %v1251 = vunpack.c.l.b16 %v80
  %v1252 = vunpack.c.l.b16 %v81
  %v1253 = vunpack.c.l.b16 %v82
  %v1254 = vunpack.c.l.b16 %v83
  %v1255 = vunpack.c.l.b16 %v84
  %v1256 = vunpack.c.l.b16 %v85
  %v1257 = vunpack.c.l.b16 %v86
  %v1258 = vunpack.c.l.b16 %v87
  %v1259 = vunpack.c.l.b16 %v88
  %v1260 = vunpack.c.l.b16 %v89
  %v1261 = vunpack.c.l.b16 %v90
  %v1262 = vunpack.c.l.b16 %v91
  %v1263 = vunpack.c.l.b16 %v92
  %v1264 = vunpack.c.l.b16 %v93
  %v1265 = vunpack.c.l.b16 %v94
  %v1266 = vunpack.c.l.b16 %v95
  %v1267 = vunpack.c.l.b16 %v96
  %v1268 = vunpack.c.l.b16 %v97
  %v1269 = vunpack.c.l.b16 %v98
  %v1270 = vunpack.c.l.b16 %v99
  %v1271 = vunpack.c.l.b16 %v100
  %v1272 = vunpack.c.l.b16 %v101
  %v1273 = vunpack.c.l.b16 %v102
  %v1274 = vunpack.c.l.b16 %v103
  %v1275 = vunpack.c.l.b16 %v104
  %v1276 = vunpack.c.l.b16 %v105
  %v1277 = vunpack.c.l.b16 %v106
  %v1278 = vunpack.c.l.b16 %v107
  %v1279 = vunpack.c.l.b16 %v108
  %v1280 = vunpack.c.l.b16 %v109
  %v1281 = vunpack.c.l.b16 %v110
  %v1282 = vunpack.c.l.b16 %v111
  %v1283 = vunpack.c.l.b16 %v112
  %v1284 = vunpack.c.l.b16 %v113
  %v1285 = vunpack.c.l.b16 %v114
  %v1286 = vunpack.c.l.b16 %v115
  %v1287 = vunpack.c.l.b16 %v116
  %v1288 = vunpack.c.l.b16 %v117
  %v1289 = vunpack.c.l.b16 %v118
  %v1290 = vunpack.c.l.b16 %v119
  %v1291 = vunpack.c.l.b16 %v120
  %v1292 = vunpack.c.l.b16 %v121
  %v1293 = vunpack.c.l.b16 %v122
  %v1294 = vunpack.c.l.b16 %v123
  %v1295 = vunpack.c.l.b16 %v124
  %v1296 = vunpack.c.l.b16 %v125
  %v1297 = vunpack.c.l.b16 %v126
  %v1298 = vunpack.c.l.b16 %v127
  %v1299 = vunpack.c.l.b16 %v128
  %v1300 = vunpack.c.l.b16 %v129
  %v1301 = vunpack.c.l.b16 %v130
  %v1302 = vunpack.c.l.b16 %v131
  %v1303 = vunpack.c.l.b16 %v132
  %v1304 = vunpack.c.l.b16 %v133
  %v1305 = vunpack.c.l.b16 %v134
  %v1306 = vunpack.c.l.b16 %v135
  %v1307 = vunpack.c.l.b16 %v136
  %v1308 = vunpack.c.l.b16 %v137
  %v1309 = vunpack.c.l.b16 %v138
  %v1310 = vunpack.c.l.b16 %v139
  %v1311 = vunpack.c.l.b16 %v140
  %v1312 = vunpack.c.l.b16 %v141
  %v1313 = vunpack.c.l.b16 %v142
  %v1314 = vunpack.c.l.b16 %v143
  %v1315 = vunpack.c.l.b16 %v144
  %v1316 = vunpack.c.l.b16 %v145
  %v1317 = vunpack.c.l.b16 %v146
  %v1318 = vunpack.c.l.b16 %v147
  %v1319 = vunpack.c.l.b16 %v148
  %v1320 = vunpack.c.l.b16 %v149
  %v1321 = vunpack.c.l.b16 %v150
  %v1322 = vunpack.c.l.b16 %v151
  %v1323 = vunpack.c.l.b16 %v152
  %v1324 = vunpack.c.l.b16 %v153
  %v1325 = vunpack.c.l.b16 %v154
  %v1326 = vunpack.c.l.b16 %v155
  %v1327 = vunpack.c.l.b16 %v156
  %v1328 = vunpack.c.l.b16 %v157
  %v1329 = vunpack.c.l.b16 %v158
  %v1330 = vunpack.c.l.b16 %v159
  %v1331 = vunpack.c.l.b16 %v160
  %v1332 = vunpack.c.l.b16 %v161
  %v1333 = vunpack.c.l.b16 %v162
  %v1334 = vunpack.c.l.b16 %v163
  %v1335 = vunpack.c.l.b16 %v164
  %v1336 = vunpack.c.l.b16 %v165
  %v1337 = vunpack.c.l.b16 %v166
  %v1338 = vunpack.c.l.b16 %v167
  %v1339 = vunpack.c.l.b16 %v168
  %v1340 = vunpack.c.l.b16 %v169
  %v1341 = vunpack.c.l.b16 %v170
  %v1342 = vunpack.c.l.b16 %v171
  %v1343 = vunpack.c.l.b16 %v172
  %v1344 = vunpack.c.l.b16 %v173
  %v1345 = vunpack.c.l.b16 %v174
  %v1346 = vunpack.c.l.b16 %v175
  %v1347 = vunpack.c.l.b16 %v176
  %v1348 = vunpack.c.l.b16 %v177
  %v1349 = vpack.c.b16 %v1206, %v1205
  %v1350 = vpack.c.b16 %v1208, %v1207
  %v1351 = vpack.c.b16 %v1210, %v1209
  %v1352 = vpack.c.b16 %v1212, %v1211
  %v1353 = vpack.c.b16 %v1214, %v1213
  %v1354 = vpack.c.b16 %v1216, %v1215
  %v1355 = vpack.c.b16 %v1218, %v1217
  %v1356 = vpack.c.b16 %v1220, %v1219
  %v1357 = vpack.c.b16 %v1222, %v1221
  %v1358 = vpack.c.b16 %v1224, %v1223
  %v1359 = vpack.c.b16 %v1226, %v1225
  %v1360 = vpack.c.b16 %v1228, %v1227
  %v1361 = vpack.c.b16 %v1230, %v1229
  %v1362 = vpack.c.b16 %v1232, %v1231
  %v1363 = vpack.c.b16 %v1234, %v1233
  %v1364 = vpack.c.b16 %v1236, %v1235
  %v1365 = vpack.c.b16 %v1238, %v1237
  %v1366 = vpack.c.b16 %v1240, %v1239
  %v1367 = vpack.c.b16 %v1242, %v1241
  %v1368 = vpack.c.b16 %v1244, %v1243
  %v1369 = vpack.c.b16 %v1246, %v1245
  %v1370 = vpack.c.b16 %v1248, %v1247
  %v1371 = vpack.c.b16 %v1250, %v1249
  %v1372 = vpack.c.b16 %v1252, %v1251
  %v1373 = vpack.c.b16 %v1254, %v1253
  %v1374 = vpack.c.b16 %v1256, %v1255
  %v1375 = vpack.c.b16 %v1258, %v1257
  %v1376 = vpack.c.b16 %v1260, %v1259
  %v1377 = vpack.c.b16 %v1262, %v1261
  %v1378 = vpack.c.b16 %v1264, %v1263
  %v1379 = vpack.c.b16 %v1266, %v1265
  %v1380 = vpack.c.b16 %v1268, %v1267
  %v1381 = vpack.c.b16 %v1270, %v1269
  %v1382 = vpack.c.b16 %v1272, %v1271
  %v1383 = vpack.c.b16 %v1274, %v1273
  %v1384 = vpack.c.b16 %v1276, %v1275
  %v1385 = vpack.c.b16 %v1278, %v1277
  %v1386 = vpack.c.b16 %v1280, %v1279
  %v1387 = vpack.c.b16 %v1282, %v1281
  %v1388 = vpack.c.b16 %v1284, %v1283
  %v1389 = vpack.c.b16 %v1286, %v1285
  %v1390 = vpack.c.b16 %v1288, %v1287
  %v1391 = vpack.c.b16 %v1290, %v1289
  %v1392 = vpack.c.b16 %v1292, %v1291
  %v1393 = vpack.c.b16 %v1294, %v1293
  %v1394 = vpack.c.b16 %v1296, %v1295
  %v1395 = vpack.c.b16 %v1298, %v1297
  %v1396 = vpack.c.b16 %v1300, %v1299
  %v1397 = vpack.c.b16 %v1302, %v1301
  %v1398 = vpack.c.b16 %v1304, %v1303
  %v1399 = vpack.c.b16 %v1306, %v1305
  %v1400 = vpack.c.b16 %v1308, %v1307
  %v1401 = vpack.c.b16 %v1310, %v1309
  %v1402 = vpack.c.b16 %v1312, %v1311
  %v1403 = vpack.c.b16 %v1314, %v1313
  %v1404 = vpack.c.b16 %v1316, %v1315
  %v1405 = vpack.c.b16 %v1318, %v1317
  %v1406 = vpack.c.b16 %v1320, %v1319
  %v1407 = vpack.c.b16 %v1322, %v1321
  %v1408 = vpack.c.b16 %v1324, %v1323
  %v1409 = vpack.c.b16 %v1326, %v1325
  %v1410 = vpack.c.b16 %v1328, %v1327
  %v1411 = vpack.c.b16 %v1330, %v1329
  %v1412 = vpack.c.b16 %v1332, %v1331
  %v1413 = vpack.c.b16 %v1334, %v1333
  %v1414 = vpack.c.b16 %v1336, %v1335
  %v1415 = vpack.c.b16 %v1338, %v1337
  %v1416 = vpack.c.b16 %v1340, %v1339
  %v1417 = vpack.c.b16 %v1342, %v1341
  %v1418 = vpack.c.b16 %v1344, %v1343
  %v1419 = vpack.c.b16 %v1346, %v1345
  %v1420 = vpack.c.b16 %v1348, %v1347
  %1493 = vmatprep.subr.bf16.mxu0 0
  %1494 = vmatpush1.bf16.msra.mxu0 %v1349
  %1495 = vmatprep.subr.bf16.mxu0 0
  %1496 = vmatpush1.bf16.msra.mxu0 %v1350
  %1497 = vmatprep.subr.bf16.mxu0 0
  %1498 = vmatpush1.bf16.msra.mxu0 %v1351
  %1499 = vmatprep.subr.bf16.mxu0 0
  %1500 = vmatpush1.bf16.msra.mxu0 %v1352
  %1501 = vmatprep.subr.bf16.mxu0 0
  %1502 = vmatpush1.bf16.msra.mxu0 %v1353
  %1503 = vmatprep.subr.bf16.mxu0 0
  %1504 = vmatpush1.bf16.msra.mxu0 %v1354
  %1505 = vmatprep.subr.bf16.mxu0 0
  %1506 = vmatpush1.bf16.msra.mxu0 %v1355
  %1507 = vmatprep.subr.bf16.mxu0 0
  %1508 = vmatpush1.bf16.msra.mxu0 %v1356
  %1509 = vmatprep.subr.bf16.mxu0 0
  %1510 = vmatpush1.bf16.msra.mxu0 %v1357
  %1511 = vmatprep.subr.bf16.mxu0 0
  %1512 = vmatpush1.bf16.msra.mxu0 %v1358
  %1513 = vmatprep.subr.bf16.mxu0 0
  %1514 = vmatpush1.bf16.msra.mxu0 %v1359
  %1515 = vmatprep.subr.bf16.mxu0 0
  %1516 = vmatpush1.bf16.msra.mxu0 %v1360
  %1517 = vmatprep.subr.bf16.mxu0 0
  %1518 = vmatpush1.bf16.msra.mxu0 %v1361
  %1519 = vmatprep.subr.bf16.mxu0 0
  %1520 = vmatpush1.bf16.msra.mxu0 %v1362
  %1521 = vmatprep.subr.bf16.mxu0 0
  %1522 = vmatpush1.bf16.msra.mxu0 %v1363
  %1523 = vmatprep.subr.bf16.mxu0 0
  %1524 = vmatpush1.bf16.msra.mxu0 %v1364
  %1525 = vmatprep.mubr.bf16.mxu0 %v1044
  %1526 = vmatmul.mubr.bf16.gmra.mrb[0].mxu0 %v1043
  %v1527 = vpop.f32.mrb[0].mxu0
  %v1528 = vadd.f32 %v1009, %v1527
  %v1529 = vpop.f32.mrb[0].mxu0
  %v1530 = vpop.f32.mrb[0].mxu0
  %v1531 = vadd.f32 %v1012, %v1530
  %v1532 = vpop.f32.mrb[0].mxu0
  %1533 = vdwg.mxu0
  %1534 = vmatprep.subr.bf16.mxu0 0
  %1535 = vmatpush1.bf16.msra.mxu0 %v1365
  %1536 = vmatprep.subr.bf16.mxu0 0
  %1537 = vmatpush1.bf16.msra.mxu0 %v1366
  %1538 = vmatprep.subr.bf16.mxu0 0
  %1539 = vmatpush1.bf16.msra.mxu0 %v1367
  %1540 = vmatprep.subr.bf16.mxu0 0
  %1541 = vmatpush1.bf16.msra.mxu0 %v1368
  %1542 = vmatprep.subr.bf16.mxu0 0
  %1543 = vmatpush1.bf16.msra.mxu0 %v1369
  %1544 = vmatprep.subr.bf16.mxu0 0
  %1545 = vmatpush1.bf16.msra.mxu0 %v1370
  %1546 = vmatprep.subr.bf16.mxu0 0
  %1547 = vmatpush1.bf16.msra.mxu0 %v1371
  %1548 = vmatprep.subr.bf16.mxu0 0
  %1549 = vmatpush1.bf16.msra.mxu0 %v1372
  %1550 = vmatprep.subr.bf16.mxu0 0
  %1551 = vmatpush1.bf16.msra.mxu0 %v1373
  %1552 = vmatprep.subr.bf16.mxu0 0
  %1553 = vmatpush1.bf16.msra.mxu0 %v1374
  %1554 = vmatprep.subr.bf16.mxu0 0
  %1555 = vmatpush1.bf16.msra.mxu0 %v1375
  %1556 = vmatprep.subr.bf16.mxu0 0
  %1557 = vmatpush1.bf16.msra.mxu0 %v1376
  %1558 = vmatprep.subr.bf16.mxu0 0
  %1559 = vmatpush1.bf16.msra.mxu0 %v1377
  %1560 = vmatprep.subr.bf16.mxu0 0
  %1561 = vmatpush1.bf16.msra.mxu0 %v1378
  %1562 = vmatprep.subr.bf16.mxu0 0
  %1563 = vmatpush1.bf16.msra.mxu0 %v1379
  %1564 = vmatprep.subr.bf16.mxu0 0
  %1565 = vmatpush1.bf16.msra.mxu0 %v1380
  %1566 = vmatprep.mubr.bf16.mxu0 %v1046
  %1567 = vmatmul.mubr.bf16.gmra.mrb[0].mxu0 %v1045
  %v1568 = vpop.f32.mrb[0].mxu0
  %v1569 = vadd.f32 %v1528, %v1568
  %v1570 = vpop.f32.mrb[0].mxu0
  %v1571 = vpop.f32.mrb[0].mxu0
  %v1572 = vadd.f32 %v1531, %v1571
  %v1573 = vpop.f32.mrb[0].mxu0
  %1574 = vdwg.mxu0
  %1575 = vmatprep.subr.bf16.mxu0 0
  %1576 = vmatpush1.bf16.msra.mxu0 %v1381
  %1577 = vmatprep.subr.bf16.mxu0 0
  %1578 = vmatpush1.bf16.msra.mxu0 %v1382
  %1579 = vmatprep.subr.bf16.mxu0 0
  %1580 = vmatpush1.bf16.msra.mxu0 %v1383
  %1581 = vmatprep.subr.bf16.mxu0 0
  %1582 = vmatpush1.bf16.msra.mxu0 %v1384
  %1583 = vmatprep.subr.bf16.mxu0 0
  %1584 = vmatpush1.bf16.msra.mxu0 %v1385
  %1585 = vmatprep.subr.bf16.mxu0 0
  %1586 = vmatpush1.bf16.msra.mxu0 %v1386
  %1587 = vmatprep.subr.bf16.mxu0 0
  %1588 = vmatpush1.bf16.msra.mxu0 %v1387
  %1589 = vmatprep.subr.bf16.mxu0 0
  %1590 = vmatpush1.bf16.msra.mxu0 %v1388
  %1591 = vmatprep.subr.bf16.mxu0 0
  %1592 = vmatpush1.bf16.msra.mxu0 %v1389
  %1593 = vmatprep.subr.bf16.mxu0 0
  %1594 = vmatpush1.bf16.msra.mxu0 %v1390
  %1595 = vmatprep.subr.bf16.mxu0 0
  %1596 = vmatpush1.bf16.msra.mxu0 %v1391
  %1597 = vmatprep.subr.bf16.mxu0 0
  %1598 = vmatpush1.bf16.msra.mxu0 %v1392
  %1599 = vmatprep.subr.bf16.mxu0 0
  %1600 = vmatpush1.bf16.msra.mxu0 %v1393
  %1601 = vmatprep.subr.bf16.mxu0 0
  %1602 = vmatpush1.bf16.msra.mxu0 %v1394
  %1603 = vmatprep.subr.bf16.mxu0 0
  %1604 = vmatpush1.bf16.msra.mxu0 %v1395
  %1605 = vmatprep.subr.bf16.mxu0 0
  %1606 = vmatpush1.bf16.msra.mxu0 %v1396
  %1607 = vmatprep.mubr.bf16.mxu0 %v1048
  %1608 = vmatmul.mubr.bf16.gmra.mrb[0].mxu0 %v1047
  %v1609 = vpop.f32.mrb[0].mxu0
  %v1610 = vadd.f32 %v1569, %v1609
  %v1611 = vpop.f32.mrb[0].mxu0
  %v1612 = vpop.f32.mrb[0].mxu0
  %v1613 = vadd.f32 %v1572, %v1612
  %v1614 = vpop.f32.mrb[0].mxu0
  %1615 = vdwg.mxu0
  %1616 = vmatprep.subr.bf16.mxu0 0
  %1617 = vmatpush1.bf16.msra.mxu0 %v1397
  %1618 = vmatprep.subr.bf16.mxu0 0
  %1619 = vmatpush1.bf16.msra.mxu0 %v1398
  %1620 = vmatprep.subr.bf16.mxu0 0
  %1621 = vmatpush1.bf16.msra.mxu0 %v1399
  %1622 = vmatprep.subr.bf16.mxu0 0
  %1623 = vmatpush1.bf16.msra.mxu0 %v1400
  %1624 = vmatprep.subr.bf16.mxu0 0
  %1625 = vmatpush1.bf16.msra.mxu0 %v1401
  %1626 = vmatprep.subr.bf16.mxu0 0
  %1627 = vmatpush1.bf16.msra.mxu0 %v1402
  %1628 = vmatprep.subr.bf16.mxu0 0
  %1629 = vmatpush1.bf16.msra.mxu0 %v1403
  %1630 = vmatprep.subr.bf16.mxu0 0
  %1631 = vmatpush1.bf16.msra.mxu0 %v1404
  %1632 = vmatprep.subr.bf16.mxu0 0
  %1633 = vmatpush1.bf16.msra.mxu0 %v1405
  %1634 = vmatprep.subr.bf16.mxu0 0
  %1635 = vmatpush1.bf16.msra.mxu0 %v1406
  %1636 = vmatprep.subr.bf16.mxu0 0
  %1637 = vmatpush1.bf16.msra.mxu0 %v1407
  %1638 = vmatprep.subr.bf16.mxu0 0
  %1639 = vmatpush1.bf16.msra.mxu0 %v1408
  %1640 = vmatprep.subr.bf16.mxu0 0
  %1641 = vmatpush1.bf16.msra.mxu0 %v1409
  %1642 = vmatprep.subr.bf16.mxu0 0
  %1643 = vmatpush1.bf16.msra.mxu0 %v1410
  %1644 = vmatprep.subr.bf16.mxu0 0
  %1645 = vmatpush1.bf16.msra.mxu0 %v1411
  %1646 = vmatprep.subr.bf16.mxu0 0
  %1647 = vmatpush1.bf16.msra.mxu0 %v1412
  %1648 = vmatprep.mubr.bf16.mxu0 %v1050
  %1649 = vmatmul.mubr.bf16.gmra.mrb[0].mxu0 %v1049
  %v1650 = vpop.f32.mrb[0].mxu0
  %v1651 = vadd.f32 %v1610, %v1650
  %v1652 = vpop.f32.mrb[0].mxu0
  %v1653 = vpop.f32.mrb[0].mxu0
  %v1654 = vadd.f32 %v1613, %v1653
  %v1655 = vpop.f32.mrb[0].mxu0
  %1656 = vdwg.mxu0
  %1657 = vmatprep.subr.bf16.mxu0 0
  %1658 = vmatpush1.bf16.msra.mxu0 %v1413
  %1659 = vmatprep.subr.bf16.mxu0 0
  %1660 = vmatpush1.bf16.msra.mxu0 %v1414
  %1661 = vmatprep.subr.bf16.mxu0 0
  %1662 = vmatpush1.bf16.msra.mxu0 %v1415
  %1663 = vmatprep.subr.bf16.mxu0 0
  %1664 = vmatpush1.bf16.msra.mxu0 %v1416
  %1665 = vmatprep.subr.bf16.mxu0 0
  %1666 = vmatpush1.bf16.msra.mxu0 %v1417
  %1667 = vmatprep.subr.bf16.mxu0 0
  %1668 = vmatpush1.bf16.msra.mxu0 %v1418
  %1669 = vmatprep.subr.bf16.mxu0 0
  %1670 = vmatpush1.bf16.msra.mxu0 %v1419
  %1671 = vmatprep.subr.bf16.mxu0 0
  %1672 = vmatpush1.bf16.msra.mxu0 %v1420
  %1673 = vmatprep.subr.bf16.mxu0 0
  %1674 = vmatpush1.bf16.msra.mxu0 0
  %1675 = vmatprep.subr.bf16.mxu0 0
  %1676 = vmatpush1.bf16.msra.mxu0 0
  %1677 = vmatprep.subr.bf16.mxu0 0
  %1678 = vmatpush1.bf16.msra.mxu0 0
  %1679 = vmatprep.subr.bf16.mxu0 0
  %1680 = vmatpush1.bf16.msra.mxu0 0
  %1681 = vmatprep.subr.bf16.mxu0 0
  %1682 = vmatpush1.bf16.msra.mxu0 0
  %1683 = vmatprep.subr.bf16.mxu0 0
  %1684 = vmatpush1.bf16.msra.mxu0 0
  %1685 = vmatprep.subr.bf16.mxu0 0
  %1686 = vmatpush1.bf16.msra.mxu0 0
  %1687 = vmatprep.subr.bf16.mxu0 0
  %1688 = vmatpush1.bf16.msra.mxu0 0
  %1689 = vmatprep.mubr.bf16.mxu0 0
  %1690 = vmatmul.mubr.bf16.gmra.mrb[0].mxu0 %v1051
  %v1691 = vpop.f32.mrb[0].mxu0
  %v1692 = vadd.f32 %v1651, %v1691
  %v1693 = vpop.f32.mrb[0].mxu0
  %v1694 = vpop.f32.mrb[0].mxu0
  %v1695 = vadd.f32 %v1654, %v1694
  %v1696 = vpop.f32.mrb[0].mxu0
  %1697 = vdwg.mxu0
  %v1698 = vld [vmem:[%s4] sm:$0x1]
  %v1700 = vlaneseq
  %v1701 = vshrl.u32 %v1700, 7
  %v1702 = vsub.s32 0, %v1701
  %v1703 = vrot.slane %v1698, %v1702
  %v1705 = vadd.f32 %v1692, %v1703
  %v1706 = vadd.f32 %v1695, %v1703
  %v1707 = vmax.f32 %v1705, 0.0
  %v1708 = vmax.f32 %v1706, 0.0
  %v1709 = vpack.c.bf16 %v1708, %v1707
  %v1711 = vunpack.c.l.b16 %v1709
  %v1712 = vunpack.c.h.b16 %v1709
  %v1713 = vpack.c.b16 %v1711, %v1711
  %v1714 = vpack.c.b16 %v1712, %v1712
  %1717 = vst [vmem:[%s5] sm:$0xf] %v1713
  %1718 = vst [vmem:[%s5 + $0x4] sm:$0xf] %v1714
  %p1719 = scmp.ne.s32.totalorder 0, 0
  // Predicated region
  $region22: #{unet_forward.13} parent=0 // pred_check
    %p1720 = pneg %p1719
  $region23: #{unet_forward.13} parent=0 // pred_check_branch
    %1722 = sbr.rel (%p1720) target = $region25
  $region24: #{unet_forward.13} parent=0 // pred_region
    %v1723 = vadd.f32 %v1707, %v1708
    %v1724 = vrot.slane %v1723, 4
    %v1725 = vadd.f32 %v1723, %v1724
    %v1726 = vrot.slane %v1725, 2
    %v1727 = vadd.f32 %v1725, %v1726
    %v1728 = vrot.slane %v1727, 1
    %v1729 = vadd.f32 %v1727, %v1728
    %1730 = vst [vmem:[%s6] sm:$0x1] %v1729
    %v1731 = vmul.f32 %v1707, %v1707
    %v1732 = vmul.f32 %v1708, %v1708
    %v1733 = vadd.f32 %v1731, %v1732
    %v1734 = vrot.slane %v1733, 4
    %v1735 = vadd.f32 %v1733, %v1734
    %v1736 = vrot.slane %v1735, 2
    %v1737 = vadd.f32 %v1735, %v1736
    %v1738 = vrot.slane %v1737, 1
    %v1739 = vadd.f32 %v1737, %v1738
    %1740 = vst [vmem:[%s7] sm:$0x1] %v1739
  $region25: #{unet_forward.13} parent=0 // pred_fallthru
    _
  %p1741 = scmp.eq.s32.totalorder 0, 0
  // Predicated region
  $region26: #{unet_forward.13} parent=0 // pred_check
    %p1742 = pneg %p1741
  $region27: #{unet_forward.13} parent=0 // pred_check_branch
    %1744 = sbr.rel (%p1742) target = $region29
  $region28: #{unet_forward.13} parent=0 // pred_region
    %s1745 = smul.u32 0, 16
    %v1746 = vlaneseq
    %v1747 = vshrl.u32 %v1746, 7
    %v1748 = vadd.s32 %v1747, 8
    %v1749 = vstv %s1745
    %v1750 = vadd.s32 %v1749, %v1747
    %v1751 = vadd.s32 %v1749, %v1748
    %vm1752 = vcmp.lt.s32.totalorder %v1750, 2
    %vm1753 = vcmp.lt.s32.totalorder %v1751, 2
    %v1754 = vsel %vm1752, %v1707, 0.0
    %v1755 = vsel %vm1753, %v1708, 0.0
    %v1756 = vadd.f32 %v1754, %v1755
    %v1757 = vrot.slane %v1756, 4
    %v1758 = vadd.f32 %v1756, %v1757
    %v1759 = vrot.slane %v1758, 2
    %v1760 = vadd.f32 %v1758, %v1759
    %v1761 = vrot.slane %v1760, 1
    %v1762 = vadd.f32 %v1760, %v1761
    %1763 = vst [vmem:[%s6] sm:$0x1] %v1762
    %v1764 = vmul.f32 %v1754, %v1754
    %v1765 = vmul.f32 %v1755, %v1755
    %v1766 = vadd.f32 %v1764, %v1765
    %v1767 = vrot.slane %v1766, 4
    %v1768 = vadd.f32 %v1766, %v1767
    %v1769 = vrot.slane %v1768, 2
    %v1770 = vadd.f32 %v1768, %v1769
    %v1771 = vrot.slane %v1770, 1
    %v1772 = vadd.f32 %v1770, %v1771
    %1773 = vst [vmem:[%s7] sm:$0x1] %v1772
  $region29: #{unet_forward.13} parent=0 // pred_fallthru
    _
  // Predicated region
  $region30: #{unet_forward.13} parent=0 // pred_check
    _
  $region31: #{unet_forward.13} parent=0 // pred_check_branch
    %1775 = sbr.rel (0) target = $region33
  $region32: #{unet_forward.13} parent=0 // pred_region
    _
  $region33: #{unet_forward.13} parent=0 // pred_fallthru
    _
  // Predicated region
  $region34: #{unet_forward.13} parent=0 // pred_check
    _
  $region35: #{unet_forward.13} parent=0 // pred_check_branch
    %1777 = sbr.rel (0) target = $region37
  $region36: #{unet_forward.13} parent=0 // pred_region
    _
  $region37: #{unet_forward.13} parent=0 // pred_fallthru
    _
  // Predicated region
  $region38: #{unet_forward.13} parent=0 // pred_check
    _
  $region39: #{unet_forward.13} parent=0 // pred_check_branch
    %1779 = sbr.rel (0) target = $region41
  $region40: #{unet_forward.13} parent=0 // pred_region
    _
  $region41: #{unet_forward.13} parent=0 // pred_fallthru
    _
  // Predicated region
  $region42: #{unet_forward.13} parent=0 // pred_check
    _
  $region43: #{unet_forward.13} parent=0 // pred_check_branch
    %1781 = sbr.rel (0) target = $region45
  $region44: #{unet_forward.13} parent=0 // pred_region
    _
  $region45: #{unet_forward.13} parent=0 // pred_fallthru
    _
  // Predicated region
  $region46: #{unet_forward.13} parent=0 // pred_check
    _
  $region47: #{unet_forward.13} parent=0 // pred_check_branch
    %1783 = sbr.rel (0) target = $region49
  $region48: #{unet_forward.13} parent=0 // pred_region
    _
  $region49: #{unet_forward.13} parent=0 // pred_fallthru
    _
  // Predicated region
  $region50: #{unet_forward.13} parent=0 // pred_check
    _
  $region51: #{unet_forward.13} parent=0 // pred_check_branch
    %1785 = sbr.rel (0) target = $region53
  $region52: #{unet_forward.13} parent=0 // pred_region
    _
  $region53: #{unet_forward.13} parent=0 // pred_fallthru
    _

// kernel: unet_forward.12
$region0: #{unet_forward.12}
  #allocation0 [shape = 'u32[]', space=smem, size = 0x4, offset = 0x4, fixed_abs, tag = 'smem constant byte address 0x4 - core index']
  #allocation1 [shape = 'u32[144,128]{1,0:T(1,128)}', space=vmem, size = 0x12000, scoped, tag = 'internal scratch']
  %s0 = inlined_call_operand.vmem [shape: bf16[16,384], index: 0, kind: input, shape index: {}]
  %s1 = inlined_call_operand.vmem [shape: bf16[16,2304], index: 1, kind: input, shape index: {}]
  %s2 = inlined_call_operand.vmem [shape: bf16[384,128], index: 2, kind: input, shape index: {}]
  %s3 = inlined_call_operand.vmem [shape: bf16[2304,128], index: 3, kind: input, shape index: {}]
  %s4 = inlined_call_operand.vmem [shape: f32[1,128], index: 4, kind: input, shape index: {}]
  %s5 = inlined_call_operand.vmem [shape: bf16[16,128], index: 5, kind: output, shape index: {0}]
  %s6 = inlined_call_operand.vmem [shape: f32[1,1,128], index: 6, kind: output, shape index: {1}]
  %s7 = inlined_call_operand.vmem [shape: f32[1,1,128], index: 7, kind: output, shape index: {2}]
  %8 = xla_tuple %s5, %s6, %s7
  %s9 = sld [smem:[#allocation0]]
  $region54: #{unet_forward.12} parent=0
    _
  %s11 = ssub.s32 1, %s9
  %s12 = scalar_select 0, %s11, %s9
  // Predicated region
  $region2: #{unet_forward.12} parent=0 // pred_check
    _
  $region3: #{unet_forward.12} parent=0 // pred_check_branch
    %14 = sbr.rel (0) target = $region5
  $region4: #{unet_forward.12} parent=0 // pred_region
    _
  $region5: #{unet_forward.12} parent=0 // pred_fallthru
    _
  // Predicated region
  $region6: #{unet_forward.12} parent=0 // pred_check
    _
  $region7: #{unet_forward.12} parent=0 // pred_check_branch
    %16 = sbr.rel (0) target = $region9
  $region8: #{unet_forward.12} parent=0 // pred_region
    _
  $region9: #{unet_forward.12} parent=0 // pred_fallthru
    _
  // Predicated region
  $region10: #{unet_forward.12} parent=0 // pred_check
    _
  $region11: #{unet_forward.12} parent=0 // pred_check_branch
    %18 = sbr.rel (0) target = $region13
  $region12: #{unet_forward.12} parent=0 // pred_region
    _
  $region13: #{unet_forward.12} parent=0 // pred_fallthru
    _
  // Predicated region
  $region14: #{unet_forward.12} parent=0 // pred_check
    _
  $region15: #{unet_forward.12} parent=0 // pred_check_branch
    %20 = sbr.rel (0) target = $region17
  $region16: #{unet_forward.12} parent=0 // pred_region
    _
  $region17: #{unet_forward.12} parent=0 // pred_fallthru
    _
  // Predicated region
  $region18: #{unet_forward.12} parent=0 // pred_check
    _
  $region19: #{unet_forward.12} parent=0 // pred_check_branch
    %22 = sbr.rel (0) target = $region21
  $region20: #{unet_forward.12} parent=0 // pred_region
    _
  $region21: #{unet_forward.12} parent=0 // pred_fallthru
    _
  %v24 = vld [vmem:[%s0] sm:$0xff]
  %v25 = vld [vmem:[%s0 + $0x8] sm:$0xf]
  %v26 = vld [vmem:[%s0 + $0xc] sm:$0xff]
  %v27 = vld [vmem:[%s0 + $0x14] sm:$0xf]
  %v28 = vld [vmem:[%s2] sm:$0xf]
  %v29 = vld [vmem:[%s2 + $0x4] sm:$0xf]
  %v30 = vld [vmem:[%s2 + $0x8] sm:$0xf]
  %v31 = vld [vmem:[%s2 + $0xc] sm:$0xf]
  %v32 = vld [vmem:[%s2 + $0x10] sm:$0xf]
  %v33 = vld [vmem:[%s2 + $0x14] sm:$0xf]
  %v34 = vld [vmem:[%s2 + $0x18] sm:$0xf]
  %v35 = vld [vmem:[%s2 + $0x1c] sm:$0xf]
  %v36 = vld [vmem:[%s2 + $0x20] sm:$0xf]
  %v37 = vld [vmem:[%s2 + $0x24] sm:$0xf]
  %v38 = vld [vmem:[%s2 + $0x28] sm:$0xf]
  %v39 = vld [vmem:[%s2 + $0x2c] sm:$0xf]
  %v40 = vld [vmem:[%s2 + $0x30] sm:$0xf]
  %v41 = vld [vmem:[%s2 + $0x34] sm:$0xf]
  %v42 = vld [vmem:[%s2 + $0x38] sm:$0xf]
  %v43 = vld [vmem:[%s2 + $0x3c] sm:$0xf]
  %v44 = vld [vmem:[%s2 + $0x40] sm:$0xf]
  %v45 = vld [vmem:[%s2 + $0x44] sm:$0xf]
  %v46 = vld [vmem:[%s2 + $0x48] sm:$0xf]
  %v47 = vld [vmem:[%s2 + $0x4c] sm:$0xf]
  %v48 = vld [vmem:[%s2 + $0x50] sm:$0xf]
  %v49 = vld [vmem:[%s2 + $0x54] sm:$0xf]
  %v50 = vld [vmem:[%s2 + $0x58] sm:$0xf]
  %v51 = vld [vmem:[%s2 + $0x5c] sm:$0xf]
  %v52 = vld [vmem:[%s2 + $0x60] sm:$0xf]
  %v53 = vld [vmem:[%s2 + $0x64] sm:$0xf]
  %v54 = vld [vmem:[%s2 + $0x68] sm:$0xf]
  %v55 = vld [vmem:[%s2 + $0x6c] sm:$0xf]
  %v56 = vld [vmem:[%s2 + $0x70] sm:$0xf]
  %v57 = vld [vmem:[%s2 + $0x74] sm:$0xf]
  %v58 = vld [vmem:[%s2 + $0x78] sm:$0xf]
  %v59 = vld [vmem:[%s2 + $0x7c] sm:$0xf]
  %v60 = vld [vmem:[%s2 + $0x80] sm:$0xf]
  %v61 = vld [vmem:[%s2 + $0x84] sm:$0xf]
  %v62 = vld [vmem:[%s2 + $0x88] sm:$0xf]
  %v63 = vld [vmem:[%s2 + $0x8c] sm:$0xf]
  %v64 = vld [vmem:[%s2 + $0x90] sm:$0xf]
  %v65 = vld [vmem:[%s2 + $0x94] sm:$0xf]
  %v66 = vld [vmem:[%s2 + $0x98] sm:$0xf]
  %v67 = vld [vmem:[%s2 + $0x9c] sm:$0xf]
  %v68 = vld [vmem:[%s2 + $0xa0] sm:$0xf]
  %v69 = vld [vmem:[%s2 + $0xa4] sm:$0xf]
  %v70 = vld [vmem:[%s2 + $0xa8] sm:$0xf]
  %v71 = vld [vmem:[%s2 + $0xac] sm:$0xf]
  %v72 = vld [vmem:[%s2 + $0xb0] sm:$0xf]
  %v73 = vld [vmem:[%s2 + $0xb4] sm:$0xf]
  %v74 = vld [vmem:[%s2 + $0xb8] sm:$0xf]
  %v75 = vld [vmem:[%s2 + $0xbc] sm:$0xf]
  %v76 = vld [vmem:[%s1] sm:$0xff]
  %v77 = vld [vmem:[%s1 + $0x8] sm:$0xff]
  %v78 = vld [vmem:[%s1 + $0x10] sm:$0xff]
  %v79 = vld [vmem:[%s1 + $0x18] sm:$0xff]
  %v80 = vld [vmem:[%s1 + $0x20] sm:$0xff]
  %v81 = vld [vmem:[%s1 + $0x28] sm:$0xff]
  %v82 = vld [vmem:[%s1 + $0x30] sm:$0xff]
  %v83 = vld [vmem:[%s1 + $0x38] sm:$0xff]
  %v84 = vld [vmem:[%s1 + $0x40] sm:$0xff]
  %v85 = vld [vmem:[%s1 + $0x48] sm:$0xff]
  %v86 = vld [vmem:[%s1 + $0x50] sm:$0xff]
  %v87 = vld [vmem:[%s1 + $0x58] sm:$0xff]
  %v88 = vld [vmem:[%s1 + $0x60] sm:$0xff]
  %v89 = vld [vmem:[%s1 + $0x68] sm:$0xff]
  %v90 = vld [vmem:[%s1 + $0x70] sm:$0xff]
  %v91 = vld [vmem:[%s1 + $0x78] sm:$0xff]
  %v92 = vld [vmem:[%s1 + $0x80] sm:$0xff]
  %v93 = vld [vmem:[%s1 + $0x88] sm:$0xff]
  %v94 = vld [vmem:[%s3] sm:$0xf]
  %v95 = vld [vmem:[%s3 + $0x4] sm:$0xf]
  %v96 = vld [vmem:[%s3 + $0x8] sm:$0xf]
  %v97 = vld [vmem:[%s3 + $0xc] sm:$0xf]
  %v98 = vld [vmem:[%s3 + $0x10] sm:$0xf]
  %v99 = vld [vmem:[%s3 + $0x14] sm:$0xf]
  %v100 = vld [vmem:[%s3 + $0x18] sm:$0xf]
  %v101 = vld [vmem:[%s3 + $0x1c] sm:$0xf]
  %v102 = vld [vmem:[%s3 + $0x20] sm:$0xf]
  %v103 = vld [vmem:[%s3 + $0x24] sm:$0xf]
  %v104 = vld [vmem:[%s3 + $0x28] sm:$0xf]
  %v105 = vld [vmem:[%s3 + $0x2c] sm:$0xf]
  %v106 = vld [vmem:[%s3 + $0x30] sm:$0xf]
  %v107 = vld [vmem:[%s3 + $0x34] sm:$0xf]
  %v108 = vld [vmem:[%s3 + $0x38] sm:$0xf]
  %v109 = vld [vmem:[%s3 + $0x3c] sm:$0xf]
  %v110 = vld [vmem:[%s3 + $0x40] sm:$0xf]
  %v111 = vld [vmem:[%s3 + $0x44] sm:$0xf]
  %v112 = vld [vmem:[%s3 + $0x48] sm:$0xf]
  %v113 = vld [vmem:[%s3 + $0x4c] sm:$0xf]
  %v114 = vld [vmem:[%s3 + $0x50] sm:$0xf]
  %v115 = vld [vmem:[%s3 + $0x54] sm:$0xf]
  %v116 = vld [vmem:[%s3 + $0x58] sm:$0xf]
  %v117 = vld [vmem:[%s3 + $0x5c] sm:$0xf]
  %v118 = vld [vmem:[%s3 + $0x60] sm:$0xf]
  %v119 = vld [vmem:[%s3 + $0x64] sm:$0xf]
  %v120 = vld [vmem:[%s3 + $0x68] sm:$0xf]
  %v121 = vld [vmem:[%s3 + $0x6c] sm:$0xf]
  %v122 = vld [vmem:[%s3 + $0x70] sm:$0xf]
  %v123 = vld [vmem:[%s3 + $0x74] sm:$0xf]
  %v124 = vld [vmem:[%s3 + $0x78] sm:$0xf]
  %v125 = vld [vmem:[%s3 + $0x7c] sm:$0xf]
  %v126 = vld [vmem:[%s3 + $0x80] sm:$0xf]
  %v127 = vld [vmem:[%s3 + $0x84] sm:$0xf]
  %v128 = vld [vmem:[%s3 + $0x88] sm:$0xf]
  %v129 = vld [vmem:[%s3 + $0x8c] sm:$0xf]
  %v130 = vld [vmem:[%s3 + $0x90] sm:$0xf]
  %v131 = vld [vmem:[%s3 + $0x94] sm:$0xf]
  %v132 = vld [vmem:[%s3 + $0x98] sm:$0xf]
  %v133 = vld [vmem:[%s3 + $0x9c] sm:$0xf]
  %v134 = vld [vmem:[%s3 + $0xa0] sm:$0xf]
  %v135 = vld [vmem:[%s3 + $0xa4] sm:$0xf]
  %v136 = vld [vmem:[%s3 + $0xa8] sm:$0xf]
  %v137 = vld [vmem:[%s3 + $0xac] sm:$0xf]
  %v138 = vld [vmem:[%s3 + $0xb0] sm:$0xf]
  %v139 = vld [vmem:[%s3 + $0xb4] sm:$0xf]
  %v140 = vld [vmem:[%s3 + $0xb8] sm:$0xf]
  %v141 = vld [vmem:[%s3 + $0xbc] sm:$0xf]
  %v142 = vld [vmem:[%s3 + $0xc0] sm:$0xf]
  %v143 = vld [vmem:[%s3 + $0xc4] sm:$0xf]
  %v144 = vld [vmem:[%s3 + $0xc8] sm:$0xf]
  %v145 = vld [vmem:[%s3 + $0xcc] sm:$0xf]
  %v146 = vld [vmem:[%s3 + $0xd0] sm:$0xf]
  %v147 = vld [vmem:[%s3 + $0xd4] sm:$0xf]
  %v148 = vld [vmem:[%s3 + $0xd8] sm:$0xf]
  %v149 = vld [vmem:[%s3 + $0xdc] sm:$0xf]
  %v150 = vld [vmem:[%s3 + $0xe0] sm:$0xf]
  %v151 = vld [vmem:[%s3 + $0xe4] sm:$0xf]
  %v152 = vld [vmem:[%s3 + $0xe8] sm:$0xf]
  %v153 = vld [vmem:[%s3 + $0xec] sm:$0xf]
  %v154 = vld [vmem:[%s3 + $0xf0] sm:$0xf]
  %v155 = vld [vmem:[%s3 + $0xf4] sm:$0xf]
  %v156 = vld [vmem:[%s3 + $0xf8] sm:$0xf]
  %v157 = vld [vmem:[%s3 + $0xfc] sm:$0xf]
  %v158 = vld [vmem:[%s3 + $0x100] sm:$0xf]
  %v159 = vld [vmem:[%s3 + $0x104] sm:$0xf]
  %v160 = vld [vmem:[%s3 + $0x108] sm:$0xf]
  %v161 = vld [vmem:[%s3 + $0x10c] sm:$0xf]
  %v162 = vld [vmem:[%s3 + $0x110] sm:$0xf]
  %v163 = vld [vmem:[%s3 + $0x114] sm:$0xf]
  %v164 = vld [vmem:[%s3 + $0x118] sm:$0xf]
  %v165 = vld [vmem:[%s3 + $0x11c] sm:$0xf]
  %v166 = vld [vmem:[%s3 + $0x120] sm:$0xf]
  %v167 = vld [vmem:[%s3 + $0x124] sm:$0xf]
  %v168 = vld [vmem:[%s3 + $0x128] sm:$0xf]
  %v169 = vld [vmem:[%s3 + $0x12c] sm:$0xf]
  %v170 = vld [vmem:[%s3 + $0x130] sm:$0xf]
  %v171 = vld [vmem:[%s3 + $0x134] sm:$0xf]
  %v172 = vld [vmem:[%s3 + $0x138] sm:$0xf]
  %v173 = vld [vmem:[%s3 + $0x13c] sm:$0xf]
  %v174 = vld [vmem:[%s3 + $0x140] sm:$0xf]
  %v175 = vld [vmem:[%s3 + $0x144] sm:$0xf]
  %v176 = vld [vmem:[%s3 + $0x148] sm:$0xf]
  %v177 = vld [vmem:[%s3 + $0x14c] sm:$0xf]
  %v178 = vld [vmem:[%s3 + $0x150] sm:$0xf]
  %v179 = vld [vmem:[%s3 + $0x154] sm:$0xf]
  %v180 = vld [vmem:[%s3 + $0x158] sm:$0xf]
  %v181 = vld [vmem:[%s3 + $0x15c] sm:$0xf]
  %v182 = vld [vmem:[%s3 + $0x160] sm:$0xf]
  %v183 = vld [vmem:[%s3 + $0x164] sm:$0xf]
  %v184 = vld [vmem:[%s3 + $0x168] sm:$0xf]
  %v185 = vld [vmem:[%s3 + $0x16c] sm:$0xf]
  %v186 = vld [vmem:[%s3 + $0x170] sm:$0xf]
  %v187 = vld [vmem:[%s3 + $0x174] sm:$0xf]
  %v188 = vld [vmem:[%s3 + $0x178] sm:$0xf]
  %v189 = vld [vmem:[%s3 + $0x17c] sm:$0xf]
  %v190 = vld [vmem:[%s3 + $0x180] sm:$0xf]
  %v191 = vld [vmem:[%s3 + $0x184] sm:$0xf]
  %v192 = vld [vmem:[%s3 + $0x188] sm:$0xf]
  %v193 = vld [vmem:[%s3 + $0x18c] sm:$0xf]
  %v194 = vld [vmem:[%s3 + $0x190] sm:$0xf]
  %v195 = vld [vmem:[%s3 + $0x194] sm:$0xf]
  %v196 = vld [vmem:[%s3 + $0x198] sm:$0xf]
  %v197 = vld [vmem:[%s3 + $0x19c] sm:$0xf]
  %v198 = vld [vmem:[%s3 + $0x1a0] sm:$0xf]
  %v199 = vld [vmem:[%s3 + $0x1a4] sm:$0xf]
  %v200 = vld [vmem:[%s3 + $0x1a8] sm:$0xf]
  %v201 = vld [vmem:[%s3 + $0x1ac] sm:$0xf]
  %v202 = vld [vmem:[%s3 + $0x1b0] sm:$0xf]
  %v203 = vld [vmem:[%s3 + $0x1b4] sm:$0xf]
  %v204 = vld [vmem:[%s3 + $0x1b8] sm:$0xf]
  %v205 = vld [vmem:[%s3 + $0x1bc] sm:$0xf]
  %v206 = vld [vmem:[%s3 + $0x1c0] sm:$0xf]
  %v207 = vld [vmem:[%s3 + $0x1c4] sm:$0xf]
  %v208 = vld [vmem:[%s3 + $0x1c8] sm:$0xf]
  %v209 = vld [vmem:[%s3 + $0x1cc] sm:$0xf]
  %v210 = vld [vmem:[%s3 + $0x1d0] sm:$0xf]
  %v211 = vld [vmem:[%s3 + $0x1d4] sm:$0xf]
  %v212 = vld [vmem:[%s3 + $0x1d8] sm:$0xf]
  %v213 = vld [vmem:[%s3 + $0x1dc] sm:$0xf]
  %v214 = vld [vmem:[%s3 + $0x1e0] sm:$0xf]
  %v215 = vld [vmem:[%s3 + $0x1e4] sm:$0xf]
  %v216 = vld [vmem:[%s3 + $0x1e8] sm:$0xf]
  %v217 = vld [vmem:[%s3 + $0x1ec] sm:$0xf]
  %v218 = vld [vmem:[%s3 + $0x1f0] sm:$0xf]
  %v219 = vld [vmem:[%s3 + $0x1f4] sm:$0xf]
  %v220 = vld [vmem:[%s3 + $0x1f8] sm:$0xf]
  %v221 = vld [vmem:[%s3 + $0x1fc] sm:$0xf]
  %v222 = vld [vmem:[%s3 + $0x200] sm:$0xf]
  %v223 = vld [vmem:[%s3 + $0x204] sm:$0xf]
  %v224 = vld [vmem:[%s3 + $0x208] sm:$0xf]
  %v225 = vld [vmem:[%s3 + $0x20c] sm:$0xf]
  %v226 = vld [vmem:[%s3 + $0x210] sm:$0xf]
  %v227 = vld [vmem:[%s3 + $0x214] sm:$0xf]
  %v228 = vld [vmem:[%s3 + $0x218] sm:$0xf]
  %v229 = vld [vmem:[%s3 + $0x21c] sm:$0xf]
  %v230 = vld [vmem:[%s3 + $0x220] sm:$0xf]
  %v231 = vld [vmem:[%s3 + $0x224] sm:$0xf]
  %v232 = vld [vmem:[%s3 + $0x228] sm:$0xf]
  %v233 = vld [vmem:[%s3 + $0x22c] sm:$0xf]
  %v234 = vld [vmem:[%s3 + $0x230] sm:$0xf]
  %v235 = vld [vmem:[%s3 + $0x234] sm:$0xf]
  %v236 = vld [vmem:[%s3 + $0x238] sm:$0xf]
  %v237 = vld [vmem:[%s3 + $0x23c] sm:$0xf]
  %v238 = vld [vmem:[%s3 + $0x240] sm:$0xf]
  %v239 = vld [vmem:[%s3 + $0x244] sm:$0xf]
  %v240 = vld [vmem:[%s3 + $0x248] sm:$0xf]
  %v241 = vld [vmem:[%s3 + $0x24c] sm:$0xf]
  %v242 = vld [vmem:[%s3 + $0x250] sm:$0xf]
  %v243 = vld [vmem:[%s3 + $0x254] sm:$0xf]
  %v244 = vld [vmem:[%s3 + $0x258] sm:$0xf]
  %v245 = vld [vmem:[%s3 + $0x25c] sm:$0xf]
  %v246 = vld [vmem:[%s3 + $0x260] sm:$0xf]
  %v247 = vld [vmem:[%s3 + $0x264] sm:$0xf]
  %v248 = vld [vmem:[%s3 + $0x268] sm:$0xf]
  %v249 = vld [vmem:[%s3 + $0x26c] sm:$0xf]
  %v250 = vld [vmem:[%s3 + $0x270] sm:$0xf]
  %v251 = vld [vmem:[%s3 + $0x274] sm:$0xf]
  %v252 = vld [vmem:[%s3 + $0x278] sm:$0xf]
  %v253 = vld [vmem:[%s3 + $0x27c] sm:$0xf]
  %v254 = vld [vmem:[%s3 + $0x280] sm:$0xf]
  %v255 = vld [vmem:[%s3 + $0x284] sm:$0xf]
  %v256 = vld [vmem:[%s3 + $0x288] sm:$0xf]
  %v257 = vld [vmem:[%s3 + $0x28c] sm:$0xf]
  %v258 = vld [vmem:[%s3 + $0x290] sm:$0xf]
  %v259 = vld [vmem:[%s3 + $0x294] sm:$0xf]
  %v260 = vld [vmem:[%s3 + $0x298] sm:$0xf]
  %v261 = vld [vmem:[%s3 + $0x29c] sm:$0xf]
  %v262 = vld [vmem:[%s3 + $0x2a0] sm:$0xf]
  %v263 = vld [vmem:[%s3 + $0x2a4] sm:$0xf]
  %v264 = vld [vmem:[%s3 + $0x2a8] sm:$0xf]
  %v265 = vld [vmem:[%s3 + $0x2ac] sm:$0xf]
  %v266 = vld [vmem:[%s3 + $0x2b0] sm:$0xf]
  %v267 = vld [vmem:[%s3 + $0x2b4] sm:$0xf]
  %v268 = vld [vmem:[%s3 + $0x2b8] sm:$0xf]
  %v269 = vld [vmem:[%s3 + $0x2bc] sm:$0xf]
  %v270 = vld [vmem:[%s3 + $0x2c0] sm:$0xf]
  %v271 = vld [vmem:[%s3 + $0x2c4] sm:$0xf]
  %v272 = vld [vmem:[%s3 + $0x2c8] sm:$0xf]
  %v273 = vld [vmem:[%s3 + $0x2cc] sm:$0xf]
  %v274 = vld [vmem:[%s3 + $0x2d0] sm:$0xf]
  %v275 = vld [vmem:[%s3 + $0x2d4] sm:$0xf]
  %v276 = vld [vmem:[%s3 + $0x2d8] sm:$0xf]
  %v277 = vld [vmem:[%s3 + $0x2dc] sm:$0xf]
  %v278 = vld [vmem:[%s3 + $0x2e0] sm:$0xf]
  %v279 = vld [vmem:[%s3 + $0x2e4] sm:$0xf]
  %v280 = vld [vmem:[%s3 + $0x2e8] sm:$0xf]
  %v281 = vld [vmem:[%s3 + $0x2ec] sm:$0xf]
  %v282 = vld [vmem:[%s3 + $0x2f0] sm:$0xf]
  %v283 = vld [vmem:[%s3 + $0x2f4] sm:$0xf]
  %v284 = vld [vmem:[%s3 + $0x2f8] sm:$0xf]
  %v285 = vld [vmem:[%s3 + $0x2fc] sm:$0xf]
  %v286 = vld [vmem:[%s3 + $0x300] sm:$0xf]
  %v287 = vld [vmem:[%s3 + $0x304] sm:$0xf]
  %v288 = vld [vmem:[%s3 + $0x308] sm:$0xf]
  %v289 = vld [vmem:[%s3 + $0x30c] sm:$0xf]
  %v290 = vld [vmem:[%s3 + $0x310] sm:$0xf]
  %v291 = vld [vmem:[%s3 + $0x314] sm:$0xf]
  %v292 = vld [vmem:[%s3 + $0x318] sm:$0xf]
  %v293 = vld [vmem:[%s3 + $0x31c] sm:$0xf]
  %v294 = vld [vmem:[%s3 + $0x320] sm:$0xf]
  %v295 = vld [vmem:[%s3 + $0x324] sm:$0xf]
  %v296 = vld [vmem:[%s3 + $0x328] sm:$0xf]
  %v297 = vld [vmem:[%s3 + $0x32c] sm:$0xf]
  %v298 = vld [vmem:[%s3 + $0x330] sm:$0xf]
  %v299 = vld [vmem:[%s3 + $0x334] sm:$0xf]
  %v300 = vld [vmem:[%s3 + $0x338] sm:$0xf]
  %v301 = vld [vmem:[%s3 + $0x33c] sm:$0xf]
  %v302 = vld [vmem:[%s3 + $0x340] sm:$0xf]
  %v303 = vld [vmem:[%s3 + $0x344] sm:$0xf]
  %v304 = vld [vmem:[%s3 + $0x348] sm:$0xf]
  %v305 = vld [vmem:[%s3 + $0x34c] sm:$0xf]
  %v306 = vld [vmem:[%s3 + $0x350] sm:$0xf]
  %v307 = vld [vmem:[%s3 + $0x354] sm:$0xf]
  %v308 = vld [vmem:[%s3 + $0x358] sm:$0xf]
  %v309 = vld [vmem:[%s3 + $0x35c] sm:$0xf]
  %v310 = vld [vmem:[%s3 + $0x360] sm:$0xf]
  %v311 = vld [vmem:[%s3 + $0x364] sm:$0xf]
  %v312 = vld [vmem:[%s3 + $0x368] sm:$0xf]
  %v313 = vld [vmem:[%s3 + $0x36c] sm:$0xf]
  %v314 = vld [vmem:[%s3 + $0x370] sm:$0xf]
  %v315 = vld [vmem:[%s3 + $0x374] sm:$0xf]
  %v316 = vld [vmem:[%s3 + $0x378] sm:$0xf]
  %v317 = vld [vmem:[%s3 + $0x37c] sm:$0xf]
  %v318 = vld [vmem:[%s3 + $0x380] sm:$0xf]
  %v319 = vld [vmem:[%s3 + $0x384] sm:$0xf]
  %v320 = vld [vmem:[%s3 + $0x388] sm:$0xf]
  %v321 = vld [vmem:[%s3 + $0x38c] sm:$0xf]
  %v322 = vld [vmem:[%s3 + $0x390] sm:$0xf]
  %v323 = vld [vmem:[%s3 + $0x394] sm:$0xf]
  %v324 = vld [vmem:[%s3 + $0x398] sm:$0xf]
  %v325 = vld [vmem:[%s3 + $0x39c] sm:$0xf]
  %v326 = vld [vmem:[%s3 + $0x3a0] sm:$0xf]
  %v327 = vld [vmem:[%s3 + $0x3a4] sm:$0xf]
  %v328 = vld [vmem:[%s3 + $0x3a8] sm:$0xf]
  %v329 = vld [vmem:[%s3 + $0x3ac] sm:$0xf]
  %v330 = vld [vmem:[%s3 + $0x3b0] sm:$0xf]
  %v331 = vld [vmem:[%s3 + $0x3b4] sm:$0xf]
  %v332 = vld [vmem:[%s3 + $0x3b8] sm:$0xf]
  %v333 = vld [vmem:[%s3 + $0x3bc] sm:$0xf]
  %v334 = vld [vmem:[%s3 + $0x3c0] sm:$0xf]
  %v335 = vld [vmem:[%s3 + $0x3c4] sm:$0xf]
  %v336 = vld [vmem:[%s3 + $0x3c8] sm:$0xf]
  %v337 = vld [vmem:[%s3 + $0x3cc] sm:$0xf]
  %v338 = vld [vmem:[%s3 + $0x3d0] sm:$0xf]
  %v339 = vld [vmem:[%s3 + $0x3d4] sm:$0xf]
  %v340 = vld [vmem:[%s3 + $0x3d8] sm:$0xf]
  %v341 = vld [vmem:[%s3 + $0x3dc] sm:$0xf]
  %v342 = vld [vmem:[%s3 + $0x3e0] sm:$0xf]
  %v343 = vld [vmem:[%s3 + $0x3e4] sm:$0xf]
  %v344 = vld [vmem:[%s3 + $0x3e8] sm:$0xf]
  %v345 = vld [vmem:[%s3 + $0x3ec] sm:$0xf]
  %v346 = vld [vmem:[%s3 + $0x3f0] sm:$0xf]
  %v347 = vld [vmem:[%s3 + $0x3f4] sm:$0xf]
  %v348 = vld [vmem:[%s3 + $0x3f8] sm:$0xf]
  %v349 = vld [vmem:[%s3 + $0x3fc] sm:$0xf]
  %v350 = vld [vmem:[%s3 + $0x400] sm:$0xf]
  %v351 = vld [vmem:[%s3 + $0x404] sm:$0xf]
  %v352 = vld [vmem:[%s3 + $0x408] sm:$0xf]
  %v353 = vld [vmem:[%s3 + $0x40c] sm:$0xf]
  %v354 = vld [vmem:[%s3 + $0x410] sm:$0xf]
  %v355 = vld [vmem:[%s3 + $0x414] sm:$0xf]
  %v356 = vld [vmem:[%s3 + $0x418] sm:$0xf]
  %v357 = vld [vmem:[%s3 + $0x41c] sm:$0xf]
  %v358 = vld [vmem:[%s3 + $0x420] sm:$0xf]
  %v359 = vld [vmem:[%s3 + $0x424] sm:$0xf]
  %v360 = vld [vmem:[%s3 + $0x428] sm:$0xf]
  %v361 = vld [vmem:[%s3 + $0x42c] sm:$0xf]
  %v362 = vld [vmem:[%s3 + $0x430] sm:$0xf]
  %v363 = vld [vmem:[%s3 + $0x434] sm:$0xf]
  %v364 = vld [vmem:[%s3 + $0x438] sm:$0xf]
  %v365 = vld [vmem:[%s3 + $0x43c] sm:$0xf]
  %v366 = vld [vmem:[%s3 + $0x440] sm:$0xf]
  %v367 = vld [vmem:[%s3 + $0x444] sm:$0xf]
  %v368 = vld [vmem:[%s3 + $0x448] sm:$0xf]
  %v369 = vld [vmem:[%s3 + $0x44c] sm:$0xf]
  %v370 = vld [vmem:[%s3 + $0x450] sm:$0xf]
  %v371 = vld [vmem:[%s3 + $0x454] sm:$0xf]
  %v372 = vld [vmem:[%s3 + $0x458] sm:$0xf]
  %v373 = vld [vmem:[%s3 + $0x45c] sm:$0xf]
  %v374 = vld [vmem:[%s3 + $0x460] sm:$0xf]
  %v375 = vld [vmem:[%s3 + $0x464] sm:$0xf]
  %v376 = vld [vmem:[%s3 + $0x468] sm:$0xf]
  %v377 = vld [vmem:[%s3 + $0x46c] sm:$0xf]
  %v378 = vld [vmem:[%s3 + $0x470] sm:$0xf]
  %v379 = vld [vmem:[%s3 + $0x474] sm:$0xf]
  %v380 = vld [vmem:[%s3 + $0x478] sm:$0xf]
  %v381 = vld [vmem:[%s3 + $0x47c] sm:$0xf]
  %v400 = vunpack.c.l.b16 %v76
  %v401 = vunpack.c.h.b16 %v76
  %v402 = vunpack.c.l.b16 %v77
  %v403 = vunpack.c.h.b16 %v77
  %v404 = vunpack.c.l.b16 %v78
  %v405 = vunpack.c.h.b16 %v78
  %v406 = vunpack.c.l.b16 %v79
  %v407 = vunpack.c.h.b16 %v79
  %v408 = vunpack.c.l.b16 %v80
  %v409 = vunpack.c.h.b16 %v80
  %v410 = vunpack.c.l.b16 %v81
  %v411 = vunpack.c.h.b16 %v81
  %v412 = vunpack.c.l.b16 %v82
  %v413 = vunpack.c.h.b16 %v82
  %v414 = vunpack.c.l.b16 %v83
  %v415 = vunpack.c.h.b16 %v83
  %v416 = vunpack.c.l.b16 %v84
  %v417 = vunpack.c.h.b16 %v84
  %v418 = vunpack.c.l.b16 %v85
  %v419 = vunpack.c.h.b16 %v85
  %v420 = vunpack.c.l.b16 %v86
  %v421 = vunpack.c.h.b16 %v86
  %v422 = vunpack.c.l.b16 %v87
  %v423 = vunpack.c.h.b16 %v87
  %v424 = vunpack.c.l.b16 %v88
  %v425 = vunpack.c.h.b16 %v88
  %v426 = vunpack.c.l.b16 %v89
  %v427 = vunpack.c.h.b16 %v89
  %v428 = vunpack.c.l.b16 %v90
  %v429 = vunpack.c.h.b16 %v90
  %v430 = vunpack.c.l.b16 %v91
  %v431 = vunpack.c.h.b16 %v91
  %v432 = vunpack.c.l.b16 %v92
  %v433 = vunpack.c.h.b16 %v92
  %v434 = vunpack.c.l.b16 %v93
  %v435 = vunpack.c.h.b16 %v93
  %v436 = vpack.c.b16 %v418, %v400
  %v437 = vpack.c.b16 %v419, %v401
  %v438 = vpack.c.b16 %v420, %v402
  %v439 = vpack.c.b16 %v421, %v403
  %v440 = vpack.c.b16 %v422, %v404
  %v441 = vpack.c.b16 %v423, %v405
  %v442 = vpack.c.b16 %v424, %v406
  %v443 = vpack.c.b16 %v425, %v407
  %v444 = vpack.c.b16 %v426, %v408
  %v445 = vpack.c.b16 %v427, %v409
  %v446 = vpack.c.b16 %v428, %v410
  %v447 = vpack.c.b16 %v429, %v411
  %v448 = vpack.c.b16 %v430, %v412
  %v449 = vpack.c.b16 %v431, %v413
  %v450 = vpack.c.b16 %v432, %v414
  %v451 = vpack.c.b16 %v433, %v415
  %v452 = vpack.c.b16 %v434, %v416
  %v453 = vpack.c.b16 %v435, %v417
  %v760 = vunpack.c.l.b16 %v94
  %v761 = vunpack.c.l.b16 %v95
  %v762 = vunpack.c.l.b16 %v96
  %v763 = vunpack.c.l.b16 %v97
  %v764 = vunpack.c.l.b16 %v98
  %v765 = vunpack.c.l.b16 %v99
  %v766 = vunpack.c.l.b16 %v100
  %v767 = vunpack.c.l.b16 %v101
  %v768 = vunpack.c.l.b16 %v102
  %v769 = vunpack.c.l.b16 %v103
  %v770 = vunpack.c.l.b16 %v104
  %v771 = vunpack.c.l.b16 %v105
  %v772 = vunpack.c.l.b16 %v106
  %v773 = vunpack.c.l.b16 %v107
  %v774 = vunpack.c.l.b16 %v108
  %v775 = vunpack.c.l.b16 %v109
  %v776 = vunpack.c.l.b16 %v110
  %v777 = vunpack.c.l.b16 %v111
  %v778 = vunpack.c.l.b16 %v112
  %v779 = vunpack.c.l.b16 %v113
  %v780 = vunpack.c.l.b16 %v114
  %v781 = vunpack.c.l.b16 %v115
  %v782 = vunpack.c.l.b16 %v116
  %v783 = vunpack.c.l.b16 %v117
  %v784 = vunpack.c.l.b16 %v118
  %v785 = vunpack.c.l.b16 %v119
  %v786 = vunpack.c.l.b16 %v120
  %v787 = vunpack.c.l.b16 %v121
  %v788 = vunpack.c.l.b16 %v122
  %v789 = vunpack.c.l.b16 %v123
  %v790 = vunpack.c.l.b16 %v124
  %v791 = vunpack.c.l.b16 %v125
  %v792 = vunpack.c.l.b16 %v126
  %v793 = vunpack.c.l.b16 %v127
  %v794 = vunpack.c.l.b16 %v128
  %v795 = vunpack.c.l.b16 %v129
  %v796 = vunpack.c.l.b16 %v130
  %v797 = vunpack.c.l.b16 %v131
  %v798 = vunpack.c.l.b16 %v132
  %v799 = vunpack.c.l.b16 %v133
  %v800 = vunpack.c.l.b16 %v134
  %v801 = vunpack.c.l.b16 %v135
  %v802 = vunpack.c.l.b16 %v136
  %v803 = vunpack.c.l.b16 %v137
  %v804 = vunpack.c.l.b16 %v138
  %v805 = vunpack.c.l.b16 %v139
  %v806 = vunpack.c.l.b16 %v140
  %v807 = vunpack.c.l.b16 %v141
  %v808 = vunpack.c.l.b16 %v142
  %v809 = vunpack.c.l.b16 %v143
  %v810 = vunpack.c.l.b16 %v144
  %v811 = vunpack.c.l.b16 %v145
  %v812 = vunpack.c.l.b16 %v146
  %v813 = vunpack.c.l.b16 %v147
  %v814 = vunpack.c.l.b16 %v148
  %v815 = vunpack.c.l.b16 %v149
  %v816 = vunpack.c.l.b16 %v150
  %v817 = vunpack.c.l.b16 %v151
  %v818 = vunpack.c.l.b16 %v152
  %v819 = vunpack.c.l.b16 %v153
  %v820 = vunpack.c.l.b16 %v154
  %v821 = vunpack.c.l.b16 %v155
  %v822 = vunpack.c.l.b16 %v156
  %v823 = vunpack.c.l.b16 %v157
  %v824 = vunpack.c.l.b16 %v158
  %v825 = vunpack.c.l.b16 %v159
  %v826 = vunpack.c.l.b16 %v160
  %v827 = vunpack.c.l.b16 %v161
  %v828 = vunpack.c.l.b16 %v162
  %v829 = vunpack.c.l.b16 %v163
  %v830 = vunpack.c.l.b16 %v164
  %v831 = vunpack.c.l.b16 %v165
  %v832 = vunpack.c.l.b16 %v166
  %v833 = vunpack.c.l.b16 %v167
  %v834 = vunpack.c.l.b16 %v168
  %v835 = vunpack.c.l.b16 %v169
  %v836 = vunpack.c.l.b16 %v170
  %v837 = vunpack.c.l.b16 %v171
  %v838 = vunpack.c.l.b16 %v172
  %v839 = vunpack.c.l.b16 %v173
  %v840 = vunpack.c.l.b16 %v174
  %v841 = vunpack.c.l.b16 %v175
  %v842 = vunpack.c.l.b16 %v176
  %v843 = vunpack.c.l.b16 %v177
  %v844 = vunpack.c.l.b16 %v178
  %v845 = vunpack.c.l.b16 %v179
  %v846 = vunpack.c.l.b16 %v180
  %v847 = vunpack.c.l.b16 %v181
  %v848 = vunpack.c.l.b16 %v182
  %v849 = vunpack.c.l.b16 %v183
  %v850 = vunpack.c.l.b16 %v184
  %v851 = vunpack.c.l.b16 %v185
  %v852 = vunpack.c.l.b16 %v186
  %v853 = vunpack.c.l.b16 %v187
  %v854 = vunpack.c.l.b16 %v188
  %v855 = vunpack.c.l.b16 %v189
  %v856 = vunpack.c.l.b16 %v190
  %v857 = vunpack.c.l.b16 %v191
  %v858 = vunpack.c.l.b16 %v192
  %v859 = vunpack.c.l.b16 %v193
  %v860 = vunpack.c.l.b16 %v194
  %v861 = vunpack.c.l.b16 %v195
  %v862 = vunpack.c.l.b16 %v196
  %v863 = vunpack.c.l.b16 %v197
  %v864 = vunpack.c.l.b16 %v198
  %v865 = vunpack.c.l.b16 %v199
  %v866 = vunpack.c.l.b16 %v200
  %v867 = vunpack.c.l.b16 %v201
  %v868 = vunpack.c.l.b16 %v202
  %v869 = vunpack.c.l.b16 %v203
  %v870 = vunpack.c.l.b16 %v204
  %v871 = vunpack.c.l.b16 %v205
  %v872 = vunpack.c.l.b16 %v206
  %v873 = vunpack.c.l.b16 %v207
  %v874 = vunpack.c.l.b16 %v208
  %v875 = vunpack.c.l.b16 %v209
  %v876 = vunpack.c.l.b16 %v210
  %v877 = vunpack.c.l.b16 %v211
  %v878 = vunpack.c.l.b16 %v212
  %v879 = vunpack.c.l.b16 %v213
  %v880 = vunpack.c.l.b16 %v214
  %v881 = vunpack.c.l.b16 %v215
  %v882 = vunpack.c.l.b16 %v216
  %v883 = vunpack.c.l.b16 %v217
  %v884 = vunpack.c.l.b16 %v218
  %v885 = vunpack.c.l.b16 %v219
  %v886 = vunpack.c.l.b16 %v220
  %v887 = vunpack.c.l.b16 %v221
  %v888 = vunpack.c.l.b16 %v222
  %v889 = vunpack.c.l.b16 %v223
  %v890 = vunpack.c.l.b16 %v224
  %v891 = vunpack.c.l.b16 %v225
  %v892 = vunpack.c.l.b16 %v226
  %v893 = vunpack.c.l.b16 %v227
  %v894 = vunpack.c.l.b16 %v228
  %v895 = vunpack.c.l.b16 %v229
  %v896 = vunpack.c.l.b16 %v230
  %v897 = vunpack.c.l.b16 %v231
  %v898 = vunpack.c.l.b16 %v232
  %v899 = vunpack.c.l.b16 %v233
  %v900 = vunpack.c.l.b16 %v234
  %v901 = vunpack.c.l.b16 %v235
  %v902 = vunpack.c.l.b16 %v236
  %v903 = vunpack.c.l.b16 %v237
  %v904 = vunpack.c.l.b16 %v238
  %v905 = vunpack.c.l.b16 %v239
  %v906 = vunpack.c.l.b16 %v240
  %v907 = vunpack.c.l.b16 %v241
  %v908 = vunpack.c.l.b16 %v242
  %v909 = vunpack.c.l.b16 %v243
  %v910 = vunpack.c.l.b16 %v244
  %v911 = vunpack.c.l.b16 %v245
  %v912 = vunpack.c.l.b16 %v246
  %v913 = vunpack.c.l.b16 %v247
  %v914 = vunpack.c.l.b16 %v248
  %v915 = vunpack.c.l.b16 %v249
  %v916 = vunpack.c.l.b16 %v250
  %v917 = vunpack.c.l.b16 %v251
  %v918 = vunpack.c.l.b16 %v252
  %v919 = vunpack.c.l.b16 %v253
  %v920 = vunpack.c.l.b16 %v254
  %v921 = vunpack.c.l.b16 %v255
  %v922 = vunpack.c.l.b16 %v256
  %v923 = vunpack.c.l.b16 %v257
  %v924 = vunpack.c.l.b16 %v258
  %v925 = vunpack.c.l.b16 %v259
  %v926 = vunpack.c.l.b16 %v260
  %v927 = vunpack.c.l.b16 %v261
  %v928 = vunpack.c.l.b16 %v262
  %v929 = vunpack.c.l.b16 %v263
  %v930 = vunpack.c.l.b16 %v264
  %v931 = vunpack.c.l.b16 %v265
  %v932 = vunpack.c.l.b16 %v266
  %v933 = vunpack.c.l.b16 %v267
  %v934 = vunpack.c.l.b16 %v268
  %v935 = vunpack.c.l.b16 %v269
  %v936 = vunpack.c.l.b16 %v270
  %v937 = vunpack.c.l.b16 %v271
  %v938 = vunpack.c.l.b16 %v272
  %v939 = vunpack.c.l.b16 %v273
  %v940 = vunpack.c.l.b16 %v274
  %v941 = vunpack.c.l.b16 %v275
  %v942 = vunpack.c.l.b16 %v276
  %v943 = vunpack.c.l.b16 %v277
  %v944 = vunpack.c.l.b16 %v278
  %v945 = vunpack.c.l.b16 %v279
  %v946 = vunpack.c.l.b16 %v280
  %v947 = vunpack.c.l.b16 %v281
  %v948 = vunpack.c.l.b16 %v282
  %v949 = vunpack.c.l.b16 %v283
  %v950 = vunpack.c.l.b16 %v284
  %v951 = vunpack.c.l.b16 %v285
  %v952 = vunpack.c.l.b16 %v286
  %v953 = vunpack.c.l.b16 %v287
  %v954 = vunpack.c.l.b16 %v288
  %v955 = vunpack.c.l.b16 %v289
  %v956 = vunpack.c.l.b16 %v290
  %v957 = vunpack.c.l.b16 %v291
  %v958 = vunpack.c.l.b16 %v292
  %v959 = vunpack.c.l.b16 %v293
  %v960 = vunpack.c.l.b16 %v294
  %v961 = vunpack.c.l.b16 %v295
  %v962 = vunpack.c.l.b16 %v296
  %v963 = vunpack.c.l.b16 %v297
  %v964 = vunpack.c.l.b16 %v298
  %v965 = vunpack.c.l.b16 %v299
  %v966 = vunpack.c.l.b16 %v300
  %v967 = vunpack.c.l.b16 %v301
  %v968 = vunpack.c.l.b16 %v302
  %v969 = vunpack.c.l.b16 %v303
  %v970 = vunpack.c.l.b16 %v304
  %v971 = vunpack.c.l.b16 %v305
  %v972 = vunpack.c.l.b16 %v306
  %v973 = vunpack.c.l.b16 %v307
  %v974 = vunpack.c.l.b16 %v308
  %v975 = vunpack.c.l.b16 %v309
  %v976 = vunpack.c.l.b16 %v310
  %v977 = vunpack.c.l.b16 %v311
  %v978 = vunpack.c.l.b16 %v312
  %v979 = vunpack.c.l.b16 %v313
  %v980 = vunpack.c.l.b16 %v314
  %v981 = vunpack.c.l.b16 %v315
  %v982 = vunpack.c.l.b16 %v316
  %v983 = vunpack.c.l.b16 %v317
  %v984 = vunpack.c.l.b16 %v318
  %v985 = vunpack.c.l.b16 %v319
  %v986 = vunpack.c.l.b16 %v320
  %v987 = vunpack.c.l.b16 %v321
  %v988 = vunpack.c.l.b16 %v322
  %v989 = vunpack.c.l.b16 %v323
  %v990 = vunpack.c.l.b16 %v324
  %v991 = vunpack.c.l.b16 %v325
  %v992 = vunpack.c.l.b16 %v326
  %v993 = vunpack.c.l.b16 %v327
  %v994 = vunpack.c.l.b16 %v328
  %v995 = vunpack.c.l.b16 %v329
  %v996 = vunpack.c.l.b16 %v330
  %v997 = vunpack.c.l.b16 %v331
  %v998 = vunpack.c.l.b16 %v332
  %v999 = vunpack.c.l.b16 %v333
  %v1000 = vunpack.c.l.b16 %v334
  %v1001 = vunpack.c.l.b16 %v335
  %v1002 = vunpack.c.l.b16 %v336
  %v1003 = vunpack.c.l.b16 %v337
  %v1004 = vunpack.c.l.b16 %v338
  %v1005 = vunpack.c.l.b16 %v339
  %v1006 = vunpack.c.l.b16 %v340
  %v1007 = vunpack.c.l.b16 %v341
  %v1008 = vunpack.c.l.b16 %v342
  %v1009 = vunpack.c.l.b16 %v343
  %v1010 = vunpack.c.l.b16 %v344
  %v1011 = vunpack.c.l.b16 %v345
  %v1012 = vunpack.c.l.b16 %v346
  %v1013 = vunpack.c.l.b16 %v347
  %v1014 = vunpack.c.l.b16 %v348
  %v1015 = vunpack.c.l.b16 %v349
  %v1016 = vunpack.c.l.b16 %v350
  %v1017 = vunpack.c.l.b16 %v351
  %v1018 = vunpack.c.l.b16 %v352
  %v1019 = vunpack.c.l.b16 %v353
  %v1020 = vunpack.c.l.b16 %v354
  %v1021 = vunpack.c.l.b16 %v355
  %v1022 = vunpack.c.l.b16 %v356
  %v1023 = vunpack.c.l.b16 %v357
  %v1024 = vunpack.c.l.b16 %v358
  %v1025 = vunpack.c.l.b16 %v359
  %v1026 = vunpack.c.l.b16 %v360
  %v1027 = vunpack.c.l.b16 %v361
  %v1028 = vunpack.c.l.b16 %v362
  %v1029 = vunpack.c.l.b16 %v363
  %v1030 = vunpack.c.l.b16 %v364
  %v1031 = vunpack.c.l.b16 %v365
  %v1032 = vunpack.c.l.b16 %v366
  %v1033 = vunpack.c.l.b16 %v367
  %v1034 = vunpack.c.l.b16 %v368
  %v1035 = vunpack.c.l.b16 %v369
  %v1036 = vunpack.c.l.b16 %v370
  %v1037 = vunpack.c.l.b16 %v371
  %v1038 = vunpack.c.l.b16 %v372
  %v1039 = vunpack.c.l.b16 %v373
  %v1040 = vunpack.c.l.b16 %v374
  %v1041 = vunpack.c.l.b16 %v375
  %v1042 = vunpack.c.l.b16 %v376
  %v1043 = vunpack.c.l.b16 %v377
  %v1044 = vunpack.c.l.b16 %v378
  %v1045 = vunpack.c.l.b16 %v379
  %v1046 = vunpack.c.l.b16 %v380
  %v1047 = vunpack.c.l.b16 %v381
  %v1048 = vpack.c.b16 %v761, %v760
  %v1049 = vpack.c.b16 %v763, %v762
  %v1050 = vpack.c.b16 %v765, %v764
  %v1051 = vpack.c.b16 %v767, %v766
  %v1052 = vpack.c.b16 %v769, %v768
  %v1053 = vpack.c.b16 %v771, %v770
  %v1054 = vpack.c.b16 %v773, %v772
  %v1055 = vpack.c.b16 %v775, %v774
  %v1056 = vpack.c.b16 %v777, %v776
  %v1057 = vpack.c.b16 %v779, %v778
  %v1058 = vpack.c.b16 %v781, %v780
  %v1059 = vpack.c.b16 %v783, %v782
  %v1060 = vpack.c.b16 %v785, %v784
  %v1061 = vpack.c.b16 %v787, %v786
  %v1062 = vpack.c.b16 %v789, %v788
  %v1063 = vpack.c.b16 %v791, %v790
  %v1064 = vpack.c.b16 %v793, %v792
  %v1065 = vpack.c.b16 %v795, %v794
  %v1066 = vpack.c.b16 %v797, %v796
  %v1067 = vpack.c.b16 %v799, %v798
  %v1068 = vpack.c.b16 %v801, %v800
  %v1069 = vpack.c.b16 %v803, %v802
  %v1070 = vpack.c.b16 %v805, %v804
  %v1071 = vpack.c.b16 %v807, %v806
  %v1072 = vpack.c.b16 %v809, %v808
  %v1073 = vpack.c.b16 %v811, %v810
  %v1074 = vpack.c.b16 %v813, %v812
  %v1075 = vpack.c.b16 %v815, %v814
  %v1076 = vpack.c.b16 %v817, %v816
  %v1077 = vpack.c.b16 %v819, %v818
  %v1078 = vpack.c.b16 %v821, %v820
  %v1079 = vpack.c.b16 %v823, %v822
  %v1080 = vpack.c.b16 %v825, %v824
  %v1081 = vpack.c.b16 %v827, %v826
  %v1082 = vpack.c.b16 %v829, %v828
  %v1083 = vpack.c.b16 %v831, %v830
  %v1084 = vpack.c.b16 %v833, %v832
  %v1085 = vpack.c.b16 %v835, %v834
  %v1086 = vpack.c.b16 %v837, %v836
  %v1087 = vpack.c.b16 %v839, %v838
  %v1088 = vpack.c.b16 %v841, %v840
  %v1089 = vpack.c.b16 %v843, %v842
  %v1090 = vpack.c.b16 %v845, %v844
  %v1091 = vpack.c.b16 %v847, %v846
  %v1092 = vpack.c.b16 %v849, %v848
  %v1093 = vpack.c.b16 %v851, %v850
  %v1094 = vpack.c.b16 %v853, %v852
  %v1095 = vpack.c.b16 %v855, %v854
  %v1096 = vpack.c.b16 %v857, %v856
  %v1097 = vpack.c.b16 %v859, %v858
  %v1098 = vpack.c.b16 %v861, %v860
  %v1099 = vpack.c.b16 %v863, %v862
  %v1100 = vpack.c.b16 %v865, %v864
  %v1101 = vpack.c.b16 %v867, %v866
  %v1102 = vpack.c.b16 %v869, %v868
  %v1103 = vpack.c.b16 %v871, %v870
  %v1104 = vpack.c.b16 %v873, %v872
  %v1105 = vpack.c.b16 %v875, %v874
  %v1106 = vpack.c.b16 %v877, %v876
  %v1107 = vpack.c.b16 %v879, %v878
  %v1108 = vpack.c.b16 %v881, %v880
  %v1109 = vpack.c.b16 %v883, %v882
  %v1110 = vpack.c.b16 %v885, %v884
  %v1111 = vpack.c.b16 %v887, %v886
  %v1112 = vpack.c.b16 %v889, %v888
  %v1113 = vpack.c.b16 %v891, %v890
  %v1114 = vpack.c.b16 %v893, %v892
  %v1115 = vpack.c.b16 %v895, %v894
  %v1116 = vpack.c.b16 %v897, %v896
  %v1117 = vpack.c.b16 %v899, %v898
  %v1118 = vpack.c.b16 %v901, %v900
  %v1119 = vpack.c.b16 %v903, %v902
  %v1120 = vpack.c.b16 %v905, %v904
  %v1121 = vpack.c.b16 %v907, %v906
  %v1122 = vpack.c.b16 %v909, %v908
  %v1123 = vpack.c.b16 %v911, %v910
  %v1124 = vpack.c.b16 %v913, %v912
  %v1125 = vpack.c.b16 %v915, %v914
  %v1126 = vpack.c.b16 %v917, %v916
  %v1127 = vpack.c.b16 %v919, %v918
  %v1128 = vpack.c.b16 %v921, %v920
  %v1129 = vpack.c.b16 %v923, %v922
  %v1130 = vpack.c.b16 %v925, %v924
  %v1131 = vpack.c.b16 %v927, %v926
  %v1132 = vpack.c.b16 %v929, %v928
  %v1133 = vpack.c.b16 %v931, %v930
  %v1134 = vpack.c.b16 %v933, %v932
  %v1135 = vpack.c.b16 %v935, %v934
  %v1136 = vpack.c.b16 %v937, %v936
  %v1137 = vpack.c.b16 %v939, %v938
  %v1138 = vpack.c.b16 %v941, %v940
  %v1139 = vpack.c.b16 %v943, %v942
  %v1140 = vpack.c.b16 %v945, %v944
  %v1141 = vpack.c.b16 %v947, %v946
  %v1142 = vpack.c.b16 %v949, %v948
  %v1143 = vpack.c.b16 %v951, %v950
  %v1144 = vpack.c.b16 %v953, %v952
  %v1145 = vpack.c.b16 %v955, %v954
  %v1146 = vpack.c.b16 %v957, %v956
  %v1147 = vpack.c.b16 %v959, %v958
  %v1148 = vpack.c.b16 %v961, %v960
  %v1149 = vpack.c.b16 %v963, %v962
  %v1150 = vpack.c.b16 %v965, %v964
  %v1151 = vpack.c.b16 %v967, %v966
  %v1152 = vpack.c.b16 %v969, %v968
  %v1153 = vpack.c.b16 %v971, %v970
  %v1154 = vpack.c.b16 %v973, %v972
  %v1155 = vpack.c.b16 %v975, %v974
  %v1156 = vpack.c.b16 %v977, %v976
  %v1157 = vpack.c.b16 %v979, %v978
  %v1158 = vpack.c.b16 %v981, %v980
  %v1159 = vpack.c.b16 %v983, %v982
  %v1160 = vpack.c.b16 %v985, %v984
  %v1161 = vpack.c.b16 %v987, %v986
  %v1162 = vpack.c.b16 %v989, %v988
  %v1163 = vpack.c.b16 %v991, %v990
  %v1164 = vpack.c.b16 %v993, %v992
  %v1165 = vpack.c.b16 %v995, %v994
  %v1166 = vpack.c.b16 %v997, %v996
  %v1167 = vpack.c.b16 %v999, %v998
  %v1168 = vpack.c.b16 %v1001, %v1000
  %v1169 = vpack.c.b16 %v1003, %v1002
  %v1170 = vpack.c.b16 %v1005, %v1004
  %v1171 = vpack.c.b16 %v1007, %v1006
  %v1172 = vpack.c.b16 %v1009, %v1008
  %v1173 = vpack.c.b16 %v1011, %v1010
  %v1174 = vpack.c.b16 %v1013, %v1012
  %v1175 = vpack.c.b16 %v1015, %v1014
  %v1176 = vpack.c.b16 %v1017, %v1016
  %v1177 = vpack.c.b16 %v1019, %v1018
  %v1178 = vpack.c.b16 %v1021, %v1020
  %v1179 = vpack.c.b16 %v1023, %v1022
  %v1180 = vpack.c.b16 %v1025, %v1024
  %v1181 = vpack.c.b16 %v1027, %v1026
  %v1182 = vpack.c.b16 %v1029, %v1028
  %v1183 = vpack.c.b16 %v1031, %v1030
  %v1184 = vpack.c.b16 %v1033, %v1032
  %v1185 = vpack.c.b16 %v1035, %v1034
  %v1186 = vpack.c.b16 %v1037, %v1036
  %v1187 = vpack.c.b16 %v1039, %v1038
  %v1188 = vpack.c.b16 %v1041, %v1040
  %v1189 = vpack.c.b16 %v1043, %v1042
  %v1190 = vpack.c.b16 %v1045, %v1044
  %v1191 = vpack.c.b16 %v1047, %v1046
  %1336 = vmatprep.subr.bf16.mxu0 0
  %1337 = vmatpush1.bf16.msra.mxu0 %v1048
  %1338 = vmatprep.subr.bf16.mxu0 0
  %1339 = vmatpush1.bf16.msra.mxu0 %v1049
  %1340 = vmatprep.subr.bf16.mxu0 0
  %1341 = vmatpush1.bf16.msra.mxu0 %v1050
  %1342 = vmatprep.subr.bf16.mxu0 0
  %1343 = vmatpush1.bf16.msra.mxu0 %v1051
  %1344 = vmatprep.subr.bf16.mxu0 0
  %1345 = vmatpush1.bf16.msra.mxu0 %v1052
  %1346 = vmatprep.subr.bf16.mxu0 0
  %1347 = vmatpush1.bf16.msra.mxu0 %v1053
  %1348 = vmatprep.subr.bf16.mxu0 0
  %1349 = vmatpush1.bf16.msra.mxu0 %v1054
  %1350 = vmatprep.subr.bf16.mxu0 0
  %1351 = vmatpush1.bf16.msra.mxu0 %v1055
  %1352 = vmatprep.subr.bf16.mxu0 0
  %1353 = vmatpush1.bf16.msra.mxu0 %v1056
  %1354 = vmatprep.subr.bf16.mxu0 0
  %1355 = vmatpush1.bf16.msra.mxu0 %v1057
  %1356 = vmatprep.subr.bf16.mxu0 0
  %1357 = vmatpush1.bf16.msra.mxu0 %v1058
  %1358 = vmatprep.subr.bf16.mxu0 0
  %1359 = vmatpush1.bf16.msra.mxu0 %v1059
  %1360 = vmatprep.subr.bf16.mxu0 0
  %1361 = vmatpush1.bf16.msra.mxu0 %v1060
  %1362 = vmatprep.subr.bf16.mxu0 0
  %1363 = vmatpush1.bf16.msra.mxu0 %v1061
  %1364 = vmatprep.subr.bf16.mxu0 0
  %1365 = vmatpush1.bf16.msra.mxu0 %v1062
  %1366 = vmatprep.subr.bf16.mxu0 0
  %1367 = vmatpush1.bf16.msra.mxu0 %v1063
  %1368 = vmatprep.mubr.bf16.mxu0 %v437
  %1369 = vmatmul.mubr.bf16.gmra.mrb[0].mxu0 %v436
  %v1370 = vpop.f32.mrb[0].mxu0
  %v1371 = vadd.f32 0.0, %v1370
  %v1372 = vpop.f32.mrb[0].mxu0
  %v1373 = vpop.f32.mrb[0].mxu0
  %v1374 = vadd.f32 0.0, %v1373
  %v1375 = vpop.f32.mrb[0].mxu0
  %1376 = vdwg.mxu0
  %1377 = vmatprep.subr.bf16.mxu0 0
  %1378 = vmatpush1.bf16.msra.mxu0 %v1064
  %1379 = vmatprep.subr.bf16.mxu0 0
  %1380 = vmatpush1.bf16.msra.mxu0 %v1065
  %1381 = vmatprep.subr.bf16.mxu0 0
  %1382 = vmatpush1.bf16.msra.mxu0 %v1066
  %1383 = vmatprep.subr.bf16.mxu0 0
  %1384 = vmatpush1.bf16.msra.mxu0 %v1067
  %1385 = vmatprep.subr.bf16.mxu0 0
  %1386 = vmatpush1.bf16.msra.mxu0 %v1068
  %1387 = vmatprep.subr.bf16.mxu0 0
  %1388 = vmatpush1.bf16.msra.mxu0 %v1069
  %1389 = vmatprep.subr.bf16.mxu0 0
  %1390 = vmatpush1.bf16.msra.mxu0 %v1070
  %1391 = vmatprep.subr.bf16.mxu0 0
  %1392 = vmatpush1.bf16.msra.mxu0 %v1071
  %1393 = vmatprep.subr.bf16.mxu0 0
  %1394 = vmatpush1.bf16.msra.mxu0 %v1072
  %1395 = vmatprep.subr.bf16.mxu0 0
  %1396 = vmatpush1.bf16.msra.mxu0 %v1073
  %1397 = vmatprep.subr.bf16.mxu0 0
  %1398 = vmatpush1.bf16.msra.mxu0 %v1074
  %1399 = vmatprep.subr.bf16.mxu0 0
  %1400 = vmatpush1.bf16.msra.mxu0 %v1075
  %1401 = vmatprep.subr.bf16.mxu0 0
  %1402 = vmatpush1.bf16.msra.mxu0 %v1076
  %1403 = vmatprep.subr.bf16.mxu0 0
  %1404 = vmatpush1.bf16.msra.mxu0 %v1077
  %1405 = vmatprep.subr.bf16.mxu0 0
  %1406 = vmatpush1.bf16.msra.mxu0 %v1078
  %1407 = vmatprep.subr.bf16.mxu0 0
  %1408 = vmatpush1.bf16.msra.mxu0 %v1079
  %1409 = vmatprep.mubr.bf16.mxu0 %v439
  %1410 = vmatmul.mubr.bf16.gmra.mrb[0].mxu0 %v438
  %v1411 = vpop.f32.mrb[0].mxu0
  %v1412 = vadd.f32 %v1371, %v1411
  %v1413 = vpop.f32.mrb[0].mxu0
  %v1414 = vpop.f32.mrb[0].mxu0
  %v1415 = vadd.f32 %v1374, %v1414
  %v1416 = vpop.f32.mrb[0].mxu0
  %1417 = vdwg.mxu0
  %1418 = vmatprep.subr.bf16.mxu0 0
  %1419 = vmatpush1.bf16.msra.mxu0 %v1080
  %1420 = vmatprep.subr.bf16.mxu0 0
  %1421 = vmatpush1.bf16.msra.mxu0 %v1081
  %1422 = vmatprep.subr.bf16.mxu0 0
  %1423 = vmatpush1.bf16.msra.mxu0 %v1082
  %1424 = vmatprep.subr.bf16.mxu0 0
  %1425 = vmatpush1.bf16.msra.mxu0 %v1083
  %1426 = vmatprep.subr.bf16.mxu0 0
  %1427 = vmatpush1.bf16.msra.mxu0 %v1084
  %1428 = vmatprep.subr.bf16.mxu0 0
  %1429 = vmatpush1.bf16.msra.mxu0 %v1085
  %1430 = vmatprep.subr.bf16.mxu0 0
  %1431 = vmatpush1.bf16.msra.mxu0 %v1086
  %1432 = vmatprep.subr.bf16.mxu0 0
  %1433 = vmatpush1.bf16.msra.mxu0 %v1087
  %1434 = vmatprep.subr.bf16.mxu0 0
  %1435 = vmatpush1.bf16.msra.mxu0 %v1088
  %1436 = vmatprep.subr.bf16.mxu0 0
  %1437 = vmatpush1.bf16.msra.mxu0 %v1089
  %1438 = vmatprep.subr.bf16.mxu0 0
  %1439 = vmatpush1.bf16.msra.mxu0 %v1090
  %1440 = vmatprep.subr.bf16.mxu0 0
  %1441 = vmatpush1.bf16.msra.mxu0 %v1091
  %1442 = vmatprep.subr.bf16.mxu0 0
  %1443 = vmatpush1.bf16.msra.mxu0 %v1092
  %1444 = vmatprep.subr.bf16.mxu0 0
  %1445 = vmatpush1.bf16.msra.mxu0 %v1093
  %1446 = vmatprep.subr.bf16.mxu0 0
  %1447 = vmatpush1.bf16.msra.mxu0 %v1094
  %1448 = vmatprep.subr.bf16.mxu0 0
  %1449 = vmatpush1.bf16.msra.mxu0 %v1095
  %1450 = vmatprep.mubr.bf16.mxu0 %v441
  %1451 = vmatmul.mubr.bf16.gmra.mrb[0].mxu0 %v440
  %v1452 = vpop.f32.mrb[0].mxu0
  %v1453 = vadd.f32 %v1412, %v1452
  %v1454 = vpop.f32.mrb[0].mxu0
  %v1455 = vpop.f32.mrb[0].mxu0
  %v1456 = vadd.f32 %v1415, %v1455
  %v1457 = vpop.f32.mrb[0].mxu0
  %1458 = vdwg.mxu0
  %1459 = vmatprep.subr.bf16.mxu0 0
  %1460 = vmatpush1.bf16.msra.mxu0 %v1096
  %1461 = vmatprep.subr.bf16.mxu0 0
  %1462 = vmatpush1.bf16.msra.mxu0 %v1097
  %1463 = vmatprep.subr.bf16.mxu0 0
  %1464 = vmatpush1.bf16.msra.mxu0 %v1098
  %1465 = vmatprep.subr.bf16.mxu0 0
  %1466 = vmatpush1.bf16.msra.mxu0 %v1099
  %1467 = vmatprep.subr.bf16.mxu0 0
  %1468 = vmatpush1.bf16.msra.mxu0 %v1100
  %1469 = vmatprep.subr.bf16.mxu0 0
  %1470 = vmatpush1.bf16.msra.mxu0 %v1101
  %1471 = vmatprep.subr.bf16.mxu0 0
  %1472 = vmatpush1.bf16.msra.mxu0 %v1102
  %1473 = vmatprep.subr.bf16.mxu0 0
  %1474 = vmatpush1.bf16.msra.mxu0 %v1103
  %1475 = vmatprep.subr.bf16.mxu0 0
  %1476 = vmatpush1.bf16.msra.mxu0 %v1104
  %1477 = vmatprep.subr.bf16.mxu0 0
  %1478 = vmatpush1.bf16.msra.mxu0 %v1105
  %1479 = vmatprep.subr.bf16.mxu0 0
  %1480 = vmatpush1.bf16.msra.mxu0 %v1106
  %1481 = vmatprep.subr.bf16.mxu0 0
  %1482 = vmatpush1.bf16.msra.mxu0 %v1107
  %1483 = vmatprep.subr.bf16.mxu0 0
  %1484 = vmatpush1.bf16.msra.mxu0 %v1108
  %1485 = vmatprep.subr.bf16.mxu0 0
  %1486 = vmatpush1.bf16.msra.mxu0 %v1109
  %1487 = vmatprep.subr.bf16.mxu0 0
  %1488 = vmatpush1.bf16.msra.mxu0 %v1110
  %1489 = vmatprep.subr.bf16.mxu0 0
  %1490 = vmatpush1.bf16.msra.mxu0 %v1111
  %1491 = vmatprep.mubr.bf16.mxu0 %v443
  %1492 = vmatmul.mubr.bf16.gmra.mrb[0].mxu0 %v442
  %v1493 = vpop.f32.mrb[0].mxu0
  %v1494 = vadd.f32 %v1453, %v1493
  %v1495 = vpop.f32.mrb[0].mxu0
  %v1496 = vpop.f32.mrb[0].mxu0
  %v1497 = vadd.f32 %v1456, %v1496
  %v1498 = vpop.f32.mrb[0].mxu0
  %1499 = vdwg.mxu0
  %1500 = vmatprep.subr.bf16.mxu0 0
  %1501 = vmatpush1.bf16.msra.mxu0 %v1112
  %1502 = vmatprep.subr.bf16.mxu0 0
  %1503 = vmatpush1.bf16.msra.mxu0 %v1113
  %1504 = vmatprep.subr.bf16.mxu0 0
  %1505 = vmatpush1.bf16.msra.mxu0 %v1114
  %1506 = vmatprep.subr.bf16.mxu0 0
  %1507 = vmatpush1.bf16.msra.mxu0 %v1115
  %1508 = vmatprep.subr.bf16.mxu0 0
  %1509 = vmatpush1.bf16.msra.mxu0 %v1116
  %1510 = vmatprep.subr.bf16.mxu0 0
  %1511 = vmatpush1.bf16.msra.mxu0 %v1117
  %1512 = vmatprep.subr.bf16.mxu0 0
  %1513 = vmatpush1.bf16.msra.mxu0 %v1118
  %1514 = vmatprep.subr.bf16.mxu0 0
  %1515 = vmatpush1.bf16.msra.mxu0 %v1119
  %1516 = vmatprep.subr.bf16.mxu0 0
  %1517 = vmatpush1.bf16.msra.mxu0 %v1120
  %1518 = vmatprep.subr.bf16.mxu0 0
  %1519 = vmatpush1.bf16.msra.mxu0 %v1121
  %1520 = vmatprep.subr.bf16.mxu0 0
  %1521 = vmatpush1.bf16.msra.mxu0 %v1122
  %1522 = vmatprep.subr.bf16.mxu0 0
  %1523 = vmatpush1.bf16.msra.mxu0 %v1123
  %1524 = vmatprep.subr.bf16.mxu0 0
  %1525 = vmatpush1.bf16.msra.mxu0 %v1124
  %1526 = vmatprep.subr.bf16.mxu0 0
  %1527 = vmatpush1.bf16.msra.mxu0 %v1125
  %1528 = vmatprep.subr.bf16.mxu0 0
  %1529 = vmatpush1.bf16.msra.mxu0 %v1126
  %1530 = vmatprep.subr.bf16.mxu0 0
  %1531 = vmatpush1.bf16.msra.mxu0 %v1127
  %1532 = vmatprep.mubr.bf16.mxu0 %v445
  %1533 = vmatmul.mubr.bf16.gmra.mrb[0].mxu0 %v444
  %v1534 = vpop.f32.mrb[0].mxu0
  %v1535 = vadd.f32 %v1494, %v1534
  %v1536 = vpop.f32.mrb[0].mxu0
  %v1537 = vpop.f32.mrb[0].mxu0
  %v1538 = vadd.f32 %v1497, %v1537
  %v1539 = vpop.f32.mrb[0].mxu0
  %1540 = vdwg.mxu0
  %1541 = vmatprep.subr.bf16.mxu0 0
  %1542 = vmatpush1.bf16.msra.mxu0 %v1128
  %1543 = vmatprep.subr.bf16.mxu0 0
  %1544 = vmatpush1.bf16.msra.mxu0 %v1129
  %1545 = vmatprep.subr.bf16.mxu0 0
  %1546 = vmatpush1.bf16.msra.mxu0 %v1130
  %1547 = vmatprep.subr.bf16.mxu0 0
  %1548 = vmatpush1.bf16.msra.mxu0 %v1131
  %1549 = vmatprep.subr.bf16.mxu0 0
  %1550 = vmatpush1.bf16.msra.mxu0 %v1132
  %1551 = vmatprep.subr.bf16.mxu0 0
  %1552 = vmatpush1.bf16.msra.mxu0 %v1133
  %1553 = vmatprep.subr.bf16.mxu0 0
  %1554 = vmatpush1.bf16.msra.mxu0 %v1134
  %1555 = vmatprep.subr.bf16.mxu0 0
  %1556 = vmatpush1.bf16.msra.mxu0 %v1135
  %1557 = vmatprep.subr.bf16.mxu0 0
  %1558 = vmatpush1.bf16.msra.mxu0 %v1136
  %1559 = vmatprep.subr.bf16.mxu0 0
  %1560 = vmatpush1.bf16.msra.mxu0 %v1137
  %1561 = vmatprep.subr.bf16.mxu0 0
  %1562 = vmatpush1.bf16.msra.mxu0 %v1138
  %1563 = vmatprep.subr.bf16.mxu0 0
  %1564 = vmatpush1.bf16.msra.mxu0 %v1139
  %1565 = vmatprep.subr.bf16.mxu0 0
  %1566 = vmatpush1.bf16.msra.mxu0 %v1140
  %1567 = vmatprep.subr.bf16.mxu0 0
  %1568 = vmatpush1.bf16.msra.mxu0 %v1141
  %1569 = vmatprep.subr.bf16.mxu0 0
  %1570 = vmatpush1.bf16.msra.mxu0 %v1142
  %1571 = vmatprep.subr.bf16.mxu0 0
  %1572 = vmatpush1.bf16.msra.mxu0 %v1143
  %1573 = vmatprep.mubr.bf16.mxu0 %v447
  %1574 = vmatmul.mubr.bf16.gmra.mrb[0].mxu0 %v446
  %v1575 = vpop.f32.mrb[0].mxu0
  %v1576 = vadd.f32 %v1535, %v1575
  %v1577 = vpop.f32.mrb[0].mxu0
  %v1578 = vpop.f32.mrb[0].mxu0
  %v1579 = vadd.f32 %v1538, %v1578
  %v1580 = vpop.f32.mrb[0].mxu0
  %1581 = vdwg.mxu0
  %1582 = vmatprep.subr.bf16.mxu0 0
  %1583 = vmatpush1.bf16.msra.mxu0 %v1144
  %1584 = vmatprep.subr.bf16.mxu0 0
  %1585 = vmatpush1.bf16.msra.mxu0 %v1145
  %1586 = vmatprep.subr.bf16.mxu0 0
  %1587 = vmatpush1.bf16.msra.mxu0 %v1146
  %1588 = vmatprep.subr.bf16.mxu0 0
  %1589 = vmatpush1.bf16.msra.mxu0 %v1147
  %1590 = vmatprep.subr.bf16.mxu0 0
  %1591 = vmatpush1.bf16.msra.mxu0 %v1148
  %1592 = vmatprep.subr.bf16.mxu0 0
  %1593 = vmatpush1.bf16.msra.mxu0 %v1149
  %1594 = vmatprep.subr.bf16.mxu0 0
  %1595 = vmatpush1.bf16.msra.mxu0 %v1150
  %1596 = vmatprep.subr.bf16.mxu0 0
  %1597 = vmatpush1.bf16.msra.mxu0 %v1151
  %1598 = vmatprep.subr.bf16.mxu0 0
  %1599 = vmatpush1.bf16.msra.mxu0 %v1152
  %1600 = vmatprep.subr.bf16.mxu0 0
  %1601 = vmatpush1.bf16.msra.mxu0 %v1153
  %1602 = vmatprep.subr.bf16.mxu0 0
  %1603 = vmatpush1.bf16.msra.mxu0 %v1154
  %1604 = vmatprep.subr.bf16.mxu0 0
  %1605 = vmatpush1.bf16.msra.mxu0 %v1155
  %1606 = vmatprep.subr.bf16.mxu0 0
  %1607 = vmatpush1.bf16.msra.mxu0 %v1156
  %1608 = vmatprep.subr.bf16.mxu0 0
  %1609 = vmatpush1.bf16.msra.mxu0 %v1157
  %1610 = vmatprep.subr.bf16.mxu0 0
  %1611 = vmatpush1.bf16.msra.mxu0 %v1158
  %1612 = vmatprep.subr.bf16.mxu0 0
  %1613 = vmatpush1.bf16.msra.mxu0 %v1159
  %1614 = vmatprep.mubr.bf16.mxu0 %v449
  %1615 = vmatmul.mubr.bf16.gmra.mrb[0].mxu0 %v448
  %v1616 = vpop.f32.mrb[0].mxu0
  %v1617 = vadd.f32 %v1576, %v1616
  %v1618 = vpop.f32.mrb[0].mxu0
  %v1619 = vpop.f32.mrb[0].mxu0
  %v1620 = vadd.f32 %v1579, %v1619
  %v1621 = vpop.f32.mrb[0].mxu0
  %1622 = vdwg.mxu0
  %1623 = vmatprep.subr.bf16.mxu0 0
  %1624 = vmatpush1.bf16.msra.mxu0 %v1160
  %1625 = vmatprep.subr.bf16.mxu0 0
  %1626 = vmatpush1.bf16.msra.mxu0 %v1161
  %1627 = vmatprep.subr.bf16.mxu0 0
  %1628 = vmatpush1.bf16.msra.mxu0 %v1162
  %1629 = vmatprep.subr.bf16.mxu0 0
  %1630 = vmatpush1.bf16.msra.mxu0 %v1163
  %1631 = vmatprep.subr.bf16.mxu0 0
  %1632 = vmatpush1.bf16.msra.mxu0 %v1164
  %1633 = vmatprep.subr.bf16.mxu0 0
  %1634 = vmatpush1.bf16.msra.mxu0 %v1165
  %1635 = vmatprep.subr.bf16.mxu0 0
  %1636 = vmatpush1.bf16.msra.mxu0 %v1166
  %1637 = vmatprep.subr.bf16.mxu0 0
  %1638 = vmatpush1.bf16.msra.mxu0 %v1167
  %1639 = vmatprep.subr.bf16.mxu0 0
  %1640 = vmatpush1.bf16.msra.mxu0 %v1168
  %1641 = vmatprep.subr.bf16.mxu0 0
  %1642 = vmatpush1.bf16.msra.mxu0 %v1169
  %1643 = vmatprep.subr.bf16.mxu0 0
  %1644 = vmatpush1.bf16.msra.mxu0 %v1170
  %1645 = vmatprep.subr.bf16.mxu0 0
  %1646 = vmatpush1.bf16.msra.mxu0 %v1171
  %1647 = vmatprep.subr.bf16.mxu0 0
  %1648 = vmatpush1.bf16.msra.mxu0 %v1172
  %1649 = vmatprep.subr.bf16.mxu0 0
  %1650 = vmatpush1.bf16.msra.mxu0 %v1173
  %1651 = vmatprep.subr.bf16.mxu0 0
  %1652 = vmatpush1.bf16.msra.mxu0 %v1174
  %1653 = vmatprep.subr.bf16.mxu0 0
  %1654 = vmatpush1.bf16.msra.mxu0 %v1175
  %1655 = vmatprep.mubr.bf16.mxu0 %v451
  %1656 = vmatmul.mubr.bf16.gmra.mrb[0].mxu0 %v450
  %v1657 = vpop.f32.mrb[0].mxu0
  %v1658 = vadd.f32 %v1617, %v1657
  %v1659 = vpop.f32.mrb[0].mxu0
  %v1660 = vpop.f32.mrb[0].mxu0
  %v1661 = vadd.f32 %v1620, %v1660
  %v1662 = vpop.f32.mrb[0].mxu0
  %1663 = vdwg.mxu0
  %1664 = vmatprep.subr.bf16.mxu0 0
  %1665 = vmatpush1.bf16.msra.mxu0 %v1176
  %1666 = vmatprep.subr.bf16.mxu0 0
  %1667 = vmatpush1.bf16.msra.mxu0 %v1177
  %1668 = vmatprep.subr.bf16.mxu0 0
  %1669 = vmatpush1.bf16.msra.mxu0 %v1178
  %1670 = vmatprep.subr.bf16.mxu0 0
  %1671 = vmatpush1.bf16.msra.mxu0 %v1179
  %1672 = vmatprep.subr.bf16.mxu0 0
  %1673 = vmatpush1.bf16.msra.mxu0 %v1180
  %1674 = vmatprep.subr.bf16.mxu0 0
  %1675 = vmatpush1.bf16.msra.mxu0 %v1181
  %1676 = vmatprep.subr.bf16.mxu0 0
  %1677 = vmatpush1.bf16.msra.mxu0 %v1182
  %1678 = vmatprep.subr.bf16.mxu0 0
  %1679 = vmatpush1.bf16.msra.mxu0 %v1183
  %1680 = vmatprep.subr.bf16.mxu0 0
  %1681 = vmatpush1.bf16.msra.mxu0 %v1184
  %1682 = vmatprep.subr.bf16.mxu0 0
  %1683 = vmatpush1.bf16.msra.mxu0 %v1185
  %1684 = vmatprep.subr.bf16.mxu0 0
  %1685 = vmatpush1.bf16.msra.mxu0 %v1186
  %1686 = vmatprep.subr.bf16.mxu0 0
  %1687 = vmatpush1.bf16.msra.mxu0 %v1187
  %1688 = vmatprep.subr.bf16.mxu0 0
  %1689 = vmatpush1.bf16.msra.mxu0 %v1188
  %1690 = vmatprep.subr.bf16.mxu0 0
  %1691 = vmatpush1.bf16.msra.mxu0 %v1189
  %1692 = vmatprep.subr.bf16.mxu0 0
  %1693 = vmatpush1.bf16.msra.mxu0 %v1190
  %1694 = vmatprep.subr.bf16.mxu0 0
  %1695 = vmatpush1.bf16.msra.mxu0 %v1191
  %1696 = vmatprep.mubr.bf16.mxu0 %v453
  %1697 = vmatmul.mubr.bf16.gmra.mrb[0].mxu0 %v452
  %v1698 = vpop.f32.mrb[0].mxu0
  %v1699 = vadd.f32 %v1658, %v1698
  %v1700 = vpop.f32.mrb[0].mxu0
  %v1701 = vpop.f32.mrb[0].mxu0
  %v1702 = vadd.f32 %v1661, %v1701
  %v1703 = vpop.f32.mrb[0].mxu0
  %1704 = vdwg.mxu0
  %v1709 = vunpack.c.l.b16 %v24
  %v1710 = vunpack.c.h.b16 %v24
  %v1711 = vunpack.c.l.b16 %v25
  %v1712 = vunpack.c.l.b16 %v26
  %v1713 = vunpack.c.h.b16 %v26
  %v1714 = vunpack.c.l.b16 %v27
  %v1715 = vpack.c.b16 %v1712, %v1709
  %v1716 = vpack.c.b16 %v1713, %v1710
  %v1717 = vpack.c.b16 %v1714, %v1711
  %v1769 = vunpack.c.l.b16 %v28
  %v1770 = vunpack.c.l.b16 %v29
  %v1771 = vunpack.c.l.b16 %v30
  %v1772 = vunpack.c.l.b16 %v31
  %v1773 = vunpack.c.l.b16 %v32
  %v1774 = vunpack.c.l.b16 %v33
  %v1775 = vunpack.c.l.b16 %v34
  %v1776 = vunpack.c.l.b16 %v35
  %v1777 = vunpack.c.l.b16 %v36
  %v1778 = vunpack.c.l.b16 %v37
  %v1779 = vunpack.c.l.b16 %v38
  %v1780 = vunpack.c.l.b16 %v39
  %v1781 = vunpack.c.l.b16 %v40
  %v1782 = vunpack.c.l.b16 %v41
  %v1783 = vunpack.c.l.b16 %v42
  %v1784 = vunpack.c.l.b16 %v43
  %v1785 = vunpack.c.l.b16 %v44
  %v1786 = vunpack.c.l.b16 %v45
  %v1787 = vunpack.c.l.b16 %v46
  %v1788 = vunpack.c.l.b16 %v47
  %v1789 = vunpack.c.l.b16 %v48
  %v1790 = vunpack.c.l.b16 %v49
  %v1791 = vunpack.c.l.b16 %v50
  %v1792 = vunpack.c.l.b16 %v51
  %v1793 = vunpack.c.l.b16 %v52
  %v1794 = vunpack.c.l.b16 %v53
  %v1795 = vunpack.c.l.b16 %v54
  %v1796 = vunpack.c.l.b16 %v55
  %v1797 = vunpack.c.l.b16 %v56
  %v1798 = vunpack.c.l.b16 %v57
  %v1799 = vunpack.c.l.b16 %v58
  %v1800 = vunpack.c.l.b16 %v59
  %v1801 = vunpack.c.l.b16 %v60
  %v1802 = vunpack.c.l.b16 %v61
  %v1803 = vunpack.c.l.b16 %v62
  %v1804 = vunpack.c.l.b16 %v63
  %v1805 = vunpack.c.l.b16 %v64
  %v1806 = vunpack.c.l.b16 %v65
  %v1807 = vunpack.c.l.b16 %v66
  %v1808 = vunpack.c.l.b16 %v67
  %v1809 = vunpack.c.l.b16 %v68
  %v1810 = vunpack.c.l.b16 %v69
  %v1811 = vunpack.c.l.b16 %v70
  %v1812 = vunpack.c.l.b16 %v71
  %v1813 = vunpack.c.l.b16 %v72
  %v1814 = vunpack.c.l.b16 %v73
  %v1815 = vunpack.c.l.b16 %v74
  %v1816 = vunpack.c.l.b16 %v75
  %v1817 = vpack.c.b16 %v1770, %v1769
  %v1818 = vpack.c.b16 %v1772, %v1771
  %v1819 = vpack.c.b16 %v1774, %v1773
  %v1820 = vpack.c.b16 %v1776, %v1775
  %v1821 = vpack.c.b16 %v1778, %v1777
  %v1822 = vpack.c.b16 %v1780, %v1779
  %v1823 = vpack.c.b16 %v1782, %v1781
  %v1824 = vpack.c.b16 %v1784, %v1783
  %v1825 = vpack.c.b16 %v1786, %v1785
  %v1826 = vpack.c.b16 %v1788, %v1787
  %v1827 = vpack.c.b16 %v1790, %v1789
  %v1828 = vpack.c.b16 %v1792, %v1791
  %v1829 = vpack.c.b16 %v1794, %v1793
  %v1830 = vpack.c.b16 %v1796, %v1795
  %v1831 = vpack.c.b16 %v1798, %v1797
  %v1832 = vpack.c.b16 %v1800, %v1799
  %v1833 = vpack.c.b16 %v1802, %v1801
  %v1834 = vpack.c.b16 %v1804, %v1803
  %v1835 = vpack.c.b16 %v1806, %v1805
  %v1836 = vpack.c.b16 %v1808, %v1807
  %v1837 = vpack.c.b16 %v1810, %v1809
  %v1838 = vpack.c.b16 %v1812, %v1811
  %v1839 = vpack.c.b16 %v1814, %v1813
  %v1840 = vpack.c.b16 %v1816, %v1815
  %1865 = vmatprep.subr.bf16.mxu0 0
  %1866 = vmatpush1.bf16.msra.mxu0 %v1817
  %1867 = vmatprep.subr.bf16.mxu0 0
  %1868 = vmatpush1.bf16.msra.mxu0 %v1818
  %1869 = vmatprep.subr.bf16.mxu0 0
  %1870 = vmatpush1.bf16.msra.mxu0 %v1819
  %1871 = vmatprep.subr.bf16.mxu0 0
  %1872 = vmatpush1.bf16.msra.mxu0 %v1820
  %1873 = vmatprep.subr.bf16.mxu0 0
  %1874 = vmatpush1.bf16.msra.mxu0 %v1821
  %1875 = vmatprep.subr.bf16.mxu0 0
  %1876 = vmatpush1.bf16.msra.mxu0 %v1822
  %1877 = vmatprep.subr.bf16.mxu0 0
  %1878 = vmatpush1.bf16.msra.mxu0 %v1823
  %1879 = vmatprep.subr.bf16.mxu0 0
  %1880 = vmatpush1.bf16.msra.mxu0 %v1824
  %1881 = vmatprep.subr.bf16.mxu0 0
  %1882 = vmatpush1.bf16.msra.mxu0 %v1825
  %1883 = vmatprep.subr.bf16.mxu0 0
  %1884 = vmatpush1.bf16.msra.mxu0 %v1826
  %1885 = vmatprep.subr.bf16.mxu0 0
  %1886 = vmatpush1.bf16.msra.mxu0 %v1827
  %1887 = vmatprep.subr.bf16.mxu0 0
  %1888 = vmatpush1.bf16.msra.mxu0 %v1828
  %1889 = vmatprep.subr.bf16.mxu0 0
  %1890 = vmatpush1.bf16.msra.mxu0 %v1829
  %1891 = vmatprep.subr.bf16.mxu0 0
  %1892 = vmatpush1.bf16.msra.mxu0 %v1830
  %1893 = vmatprep.subr.bf16.mxu0 0
  %1894 = vmatpush1.bf16.msra.mxu0 %v1831
  %1895 = vmatprep.subr.bf16.mxu0 0
  %1896 = vmatpush1.bf16.msra.mxu0 %v1832
  %1897 = vmatprep.mubr.bf16.mxu0 %v1716
  %1898 = vmatmul.mubr.bf16.gmra.mrb[0].mxu0 %v1715
  %v1899 = vpop.f32.mrb[0].mxu0
  %v1900 = vadd.f32 %v1699, %v1899
  %v1901 = vpop.f32.mrb[0].mxu0
  %v1902 = vpop.f32.mrb[0].mxu0
  %v1903 = vadd.f32 %v1702, %v1902
  %v1904 = vpop.f32.mrb[0].mxu0
  %1905 = vdwg.mxu0
  %1906 = vmatprep.subr.bf16.mxu0 0
  %1907 = vmatpush1.bf16.msra.mxu0 %v1833
  %1908 = vmatprep.subr.bf16.mxu0 0
  %1909 = vmatpush1.bf16.msra.mxu0 %v1834
  %1910 = vmatprep.subr.bf16.mxu0 0
  %1911 = vmatpush1.bf16.msra.mxu0 %v1835
  %1912 = vmatprep.subr.bf16.mxu0 0
  %1913 = vmatpush1.bf16.msra.mxu0 %v1836
  %1914 = vmatprep.subr.bf16.mxu0 0
  %1915 = vmatpush1.bf16.msra.mxu0 %v1837
  %1916 = vmatprep.subr.bf16.mxu0 0
  %1917 = vmatpush1.bf16.msra.mxu0 %v1838
  %1918 = vmatprep.subr.bf16.mxu0 0
  %1919 = vmatpush1.bf16.msra.mxu0 %v1839
  %1920 = vmatprep.subr.bf16.mxu0 0
  %1921 = vmatpush1.bf16.msra.mxu0 %v1840
  %1922 = vmatprep.subr.bf16.mxu0 0
  %1923 = vmatpush1.bf16.msra.mxu0 0
  %1924 = vmatprep.subr.bf16.mxu0 0
  %1925 = vmatpush1.bf16.msra.mxu0 0
  %1926 = vmatprep.subr.bf16.mxu0 0
  %1927 = vmatpush1.bf16.msra.mxu0 0
  %1928 = vmatprep.subr.bf16.mxu0 0
  %1929 = vmatpush1.bf16.msra.mxu0 0
  %1930 = vmatprep.subr.bf16.mxu0 0
  %1931 = vmatpush1.bf16.msra.mxu0 0
  %1932 = vmatprep.subr.bf16.mxu0 0
  %1933 = vmatpush1.bf16.msra.mxu0 0
  %1934 = vmatprep.subr.bf16.mxu0 0
  %1935 = vmatpush1.bf16.msra.mxu0 0
  %1936 = vmatprep.subr.bf16.mxu0 0
  %1937 = vmatpush1.bf16.msra.mxu0 0
  %1938 = vmatprep.mubr.bf16.mxu0 0
  %1939 = vmatmul.mubr.bf16.gmra.mrb[0].mxu0 %v1717
  %v1940 = vpop.f32.mrb[0].mxu0
  %v1941 = vadd.f32 %v1900, %v1940
  %v1942 = vpop.f32.mrb[0].mxu0
  %v1943 = vpop.f32.mrb[0].mxu0
  %v1944 = vadd.f32 %v1903, %v1943
  %v1945 = vpop.f32.mrb[0].mxu0
  %1946 = vdwg.mxu0
  %v1947 = vld [vmem:[%s4] sm:$0x1]
  %v1949 = vlaneseq
  %v1950 = vshrl.u32 %v1949, 7
  %v1951 = vsub.s32 0, %v1950
  %v1952 = vrot.slane %v1947, %v1951
  %v1954 = vadd.f32 %v1941, %v1952
  %v1955 = vadd.f32 %v1944, %v1952
  %v1956 = vmax.f32 %v1954, 0.0
  %v1957 = vmax.f32 %v1955, 0.0
  %v1958 = vpack.c.bf16 %v1957, %v1956
  %v1960 = vunpack.c.l.b16 %v1958
  %v1961 = vunpack.c.h.b16 %v1958
  %v1962 = vpack.c.b16 %v1960, %v1960
  %v1963 = vpack.c.b16 %v1961, %v1961
  %1966 = vst [vmem:[%s5] sm:$0xf] %v1962
  %1967 = vst [vmem:[%s5 + $0x4] sm:$0xf] %v1963
  %p1968 = scmp.ne.s32.totalorder 0, 0
  // Predicated region
  $region22: #{unet_forward.12} parent=0 // pred_check
    %p1969 = pneg %p1968
  $region23: #{unet_forward.12} parent=0 // pred_check_branch
    %1971 = sbr.rel (%p1969) target = $region25
  $region24: #{unet_forward.12} parent=0 // pred_region
    %v1972 = vadd.f32 %v1956, %v1957
    %v1973 = vrot.slane %v1972, 4
    %v1974 = vadd.f32 %v1972, %v1973
    %v1975 = vrot.slane %v1974, 2
    %v1976 = vadd.f32 %v1974, %v1975
    %v1977 = vrot.slane %v1976, 1
    %v1978 = vadd.f32 %v1976, %v1977
    %1979 = vst [vmem:[%s6] sm:$0x1] %v1978
    %v1980 = vmul.f32 %v1956, %v1956
    %v1981 = vmul.f32 %v1957, %v1957
    %v1982 = vadd.f32 %v1980, %v1981
    %v1983 = vrot.slane %v1982, 4
    %v1984 = vadd.f32 %v1982, %v1983
    %v1985 = vrot.slane %v1984, 2
    %v1986 = vadd.f32 %v1984, %v1985
    %v1987 = vrot.slane %v1986, 1
    %v1988 = vadd.f32 %v1986, %v1987
    %1989 = vst [vmem:[%s7] sm:$0x1] %v1988
  $region25: #{unet_forward.12} parent=0 // pred_fallthru
    _
  %p1990 = scmp.eq.s32.totalorder 0, 0
  // Predicated region
  $region26: #{unet_forward.12} parent=0 // pred_check
    %p1991 = pneg %p1990
  $region27: #{unet_forward.12} parent=0 // pred_check_branch
    %1993 = sbr.rel (%p1991) target = $region29
  $region28: #{unet_forward.12} parent=0 // pred_region
    %s1994 = smul.u32 0, 16
    %v1995 = vlaneseq
    %v1996 = vshrl.u32 %v1995, 7
    %v1997 = vadd.s32 %v1996, 8
    %v1998 = vstv %s1994
    %v1999 = vadd.s32 %v1998, %v1996
    %v2000 = vadd.s32 %v1998, %v1997
    %vm2001 = vcmp.lt.s32.totalorder %v1999, 2
    %vm2002 = vcmp.lt.s32.totalorder %v2000, 2
    %v2003 = vsel %vm2001, %v1956, 0.0
    %v2004 = vsel %vm2002, %v1957, 0.0
    %v2005 = vadd.f32 %v2003, %v2004
    %v2006 = vrot.slane %v2005, 4
    %v2007 = vadd.f32 %v2005, %v2006
    %v2008 = vrot.slane %v2007, 2
    %v2009 = vadd.f32 %v2007, %v2008
    %v2010 = vrot.slane %v2009, 1
    %v2011 = vadd.f32 %v2009, %v2010
    %2012 = vst [vmem:[%s6] sm:$0x1] %v2011
    %v2013 = vmul.f32 %v2003, %v2003
    %v2014 = vmul.f32 %v2004, %v2004
    %v2015 = vadd.f32 %v2013, %v2014
    %v2016 = vrot.slane %v2015, 4
    %v2017 = vadd.f32 %v2015, %v2016
    %v2018 = vrot.slane %v2017, 2
    %v2019 = vadd.f32 %v2017, %v2018
    %v2020 = vrot.slane %v2019, 1
    %v2021 = vadd.f32 %v2019, %v2020
    %2022 = vst [vmem:[%s7] sm:$0x1] %v2021
  $region29: #{unet_forward.12} parent=0 // pred_fallthru
    _
  // Predicated region
  $region30: #{unet_forward.12} parent=0 // pred_check
    _
  $region31: #{unet_forward.12} parent=0 // pred_check_branch
    %2024 = sbr.rel (0) target = $region33
  $region32: #{unet_forward.12} parent=0 // pred_region
    _
  $region33: #{unet_forward.12} parent=0 // pred_fallthru
    _
  // Predicated region
  $region34: #{unet_forward.12} parent=0 // pred_check
    _
  $region35: #{unet_forward.12} parent=0 // pred_check_branch
    %2026 = sbr.rel (0) target = $region37
  $region36: #{unet_forward.12} parent=0 // pred_region
    _
  $region37: #{unet_forward.12} parent=0 // pred_fallthru
    _
  // Predicated region
  $region38: #{unet_forward.12} parent=0 // pred_check
    _
  $region39: #{unet_forward.12} parent=0 // pred_check_branch
    %2028 = sbr.rel (0) target = $region41
  $region40: #{unet_forward.12} parent=0 // pred_region
    _
  $region41: #{unet_forward.12} parent=0 // pred_fallthru
    _
  // Predicated region
  $region42: #{unet_forward.12} parent=0 // pred_check
    _
  $region43: #{unet_forward.12} parent=0 // pred_check_branch
    %2030 = sbr.rel (0) target = $region45
  $region44: #{unet_forward.12} parent=0 // pred_region
    _
  $region45: #{unet_forward.12} parent=0 // pred_fallthru
    _
  // Predicated region
  $region46: #{unet_forward.12} parent=0 // pred_check
    _
  $region47: #{unet_forward.12} parent=0 // pred_check_branch
    %2032 = sbr.rel (0) target = $region49
  $region48: #{unet_forward.12} parent=0 // pred_region
    _
  $region49: #{unet_forward.12} parent=0 // pred_fallthru
    _
  // Predicated region
  $region50: #{unet_forward.12} parent=0 // pred_check
    _
  $region51: #{unet_forward.12} parent=0 // pred_check_branch
    %2034 = sbr.rel (0) target = $region53
  $region52: #{unet_forward.12} parent=0 // pred_region
    _
  $region53: #{unet_forward.12} parent=0 // pred_fallthru
    _

// kernel: unet_forward.15
$region0: #{unet_forward.15}
  #allocation0 [shape = 'u32[]', space=smem, size = 0x4, offset = 0x4, fixed_abs, tag = 'smem constant byte address 0x4 - core index']
  #allocation1 [shape = 'u32[144,128]{1,0:T(1,128)}', space=vmem, size = 0x12000, scoped, tag = 'internal scratch']
  %s0 = inlined_call_operand.vmem [shape: bf16[16,128], index: 0, kind: input, shape index: {}]
  %s1 = inlined_call_operand.vmem [shape: f32[1,128], index: 1, kind: input, shape index: {}]
  %s2 = inlined_call_operand.vmem [shape: f32[1,128], index: 2, kind: input, shape index: {}]
  %s3 = inlined_call_operand.vmem [shape: f32[16,128], index: 3, kind: output, shape index: {}]
  %s4 = sld [smem:[#allocation0]]
  $region22: #{unet_forward.15} parent=0
    _
  %s6 = ssub.s32 1, %s4
  %s7 = scalar_select 0, %s6, %s4
  // Predicated region
  $region2: #{unet_forward.15} parent=0 // pred_check
    _
  $region3: #{unet_forward.15} parent=0 // pred_check_branch
    %9 = sbr.rel (0) target = $region5
  $region4: #{unet_forward.15} parent=0 // pred_region
    _
  $region5: #{unet_forward.15} parent=0 // pred_fallthru
    _
  // Predicated region
  $region6: #{unet_forward.15} parent=0 // pred_check
    _
  $region7: #{unet_forward.15} parent=0 // pred_check_branch
    %11 = sbr.rel (0) target = $region9
  $region8: #{unet_forward.15} parent=0 // pred_region
    _
  $region9: #{unet_forward.15} parent=0 // pred_fallthru
    _
  // Predicated region
  $region10: #{unet_forward.15} parent=0 // pred_check
    _
  $region11: #{unet_forward.15} parent=0 // pred_check_branch
    %13 = sbr.rel (0) target = $region13
  $region12: #{unet_forward.15} parent=0 // pred_region
    _
  $region13: #{unet_forward.15} parent=0 // pred_fallthru
    _
  %v14 = vld [vmem:[%s0] sm:$0xf]
  %v15 = vld [vmem:[%s0 + $0x4] sm:$0xf]
  %v16 = vunpack.c.l.bf16 %v14
  %v17 = vunpack.c.l.bf16 %v15
  %v18 = vld [vmem:[%s1] sm:$0x1]
  %v20 = vlaneseq
  %v21 = vshrl.u32 %v20, 7
  %v22 = vsub.s32 0, %v21
  %v23 = vrot.slane %v18, %v22
  %v25 = vmul.f32 %v16, %v23
  %v26 = vmul.f32 %v17, %v23
  %v27 = vld [vmem:[%s2] sm:$0x1]
  %v29 = vlaneseq
  %v30 = vshrl.u32 %v29, 7
  %v31 = vsub.s32 0, %v30
  %v32 = vrot.slane %v27, %v31
  %v34 = vadd.f32 %v25, %v32
  %v35 = vadd.f32 %v26, %v32
  %36 = vst [vmem:[%s3] sm:$0xff] %v34
  %37 = vst [vmem:[%s3 + $0x8] sm:$0xff] %v35
  // Predicated region
  $region14: #{unet_forward.15} parent=0 // pred_check
    _
  $region15: #{unet_forward.15} parent=0 // pred_check_branch
    %39 = sbr.rel (0) target = $region17
  $region16: #{unet_forward.15} parent=0 // pred_region
    _
  $region17: #{unet_forward.15} parent=0 // pred_fallthru
    _
  // Predicated region
  $region18: #{unet_forward.15} parent=0 // pred_check
    _
  $region19: #{unet_forward.15} parent=0 // pred_check_branch
    %41 = sbr.rel (0) target = $region21
  $region20: #{unet_forward.15} parent=0 // pred_region
    _
  $region21: #{unet_forward.15} parent=0 // pred_fallthru
    _

// kernel: unet_forward.14
$region0: #{unet_forward.14}
  #allocation0 [shape = 'u32[]', space=smem, size = 0x4, offset = 0x4, fixed_abs, tag = 'smem constant byte address 0x4 - core index']
  #allocation1 [shape = 'u32[144,128]{1,0:T(1,128)}', space=vmem, size = 0x12000, scoped, tag = 'internal scratch']
  %s0 = inlined_call_operand.vmem [shape: bf16[16,640], index: 0, kind: input, shape index: {}]
  %s1 = inlined_call_operand.vmem [shape: bf16[16,640], index: 1, kind: input, shape index: {}]
  %s2 = inlined_call_operand.vmem [shape: bf16[640,128], index: 2, kind: input, shape index: {}]
  %s3 = inlined_call_operand.vmem [shape: bf16[640,128], index: 3, kind: input, shape index: {}]
  %s4 = inlined_call_operand.vmem [shape: f32[1,128], index: 4, kind: input, shape index: {}]
  %s5 = inlined_call_operand.vmem [shape: bf16[16,128], index: 5, kind: output, shape index: {0}]
  %s6 = inlined_call_operand.vmem [shape: f32[1,1,128], index: 6, kind: output, shape index: {1}]
  %s7 = inlined_call_operand.vmem [shape: f32[1,1,128], index: 7, kind: output, shape index: {2}]
  %8 = xla_tuple %s5, %s6, %s7
  %s9 = sld [smem:[#allocation0]]
  $region54: #{unet_forward.14} parent=0
    _
  %s11 = ssub.s32 1, %s9
  %s12 = scalar_select 0, %s11, %s9
  // Predicated region
  $region2: #{unet_forward.14} parent=0 // pred_check
    _
  $region3: #{unet_forward.14} parent=0 // pred_check_branch
    %14 = sbr.rel (0) target = $region5
  $region4: #{unet_forward.14} parent=0 // pred_region
    _
  $region5: #{unet_forward.14} parent=0 // pred_fallthru
    _
  // Predicated region
  $region6: #{unet_forward.14} parent=0 // pred_check
    _
  $region7: #{unet_forward.14} parent=0 // pred_check_branch
    %16 = sbr.rel (0) target = $region9
  $region8: #{unet_forward.14} parent=0 // pred_region
    _
  $region9: #{unet_forward.14} parent=0 // pred_fallthru
    _
  // Predicated region
  $region10: #{unet_forward.14} parent=0 // pred_check
    _
  $region11: #{unet_forward.14} parent=0 // pred_check_branch
    %18 = sbr.rel (0) target = $region13
  $region12: #{unet_forward.14} parent=0 // pred_region
    _
  $region13: #{unet_forward.14} parent=0 // pred_fallthru
    _
  // Predicated region
  $region14: #{unet_forward.14} parent=0 // pred_check
    _
  $region15: #{unet_forward.14} parent=0 // pred_check_branch
    %20 = sbr.rel (0) target = $region17
  $region16: #{unet_forward.14} parent=0 // pred_region
    _
  $region17: #{unet_forward.14} parent=0 // pred_fallthru
    _
  // Predicated region
  $region18: #{unet_forward.14} parent=0 // pred_check
    _
  $region19: #{unet_forward.14} parent=0 // pred_check_branch
    %22 = sbr.rel (0) target = $region21
  $region20: #{unet_forward.14} parent=0 // pred_region
    _
  $region21: #{unet_forward.14} parent=0 // pred_fallthru
    _
  %v24 = vld [vmem:[%s0] sm:$0xff]
  %v25 = vld [vmem:[%s0 + $0x8] sm:$0xff]
  %v26 = vld [vmem:[%s0 + $0x10] sm:$0xf]
  %v27 = vld [vmem:[%s0 + $0x14] sm:$0xff]
  %v28 = vld [vmem:[%s0 + $0x1c] sm:$0xff]
  %v29 = vld [vmem:[%s0 + $0x24] sm:$0xf]
  %v30 = vld [vmem:[%s2] sm:$0xf]
  %v31 = vld [vmem:[%s2 + $0x4] sm:$0xf]
  %v32 = vld [vmem:[%s2 + $0x8] sm:$0xf]
  %v33 = vld [vmem:[%s2 + $0xc] sm:$0xf]
  %v34 = vld [vmem:[%s2 + $0x10] sm:$0xf]
  %v35 = vld [vmem:[%s2 + $0x14] sm:$0xf]
  %v36 = vld [vmem:[%s2 + $0x18] sm:$0xf]
  %v37 = vld [vmem:[%s2 + $0x1c] sm:$0xf]
  %v38 = vld [vmem:[%s2 + $0x20] sm:$0xf]
  %v39 = vld [vmem:[%s2 + $0x24] sm:$0xf]
  %v40 = vld [vmem:[%s2 + $0x28] sm:$0xf]
  %v41 = vld [vmem:[%s2 + $0x2c] sm:$0xf]
  %v42 = vld [vmem:[%s2 + $0x30] sm:$0xf]
  %v43 = vld [vmem:[%s2 + $0x34] sm:$0xf]
  %v44 = vld [vmem:[%s2 + $0x38] sm:$0xf]
  %v45 = vld [vmem:[%s2 + $0x3c] sm:$0xf]
  %v46 = vld [vmem:[%s2 + $0x40] sm:$0xf]
  %v47 = vld [vmem:[%s2 + $0x44] sm:$0xf]
  %v48 = vld [vmem:[%s2 + $0x48] sm:$0xf]
  %v49 = vld [vmem:[%s2 + $0x4c] sm:$0xf]
  %v50 = vld [vmem:[%s2 + $0x50] sm:$0xf]
  %v51 = vld [vmem:[%s2 + $0x54] sm:$0xf]
  %v52 = vld [vmem:[%s2 + $0x58] sm:$0xf]
  %v53 = vld [vmem:[%s2 + $0x5c] sm:$0xf]
  %v54 = vld [vmem:[%s2 + $0x60] sm:$0xf]
  %v55 = vld [vmem:[%s2 + $0x64] sm:$0xf]
  %v56 = vld [vmem:[%s2 + $0x68] sm:$0xf]
  %v57 = vld [vmem:[%s2 + $0x6c] sm:$0xf]
  %v58 = vld [vmem:[%s2 + $0x70] sm:$0xf]
  %v59 = vld [vmem:[%s2 + $0x74] sm:$0xf]
  %v60 = vld [vmem:[%s2 + $0x78] sm:$0xf]
  %v61 = vld [vmem:[%s2 + $0x7c] sm:$0xf]
  %v62 = vld [vmem:[%s2 + $0x80] sm:$0xf]
  %v63 = vld [vmem:[%s2 + $0x84] sm:$0xf]
  %v64 = vld [vmem:[%s2 + $0x88] sm:$0xf]
  %v65 = vld [vmem:[%s2 + $0x8c] sm:$0xf]
  %v66 = vld [vmem:[%s2 + $0x90] sm:$0xf]
  %v67 = vld [vmem:[%s2 + $0x94] sm:$0xf]
  %v68 = vld [vmem:[%s2 + $0x98] sm:$0xf]
  %v69 = vld [vmem:[%s2 + $0x9c] sm:$0xf]
  %v70 = vld [vmem:[%s2 + $0xa0] sm:$0xf]
  %v71 = vld [vmem:[%s2 + $0xa4] sm:$0xf]
  %v72 = vld [vmem:[%s2 + $0xa8] sm:$0xf]
  %v73 = vld [vmem:[%s2 + $0xac] sm:$0xf]
  %v74 = vld [vmem:[%s2 + $0xb0] sm:$0xf]
  %v75 = vld [vmem:[%s2 + $0xb4] sm:$0xf]
  %v76 = vld [vmem:[%s2 + $0xb8] sm:$0xf]
  %v77 = vld [vmem:[%s2 + $0xbc] sm:$0xf]
  %v78 = vld [vmem:[%s2 + $0xc0] sm:$0xf]
  %v79 = vld [vmem:[%s2 + $0xc4] sm:$0xf]
  %v80 = vld [vmem:[%s2 + $0xc8] sm:$0xf]
  %v81 = vld [vmem:[%s2 + $0xcc] sm:$0xf]
  %v82 = vld [vmem:[%s2 + $0xd0] sm:$0xf]
  %v83 = vld [vmem:[%s2 + $0xd4] sm:$0xf]
  %v84 = vld [vmem:[%s2 + $0xd8] sm:$0xf]
  %v85 = vld [vmem:[%s2 + $0xdc] sm:$0xf]
  %v86 = vld [vmem:[%s2 + $0xe0] sm:$0xf]
  %v87 = vld [vmem:[%s2 + $0xe4] sm:$0xf]
  %v88 = vld [vmem:[%s2 + $0xe8] sm:$0xf]
  %v89 = vld [vmem:[%s2 + $0xec] sm:$0xf]
  %v90 = vld [vmem:[%s2 + $0xf0] sm:$0xf]
  %v91 = vld [vmem:[%s2 + $0xf4] sm:$0xf]
  %v92 = vld [vmem:[%s2 + $0xf8] sm:$0xf]
  %v93 = vld [vmem:[%s2 + $0xfc] sm:$0xf]
  %v94 = vld [vmem:[%s2 + $0x100] sm:$0xf]
  %v95 = vld [vmem:[%s2 + $0x104] sm:$0xf]
  %v96 = vld [vmem:[%s2 + $0x108] sm:$0xf]
  %v97 = vld [vmem:[%s2 + $0x10c] sm:$0xf]
  %v98 = vld [vmem:[%s2 + $0x110] sm:$0xf]
  %v99 = vld [vmem:[%s2 + $0x114] sm:$0xf]
  %v100 = vld [vmem:[%s2 + $0x118] sm:$0xf]
  %v101 = vld [vmem:[%s2 + $0x11c] sm:$0xf]
  %v102 = vld [vmem:[%s2 + $0x120] sm:$0xf]
  %v103 = vld [vmem:[%s2 + $0x124] sm:$0xf]
  %v104 = vld [vmem:[%s2 + $0x128] sm:$0xf]
  %v105 = vld [vmem:[%s2 + $0x12c] sm:$0xf]
  %v106 = vld [vmem:[%s2 + $0x130] sm:$0xf]
  %v107 = vld [vmem:[%s2 + $0x134] sm:$0xf]
  %v108 = vld [vmem:[%s2 + $0x138] sm:$0xf]
  %v109 = vld [vmem:[%s2 + $0x13c] sm:$0xf]
  %v110 = vld [vmem:[%s1] sm:$0xff]
  %v111 = vld [vmem:[%s1 + $0x8] sm:$0xff]
  %v112 = vld [vmem:[%s1 + $0x10] sm:$0xf]
  %v113 = vld [vmem:[%s1 + $0x14] sm:$0xff]
  %v114 = vld [vmem:[%s1 + $0x1c] sm:$0xff]
  %v115 = vld [vmem:[%s1 + $0x24] sm:$0xf]
  %v116 = vld [vmem:[%s3] sm:$0xf]
  %v117 = vld [vmem:[%s3 + $0x4] sm:$0xf]
  %v118 = vld [vmem:[%s3 + $0x8] sm:$0xf]
  %v119 = vld [vmem:[%s3 + $0xc] sm:$0xf]
  %v120 = vld [vmem:[%s3 + $0x10] sm:$0xf]
  %v121 = vld [vmem:[%s3 + $0x14] sm:$0xf]
  %v122 = vld [vmem:[%s3 + $0x18] sm:$0xf]
  %v123 = vld [vmem:[%s3 + $0x1c] sm:$0xf]
  %v124 = vld [vmem:[%s3 + $0x20] sm:$0xf]
  %v125 = vld [vmem:[%s3 + $0x24] sm:$0xf]
  %v126 = vld [vmem:[%s3 + $0x28] sm:$0xf]
  %v127 = vld [vmem:[%s3 + $0x2c] sm:$0xf]
  %v128 = vld [vmem:[%s3 + $0x30] sm:$0xf]
  %v129 = vld [vmem:[%s3 + $0x34] sm:$0xf]
  %v130 = vld [vmem:[%s3 + $0x38] sm:$0xf]
  %v131 = vld [vmem:[%s3 + $0x3c] sm:$0xf]
  %v132 = vld [vmem:[%s3 + $0x40] sm:$0xf]
  %v133 = vld [vmem:[%s3 + $0x44] sm:$0xf]
  %v134 = vld [vmem:[%s3 + $0x48] sm:$0xf]
  %v135 = vld [vmem:[%s3 + $0x4c] sm:$0xf]
  %v136 = vld [vmem:[%s3 + $0x50] sm:$0xf]
  %v137 = vld [vmem:[%s3 + $0x54] sm:$0xf]
  %v138 = vld [vmem:[%s3 + $0x58] sm:$0xf]
  %v139 = vld [vmem:[%s3 + $0x5c] sm:$0xf]
  %v140 = vld [vmem:[%s3 + $0x60] sm:$0xf]
  %v141 = vld [vmem:[%s3 + $0x64] sm:$0xf]
  %v142 = vld [vmem:[%s3 + $0x68] sm:$0xf]
  %v143 = vld [vmem:[%s3 + $0x6c] sm:$0xf]
  %v144 = vld [vmem:[%s3 + $0x70] sm:$0xf]
  %v145 = vld [vmem:[%s3 + $0x74] sm:$0xf]
  %v146 = vld [vmem:[%s3 + $0x78] sm:$0xf]
  %v147 = vld [vmem:[%s3 + $0x7c] sm:$0xf]
  %v148 = vld [vmem:[%s3 + $0x80] sm:$0xf]
  %v149 = vld [vmem:[%s3 + $0x84] sm:$0xf]
  %v150 = vld [vmem:[%s3 + $0x88] sm:$0xf]
  %v151 = vld [vmem:[%s3 + $0x8c] sm:$0xf]
  %v152 = vld [vmem:[%s3 + $0x90] sm:$0xf]
  %v153 = vld [vmem:[%s3 + $0x94] sm:$0xf]
  %v154 = vld [vmem:[%s3 + $0x98] sm:$0xf]
  %v155 = vld [vmem:[%s3 + $0x9c] sm:$0xf]
  %v156 = vld [vmem:[%s3 + $0xa0] sm:$0xf]
  %v157 = vld [vmem:[%s3 + $0xa4] sm:$0xf]
  %v158 = vld [vmem:[%s3 + $0xa8] sm:$0xf]
  %v159 = vld [vmem:[%s3 + $0xac] sm:$0xf]
  %v160 = vld [vmem:[%s3 + $0xb0] sm:$0xf]
  %v161 = vld [vmem:[%s3 + $0xb4] sm:$0xf]
  %v162 = vld [vmem:[%s3 + $0xb8] sm:$0xf]
  %v163 = vld [vmem:[%s3 + $0xbc] sm:$0xf]
  %v164 = vld [vmem:[%s3 + $0xc0] sm:$0xf]
  %v165 = vld [vmem:[%s3 + $0xc4] sm:$0xf]
  %v166 = vld [vmem:[%s3 + $0xc8] sm:$0xf]
  %v167 = vld [vmem:[%s3 + $0xcc] sm:$0xf]
  %v168 = vld [vmem:[%s3 + $0xd0] sm:$0xf]
  %v169 = vld [vmem:[%s3 + $0xd4] sm:$0xf]
  %v170 = vld [vmem:[%s3 + $0xd8] sm:$0xf]
  %v171 = vld [vmem:[%s3 + $0xdc] sm:$0xf]
  %v172 = vld [vmem:[%s3 + $0xe0] sm:$0xf]
  %v173 = vld [vmem:[%s3 + $0xe4] sm:$0xf]
  %v174 = vld [vmem:[%s3 + $0xe8] sm:$0xf]
  %v175 = vld [vmem:[%s3 + $0xec] sm:$0xf]
  %v176 = vld [vmem:[%s3 + $0xf0] sm:$0xf]
  %v177 = vld [vmem:[%s3 + $0xf4] sm:$0xf]
  %v178 = vld [vmem:[%s3 + $0xf8] sm:$0xf]
  %v179 = vld [vmem:[%s3 + $0xfc] sm:$0xf]
  %v180 = vld [vmem:[%s3 + $0x100] sm:$0xf]
  %v181 = vld [vmem:[%s3 + $0x104] sm:$0xf]
  %v182 = vld [vmem:[%s3 + $0x108] sm:$0xf]
  %v183 = vld [vmem:[%s3 + $0x10c] sm:$0xf]
  %v184 = vld [vmem:[%s3 + $0x110] sm:$0xf]
  %v185 = vld [vmem:[%s3 + $0x114] sm:$0xf]
  %v186 = vld [vmem:[%s3 + $0x118] sm:$0xf]
  %v187 = vld [vmem:[%s3 + $0x11c] sm:$0xf]
  %v188 = vld [vmem:[%s3 + $0x120] sm:$0xf]
  %v189 = vld [vmem:[%s3 + $0x124] sm:$0xf]
  %v190 = vld [vmem:[%s3 + $0x128] sm:$0xf]
  %v191 = vld [vmem:[%s3 + $0x12c] sm:$0xf]
  %v192 = vld [vmem:[%s3 + $0x130] sm:$0xf]
  %v193 = vld [vmem:[%s3 + $0x134] sm:$0xf]
  %v194 = vld [vmem:[%s3 + $0x138] sm:$0xf]
  %v195 = vld [vmem:[%s3 + $0x13c] sm:$0xf]
  %v202 = vunpack.c.l.b16 %v110
  %v203 = vunpack.c.h.b16 %v110
  %v204 = vunpack.c.l.b16 %v111
  %v205 = vunpack.c.h.b16 %v111
  %v206 = vunpack.c.l.b16 %v112
  %v207 = vunpack.c.l.b16 %v113
  %v208 = vunpack.c.h.b16 %v113
  %v209 = vunpack.c.l.b16 %v114
  %v210 = vunpack.c.h.b16 %v114
  %v211 = vunpack.c.l.b16 %v115
  %v212 = vpack.c.b16 %v207, %v202
  %v213 = vpack.c.b16 %v208, %v203
  %v214 = vpack.c.b16 %v209, %v204
  %v215 = vpack.c.b16 %v210, %v205
  %v216 = vpack.c.b16 %v211, %v206
  %v302 = vunpack.c.l.b16 %v116
  %v303 = vunpack.c.l.b16 %v117
  %v304 = vunpack.c.l.b16 %v118
  %v305 = vunpack.c.l.b16 %v119
  %v306 = vunpack.c.l.b16 %v120
  %v307 = vunpack.c.l.b16 %v121
  %v308 = vunpack.c.l.b16 %v122
  %v309 = vunpack.c.l.b16 %v123
  %v310 = vunpack.c.l.b16 %v124
  %v311 = vunpack.c.l.b16 %v125
  %v312 = vunpack.c.l.b16 %v126
  %v313 = vunpack.c.l.b16 %v127
  %v314 = vunpack.c.l.b16 %v128
  %v315 = vunpack.c.l.b16 %v129
  %v316 = vunpack.c.l.b16 %v130
  %v317 = vunpack.c.l.b16 %v131
  %v318 = vunpack.c.l.b16 %v132
  %v319 = vunpack.c.l.b16 %v133
  %v320 = vunpack.c.l.b16 %v134
  %v321 = vunpack.c.l.b16 %v135
  %v322 = vunpack.c.l.b16 %v136
  %v323 = vunpack.c.l.b16 %v137
  %v324 = vunpack.c.l.b16 %v138
  %v325 = vunpack.c.l.b16 %v139
  %v326 = vunpack.c.l.b16 %v140
  %v327 = vunpack.c.l.b16 %v141
  %v328 = vunpack.c.l.b16 %v142
  %v329 = vunpack.c.l.b16 %v143
  %v330 = vunpack.c.l.b16 %v144
  %v331 = vunpack.c.l.b16 %v145
  %v332 = vunpack.c.l.b16 %v146
  %v333 = vunpack.c.l.b16 %v147
  %v334 = vunpack.c.l.b16 %v148
  %v335 = vunpack.c.l.b16 %v149
  %v336 = vunpack.c.l.b16 %v150
  %v337 = vunpack.c.l.b16 %v151
  %v338 = vunpack.c.l.b16 %v152
  %v339 = vunpack.c.l.b16 %v153
  %v340 = vunpack.c.l.b16 %v154
  %v341 = vunpack.c.l.b16 %v155
  %v342 = vunpack.c.l.b16 %v156
  %v343 = vunpack.c.l.b16 %v157
  %v344 = vunpack.c.l.b16 %v158
  %v345 = vunpack.c.l.b16 %v159
  %v346 = vunpack.c.l.b16 %v160
  %v347 = vunpack.c.l.b16 %v161
  %v348 = vunpack.c.l.b16 %v162
  %v349 = vunpack.c.l.b16 %v163
  %v350 = vunpack.c.l.b16 %v164
  %v351 = vunpack.c.l.b16 %v165
  %v352 = vunpack.c.l.b16 %v166
  %v353 = vunpack.c.l.b16 %v167
  %v354 = vunpack.c.l.b16 %v168
  %v355 = vunpack.c.l.b16 %v169
  %v356 = vunpack.c.l.b16 %v170
  %v357 = vunpack.c.l.b16 %v171
  %v358 = vunpack.c.l.b16 %v172
  %v359 = vunpack.c.l.b16 %v173
  %v360 = vunpack.c.l.b16 %v174
  %v361 = vunpack.c.l.b16 %v175
  %v362 = vunpack.c.l.b16 %v176
  %v363 = vunpack.c.l.b16 %v177
  %v364 = vunpack.c.l.b16 %v178
  %v365 = vunpack.c.l.b16 %v179
  %v366 = vunpack.c.l.b16 %v180
  %v367 = vunpack.c.l.b16 %v181
  %v368 = vunpack.c.l.b16 %v182
  %v369 = vunpack.c.l.b16 %v183
  %v370 = vunpack.c.l.b16 %v184
  %v371 = vunpack.c.l.b16 %v185
  %v372 = vunpack.c.l.b16 %v186
  %v373 = vunpack.c.l.b16 %v187
  %v374 = vunpack.c.l.b16 %v188
  %v375 = vunpack.c.l.b16 %v189
  %v376 = vunpack.c.l.b16 %v190
  %v377 = vunpack.c.l.b16 %v191
  %v378 = vunpack.c.l.b16 %v192
  %v379 = vunpack.c.l.b16 %v193
  %v380 = vunpack.c.l.b16 %v194
  %v381 = vunpack.c.l.b16 %v195
  %v382 = vpack.c.b16 %v303, %v302
  %v383 = vpack.c.b16 %v305, %v304
  %v384 = vpack.c.b16 %v307, %v306
  %v385 = vpack.c.b16 %v309, %v308
  %v386 = vpack.c.b16 %v311, %v310
  %v387 = vpack.c.b16 %v313, %v312
  %v388 = vpack.c.b16 %v315, %v314
  %v389 = vpack.c.b16 %v317, %v316
  %v390 = vpack.c.b16 %v319, %v318
  %v391 = vpack.c.b16 %v321, %v320
  %v392 = vpack.c.b16 %v323, %v322
  %v393 = vpack.c.b16 %v325, %v324
  %v394 = vpack.c.b16 %v327, %v326
  %v395 = vpack.c.b16 %v329, %v328
  %v396 = vpack.c.b16 %v331, %v330
  %v397 = vpack.c.b16 %v333, %v332
  %v398 = vpack.c.b16 %v335, %v334
  %v399 = vpack.c.b16 %v337, %v336
  %v400 = vpack.c.b16 %v339, %v338
  %v401 = vpack.c.b16 %v341, %v340
  %v402 = vpack.c.b16 %v343, %v342
  %v403 = vpack.c.b16 %v345, %v344
  %v404 = vpack.c.b16 %v347, %v346
  %v405 = vpack.c.b16 %v349, %v348
  %v406 = vpack.c.b16 %v351, %v350
  %v407 = vpack.c.b16 %v353, %v352
  %v408 = vpack.c.b16 %v355, %v354
  %v409 = vpack.c.b16 %v357, %v356
  %v410 = vpack.c.b16 %v359, %v358
  %v411 = vpack.c.b16 %v361, %v360
  %v412 = vpack.c.b16 %v363, %v362
  %v413 = vpack.c.b16 %v365, %v364
  %v414 = vpack.c.b16 %v367, %v366
  %v415 = vpack.c.b16 %v369, %v368
  %v416 = vpack.c.b16 %v371, %v370
  %v417 = vpack.c.b16 %v373, %v372
  %v418 = vpack.c.b16 %v375, %v374
  %v419 = vpack.c.b16 %v377, %v376
  %v420 = vpack.c.b16 %v379, %v378
  %v421 = vpack.c.b16 %v381, %v380
  %462 = vmatprep.subr.bf16.mxu0 0
  %463 = vmatpush1.bf16.msra.mxu0 %v382
  %464 = vmatprep.subr.bf16.mxu0 0
  %465 = vmatpush1.bf16.msra.mxu0 %v383
  %466 = vmatprep.subr.bf16.mxu0 0
  %467 = vmatpush1.bf16.msra.mxu0 %v384
  %468 = vmatprep.subr.bf16.mxu0 0
  %469 = vmatpush1.bf16.msra.mxu0 %v385
  %470 = vmatprep.subr.bf16.mxu0 0
  %471 = vmatpush1.bf16.msra.mxu0 %v386
  %472 = vmatprep.subr.bf16.mxu0 0
  %473 = vmatpush1.bf16.msra.mxu0 %v387
  %474 = vmatprep.subr.bf16.mxu0 0
  %475 = vmatpush1.bf16.msra.mxu0 %v388
  %476 = vmatprep.subr.bf16.mxu0 0
  %477 = vmatpush1.bf16.msra.mxu0 %v389
  %478 = vmatprep.subr.bf16.mxu0 0
  %479 = vmatpush1.bf16.msra.mxu0 %v390
  %480 = vmatprep.subr.bf16.mxu0 0
  %481 = vmatpush1.bf16.msra.mxu0 %v391
  %482 = vmatprep.subr.bf16.mxu0 0
  %483 = vmatpush1.bf16.msra.mxu0 %v392
  %484 = vmatprep.subr.bf16.mxu0 0
  %485 = vmatpush1.bf16.msra.mxu0 %v393
  %486 = vmatprep.subr.bf16.mxu0 0
  %487 = vmatpush1.bf16.msra.mxu0 %v394
  %488 = vmatprep.subr.bf16.mxu0 0
  %489 = vmatpush1.bf16.msra.mxu0 %v395
  %490 = vmatprep.subr.bf16.mxu0 0
  %491 = vmatpush1.bf16.msra.mxu0 %v396
  %492 = vmatprep.subr.bf16.mxu0 0
  %493 = vmatpush1.bf16.msra.mxu0 %v397
  %494 = vmatprep.mubr.bf16.mxu0 %v213
  %495 = vmatmul.mubr.bf16.gmra.mrb[0].mxu0 %v212
  %v496 = vpop.f32.mrb[0].mxu0
  %v497 = vadd.f32 0.0, %v496
  %v498 = vpop.f32.mrb[0].mxu0
  %v499 = vpop.f32.mrb[0].mxu0
  %v500 = vadd.f32 0.0, %v499
  %v501 = vpop.f32.mrb[0].mxu0
  %502 = vdwg.mxu0
  %503 = vmatprep.subr.bf16.mxu0 0
  %504 = vmatpush1.bf16.msra.mxu0 %v398
  %505 = vmatprep.subr.bf16.mxu0 0
  %506 = vmatpush1.bf16.msra.mxu0 %v399
  %507 = vmatprep.subr.bf16.mxu0 0
  %508 = vmatpush1.bf16.msra.mxu0 %v400
  %509 = vmatprep.subr.bf16.mxu0 0
  %510 = vmatpush1.bf16.msra.mxu0 %v401
  %511 = vmatprep.subr.bf16.mxu0 0
  %512 = vmatpush1.bf16.msra.mxu0 %v402
  %513 = vmatprep.subr.bf16.mxu0 0
  %514 = vmatpush1.bf16.msra.mxu0 %v403
  %515 = vmatprep.subr.bf16.mxu0 0
  %516 = vmatpush1.bf16.msra.mxu0 %v404
  %517 = vmatprep.subr.bf16.mxu0 0
  %518 = vmatpush1.bf16.msra.mxu0 %v405
  %519 = vmatprep.subr.bf16.mxu0 0
  %520 = vmatpush1.bf16.msra.mxu0 %v406
  %521 = vmatprep.subr.bf16.mxu0 0
  %522 = vmatpush1.bf16.msra.mxu0 %v407
  %523 = vmatprep.subr.bf16.mxu0 0
  %524 = vmatpush1.bf16.msra.mxu0 %v408
  %525 = vmatprep.subr.bf16.mxu0 0
  %526 = vmatpush1.bf16.msra.mxu0 %v409
  %527 = vmatprep.subr.bf16.mxu0 0
  %528 = vmatpush1.bf16.msra.mxu0 %v410
  %529 = vmatprep.subr.bf16.mxu0 0
  %530 = vmatpush1.bf16.msra.mxu0 %v411
  %531 = vmatprep.subr.bf16.mxu0 0
  %532 = vmatpush1.bf16.msra.mxu0 %v412
  %533 = vmatprep.subr.bf16.mxu0 0
  %534 = vmatpush1.bf16.msra.mxu0 %v413
  %535 = vmatprep.mubr.bf16.mxu0 %v215
  %536 = vmatmul.mubr.bf16.gmra.mrb[0].mxu0 %v214
  %v537 = vpop.f32.mrb[0].mxu0
  %v538 = vadd.f32 %v497, %v537
  %v539 = vpop.f32.mrb[0].mxu0
  %v540 = vpop.f32.mrb[0].mxu0
  %v541 = vadd.f32 %v500, %v540
  %v542 = vpop.f32.mrb[0].mxu0
  %543 = vdwg.mxu0
  %544 = vmatprep.subr.bf16.mxu0 0
  %545 = vmatpush1.bf16.msra.mxu0 %v414
  %546 = vmatprep.subr.bf16.mxu0 0
  %547 = vmatpush1.bf16.msra.mxu0 %v415
  %548 = vmatprep.subr.bf16.mxu0 0
  %549 = vmatpush1.bf16.msra.mxu0 %v416
  %550 = vmatprep.subr.bf16.mxu0 0
  %551 = vmatpush1.bf16.msra.mxu0 %v417
  %552 = vmatprep.subr.bf16.mxu0 0
  %553 = vmatpush1.bf16.msra.mxu0 %v418
  %554 = vmatprep.subr.bf16.mxu0 0
  %555 = vmatpush1.bf16.msra.mxu0 %v419
  %556 = vmatprep.subr.bf16.mxu0 0
  %557 = vmatpush1.bf16.msra.mxu0 %v420
  %558 = vmatprep.subr.bf16.mxu0 0
  %559 = vmatpush1.bf16.msra.mxu0 %v421
  %560 = vmatprep.subr.bf16.mxu0 0
  %561 = vmatpush1.bf16.msra.mxu0 0
  %562 = vmatprep.subr.bf16.mxu0 0
  %563 = vmatpush1.bf16.msra.mxu0 0
  %564 = vmatprep.subr.bf16.mxu0 0
  %565 = vmatpush1.bf16.msra.mxu0 0
  %566 = vmatprep.subr.bf16.mxu0 0
  %567 = vmatpush1.bf16.msra.mxu0 0
  %568 = vmatprep.subr.bf16.mxu0 0
  %569 = vmatpush1.bf16.msra.mxu0 0
  %570 = vmatprep.subr.bf16.mxu0 0
  %571 = vmatpush1.bf16.msra.mxu0 0
  %572 = vmatprep.subr.bf16.mxu0 0
  %573 = vmatpush1.bf16.msra.mxu0 0
  %574 = vmatprep.subr.bf16.mxu0 0
  %575 = vmatpush1.bf16.msra.mxu0 0
  %576 = vmatprep.mubr.bf16.mxu0 0
  %577 = vmatmul.mubr.bf16.gmra.mrb[0].mxu0 %v216
  %v578 = vpop.f32.mrb[0].mxu0
  %v579 = vadd.f32 %v538, %v578
  %v580 = vpop.f32.mrb[0].mxu0
  %v581 = vpop.f32.mrb[0].mxu0
  %v582 = vadd.f32 %v541, %v581
  %v583 = vpop.f32.mrb[0].mxu0
  %584 = vdwg.mxu0
  %v591 = vunpack.c.l.b16 %v24
  %v592 = vunpack.c.h.b16 %v24
  %v593 = vunpack.c.l.b16 %v25
  %v594 = vunpack.c.h.b16 %v25
  %v595 = vunpack.c.l.b16 %v26
  %v596 = vunpack.c.l.b16 %v27
  %v597 = vunpack.c.h.b16 %v27
  %v598 = vunpack.c.l.b16 %v28
  %v599 = vunpack.c.h.b16 %v28
  %v600 = vunpack.c.l.b16 %v29
  %v601 = vpack.c.b16 %v596, %v591
  %v602 = vpack.c.b16 %v597, %v592
  %v603 = vpack.c.b16 %v598, %v593
  %v604 = vpack.c.b16 %v599, %v594
  %v605 = vpack.c.b16 %v600, %v595
  %v691 = vunpack.c.l.b16 %v30
  %v692 = vunpack.c.l.b16 %v31
  %v693 = vunpack.c.l.b16 %v32
  %v694 = vunpack.c.l.b16 %v33
  %v695 = vunpack.c.l.b16 %v34
  %v696 = vunpack.c.l.b16 %v35
  %v697 = vunpack.c.l.b16 %v36
  %v698 = vunpack.c.l.b16 %v37
  %v699 = vunpack.c.l.b16 %v38
  %v700 = vunpack.c.l.b16 %v39
  %v701 = vunpack.c.l.b16 %v40
  %v702 = vunpack.c.l.b16 %v41
  %v703 = vunpack.c.l.b16 %v42
  %v704 = vunpack.c.l.b16 %v43
  %v705 = vunpack.c.l.b16 %v44
  %v706 = vunpack.c.l.b16 %v45
  %v707 = vunpack.c.l.b16 %v46
  %v708 = vunpack.c.l.b16 %v47
  %v709 = vunpack.c.l.b16 %v48
  %v710 = vunpack.c.l.b16 %v49
  %v711 = vunpack.c.l.b16 %v50
  %v712 = vunpack.c.l.b16 %v51
  %v713 = vunpack.c.l.b16 %v52
  %v714 = vunpack.c.l.b16 %v53
  %v715 = vunpack.c.l.b16 %v54
  %v716 = vunpack.c.l.b16 %v55
  %v717 = vunpack.c.l.b16 %v56
  %v718 = vunpack.c.l.b16 %v57
  %v719 = vunpack.c.l.b16 %v58
  %v720 = vunpack.c.l.b16 %v59
  %v721 = vunpack.c.l.b16 %v60
  %v722 = vunpack.c.l.b16 %v61
  %v723 = vunpack.c.l.b16 %v62
  %v724 = vunpack.c.l.b16 %v63
  %v725 = vunpack.c.l.b16 %v64
  %v726 = vunpack.c.l.b16 %v65
  %v727 = vunpack.c.l.b16 %v66
  %v728 = vunpack.c.l.b16 %v67
  %v729 = vunpack.c.l.b16 %v68
  %v730 = vunpack.c.l.b16 %v69
  %v731 = vunpack.c.l.b16 %v70
  %v732 = vunpack.c.l.b16 %v71
  %v733 = vunpack.c.l.b16 %v72
  %v734 = vunpack.c.l.b16 %v73
  %v735 = vunpack.c.l.b16 %v74
  %v736 = vunpack.c.l.b16 %v75
  %v737 = vunpack.c.l.b16 %v76
  %v738 = vunpack.c.l.b16 %v77
  %v739 = vunpack.c.l.b16 %v78
  %v740 = vunpack.c.l.b16 %v79
  %v741 = vunpack.c.l.b16 %v80
  %v742 = vunpack.c.l.b16 %v81
  %v743 = vunpack.c.l.b16 %v82
  %v744 = vunpack.c.l.b16 %v83
  %v745 = vunpack.c.l.b16 %v84
  %v746 = vunpack.c.l.b16 %v85
  %v747 = vunpack.c.l.b16 %v86
  %v748 = vunpack.c.l.b16 %v87
  %v749 = vunpack.c.l.b16 %v88
  %v750 = vunpack.c.l.b16 %v89
  %v751 = vunpack.c.l.b16 %v90
  %v752 = vunpack.c.l.b16 %v91
  %v753 = vunpack.c.l.b16 %v92
  %v754 = vunpack.c.l.b16 %v93
  %v755 = vunpack.c.l.b16 %v94
  %v756 = vunpack.c.l.b16 %v95
  %v757 = vunpack.c.l.b16 %v96
  %v758 = vunpack.c.l.b16 %v97
  %v759 = vunpack.c.l.b16 %v98
  %v760 = vunpack.c.l.b16 %v99
  %v761 = vunpack.c.l.b16 %v100
  %v762 = vunpack.c.l.b16 %v101
  %v763 = vunpack.c.l.b16 %v102
  %v764 = vunpack.c.l.b16 %v103
  %v765 = vunpack.c.l.b16 %v104
  %v766 = vunpack.c.l.b16 %v105
  %v767 = vunpack.c.l.b16 %v106
  %v768 = vunpack.c.l.b16 %v107
  %v769 = vunpack.c.l.b16 %v108
  %v770 = vunpack.c.l.b16 %v109
  %v771 = vpack.c.b16 %v692, %v691
  %v772 = vpack.c.b16 %v694, %v693
  %v773 = vpack.c.b16 %v696, %v695
  %v774 = vpack.c.b16 %v698, %v697
  %v775 = vpack.c.b16 %v700, %v699
  %v776 = vpack.c.b16 %v702, %v701
  %v777 = vpack.c.b16 %v704, %v703
  %v778 = vpack.c.b16 %v706, %v705
  %v779 = vpack.c.b16 %v708, %v707
  %v780 = vpack.c.b16 %v710, %v709
  %v781 = vpack.c.b16 %v712, %v711
  %v782 = vpack.c.b16 %v714, %v713
  %v783 = vpack.c.b16 %v716, %v715
  %v784 = vpack.c.b16 %v718, %v717
  %v785 = vpack.c.b16 %v720, %v719
  %v786 = vpack.c.b16 %v722, %v721
  %v787 = vpack.c.b16 %v724, %v723
  %v788 = vpack.c.b16 %v726, %v725
  %v789 = vpack.c.b16 %v728, %v727
  %v790 = vpack.c.b16 %v730, %v729
  %v791 = vpack.c.b16 %v732, %v731
  %v792 = vpack.c.b16 %v734, %v733
  %v793 = vpack.c.b16 %v736, %v735
  %v794 = vpack.c.b16 %v738, %v737
  %v795 = vpack.c.b16 %v740, %v739
  %v796 = vpack.c.b16 %v742, %v741
  %v797 = vpack.c.b16 %v744, %v743
  %v798 = vpack.c.b16 %v746, %v745
  %v799 = vpack.c.b16 %v748, %v747
  %v800 = vpack.c.b16 %v750, %v749
  %v801 = vpack.c.b16 %v752, %v751
  %v802 = vpack.c.b16 %v754, %v753
  %v803 = vpack.c.b16 %v756, %v755
  %v804 = vpack.c.b16 %v758, %v757
  %v805 = vpack.c.b16 %v760, %v759
  %v806 = vpack.c.b16 %v762, %v761
  %v807 = vpack.c.b16 %v764, %v763
  %v808 = vpack.c.b16 %v766, %v765
  %v809 = vpack.c.b16 %v768, %v767
  %v810 = vpack.c.b16 %v770, %v769
  %851 = vmatprep.subr.bf16.mxu0 0
  %852 = vmatpush1.bf16.msra.mxu0 %v771
  %853 = vmatprep.subr.bf16.mxu0 0
  %854 = vmatpush1.bf16.msra.mxu0 %v772
  %855 = vmatprep.subr.bf16.mxu0 0
  %856 = vmatpush1.bf16.msra.mxu0 %v773
  %857 = vmatprep.subr.bf16.mxu0 0
  %858 = vmatpush1.bf16.msra.mxu0 %v774
  %859 = vmatprep.subr.bf16.mxu0 0
  %860 = vmatpush1.bf16.msra.mxu0 %v775
  %861 = vmatprep.subr.bf16.mxu0 0
  %862 = vmatpush1.bf16.msra.mxu0 %v776
  %863 = vmatprep.subr.bf16.mxu0 0
  %864 = vmatpush1.bf16.msra.mxu0 %v777
  %865 = vmatprep.subr.bf16.mxu0 0
  %866 = vmatpush1.bf16.msra.mxu0 %v778
  %867 = vmatprep.subr.bf16.mxu0 0
  %868 = vmatpush1.bf16.msra.mxu0 %v779
  %869 = vmatprep.subr.bf16.mxu0 0
  %870 = vmatpush1.bf16.msra.mxu0 %v780
  %871 = vmatprep.subr.bf16.mxu0 0
  %872 = vmatpush1.bf16.msra.mxu0 %v781
  %873 = vmatprep.subr.bf16.mxu0 0
  %874 = vmatpush1.bf16.msra.mxu0 %v782
  %875 = vmatprep.subr.bf16.mxu0 0
  %876 = vmatpush1.bf16.msra.mxu0 %v783
  %877 = vmatprep.subr.bf16.mxu0 0
  %878 = vmatpush1.bf16.msra.mxu0 %v784
  %879 = vmatprep.subr.bf16.mxu0 0
  %880 = vmatpush1.bf16.msra.mxu0 %v785
  %881 = vmatprep.subr.bf16.mxu0 0
  %882 = vmatpush1.bf16.msra.mxu0 %v786
  %883 = vmatprep.mubr.bf16.mxu0 %v602
  %884 = vmatmul.mubr.bf16.gmra.mrb[0].mxu0 %v601
  %v885 = vpop.f32.mrb[0].mxu0
  %v886 = vadd.f32 %v579, %v885
  %v887 = vpop.f32.mrb[0].mxu0
  %v888 = vpop.f32.mrb[0].mxu0
  %v889 = vadd.f32 %v582, %v888
  %v890 = vpop.f32.mrb[0].mxu0
  %891 = vdwg.mxu0
  %892 = vmatprep.subr.bf16.mxu0 0
  %893 = vmatpush1.bf16.msra.mxu0 %v787
  %894 = vmatprep.subr.bf16.mxu0 0
  %895 = vmatpush1.bf16.msra.mxu0 %v788
  %896 = vmatprep.subr.bf16.mxu0 0
  %897 = vmatpush1.bf16.msra.mxu0 %v789
  %898 = vmatprep.subr.bf16.mxu0 0
  %899 = vmatpush1.bf16.msra.mxu0 %v790
  %900 = vmatprep.subr.bf16.mxu0 0
  %901 = vmatpush1.bf16.msra.mxu0 %v791
  %902 = vmatprep.subr.bf16.mxu0 0
  %903 = vmatpush1.bf16.msra.mxu0 %v792
  %904 = vmatprep.subr.bf16.mxu0 0
  %905 = vmatpush1.bf16.msra.mxu0 %v793
  %906 = vmatprep.subr.bf16.mxu0 0
  %907 = vmatpush1.bf16.msra.mxu0 %v794
  %908 = vmatprep.subr.bf16.mxu0 0
  %909 = vmatpush1.bf16.msra.mxu0 %v795
  %910 = vmatprep.subr.bf16.mxu0 0
  %911 = vmatpush1.bf16.msra.mxu0 %v796
  %912 = vmatprep.subr.bf16.mxu0 0
  %913 = vmatpush1.bf16.msra.mxu0 %v797
  %914 = vmatprep.subr.bf16.mxu0 0
  %915 = vmatpush1.bf16.msra.mxu0 %v798
  %916 = vmatprep.subr.bf16.mxu0 0
  %917 = vmatpush1.bf16.msra.mxu0 %v799
  %918 = vmatprep.subr.bf16.mxu0 0
  %919 = vmatpush1.bf16.msra.mxu0 %v800
  %920 = vmatprep.subr.bf16.mxu0 0
  %921 = vmatpush1.bf16.msra.mxu0 %v801
  %922 = vmatprep.subr.bf16.mxu0 0
  %923 = vmatpush1.bf16.msra.mxu0 %v802
  %924 = vmatprep.mubr.bf16.mxu0 %v604
  %925 = vmatmul.mubr.bf16.gmra.mrb[0].mxu0 %v603
  %v926 = vpop.f32.mrb[0].mxu0
  %v927 = vadd.f32 %v886, %v926
  %v928 = vpop.f32.mrb[0].mxu0
  %v929 = vpop.f32.mrb[0].mxu0
  %v930 = vadd.f32 %v889, %v929
  %v931 = vpop.f32.mrb[0].mxu0
  %932 = vdwg.mxu0
  %933 = vmatprep.subr.bf16.mxu0 0
  %934 = vmatpush1.bf16.msra.mxu0 %v803
  %935 = vmatprep.subr.bf16.mxu0 0
  %936 = vmatpush1.bf16.msra.mxu0 %v804
  %937 = vmatprep.subr.bf16.mxu0 0
  %938 = vmatpush1.bf16.msra.mxu0 %v805
  %939 = vmatprep.subr.bf16.mxu0 0
  %940 = vmatpush1.bf16.msra.mxu0 %v806
  %941 = vmatprep.subr.bf16.mxu0 0
  %942 = vmatpush1.bf16.msra.mxu0 %v807
  %943 = vmatprep.subr.bf16.mxu0 0
  %944 = vmatpush1.bf16.msra.mxu0 %v808
  %945 = vmatprep.subr.bf16.mxu0 0
  %946 = vmatpush1.bf16.msra.mxu0 %v809
  %947 = vmatprep.subr.bf16.mxu0 0
  %948 = vmatpush1.bf16.msra.mxu0 %v810
  %949 = vmatprep.subr.bf16.mxu0 0
  %950 = vmatpush1.bf16.msra.mxu0 0
  %951 = vmatprep.subr.bf16.mxu0 0
  %952 = vmatpush1.bf16.msra.mxu0 0
  %953 = vmatprep.subr.bf16.mxu0 0
  %954 = vmatpush1.bf16.msra.mxu0 0
  %955 = vmatprep.subr.bf16.mxu0 0
  %956 = vmatpush1.bf16.msra.mxu0 0
  %957 = vmatprep.subr.bf16.mxu0 0
  %958 = vmatpush1.bf16.msra.mxu0 0
  %959 = vmatprep.subr.bf16.mxu0 0
  %960 = vmatpush1.bf16.msra.mxu0 0
  %961 = vmatprep.subr.bf16.mxu0 0
  %962 = vmatpush1.bf16.msra.mxu0 0
  %963 = vmatprep.subr.bf16.mxu0 0
  %964 = vmatpush1.bf16.msra.mxu0 0
  %965 = vmatprep.mubr.bf16.mxu0 0
  %966 = vmatmul.mubr.bf16.gmra.mrb[0].mxu0 %v605
  %v967 = vpop.f32.mrb[0].mxu0
  %v968 = vadd.f32 %v927, %v967
  %v969 = vpop.f32.mrb[0].mxu0
  %v970 = vpop.f32.mrb[0].mxu0
  %v971 = vadd.f32 %v930, %v970
  %v972 = vpop.f32.mrb[0].mxu0
  %973 = vdwg.mxu0
  %v974 = vld [vmem:[%s4] sm:$0x1]
  %v976 = vlaneseq
  %v977 = vshrl.u32 %v976, 7
  %v978 = vsub.s32 0, %v977
  %v979 = vrot.slane %v974, %v978
  %v981 = vadd.f32 %v968, %v979
  %v982 = vadd.f32 %v971, %v979
  %v983 = vmax.f32 %v981, 0.0
  %v984 = vmax.f32 %v982, 0.0
  %v985 = vpack.c.bf16 %v984, %v983
  %v987 = vunpack.c.l.b16 %v985
  %v988 = vunpack.c.h.b16 %v985
  %v989 = vpack.c.b16 %v987, %v987
  %v990 = vpack.c.b16 %v988, %v988
  %993 = vst [vmem:[%s5] sm:$0xf] %v989
  %994 = vst [vmem:[%s5 + $0x4] sm:$0xf] %v990
  %p995 = scmp.ne.s32.totalorder 0, 0
  // Predicated region
  $region22: #{unet_forward.14} parent=0 // pred_check
    %p996 = pneg %p995
  $region23: #{unet_forward.14} parent=0 // pred_check_branch
    %998 = sbr.rel (%p996) target = $region25
  $region24: #{unet_forward.14} parent=0 // pred_region
    %v999 = vadd.f32 %v983, %v984
    %v1000 = vrot.slane %v999, 4
    %v1001 = vadd.f32 %v999, %v1000
    %v1002 = vrot.slane %v1001, 2
    %v1003 = vadd.f32 %v1001, %v1002
    %v1004 = vrot.slane %v1003, 1
    %v1005 = vadd.f32 %v1003, %v1004
    %1006 = vst [vmem:[%s6] sm:$0x1] %v1005
    %v1007 = vmul.f32 %v983, %v983
    %v1008 = vmul.f32 %v984, %v984
    %v1009 = vadd.f32 %v1007, %v1008
    %v1010 = vrot.slane %v1009, 4
    %v1011 = vadd.f32 %v1009, %v1010
    %v1012 = vrot.slane %v1011, 2
    %v1013 = vadd.f32 %v1011, %v1012
    %v1014 = vrot.slane %v1013, 1
    %v1015 = vadd.f32 %v1013, %v1014
    %1016 = vst [vmem:[%s7] sm:$0x1] %v1015
  $region25: #{unet_forward.14} parent=0 // pred_fallthru
    _
  %p1017 = scmp.eq.s32.totalorder 0, 0
  // Predicated region
  $region26: #{unet_forward.14} parent=0 // pred_check
    %p1018 = pneg %p1017
  $region27: #{unet_forward.14} parent=0 // pred_check_branch
    %1020 = sbr.rel (%p1018) target = $region29
  $region28: #{unet_forward.14} parent=0 // pred_region
    %s1021 = smul.u32 0, 16
    %v1022 = vlaneseq
    %v1023 = vshrl.u32 %v1022, 7
    %v1024 = vadd.s32 %v1023, 8
    %v1025 = vstv %s1021
    %v1026 = vadd.s32 %v1025, %v1023
    %v1027 = vadd.s32 %v1025, %v1024
    %vm1028 = vcmp.lt.s32.totalorder %v1026, 2
    %vm1029 = vcmp.lt.s32.totalorder %v1027, 2
    %v1030 = vsel %vm1028, %v983, 0.0
    %v1031 = vsel %vm1029, %v984, 0.0
    %v1032 = vadd.f32 %v1030, %v1031
    %v1033 = vrot.slane %v1032, 4
    %v1034 = vadd.f32 %v1032, %v1033
    %v1035 = vrot.slane %v1034, 2
    %v1036 = vadd.f32 %v1034, %v1035
    %v1037 = vrot.slane %v1036, 1
    %v1038 = vadd.f32 %v1036, %v1037
    %1039 = vst [vmem:[%s6] sm:$0x1] %v1038
    %v1040 = vmul.f32 %v1030, %v1030
    %v1041 = vmul.f32 %v1031, %v1031
    %v1042 = vadd.f32 %v1040, %v1041
    %v1043 = vrot.slane %v1042, 4
    %v1044 = vadd.f32 %v1042, %v1043
    %v1045 = vrot.slane %v1044, 2
    %v1046 = vadd.f32 %v1044, %v1045
    %v1047 = vrot.slane %v1046, 1
    %v1048 = vadd.f32 %v1046, %v1047
    %1049 = vst [vmem:[%s7] sm:$0x1] %v1048
  $region29: #{unet_forward.14} parent=0 // pred_fallthru
    _
  // Predicated region
  $region30: #{unet_forward.14} parent=0 // pred_check
    _
  $region31: #{unet_forward.14} parent=0 // pred_check_branch
    %1051 = sbr.rel (0) target = $region33
  $region32: #{unet_forward.14} parent=0 // pred_region
    _
  $region33: #{unet_forward.14} parent=0 // pred_fallthru
    _
  // Predicated region
  $region34: #{unet_forward.14} parent=0 // pred_check
    _
  $region35: #{unet_forward.14} parent=0 // pred_check_branch
    %1053 = sbr.rel (0) target = $region37
  $region36: #{unet_forward.14} parent=0 // pred_region
    _
  $region37: #{unet_forward.14} parent=0 // pred_fallthru
    _
  // Predicated region
  $region38: #{unet_forward.14} parent=0 // pred_check
    _
  $region39: #{unet_forward.14} parent=0 // pred_check_branch
    %1055 = sbr.rel (0) target = $region41
  $region40: #{unet_forward.14} parent=0 // pred_region
    _
  $region41: #{unet_forward.14} parent=0 // pred_fallthru
    _
  // Predicated region
  $region42: #{unet_forward.14} parent=0 // pred_check
    _
  $region43: #{unet_forward.14} parent=0 // pred_check_branch
    %1057 = sbr.rel (0) target = $region45
  $region44: #{unet_forward.14} parent=0 // pred_region
    _
  $region45: #{unet_forward.14} parent=0 // pred_fallthru
    _
  // Predicated region
  $region46: #{unet_forward.14} parent=0 // pred_check
    _
  $region47: #{unet_forward.14} parent=0 // pred_check_branch
    %1059 = sbr.rel (0) target = $region49
  $region48: #{unet_forward.14} parent=0 // pred_region
    _
  $region49: #{unet_forward.14} parent=0 // pred_fallthru
    _
  // Predicated region
  $region50: #{unet_forward.14} parent=0 // pred_check
    _
  $region51: #{unet_forward.14} parent=0 // pred_check_branch
    %1061 = sbr.rel (0) target = $region53
  $region52: #{unet_forward.14} parent=0 // pred_region
    _
  $region53: #{unet_forward.14} parent=0 // pred_fallthru
    _

</llo_original>
